<compile_context>
chip_gen: v7x
topology: tpu7x:2x2x1
jax: 0.10.0
libtpu: 0.0.40
codegen_flags: <defaults>
</compile_context>

<pallas_src>
import jax
import jax.numpy as jnp
from jax.experimental import pallas as pl
from jax.experimental.pallas import tpu as pltpu


# ----------------------------- tiling / VMEM plan ----------------------------- #

def _tile_cap_and_vmem():
    """Per-generation batch-tile cap and scoped-VMEM request."""
    cap, vmem = 8, 48 * 1024 * 1024          # safe on v7x (64 MiB / TensorCore)
    try:
        info = pltpu.get_tpu_info()
        phys = int(getattr(info, "vmem_capacity_bytes", 0) or 0)
        if phys >= 96 * 1024 * 1024:          # v5e / v6e: 128 MiB VMEM
            cap, vmem = 16, 64 * 1024 * 1024
    except Exception:
        pass
    return cap, vmem


def _plan_batch(batch, cap):
    """Return (padded_batch, tile).  tile is a multiple of 8 (keeps the (tile,10)
    output block legal) or the whole batch; the batch is zero-padded if needed."""
    if batch <= cap:
        return batch, batch
    for t in range(cap - cap % 8, 7, -8):
        if batch % t == 0:
            return batch, t
    pad = (-batch) % 8
    return batch + pad, 8


# --------------------------------- the kernel --------------------------------- #

def _convnet_kernel(x_ref, w1_ref, b1_ref, w2_ref, b2_ref,
                    wf1_ref, bf1_ref, wf2_ref, bf2_ref, o_ref):
    # x_ref  : (tb, 32, 28) f32   input images (28 rows + 4 zero-pad rows)
    # w1_ref : (28, 1536)   bf16  conv1 banded weights, columns (ki, s', cout), 512/ki
    # b1_ref : (1, 416)     f32   conv1 bias tiled over (s', cout)
    # w2_ref : (3, 416, 768) bf16 conv2 banded weights per row tap ki,
    #                             rows (s, cin), columns (parity, w, cout)
    # b2_ref : (1, 768)     f32
    # wf1_ref: (12, 384, 64) bf16 fc1 weights regrouped per pooled row h
    # bf1_ref: (1, 64)      f32
    # wf2_ref: (64, 10)     f32
    # bf2_ref: (1, 10)      f32
    # o_ref  : (tb, 10)     f32   log-probabilities
    tb = x_ref.shape[0]

    # ---- conv1: one banded MXU matmul over the width dimension ---------------- #
    x2 = x_ref[...].reshape(tb * 32, 28).astype(jnp.bfloat16)
    g = jnp.dot(x2, w1_ref[...], preferred_element_type=jnp.float32)   # (tb*32, 1536)
    g3 = g.reshape(tb, 32, 1536)
    # row-tap shift: ki-th 512-aligned column block, rows ki..ki+25
    h1 = (g3[:, 0:26, 0:416]
          + g3[:, 1:27, 512:928]
          + g3[:, 2:28, 1024:1440])                                    # (tb, 26, 416)
    h1 = jnp.maximum(h1 + b1_ref[...], 0.0)                            # bias + ReLU, f32

    # ---- conv2: 3 accumulated banded MXU matmuls (one per row tap) ------------ #
    acc = None
    for ki in range(3):
        lhs = h1[:, ki:ki + 24, :].reshape(tb * 24, 416).astype(jnp.bfloat16)
        d = jnp.dot(lhs, w2_ref[ki], preferred_element_type=jnp.float32)
        acc = d if acc is None else acc + d                            # (tb*24, 768)
    act = jnp.maximum(acc + b2_ref[...], 0.0).reshape(tb, 24, 768)     # rows (b, i)

    # ---- 2x2 max-pool fused with fc1 (one pooled row h per small matmul) ------ #
    # H-pool: adjacent image rows.  W-pool: the two 384-wide lane halves
    # (output columns were ordered (parity, w, cout) host-side).
    fc1 = None
    for h in range(12):
        hp = jnp.maximum(act[:, 2 * h, :], act[:, 2 * h + 1, :])       # (tb, 768)
        wp = jnp.maximum(hp[:, 0:384], hp[:, 384:768])                 # (tb, 384)
        d = jnp.dot(wp.astype(jnp.bfloat16), wf1_ref[h],
                    preferred_element_type=jnp.float32)                # (tb, 64)
        fc1 = d if fc1 is None else fc1 + d
    hfc = jnp.maximum(fc1 + bf1_ref[...], 0.0)                         # (tb, 64)

    # ---- fc2 + log_softmax (f32, tiny) ---------------------------------------- #
    z = jnp.dot(hfc, wf2_ref[...], preferred_element_type=jnp.float32) + bf2_ref[...]
    m = jnp.max(z, axis=1, keepdims=True)
    lse = m + jnp.log(jnp.sum(jnp.exp(z - m), axis=1, keepdims=True))
    o_ref[...] = z - lse


# --------------------------------- JAX wrapper --------------------------------- #

def convnet_forward(x_nchw, kparams):
    """x_nchw: (B, 1, 28, 28) float32 -> (B, 10) log-probabilities."""
    (w1_band, b1d, w2_band, b2d, wf1, bf1, wf2, bf2) = kparams
    B = x_nchw.shape[0]
    assert x_nchw.shape[1:] == (1, 28, 28), x_nchw.shape

    cap, vmem_bytes = _tile_cap_and_vmem()
    Bp, tb = _plan_batch(B, cap)

    # glue: squeeze Cin=1, pad rows 28->32 (keeps all in-kernel reshapes
    # sublane-tile aligned) and zero-pad the batch if it does not tile evenly.
    x = x_nchw.reshape(B, 28, 28)
    x = jnp.pad(x, ((0, Bp - B), (0, 4), (0, 0)))

    out = pl.pallas_call(
        _convnet_kernel,
        out_shape=jax.ShapeDtypeStruct((Bp, 10), jnp.float32),
        grid_spec=pltpu.PrefetchScalarGridSpec(
            num_scalar_prefetch=0,
            grid=(Bp // tb,),
            in_specs=[
                pl.BlockSpec((tb, 32, 28), lambda i: (i, 0, 0)),
                pl.BlockSpec((28, 1536), lambda i: (0, 0)),
                pl.BlockSpec((1, 416), lambda i: (0, 0)),
                pl.BlockSpec((3, 416, 768), lambda i: (0, 0, 0)),
                pl.BlockSpec((1, 768), lambda i: (0, 0)),
                pl.BlockSpec((12, 384, 64), lambda i: (0, 0, 0)),
                pl.BlockSpec((1, 64), lambda i: (0, 0)),
                pl.BlockSpec((64, 10), lambda i: (0, 0)),
                pl.BlockSpec((1, 10), lambda i: (0, 0)),
            ],
            out_specs=pl.BlockSpec((tb, 10), lambda i: (i, 0)),
        ),
        compiler_params=pltpu.CompilerParams(
            dimension_semantics=("parallel",),
            vmem_limit_bytes=vmem_bytes,
        ),
    )(x, w1_band, b1d, w2_band, b2d, wf1, bf1, wf2, bf2)

    return out[:B]


# --------------------------------- parameters ---------------------------------- #

def make_torch_params():
    """Deterministic synthetic parameters in PyTorch shapes."""
    key = jax.random.PRNGKey(0)
    ks = jax.random.split(key, 8)
    cn1_w = jax.random.normal(ks[0], (16, 1, 3, 3), jnp.float32) * 0.10   # (Cout,Cin,KH,KW)
    cn1_b = jax.random.normal(ks[1], (16,), jnp.float32) * 0.10
    cn2_w = jax.random.normal(ks[2], (32, 16, 3, 3), jnp.float32) * 0.05
    cn2_b = jax.random.normal(ks[3], (32,), jnp.float32) * 0.05
    fc1_w = jax.random.normal(ks[4], (64, 4608), jnp.float32) * 0.01      # (out, in) over (C,H,W)
    fc1_b = jax.random.normal(ks[5], (64,), jnp.float32) * 0.01
    fc2_w = jax.random.normal(ks[6], (10, 64), jnp.float32) * 0.05
    fc2_b = jax.random.normal(ks[7], (10,), jnp.float32) * 0.05
    return cn1_w, cn1_b, cn2_w, cn2_b, fc1_w, fc1_b, fc2_w, fc2_b


def to_kernel_params(p):
    """Host-side glue: banded conv weights, parity-ordered conv2 columns, fc1 rows
    regrouped to the kernel's pooled (h, w, c) layout, bf16 MXU weights."""
    cn1_w, cn1_b, cn2_w, cn2_b, fc1_w, fc1_b, fc2_w, fc2_b = p

    # conv1: banded along width; one 512-wide, 128-aligned column block per row tap ki.
    w1 = jnp.transpose(cn1_w[:, 0], (1, 2, 0))                # (ki, kj, cout) = (3,3,16)
    band1 = jnp.zeros((28, 3, 32, 16), jnp.float32)           # (s, ki, s'(padded to 32), cout)
    cols = jnp.arange(26)
    for ki in range(3):
        for kj in range(3):
            band1 = band1.at[cols + kj, ki, cols, :].add(w1[ki, kj])
    w1_band = band1.reshape(28, 1536).astype(jnp.bfloat16)
    b1_dense = jnp.tile(cn1_b, 26).reshape(1, 416)

    # conv2: banded along width per row tap; output columns ordered (parity, w, cout)
    # so the in-kernel W-pool is a max of two aligned 384-lane halves.
    w2 = jnp.transpose(cn2_w, (2, 3, 1, 0))                   # (ki, kj, cin, cout)
    band2 = jnp.zeros((3, 26, 16, 2, 12, 32), jnp.float32)    # (ki, s, cin, parity, w, cout)
    wcols = jnp.arange(12)
    for ki in range(3):
        for kj in range(3):
            for par in range(2):
                s = 2 * wcols + par + kj
                band2 = band2.at[ki, s, :, par, wcols, :].add(w2[ki, kj])
    w2_band = band2.reshape(3, 416, 768).astype(jnp.bfloat16)
    b2_dense = jnp.tile(cn2_b, 24).reshape(1, 768)

    # fc1: PyTorch flattens (C=32, H=12, W=12); kernel contracts per pooled row h over
    # a (w, c)-ordered 384-vector -> regroup rows to (h, w, c) and split per h.
    wf1 = jnp.transpose(fc1_w.reshape(64, 32, 12, 12), (2, 3, 1, 0))   # (h, w, c, out)
    wf1 = wf1.reshape(12, 384, 64).astype(jnp.bfloat16)
    wf2 = jnp.transpose(fc2_w)                                          # (64, 10)
    return (w1_band, b1_dense, w2_band, b2_dense,
            wf1, fc1_b.reshape(1, 64), wf2, fc2_b.reshape(1, 10))


def convnet_reference(x_nchw, p):
    """Pure-JAX reference (mirrors the PyTorch module) for correctness checking."""
    cn1_w, cn1_b, cn2_w, cn2_b, fc1_w, fc1_b, fc2_w, fc2_b = p
    dn = ("NCHW", "OIHW", "NCHW")
    hi = jax.lax.Precision.HIGHEST
    h = jax.lax.conv_general_dilated(x_nchw, cn1_w, (1, 1), "VALID",
                                     dimension_numbers=dn, precision=hi)
    h = jax.nn.relu(h + cn1_b[None, :, None, None])
    h = jax.lax.conv_general_dilated(h, cn2_w, (1, 1), "VALID",
                                     dimension_numbers=dn, precision=hi)
    h = jax.nn.relu(h + cn2_b[None, :, None, None])
    h = jax.lax.reduce_window(h, -jnp.inf, jax.lax.max,
                              (1, 1, 2, 2), (1, 1, 2, 2), "VALID")
    h = h.reshape(h.shape[0], -1)
    h = jax.nn.relu(jnp.dot(h, fc1_w.T, precision=hi) + fc1_b)
    z = jnp.dot(h, fc2_w.T, precision=hi) + fc2_b
    return jax.nn.log_softmax(z, axis=1)


if __name__ == "__main__":
    torch_params = make_torch_params()
    kparams = to_kernel_params(torch_params)
    x = jax.random.normal(jax.random.fold_in(jax.random.PRNGKey(0), 123),
                          (2, 1, 28, 28), jnp.float32)

    fwd = jax.jit(lambda xx: convnet_forward(xx, kparams))
    out = jax.block_until_ready(fwd(x))

    assert out.shape == (2, 10), out.shape
    assert out.dtype == jnp.float32
    assert bool(jnp.all(jnp.isfinite(out)))
    # log_softmax rows should exponentiate-sum to 1
    assert bool(jnp.allclose(jnp.sum(jnp.exp(out), axis=1), 1.0, atol=1e-3))
    # compare against the pure-JAX f32 reference of the PyTorch module
    ref = convnet_reference(x, torch_params)
    err = float(jnp.max(jnp.abs(out - ref)))
    assert bool(jnp.allclose(out, ref, atol=1e-2, rtol=1e-2)), err
    print("KERNEL_OK")
</pallas_src>

<mosaic_0001>
module attributes {stable_mosaic.version = 11 : i64} {
  func.func @_convnet_kernel(%arg0: i32, %arg1: memref<2x32x28xf32, #tpu.memory_space<vmem>>, %arg2: memref<28x1536xbf16, #tpu.memory_space<vmem>>, %arg3: memref<1x416xf32, #tpu.memory_space<vmem>>, %arg4: memref<3x416x768xbf16, #tpu.memory_space<vmem>>, %arg5: memref<1x768xf32, #tpu.memory_space<vmem>>, %arg6: memref<12x384x64xbf16, #tpu.memory_space<vmem>>, %arg7: memref<1x64xf32, #tpu.memory_space<vmem>>, %arg8: memref<64x10xf32, #tpu.memory_space<vmem>>, %arg9: memref<1x10xf32, #tpu.memory_space<vmem>>, %arg10: memref<2x10xf32, #tpu.memory_space<vmem>>) attributes {dimension_semantics = [#tpu.dimension_semantics<parallel>], iteration_bounds = array<i64: 1>, scalar_prefetch = 0 : i64, scratch_operands = 0 : i64, tpu.core_type = #tpu.core_type<tc>, window_params = [{transform_indices = @transform_0, window_bounds = array<i64: 2, 32, 28>}, {pipeline_mode = #tpu.pipeline_mode<synchronous>, transform_indices = @transform_1, window_bounds = array<i64: 28, 1536>}, {pipeline_mode = #tpu.pipeline_mode<synchronous>, transform_indices = @transform_2, window_bounds = array<i64: 1, 416>}, {pipeline_mode = #tpu.pipeline_mode<synchronous>, transform_indices = @transform_3, window_bounds = array<i64: 3, 416, 768>}, {pipeline_mode = #tpu.pipeline_mode<synchronous>, transform_indices = @transform_4, window_bounds = array<i64: 1, 768>}, {pipeline_mode = #tpu.pipeline_mode<synchronous>, transform_indices = @transform_5, window_bounds = array<i64: 12, 384, 64>}, {pipeline_mode = #tpu.pipeline_mode<synchronous>, transform_indices = @transform_6, window_bounds = array<i64: 1, 64>}, {pipeline_mode = #tpu.pipeline_mode<synchronous>, transform_indices = @transform_7, window_bounds = array<i64: 64, 10>}, {pipeline_mode = #tpu.pipeline_mode<synchronous>, transform_indices = @transform_8, window_bounds = array<i64: 1, 10>}, {transform_indices = @transform_9, window_bounds = array<i64: 2, 10>}]} {
    %c0 = arith.constant 0 : index
    %c0_0 = arith.constant 0 : index
    %c0_1 = arith.constant 0 : index
    %0 = vector.load %arg1[%c0, %c0_0, %c0_1] : memref<2x32x28xf32, #tpu.memory_space<vmem>>, vector<2x32x28xf32>
    %1 = vector.shape_cast %0 : vector<2x32x28xf32> to vector<64x28xf32>
    %2 = arith.truncf %1 : vector<64x28xf32> to vector<64x28xbf16>
    %c0_2 = arith.constant 0 : index
    %c0_3 = arith.constant 0 : index
    %3 = vector.load %arg2[%c0_2, %c0_3] : memref<28x1536xbf16, #tpu.memory_space<vmem>>, vector<28x1536xbf16>
    %cst = arith.constant dense<0.000000e+00> : vector<64x1536xf32>
    %4 = tpu.matmul %2, %3, %cst {dimension_numbers = #tpu.dot_dimension_numbers<[1], [0], [0], [1], [0, 0, 1, 1], [], []>} : vector<64x28xbf16>, vector<28x1536xbf16>, vector<64x1536xf32> -> vector<64x1536xf32>
    %5 = vector.shape_cast %4 : vector<64x1536xf32> to vector<2x32x1536xf32>
    %6 = vector.extract_strided_slice %5 {offsets = [0, 0, 0], sizes = [2, 26, 416], strides = [1, 1, 1]} : vector<2x32x1536xf32> to vector<2x26x416xf32>
    %7 = vector.extract_strided_slice %5 {offsets = [0, 1, 512], sizes = [2, 26, 416], strides = [1, 1, 1]} : vector<2x32x1536xf32> to vector<2x26x416xf32>
    %8 = arith.addf %6, %7 : vector<2x26x416xf32>
    %9 = vector.extract_strided_slice %5 {offsets = [0, 2, 1024], sizes = [2, 26, 416], strides = [1, 1, 1]} : vector<2x32x1536xf32> to vector<2x26x416xf32>
    %10 = arith.addf %8, %9 : vector<2x26x416xf32>
    %c0_4 = arith.constant 0 : index
    %c0_5 = arith.constant 0 : index
    %11 = vector.load %arg3[%c0_4, %c0_5] : memref<1x416xf32, #tpu.memory_space<vmem>>, vector<1x416xf32>
    %12 = vector.shape_cast %11 : vector<1x416xf32> to vector<1x1x416xf32>
    %13 = vector.broadcast %12 : vector<1x1x416xf32> to vector<2x26x416xf32>
    %14 = arith.addf %10, %13 : vector<2x26x416xf32>
    %cst_6 = arith.constant 0.000000e+00 : f32
    %15 = vector.broadcast %cst_6 : f32 to vector<2x26x416xf32>
    %16 = arith.maximumf %14, %15 : vector<2x26x416xf32>
    %17 = vector.extract_strided_slice %16 {offsets = [0, 0, 0], sizes = [2, 24, 416], strides = [1, 1, 1]} : vector<2x26x416xf32> to vector<2x24x416xf32>
    %18 = vector.shape_cast %17 : vector<2x24x416xf32> to vector<48x416xf32>
    %19 = arith.truncf %18 : vector<48x416xf32> to vector<48x416xbf16>
    %c0_7 = arith.constant 0 : index
    %c0_8 = arith.constant 0 : index
    %c0_9 = arith.constant 0 : index
    %20 = vector.load %arg4[%c0_7, %c0_8, %c0_9] : memref<3x416x768xbf16, #tpu.memory_space<vmem>>, vector<1x416x768xbf16>
    %21 = vector.shape_cast %20 : vector<1x416x768xbf16> to vector<416x768xbf16>
    %cst_10 = arith.constant dense<0.000000e+00> : vector<48x768xf32>
    %22 = tpu.matmul %19, %21, %cst_10 {dimension_numbers = #tpu.dot_dimension_numbers<[1], [0], [0], [1], [0, 0, 1, 1], [], []>} : vector<48x416xbf16>, vector<416x768xbf16>, vector<48x768xf32> -> vector<48x768xf32>
    %23 = vector.extract_strided_slice %16 {offsets = [0, 1, 0], sizes = [2, 24, 416], strides = [1, 1, 1]} : vector<2x26x416xf32> to vector<2x24x416xf32>
    %24 = vector.shape_cast %23 : vector<2x24x416xf32> to vector<48x416xf32>
    %25 = arith.truncf %24 : vector<48x416xf32> to vector<48x416xbf16>
    %c1 = arith.constant 1 : index
    %c0_11 = arith.constant 0 : index
    %c0_12 = arith.constant 0 : index
    %26 = vector.load %arg4[%c1, %c0_11, %c0_12] : memref<3x416x768xbf16, #tpu.memory_space<vmem>>, vector<1x416x768xbf16>
    %27 = vector.shape_cast %26 : vector<1x416x768xbf16> to vector<416x768xbf16>
    %cst_13 = arith.constant dense<0.000000e+00> : vector<48x768xf32>
    %28 = tpu.matmul %25, %27, %cst_13 {dimension_numbers = #tpu.dot_dimension_numbers<[1], [0], [0], [1], [0, 0, 1, 1], [], []>} : vector<48x416xbf16>, vector<416x768xbf16>, vector<48x768xf32> -> vector<48x768xf32>
    %29 = arith.addf %22, %28 : vector<48x768xf32>
    %30 = vector.extract_strided_slice %16 {offsets = [0, 2, 0], sizes = [2, 24, 416], strides = [1, 1, 1]} : vector<2x26x416xf32> to vector<2x24x416xf32>
    %31 = vector.shape_cast %30 : vector<2x24x416xf32> to vector<48x416xf32>
    %32 = arith.truncf %31 : vector<48x416xf32> to vector<48x416xbf16>
    %c2 = arith.constant 2 : index
    %c0_14 = arith.constant 0 : index
    %c0_15 = arith.constant 0 : index
    %33 = vector.load %arg4[%c2, %c0_14, %c0_15] : memref<3x416x768xbf16, #tpu.memory_space<vmem>>, vector<1x416x768xbf16>
    %34 = vector.shape_cast %33 : vector<1x416x768xbf16> to vector<416x768xbf16>
    %cst_16 = arith.constant dense<0.000000e+00> : vector<48x768xf32>
    %35 = tpu.matmul %32, %34, %cst_16 {dimension_numbers = #tpu.dot_dimension_numbers<[1], [0], [0], [1], [0, 0, 1, 1], [], []>} : vector<48x416xbf16>, vector<416x768xbf16>, vector<48x768xf32> -> vector<48x768xf32>
    %36 = arith.addf %29, %35 : vector<48x768xf32>
    %c0_17 = arith.constant 0 : index
    %c0_18 = arith.constant 0 : index
    %37 = vector.load %arg5[%c0_17, %c0_18] : memref<1x768xf32, #tpu.memory_space<vmem>>, vector<1x768xf32>
    %38 = vector.broadcast %37 : vector<1x768xf32> to vector<48x768xf32>
    %39 = arith.addf %36, %38 : vector<48x768xf32>
    %cst_19 = arith.constant 0.000000e+00 : f32
    %40 = vector.broadcast %cst_19 : f32 to vector<48x768xf32>
    %41 = arith.maximumf %39, %40 : vector<48x768xf32>
    %42 = vector.shape_cast %41 : vector<48x768xf32> to vector<2x24x768xf32>
    %43 = vector.extract_strided_slice %42 {offsets = [0, 0, 0], sizes = [2, 1, 768], strides = [1, 1, 1]} : vector<2x24x768xf32> to vector<2x1x768xf32>
    %44 = vector.shape_cast %43 : vector<2x1x768xf32> to vector<2x768xf32>
    %45 = vector.extract_strided_slice %42 {offsets = [0, 1, 0], sizes = [2, 1, 768], strides = [1, 1, 1]} : vector<2x24x768xf32> to vector<2x1x768xf32>
    %46 = vector.shape_cast %45 : vector<2x1x768xf32> to vector<2x768xf32>
    %47 = arith.maximumf %44, %46 : vector<2x768xf32>
    %48 = vector.extract_strided_slice %47 {offsets = [0, 0], sizes = [2, 384], strides = [1, 1]} : vector<2x768xf32> to vector<2x384xf32>
    %49 = vector.extract_strided_slice %47 {offsets = [0, 384], sizes = [2, 384], strides = [1, 1]} : vector<2x768xf32> to vector<2x384xf32>
    %50 = arith.maximumf %48, %49 : vector<2x384xf32>
    %51 = arith.truncf %50 : vector<2x384xf32> to vector<2x384xbf16>
    %c0_20 = arith.constant 0 : index
    %c0_21 = arith.constant 0 : index
    %c0_22 = arith.constant 0 : index
    %52 = vector.load %arg6[%c0_20, %c0_21, %c0_22] : memref<12x384x64xbf16, #tpu.memory_space<vmem>>, vector<1x384x64xbf16>
    %53 = vector.shape_cast %52 : vector<1x384x64xbf16> to vector<384x64xbf16>
    %cst_23 = arith.constant dense<0.000000e+00> : vector<2x64xf32>
    %54 = tpu.matmul %51, %53, %cst_23 {dimension_numbers = #tpu.dot_dimension_numbers<[1], [0], [0], [1], [0, 0, 1, 1], [], []>} : vector<2x384xbf16>, vector<384x64xbf16>, vector<2x64xf32> -> vector<2x64xf32>
    %55 = vector.extract_strided_slice %42 {offsets = [0, 2, 0], sizes = [2, 1, 768], strides = [1, 1, 1]} : vector<2x24x768xf32> to vector<2x1x768xf32>
    %56 = vector.shape_cast %55 : vector<2x1x768xf32> to vector<2x768xf32>
    %57 = vector.extract_strided_slice %42 {offsets = [0, 3, 0], sizes = [2, 1, 768], strides = [1, 1, 1]} : vector<2x24x768xf32> to vector<2x1x768xf32>
    %58 = vector.shape_cast %57 : vector<2x1x768xf32> to vector<2x768xf32>
    %59 = arith.maximumf %56, %58 : vector<2x768xf32>
    %60 = vector.extract_strided_slice %59 {offsets = [0, 0], sizes = [2, 384], strides = [1, 1]} : vector<2x768xf32> to vector<2x384xf32>
    %61 = vector.extract_strided_slice %59 {offsets = [0, 384], sizes = [2, 384], strides = [1, 1]} : vector<2x768xf32> to vector<2x384xf32>
    %62 = arith.maximumf %60, %61 : vector<2x384xf32>
    %63 = arith.truncf %62 : vector<2x384xf32> to vector<2x384xbf16>
    %c1_24 = arith.constant 1 : index
    %c0_25 = arith.constant 0 : index
    %c0_26 = arith.constant 0 : index
    %64 = vector.load %arg6[%c1_24, %c0_25, %c0_26] : memref<12x384x64xbf16, #tpu.memory_space<vmem>>, vector<1x384x64xbf16>
    %65 = vector.shape_cast %64 : vector<1x384x64xbf16> to vector<384x64xbf16>
    %cst_27 = arith.constant dense<0.000000e+00> : vector<2x64xf32>
    %66 = tpu.matmul %63, %65, %cst_27 {dimension_numbers = #tpu.dot_dimension_numbers<[1], [0], [0], [1], [0, 0, 1, 1], [], []>} : vector<2x384xbf16>, vector<384x64xbf16>, vector<2x64xf32> -> vector<2x64xf32>
    %67 = arith.addf %54, %66 : vector<2x64xf32>
    %68 = vector.extract_strided_slice %42 {offsets = [0, 4, 0], sizes = [2, 1, 768], strides = [1, 1, 1]} : vector<2x24x768xf32> to vector<2x1x768xf32>
    %69 = vector.shape_cast %68 : vector<2x1x768xf32> to vector<2x768xf32>
    %70 = vector.extract_strided_slice %42 {offsets = [0, 5, 0], sizes = [2, 1, 768], strides = [1, 1, 1]} : vector<2x24x768xf32> to vector<2x1x768xf32>
    %71 = vector.shape_cast %70 : vector<2x1x768xf32> to vector<2x768xf32>
    %72 = arith.maximumf %69, %71 : vector<2x768xf32>
    %73 = vector.extract_strided_slice %72 {offsets = [0, 0], sizes = [2, 384], strides = [1, 1]} : vector<2x768xf32> to vector<2x384xf32>
    %74 = vector.extract_strided_slice %72 {offsets = [0, 384], sizes = [2, 384], strides = [1, 1]} : vector<2x768xf32> to vector<2x384xf32>
    %75 = arith.maximumf %73, %74 : vector<2x384xf32>
    %76 = arith.truncf %75 : vector<2x384xf32> to vector<2x384xbf16>
    %c2_28 = arith.constant 2 : index
    %c0_29 = arith.constant 0 : index
    %c0_30 = arith.constant 0 : index
    %77 = vector.load %arg6[%c2_28, %c0_29, %c0_30] : memref<12x384x64xbf16, #tpu.memory_space<vmem>>, vector<1x384x64xbf16>
    %78 = vector.shape_cast %77 : vector<1x384x64xbf16> to vector<384x64xbf16>
    %cst_31 = arith.constant dense<0.000000e+00> : vector<2x64xf32>
    %79 = tpu.matmul %76, %78, %cst_31 {dimension_numbers = #tpu.dot_dimension_numbers<[1], [0], [0], [1], [0, 0, 1, 1], [], []>} : vector<2x384xbf16>, vector<384x64xbf16>, vector<2x64xf32> -> vector<2x64xf32>
    %80 = arith.addf %67, %79 : vector<2x64xf32>
    %81 = vector.extract_strided_slice %42 {offsets = [0, 6, 0], sizes = [2, 1, 768], strides = [1, 1, 1]} : vector<2x24x768xf32> to vector<2x1x768xf32>
    %82 = vector.shape_cast %81 : vector<2x1x768xf32> to vector<2x768xf32>
    %83 = vector.extract_strided_slice %42 {offsets = [0, 7, 0], sizes = [2, 1, 768], strides = [1, 1, 1]} : vector<2x24x768xf32> to vector<2x1x768xf32>
    %84 = vector.shape_cast %83 : vector<2x1x768xf32> to vector<2x768xf32>
    %85 = arith.maximumf %82, %84 : vector<2x768xf32>
    %86 = vector.extract_strided_slice %85 {offsets = [0, 0], sizes = [2, 384], strides = [1, 1]} : vector<2x768xf32> to vector<2x384xf32>
    %87 = vector.extract_strided_slice %85 {offsets = [0, 384], sizes = [2, 384], strides = [1, 1]} : vector<2x768xf32> to vector<2x384xf32>
    %88 = arith.maximumf %86, %87 : vector<2x384xf32>
    %89 = arith.truncf %88 : vector<2x384xf32> to vector<2x384xbf16>
    %c3 = arith.constant 3 : index
    %c0_32 = arith.constant 0 : index
    %c0_33 = arith.constant 0 : index
    %90 = vector.load %arg6[%c3, %c0_32, %c0_33] : memref<12x384x64xbf16, #tpu.memory_space<vmem>>, vector<1x384x64xbf16>
    %91 = vector.shape_cast %90 : vector<1x384x64xbf16> to vector<384x64xbf16>
    %cst_34 = arith.constant dense<0.000000e+00> : vector<2x64xf32>
    %92 = tpu.matmul %89, %91, %cst_34 {dimension_numbers = #tpu.dot_dimension_numbers<[1], [0], [0], [1], [0, 0, 1, 1], [], []>} : vector<2x384xbf16>, vector<384x64xbf16>, vector<2x64xf32> -> vector<2x64xf32>
    %93 = arith.addf %80, %92 : vector<2x64xf32>
    %94 = vector.extract_strided_slice %42 {offsets = [0, 8, 0], sizes = [2, 1, 768], strides = [1, 1, 1]} : vector<2x24x768xf32> to vector<2x1x768xf32>
    %95 = vector.shape_cast %94 : vector<2x1x768xf32> to vector<2x768xf32>
    %96 = vector.extract_strided_slice %42 {offsets = [0, 9, 0], sizes = [2, 1, 768], strides = [1, 1, 1]} : vector<2x24x768xf32> to vector<2x1x768xf32>
    %97 = vector.shape_cast %96 : vector<2x1x768xf32> to vector<2x768xf32>
    %98 = arith.maximumf %95, %97 : vector<2x768xf32>
    %99 = vector.extract_strided_slice %98 {offsets = [0, 0], sizes = [2, 384], strides = [1, 1]} : vector<2x768xf32> to vector<2x384xf32>
    %100 = vector.extract_strided_slice %98 {offsets = [0, 384], sizes = [2, 384], strides = [1, 1]} : vector<2x768xf32> to vector<2x384xf32>
    %101 = arith.maximumf %99, %100 : vector<2x384xf32>
    %102 = arith.truncf %101 : vector<2x384xf32> to vector<2x384xbf16>
    %c4 = arith.constant 4 : index
    %c0_35 = arith.constant 0 : index
    %c0_36 = arith.constant 0 : index
    %103 = vector.load %arg6[%c4, %c0_35, %c0_36] : memref<12x384x64xbf16, #tpu.memory_space<vmem>>, vector<1x384x64xbf16>
    %104 = vector.shape_cast %103 : vector<1x384x64xbf16> to vector<384x64xbf16>
    %cst_37 = arith.constant dense<0.000000e+00> : vector<2x64xf32>
    %105 = tpu.matmul %102, %104, %cst_37 {dimension_numbers = #tpu.dot_dimension_numbers<[1], [0], [0], [1], [0, 0, 1, 1], [], []>} : vector<2x384xbf16>, vector<384x64xbf16>, vector<2x64xf32> -> vector<2x64xf32>
    %106 = arith.addf %93, %105 : vector<2x64xf32>
    %107 = vector.extract_strided_slice %42 {offsets = [0, 10, 0], sizes = [2, 1, 768], strides = [1, 1, 1]} : vector<2x24x768xf32> to vector<2x1x768xf32>
    %108 = vector.shape_cast %107 : vector<2x1x768xf32> to vector<2x768xf32>
    %109 = vector.extract_strided_slice %42 {offsets = [0, 11, 0], sizes = [2, 1, 768], strides = [1, 1, 1]} : vector<2x24x768xf32> to vector<2x1x768xf32>
    %110 = vector.shape_cast %109 : vector<2x1x768xf32> to vector<2x768xf32>
    %111 = arith.maximumf %108, %110 : vector<2x768xf32>
    %112 = vector.extract_strided_slice %111 {offsets = [0, 0], sizes = [2, 384], strides = [1, 1]} : vector<2x768xf32> to vector<2x384xf32>
    %113 = vector.extract_strided_slice %111 {offsets = [0, 384], sizes = [2, 384], strides = [1, 1]} : vector<2x768xf32> to vector<2x384xf32>
    %114 = arith.maximumf %112, %113 : vector<2x384xf32>
    %115 = arith.truncf %114 : vector<2x384xf32> to vector<2x384xbf16>
    %c5 = arith.constant 5 : index
    %c0_38 = arith.constant 0 : index
    %c0_39 = arith.constant 0 : index
    %116 = vector.load %arg6[%c5, %c0_38, %c0_39] : memref<12x384x64xbf16, #tpu.memory_space<vmem>>, vector<1x384x64xbf16>
    %117 = vector.shape_cast %116 : vector<1x384x64xbf16> to vector<384x64xbf16>
    %cst_40 = arith.constant dense<0.000000e+00> : vector<2x64xf32>
    %118 = tpu.matmul %115, %117, %cst_40 {dimension_numbers = #tpu.dot_dimension_numbers<[1], [0], [0], [1], [0, 0, 1, 1], [], []>} : vector<2x384xbf16>, vector<384x64xbf16>, vector<2x64xf32> -> vector<2x64xf32>
    %119 = arith.addf %106, %118 : vector<2x64xf32>
    %120 = vector.extract_strided_slice %42 {offsets = [0, 12, 0], sizes = [2, 1, 768], strides = [1, 1, 1]} : vector<2x24x768xf32> to vector<2x1x768xf32>
    %121 = vector.shape_cast %120 : vector<2x1x768xf32> to vector<2x768xf32>
    %122 = vector.extract_strided_slice %42 {offsets = [0, 13, 0], sizes = [2, 1, 768], strides = [1, 1, 1]} : vector<2x24x768xf32> to vector<2x1x768xf32>
    %123 = vector.shape_cast %122 : vector<2x1x768xf32> to vector<2x768xf32>
    %124 = arith.maximumf %121, %123 : vector<2x768xf32>
    %125 = vector.extract_strided_slice %124 {offsets = [0, 0], sizes = [2, 384], strides = [1, 1]} : vector<2x768xf32> to vector<2x384xf32>
    %126 = vector.extract_strided_slice %124 {offsets = [0, 384], sizes = [2, 384], strides = [1, 1]} : vector<2x768xf32> to vector<2x384xf32>
    %127 = arith.maximumf %125, %126 : vector<2x384xf32>
    %128 = arith.truncf %127 : vector<2x384xf32> to vector<2x384xbf16>
    %c6 = arith.constant 6 : index
    %c0_41 = arith.constant 0 : index
    %c0_42 = arith.constant 0 : index
    %129 = vector.load %arg6[%c6, %c0_41, %c0_42] : memref<12x384x64xbf16, #tpu.memory_space<vmem>>, vector<1x384x64xbf16>
    %130 = vector.shape_cast %129 : vector<1x384x64xbf16> to vector<384x64xbf16>
    %cst_43 = arith.constant dense<0.000000e+00> : vector<2x64xf32>
    %131 = tpu.matmul %128, %130, %cst_43 {dimension_numbers = #tpu.dot_dimension_numbers<[1], [0], [0], [1], [0, 0, 1, 1], [], []>} : vector<2x384xbf16>, vector<384x64xbf16>, vector<2x64xf32> -> vector<2x64xf32>
    %132 = arith.addf %119, %131 : vector<2x64xf32>
    %133 = vector.extract_strided_slice %42 {offsets = [0, 14, 0], sizes = [2, 1, 768], strides = [1, 1, 1]} : vector<2x24x768xf32> to vector<2x1x768xf32>
    %134 = vector.shape_cast %133 : vector<2x1x768xf32> to vector<2x768xf32>
    %135 = vector.extract_strided_slice %42 {offsets = [0, 15, 0], sizes = [2, 1, 768], strides = [1, 1, 1]} : vector<2x24x768xf32> to vector<2x1x768xf32>
    %136 = vector.shape_cast %135 : vector<2x1x768xf32> to vector<2x768xf32>
    %137 = arith.maximumf %134, %136 : vector<2x768xf32>
    %138 = vector.extract_strided_slice %137 {offsets = [0, 0], sizes = [2, 384], strides = [1, 1]} : vector<2x768xf32> to vector<2x384xf32>
    %139 = vector.extract_strided_slice %137 {offsets = [0, 384], sizes = [2, 384], strides = [1, 1]} : vector<2x768xf32> to vector<2x384xf32>
    %140 = arith.maximumf %138, %139 : vector<2x384xf32>
    %141 = arith.truncf %140 : vector<2x384xf32> to vector<2x384xbf16>
    %c7 = arith.constant 7 : index
    %c0_44 = arith.constant 0 : index
    %c0_45 = arith.constant 0 : index
    %142 = vector.load %arg6[%c7, %c0_44, %c0_45] : memref<12x384x64xbf16, #tpu.memory_space<vmem>>, vector<1x384x64xbf16>
    %143 = vector.shape_cast %142 : vector<1x384x64xbf16> to vector<384x64xbf16>
    %cst_46 = arith.constant dense<0.000000e+00> : vector<2x64xf32>
    %144 = tpu.matmul %141, %143, %cst_46 {dimension_numbers = #tpu.dot_dimension_numbers<[1], [0], [0], [1], [0, 0, 1, 1], [], []>} : vector<2x384xbf16>, vector<384x64xbf16>, vector<2x64xf32> -> vector<2x64xf32>
    %145 = arith.addf %132, %144 : vector<2x64xf32>
    %146 = vector.extract_strided_slice %42 {offsets = [0, 16, 0], sizes = [2, 1, 768], strides = [1, 1, 1]} : vector<2x24x768xf32> to vector<2x1x768xf32>
    %147 = vector.shape_cast %146 : vector<2x1x768xf32> to vector<2x768xf32>
    %148 = vector.extract_strided_slice %42 {offsets = [0, 17, 0], sizes = [2, 1, 768], strides = [1, 1, 1]} : vector<2x24x768xf32> to vector<2x1x768xf32>
    %149 = vector.shape_cast %148 : vector<2x1x768xf32> to vector<2x768xf32>
    %150 = arith.maximumf %147, %149 : vector<2x768xf32>
    %151 = vector.extract_strided_slice %150 {offsets = [0, 0], sizes = [2, 384], strides = [1, 1]} : vector<2x768xf32> to vector<2x384xf32>
    %152 = vector.extract_strided_slice %150 {offsets = [0, 384], sizes = [2, 384], strides = [1, 1]} : vector<2x768xf32> to vector<2x384xf32>
    %153 = arith.maximumf %151, %152 : vector<2x384xf32>
    %154 = arith.truncf %153 : vector<2x384xf32> to vector<2x384xbf16>
    %c8 = arith.constant 8 : index
    %c0_47 = arith.constant 0 : index
    %c0_48 = arith.constant 0 : index
    %155 = vector.load %arg6[%c8, %c0_47, %c0_48] : memref<12x384x64xbf16, #tpu.memory_space<vmem>>, vector<1x384x64xbf16>
    %156 = vector.shape_cast %155 : vector<1x384x64xbf16> to vector<384x64xbf16>
    %cst_49 = arith.constant dense<0.000000e+00> : vector<2x64xf32>
    %157 = tpu.matmul %154, %156, %cst_49 {dimension_numbers = #tpu.dot_dimension_numbers<[1], [0], [0], [1], [0, 0, 1, 1], [], []>} : vector<2x384xbf16>, vector<384x64xbf16>, vector<2x64xf32> -> vector<2x64xf32>
    %158 = arith.addf %145, %157 : vector<2x64xf32>
    %159 = vector.extract_strided_slice %42 {offsets = [0, 18, 0], sizes = [2, 1, 768], strides = [1, 1, 1]} : vector<2x24x768xf32> to vector<2x1x768xf32>
    %160 = vector.shape_cast %159 : vector<2x1x768xf32> to vector<2x768xf32>
    %161 = vector.extract_strided_slice %42 {offsets = [0, 19, 0], sizes = [2, 1, 768], strides = [1, 1, 1]} : vector<2x24x768xf32> to vector<2x1x768xf32>
    %162 = vector.shape_cast %161 : vector<2x1x768xf32> to vector<2x768xf32>
    %163 = arith.maximumf %160, %162 : vector<2x768xf32>
    %164 = vector.extract_strided_slice %163 {offsets = [0, 0], sizes = [2, 384], strides = [1, 1]} : vector<2x768xf32> to vector<2x384xf32>
    %165 = vector.extract_strided_slice %163 {offsets = [0, 384], sizes = [2, 384], strides = [1, 1]} : vector<2x768xf32> to vector<2x384xf32>
    %166 = arith.maximumf %164, %165 : vector<2x384xf32>
    %167 = arith.truncf %166 : vector<2x384xf32> to vector<2x384xbf16>
    %c9 = arith.constant 9 : index
    %c0_50 = arith.constant 0 : index
    %c0_51 = arith.constant 0 : index
    %168 = vector.load %arg6[%c9, %c0_50, %c0_51] : memref<12x384x64xbf16, #tpu.memory_space<vmem>>, vector<1x384x64xbf16>
    %169 = vector.shape_cast %168 : vector<1x384x64xbf16> to vector<384x64xbf16>
    %cst_52 = arith.constant dense<0.000000e+00> : vector<2x64xf32>
    %170 = tpu.matmul %167, %169, %cst_52 {dimension_numbers = #tpu.dot_dimension_numbers<[1], [0], [0], [1], [0, 0, 1, 1], [], []>} : vector<2x384xbf16>, vector<384x64xbf16>, vector<2x64xf32> -> vector<2x64xf32>
    %171 = arith.addf %158, %170 : vector<2x64xf32>
    %172 = vector.extract_strided_slice %42 {offsets = [0, 20, 0], sizes = [2, 1, 768], strides = [1, 1, 1]} : vector<2x24x768xf32> to vector<2x1x768xf32>
    %173 = vector.shape_cast %172 : vector<2x1x768xf32> to vector<2x768xf32>
    %174 = vector.extract_strided_slice %42 {offsets = [0, 21, 0], sizes = [2, 1, 768], strides = [1, 1, 1]} : vector<2x24x768xf32> to vector<2x1x768xf32>
    %175 = vector.shape_cast %174 : vector<2x1x768xf32> to vector<2x768xf32>
    %176 = arith.maximumf %173, %175 : vector<2x768xf32>
    %177 = vector.extract_strided_slice %176 {offsets = [0, 0], sizes = [2, 384], strides = [1, 1]} : vector<2x768xf32> to vector<2x384xf32>
    %178 = vector.extract_strided_slice %176 {offsets = [0, 384], sizes = [2, 384], strides = [1, 1]} : vector<2x768xf32> to vector<2x384xf32>
    %179 = arith.maximumf %177, %178 : vector<2x384xf32>
    %180 = arith.truncf %179 : vector<2x384xf32> to vector<2x384xbf16>
    %c10 = arith.constant 10 : index
    %c0_53 = arith.constant 0 : index
    %c0_54 = arith.constant 0 : index
    %181 = vector.load %arg6[%c10, %c0_53, %c0_54] : memref<12x384x64xbf16, #tpu.memory_space<vmem>>, vector<1x384x64xbf16>
    %182 = vector.shape_cast %181 : vector<1x384x64xbf16> to vector<384x64xbf16>
    %cst_55 = arith.constant dense<0.000000e+00> : vector<2x64xf32>
    %183 = tpu.matmul %180, %182, %cst_55 {dimension_numbers = #tpu.dot_dimension_numbers<[1], [0], [0], [1], [0, 0, 1, 1], [], []>} : vector<2x384xbf16>, vector<384x64xbf16>, vector<2x64xf32> -> vector<2x64xf32>
    %184 = arith.addf %171, %183 : vector<2x64xf32>
    %185 = vector.extract_strided_slice %42 {offsets = [0, 22, 0], sizes = [2, 1, 768], strides = [1, 1, 1]} : vector<2x24x768xf32> to vector<2x1x768xf32>
    %186 = vector.shape_cast %185 : vector<2x1x768xf32> to vector<2x768xf32>
    %187 = vector.extract_strided_slice %42 {offsets = [0, 23, 0], sizes = [2, 1, 768], strides = [1, 1, 1]} : vector<2x24x768xf32> to vector<2x1x768xf32>
    %188 = vector.shape_cast %187 : vector<2x1x768xf32> to vector<2x768xf32>
    %189 = arith.maximumf %186, %188 : vector<2x768xf32>
    %190 = vector.extract_strided_slice %189 {offsets = [0, 0], sizes = [2, 384], strides = [1, 1]} : vector<2x768xf32> to vector<2x384xf32>
    %191 = vector.extract_strided_slice %189 {offsets = [0, 384], sizes = [2, 384], strides = [1, 1]} : vector<2x768xf32> to vector<2x384xf32>
    %192 = arith.maximumf %190, %191 : vector<2x384xf32>
    %193 = arith.truncf %192 : vector<2x384xf32> to vector<2x384xbf16>
    %c11 = arith.constant 11 : index
    %c0_56 = arith.constant 0 : index
    %c0_57 = arith.constant 0 : index
    %194 = vector.load %arg6[%c11, %c0_56, %c0_57] : memref<12x384x64xbf16, #tpu.memory_space<vmem>>, vector<1x384x64xbf16>
    %195 = vector.shape_cast %194 : vector<1x384x64xbf16> to vector<384x64xbf16>
    %cst_58 = arith.constant dense<0.000000e+00> : vector<2x64xf32>
    %196 = tpu.matmul %193, %195, %cst_58 {dimension_numbers = #tpu.dot_dimension_numbers<[1], [0], [0], [1], [0, 0, 1, 1], [], []>} : vector<2x384xbf16>, vector<384x64xbf16>, vector<2x64xf32> -> vector<2x64xf32>
    %197 = arith.addf %184, %196 : vector<2x64xf32>
    %c0_59 = arith.constant 0 : index
    %c0_60 = arith.constant 0 : index
    %198 = vector.load %arg7[%c0_59, %c0_60] : memref<1x64xf32, #tpu.memory_space<vmem>>, vector<1x64xf32>
    %199 = vector.broadcast %198 : vector<1x64xf32> to vector<2x64xf32>
    %200 = arith.addf %197, %199 : vector<2x64xf32>
    %cst_61 = arith.constant 0.000000e+00 : f32
    %201 = vector.broadcast %cst_61 : f32 to vector<2x64xf32>
    %202 = arith.maximumf %200, %201 : vector<2x64xf32>
    %c0_62 = arith.constant 0 : index
    %c0_63 = arith.constant 0 : index
    %203 = vector.load %arg8[%c0_62, %c0_63] : memref<64x10xf32, #tpu.memory_space<vmem>>, vector<64x10xf32>
    %cst_64 = arith.constant dense<0.000000e+00> : vector<2x10xf32>
    %204 = tpu.matmul %202, %203, %cst_64 {dimension_numbers = #tpu.dot_dimension_numbers<[1], [0], [0], [1], [0, 0, 1, 1], [], []>} : vector<2x64xf32>, vector<64x10xf32>, vector<2x10xf32> -> vector<2x10xf32>
    %c0_65 = arith.constant 0 : index
    %c0_66 = arith.constant 0 : index
    %205 = vector.load %arg9[%c0_65, %c0_66] : memref<1x10xf32, #tpu.memory_space<vmem>>, vector<1x10xf32>
    %206 = vector.broadcast %205 : vector<1x10xf32> to vector<2x10xf32>
    %207 = arith.addf %204, %206 : vector<2x10xf32>
    %cst_67 = arith.constant dense<0xFF800000> : vector<2xf32>
    %208 = vector.multi_reduction <maximumf>, %207, %cst_67 [1] : vector<2x10xf32> to vector<2xf32>
    %209 = vector.shape_cast %208 : vector<2xf32> to vector<2x1xf32>
    %210 = vector.broadcast %209 : vector<2x1xf32> to vector<2x10xf32>
    %211 = arith.subf %207, %210 : vector<2x10xf32>
    %212 = math.exp %211 : vector<2x10xf32>
    %cst_68 = arith.constant dense<0.000000e+00> : vector<2xf32>
    %213 = vector.multi_reduction <add>, %212, %cst_68 [1] : vector<2x10xf32> to vector<2xf32>
    %214 = vector.shape_cast %213 : vector<2xf32> to vector<2x1xf32>
    %215 = math.log %214 : vector<2x1xf32>
    %216 = arith.addf %209, %215 : vector<2x1xf32>
    %217 = vector.broadcast %216 : vector<2x1xf32> to vector<2x10xf32>
    %218 = arith.subf %207, %217 : vector<2x10xf32>
    %c0_69 = arith.constant 0 : index
    %c0_70 = arith.constant 0 : index
    %219 = vector.load %arg10[%c0_69, %c0_70] : memref<2x10xf32, #tpu.memory_space<vmem>>, vector<2x10xf32>
    tpu.vector_store %arg10[%c0_69, %c0_70], %218 {strides = array<i32>} : memref<2x10xf32, #tpu.memory_space<vmem>>, vector<2x10xf32>,
    return
  }
  func.func @transform_0(%arg0: i32) -> (i32, i32, i32) {
    %c0_i32 = arith.constant 0 : i32
    %c0_i32_0 = arith.constant 0 : i32
    %c0_i32_1 = arith.constant 0 : i32
    return %arg0, %c0_i32, %c0_i32_0 : i32, i32, i32
  }
  func.func @transform_1(%arg0: i32) -> (i32, i32) {
    %c0_i32 = arith.constant 0 : i32
    %c0_i32_0 = arith.constant 0 : i32
    %c0_i32_1 = arith.constant 0 : i32
    return %c0_i32, %c0_i32_0 : i32, i32
  }
  func.func @transform_2(%arg0: i32) -> (i32, i32) {
    %c0_i32 = arith.constant 0 : i32
    %c0_i32_0 = arith.constant 0 : i32
    %c0_i32_1 = arith.constant 0 : i32
    return %c0_i32, %c0_i32_0 : i32, i32
  }
  func.func @transform_3(%arg0: i32) -> (i32, i32, i32) {
    %c0_i32 = arith.constant 0 : i32
    %c0_i32_0 = arith.constant 0 : i32
    %c0_i32_1 = arith.constant 0 : i32
    %c0_i32_2 = arith.constant 0 : i32
    return %c0_i32, %c0_i32_0, %c0_i32_1 : i32, i32, i32
  }
  func.func @transform_4(%arg0: i32) -> (i32, i32) {
    %c0_i32 = arith.constant 0 : i32
    %c0_i32_0 = arith.constant 0 : i32
    %c0_i32_1 = arith.constant 0 : i32
    return %c0_i32, %c0_i32_0 : i32, i32
  }
  func.func @transform_5(%arg0: i32) -> (i32, i32, i32) {
    %c0_i32 = arith.constant 0 : i32
    %c0_i32_0 = arith.constant 0 : i32
    %c0_i32_1 = arith.constant 0 : i32
    %c0_i32_2 = arith.constant 0 : i32
    return %c0_i32, %c0_i32_0, %c0_i32_1 : i32, i32, i32
  }
  func.func @transform_6(%arg0: i32) -> (i32, i32) {
    %c0_i32 = arith.constant 0 : i32
    %c0_i32_0 = arith.constant 0 : i32
    %c0_i32_1 = arith.constant 0 : i32
    return %c0_i32, %c0_i32_0 : i32, i32
  }
  func.func @transform_7(%arg0: i32) -> (i32, i32) {
    %c0_i32 = arith.constant 0 : i32
    %c0_i32_0 = arith.constant 0 : i32
    %c0_i32_1 = arith.constant 0 : i32
    return %c0_i32, %c0_i32_0 : i32, i32
  }
  func.func @transform_8(%arg0: i32) -> (i32, i32) {
    %c0_i32 = arith.constant 0 : i32
    %c0_i32_0 = arith.constant 0 : i32
    %c0_i32_1 = arith.constant 0 : i32
    return %c0_i32, %c0_i32_0 : i32, i32
  }
  func.func @transform_9(%arg0: i32) -> (i32, i32) {
    %c0_i32 = arith.constant 0 : i32
    %c0_i32_0 = arith.constant 0 : i32
    return %arg0, %c0_i32 : i32, i32
  }
}

</mosaic_0001>

<llo_original>
// kernel: _lambda_.1
$region0: #{_lambda_.1}
  #allocation0 [shape = 'u32[]', space=smem, size = 0x4, offset = 0x4, fixed_abs, tag = 'smem constant byte address 0x4 - core index']
  #allocation1 [shape = 'u32[144,128]{1,0:T(1,128)}', space=vmem, size = 0x12000, scoped, tag = 'internal scratch']
  %s0 = inlined_call_operand.vmem [shape: f32[2,32,28], index: 0, kind: input, shape index: {}]
  %s1 = inlined_call_operand.vmem [shape: bf16[28,1536], index: 1, kind: input, shape index: {}]
  %s2 = inlined_call_operand.vmem [shape: f32[1,416], index: 2, kind: input, shape index: {}]
  %s3 = inlined_call_operand.vmem [shape: bf16[3,416,768], index: 3, kind: input, shape index: {}]
  %s4 = inlined_call_operand.vmem [shape: f32[1,768], index: 4, kind: input, shape index: {}]
  %s5 = inlined_call_operand.vmem [shape: bf16[12,384,64], index: 5, kind: input, shape index: {}]
  %s6 = inlined_call_operand.vmem [shape: f32[1,64], index: 6, kind: input, shape index: {}]
  %s7 = inlined_call_operand.vmem [shape: f32[64,10], index: 7, kind: input, shape index: {}]
  %s8 = inlined_call_operand.vmem [shape: f32[1,10], index: 8, kind: input, shape index: {}]
  %s9 = inlined_call_operand.hbm [shape: f32[2,10], index: 9, kind: output, shape index: {}]
  %s10 = sld [smem:[#allocation0]]
  $region46: #{_lambda_.1} parent=0
    _
  %s12 = ssub.s32 1, %s10
  %s13 = scalar_select 0, %s12, %s10
  $region1: #{_lambda_.1} parent=0
    #allocation2 [shape = 'u8[1024]{0}', space=vmem, size = 0x400, scoped, tag = 'output window, operand 0, single buffered']
    #allocation3 [shape = 's32[1]{0}', space=sflag, size = 0x4, scoped, tag = 'scoped memory for _lambda_.1']
    %14 = vsyncpa [#allocation3], 0
    // Predicated region
    $region2: #{_lambda_.1} parent=1 // pred_check
      _
    $region3: #{_lambda_.1} parent=1 // pred_check_branch
      %16 = sbr.rel (0) target = $region5
    $region4: #{_lambda_.1} parent=1 // pred_region
      _
    $region5: #{_lambda_.1} parent=1 // pred_fallthru
      _
    // Predicated region
    $region6: #{_lambda_.1} parent=1 // pred_check
      _
    $region7: #{_lambda_.1} parent=1 // pred_check_branch
      %18 = sbr.rel (0) target = $region9
    $region8: #{_lambda_.1} parent=1 // pred_region
      _
    $region9: #{_lambda_.1} parent=1 // pred_fallthru
      _
    // Predicated region
    $region10: #{_lambda_.1} parent=1 // pred_check
      _
    $region11: #{_lambda_.1} parent=1 // pred_check_branch
      %20 = sbr.rel (0) target = $region13
    $region12: #{_lambda_.1} parent=1 // pred_region
      _
    $region13: #{_lambda_.1} parent=1 // pred_fallthru
      _
    // Predicated region
    $region14: #{_lambda_.1} parent=1 // pred_check
      _
    $region15: #{_lambda_.1} parent=1 // pred_check_branch
      %22 = sbr.rel (0) target = $region17
    $region16: #{_lambda_.1} parent=1 // pred_region
      _
    $region17: #{_lambda_.1} parent=1 // pred_fallthru
      _
    // Predicated region
    $region18: #{_lambda_.1} parent=1 // pred_check
      _
    $region19: #{_lambda_.1} parent=1 // pred_check_branch
      %24 = sbr.rel (0) target = $region21
    $region20: #{_lambda_.1} parent=1 // pred_region
      _
    $region21: #{_lambda_.1} parent=1 // pred_fallthru
      _
    // Predicated region
    $region22: #{_lambda_.1} parent=1 // pred_check
      _
    $region23: #{_lambda_.1} parent=1 // pred_check_branch
      %26 = sbr.rel (0) target = $region25
    $region24: #{_lambda_.1} parent=1 // pred_region
      _
    $region25: #{_lambda_.1} parent=1 // pred_fallthru
      _
    // Predicated region
    $region26: #{_lambda_.1} parent=1 // pred_check
      _
    $region27: #{_lambda_.1} parent=1 // pred_check_branch
      %28 = sbr.rel (0) target = $region29
    $region28: #{_lambda_.1} parent=1 // pred_region
      _
    $region29: #{_lambda_.1} parent=1 // pred_fallthru
      _
    // Predicated region
    $region30: #{_lambda_.1} parent=1 // pred_check
      _
    $region31: #{_lambda_.1} parent=1 // pred_check_branch
      %30 = sbr.rel (0) target = $region33
    $region32: #{_lambda_.1} parent=1 // pred_region
      _
    $region33: #{_lambda_.1} parent=1 // pred_fallthru
      _
    // Predicated region
    $region34: #{_lambda_.1} parent=1 // pred_check
      _
    $region35: #{_lambda_.1} parent=1 // pred_check_branch
      %32 = sbr.rel (0) target = $region37
    $region36: #{_lambda_.1} parent=1 // pred_region
      _
    $region37: #{_lambda_.1} parent=1 // pred_fallthru
      _
    %v34 = vld [vmem:[%s0] sm:$0xff]
    %v35 = vld [vmem:[%s0 + $0x8] sm:$0xff]
    %v36 = vld [vmem:[%s0 + $0x10] sm:$0xff]
    %v37 = vld [vmem:[%s0 + $0x18] sm:$0xff]
    %v38 = vld [vmem:[%s0 + $0x20] sm:$0xff]
    %v39 = vld [vmem:[%s0 + $0x28] sm:$0xff]
    %v40 = vld [vmem:[%s0 + $0x30] sm:$0xff]
    %v41 = vld [vmem:[%s0 + $0x38] sm:$0xff]
    %v42 = vpack.c.bf16 %v35, %v34
    %v43 = vpack.c.bf16 %v37, %v36
    %v44 = vpack.c.bf16 %v39, %v38
    %v45 = vpack.c.bf16 %v41, %v40
    %v46 = vld [vmem:[%s1] sm:$0xff]
    %v47 = vld [vmem:[%s1 + $0x8] sm:$0xff]
    %v48 = vld [vmem:[%s1 + $0x10] sm:$0xff]
    %v49 = vld [vmem:[%s1 + $0x18] sm:$0xff]
    %v50 = vld [vmem:[%s1 + $0x20] sm:$0xff]
    %v51 = vld [vmem:[%s1 + $0x28] sm:$0xff]
    %v52 = vld [vmem:[%s1 + $0x30] sm:$0xff]
    %v53 = vld [vmem:[%s1 + $0x38] sm:$0xff]
    %v54 = vld [vmem:[%s1 + $0x40] sm:$0xff]
    %v55 = vld [vmem:[%s1 + $0x48] sm:$0xff]
    %v56 = vld [vmem:[%s1 + $0x50] sm:$0xff]
    %v57 = vld [vmem:[%s1 + $0x58] sm:$0xff]
    %v58 = vld [vmem:[%s1 + $0x60] sm:$0xff]
    %v59 = vld [vmem:[%s1 + $0x68] sm:$0xff]
    %v60 = vld [vmem:[%s1 + $0x70] sm:$0xff]
    %v61 = vld [vmem:[%s1 + $0x78] sm:$0xff]
    %v62 = vld [vmem:[%s1 + $0x80] sm:$0xff]
    %v63 = vld [vmem:[%s1 + $0x88] sm:$0xff]
    %v64 = vld [vmem:[%s1 + $0x90] sm:$0x33]
    %v65 = vld [vmem:[%s1 + $0x98] sm:$0x33]
    %v66 = vld [vmem:[%s1 + $0xa0] sm:$0x33]
    %v67 = vld [vmem:[%s1 + $0xa8] sm:$0x33]
    %v68 = vld [vmem:[%s1 + $0xb0] sm:$0x33]
    %v69 = vld [vmem:[%s1 + $0xb8] sm:$0x33]
    %v94 = vunpack.c.l.b16 %v46
    %v95 = vunpack.c.h.b16 %v46
    %v96 = vunpack.c.l.b16 %v47
    %v97 = vunpack.c.h.b16 %v47
    %v98 = vunpack.c.l.b16 %v48
    %v99 = vunpack.c.h.b16 %v48
    %v100 = vunpack.c.l.b16 %v49
    %v101 = vunpack.c.h.b16 %v49
    %v102 = vunpack.c.l.b16 %v50
    %v103 = vunpack.c.h.b16 %v50
    %v104 = vunpack.c.l.b16 %v51
    %v105 = vunpack.c.h.b16 %v51
    %v106 = vunpack.c.l.b16 %v52
    %v107 = vunpack.c.h.b16 %v52
    %v108 = vunpack.c.l.b16 %v53
    %v109 = vunpack.c.h.b16 %v53
    %v110 = vunpack.c.l.b16 %v54
    %v111 = vunpack.c.h.b16 %v54
    %v112 = vunpack.c.l.b16 %v55
    %v113 = vunpack.c.h.b16 %v55
    %v114 = vunpack.c.l.b16 %v56
    %v115 = vunpack.c.h.b16 %v56
    %v116 = vunpack.c.l.b16 %v57
    %v117 = vunpack.c.h.b16 %v57
    %v118 = vunpack.c.l.b16 %v58
    %v119 = vunpack.c.h.b16 %v58
    %v120 = vunpack.c.l.b16 %v59
    %v121 = vunpack.c.h.b16 %v59
    %v122 = vunpack.c.l.b16 %v60
    %v123 = vunpack.c.h.b16 %v60
    %v124 = vunpack.c.l.b16 %v61
    %v125 = vunpack.c.h.b16 %v61
    %v126 = vunpack.c.l.b16 %v62
    %v127 = vunpack.c.h.b16 %v62
    %v128 = vunpack.c.l.b16 %v63
    %v129 = vunpack.c.h.b16 %v63
    %v130 = vunpack.c.l.b16 %v64
    %v131 = vunpack.c.h.b16 %v64
    %v132 = vunpack.c.l.b16 %v65
    %v133 = vunpack.c.h.b16 %v65
    %v134 = vunpack.c.l.b16 %v66
    %v135 = vunpack.c.h.b16 %v66
    %v136 = vunpack.c.l.b16 %v67
    %v137 = vunpack.c.h.b16 %v67
    %v138 = vunpack.c.l.b16 %v68
    %v139 = vunpack.c.h.b16 %v68
    %v140 = vunpack.c.l.b16 %v69
    %v141 = vunpack.c.h.b16 %v69
    %v142 = vpack.c.b16 %v106, %v94
    %v143 = vpack.c.b16 %v107, %v95
    %v144 = vpack.c.b16 %v108, %v96
    %v145 = vpack.c.b16 %v109, %v97
    %v146 = vpack.c.b16 %v110, %v98
    %v147 = vpack.c.b16 %v111, %v99
    %v148 = vpack.c.b16 %v112, %v100
    %v149 = vpack.c.b16 %v113, %v101
    %v150 = vpack.c.b16 %v114, %v102
    %v151 = vpack.c.b16 %v115, %v103
    %v152 = vpack.c.b16 %v116, %v104
    %v153 = vpack.c.b16 %v117, %v105
    %v154 = vpack.c.b16 %v130, %v118
    %v155 = vpack.c.b16 %v131, %v119
    %v156 = vpack.c.b16 %v132, %v120
    %v157 = vpack.c.b16 %v133, %v121
    %v158 = vpack.c.b16 %v134, %v122
    %v159 = vpack.c.b16 %v135, %v123
    %v160 = vpack.c.b16 %v136, %v124
    %v161 = vpack.c.b16 %v137, %v125
    %v162 = vpack.c.b16 %v138, %v126
    %v163 = vpack.c.b16 %v139, %v127
    %v164 = vpack.c.b16 %v140, %v128
    %v165 = vpack.c.b16 %v141, %v129
    %vm178 = vcmask 228352
    %v180 = vsel %vm178, %v42, 0
    %v183 = vsel %vm178, %v43, 0
    %v186 = vsel %vm178, %v44, 0
    %v189 = vsel %vm178, %v45, 0
    %vm191 = vcmask 1045504
    %v193 = vsel %vm191, %v154, 0
    %v196 = vsel %vm191, %v155, 0
    %v199 = vsel %vm191, %v156, 0
    %v202 = vsel %vm191, %v157, 0
    %v205 = vsel %vm191, %v158, 0
    %v208 = vsel %vm191, %v159, 0
    %v211 = vsel %vm191, %v160, 0
    %v214 = vsel %vm191, %v161, 0
    %v217 = vsel %vm191, %v162, 0
    %v220 = vsel %vm191, %v163, 0
    %v223 = vsel %vm191, %v164, 0
    %v226 = vsel %vm191, %v165, 0
    %228 = vmatprep.subr.bf16.mxu0 %v143
    %229 = vmatpush1.bf16.msra.mxu0 %v142
    %230 = vmatprep.subr.bf16.mxu0 %v196
    %231 = vmatpush1.bf16.msra.mxu0 %v193
    %232 = vmatprep.subr.bf16.mxu0 0
    %233 = vmatpush1.bf16.msra.mxu0 0
    %234 = vmatprep.subr.bf16.mxu0 0
    %235 = vmatpush1.bf16.msra.mxu0 0
    %236 = vmatprep.subr.bf16.mxu0 0
    %237 = vmatpush1.bf16.msra.mxu0 0
    %238 = vmatprep.subr.bf16.mxu0 0
    %239 = vmatpush1.bf16.msra.mxu0 0
    %240 = vmatprep.subr.bf16.mxu0 0
    %241 = vmatpush1.bf16.msra.mxu0 0
    %242 = vmatprep.subr.bf16.mxu0 0
    %243 = vmatpush1.bf16.msra.mxu0 0
    %244 = vmatprep.subr.bf16.mxu0 0
    %245 = vmatpush1.bf16.msra.mxu0 0
    %246 = vmatprep.subr.bf16.mxu0 0
    %247 = vmatpush1.bf16.msra.mxu0 0
    %248 = vmatprep.subr.bf16.mxu0 0
    %249 = vmatpush1.bf16.msra.mxu0 0
    %250 = vmatprep.subr.bf16.mxu0 0
    %251 = vmatpush1.bf16.msra.mxu0 0
    %252 = vmatprep.subr.bf16.mxu0 0
    %253 = vmatpush1.bf16.msra.mxu0 0
    %254 = vmatprep.subr.bf16.mxu0 0
    %255 = vmatpush1.bf16.msra.mxu0 0
    %256 = vmatprep.subr.bf16.mxu0 0
    %257 = vmatpush1.bf16.msra.mxu0 0
    %258 = vmatprep.subr.bf16.mxu0 0
    %259 = vmatpush1.bf16.msra.mxu0 0
    %260 = vmatprep.mubr.bf16.mxu0 0
    %261 = vmatmul.mubr.bf16.gmra.mrb[0].mxu0 %v180
    %v262 = vpop.f32.mrb[0].mxu0
    %v263 = vadd.f32 0.0, %v262
    %v264 = vpop.f32.mrb[0].mxu0
    %v265 = vadd.f32 0.0, %v264
    %v266 = vpop.f32.mrb[0].mxu0
    %v267 = vadd.f32 0.0, %v266
    %v268 = vpop.f32.mrb[0].mxu0
    %v269 = vadd.f32 0.0, %v268
    %270 = vmatprep.mubr.bf16.mxu0 0
    %271 = vmatmul.mubr.bf16.gmra.mrb[0].mxu0 %v183
    %v272 = vpop.f32.mrb[0].mxu0
    %v273 = vadd.f32 0.0, %v272
    %v274 = vpop.f32.mrb[0].mxu0
    %v275 = vadd.f32 0.0, %v274
    %v276 = vpop.f32.mrb[0].mxu0
    %v277 = vadd.f32 0.0, %v276
    %v278 = vpop.f32.mrb[0].mxu0
    %v279 = vadd.f32 0.0, %v278
    %280 = vmatprep.mubr.bf16.mxu0 0
    %281 = vmatmul.mubr.bf16.gmra.mrb[0].mxu0 %v186
    %v282 = vpop.f32.mrb[0].mxu0
    %v283 = vadd.f32 0.0, %v282
    %v284 = vpop.f32.mrb[0].mxu0
    %v285 = vadd.f32 0.0, %v284
    %v286 = vpop.f32.mrb[0].mxu0
    %v287 = vadd.f32 0.0, %v286
    %v288 = vpop.f32.mrb[0].mxu0
    %v289 = vadd.f32 0.0, %v288
    %290 = vmatprep.mubr.bf16.mxu0 0
    %291 = vmatmul.mubr.bf16.gmra.mrb[0].mxu0 %v189
    %v292 = vpop.f32.mrb[0].mxu0
    %v293 = vadd.f32 0.0, %v292
    %v294 = vpop.f32.mrb[0].mxu0
    %v295 = vadd.f32 0.0, %v294
    %v296 = vpop.f32.mrb[0].mxu0
    %v297 = vadd.f32 0.0, %v296
    %v298 = vpop.f32.mrb[0].mxu0
    %v299 = vadd.f32 0.0, %v298
    %300 = vdwg.mxu0
    %301 = vmatprep.subr.bf16.mxu0 %v145
    %302 = vmatpush1.bf16.msra.mxu0 %v144
    %303 = vmatprep.subr.bf16.mxu0 %v202
    %304 = vmatpush1.bf16.msra.mxu0 %v199
    %305 = vmatprep.subr.bf16.mxu0 0
    %306 = vmatpush1.bf16.msra.mxu0 0
    %307 = vmatprep.subr.bf16.mxu0 0
    %308 = vmatpush1.bf16.msra.mxu0 0
    %309 = vmatprep.subr.bf16.mxu0 0
    %310 = vmatpush1.bf16.msra.mxu0 0
    %311 = vmatprep.subr.bf16.mxu0 0
    %312 = vmatpush1.bf16.msra.mxu0 0
    %313 = vmatprep.subr.bf16.mxu0 0
    %314 = vmatpush1.bf16.msra.mxu0 0
    %315 = vmatprep.subr.bf16.mxu0 0
    %316 = vmatpush1.bf16.msra.mxu0 0
    %317 = vmatprep.subr.bf16.mxu0 0
    %318 = vmatpush1.bf16.msra.mxu0 0
    %319 = vmatprep.subr.bf16.mxu0 0
    %320 = vmatpush1.bf16.msra.mxu0 0
    %321 = vmatprep.subr.bf16.mxu0 0
    %322 = vmatpush1.bf16.msra.mxu0 0
    %323 = vmatprep.subr.bf16.mxu0 0
    %324 = vmatpush1.bf16.msra.mxu0 0
    %325 = vmatprep.subr.bf16.mxu0 0
    %326 = vmatpush1.bf16.msra.mxu0 0
    %327 = vmatprep.subr.bf16.mxu0 0
    %328 = vmatpush1.bf16.msra.mxu0 0
    %329 = vmatprep.subr.bf16.mxu0 0
    %330 = vmatpush1.bf16.msra.mxu0 0
    %331 = vmatprep.subr.bf16.mxu0 0
    %332 = vmatpush1.bf16.msra.mxu0 0
    %333 = vmatprep.mubr.bf16.mxu0 0
    %334 = vmatmul.mubr.bf16.gmra.mrb[0].mxu0 %v180
    %v335 = vpop.f32.mrb[0].mxu0
    %v336 = vadd.f32 0.0, %v335
    %v337 = vpop.f32.mrb[0].mxu0
    %v338 = vadd.f32 0.0, %v337
    %v339 = vpop.f32.mrb[0].mxu0
    %v340 = vadd.f32 0.0, %v339
    %v341 = vpop.f32.mrb[0].mxu0
    %v342 = vadd.f32 0.0, %v341
    %343 = vmatprep.mubr.bf16.mxu0 0
    %344 = vmatmul.mubr.bf16.gmra.mrb[0].mxu0 %v183
    %v345 = vpop.f32.mrb[0].mxu0
    %v346 = vadd.f32 0.0, %v345
    %v347 = vpop.f32.mrb[0].mxu0
    %v348 = vadd.f32 0.0, %v347
    %v349 = vpop.f32.mrb[0].mxu0
    %v350 = vadd.f32 0.0, %v349
    %v351 = vpop.f32.mrb[0].mxu0
    %v352 = vadd.f32 0.0, %v351
    %353 = vmatprep.mubr.bf16.mxu0 0
    %354 = vmatmul.mubr.bf16.gmra.mrb[0].mxu0 %v186
    %v355 = vpop.f32.mrb[0].mxu0
    %v356 = vadd.f32 0.0, %v355
    %v357 = vpop.f32.mrb[0].mxu0
    %v358 = vadd.f32 0.0, %v357
    %v359 = vpop.f32.mrb[0].mxu0
    %v360 = vadd.f32 0.0, %v359
    %v361 = vpop.f32.mrb[0].mxu0
    %v362 = vadd.f32 0.0, %v361
    %363 = vmatprep.mubr.bf16.mxu0 0
    %364 = vmatmul.mubr.bf16.gmra.mrb[0].mxu0 %v189
    %v365 = vpop.f32.mrb[0].mxu0
    %v366 = vadd.f32 0.0, %v365
    %v367 = vpop.f32.mrb[0].mxu0
    %v368 = vadd.f32 0.0, %v367
    %v369 = vpop.f32.mrb[0].mxu0
    %v370 = vadd.f32 0.0, %v369
    %v371 = vpop.f32.mrb[0].mxu0
    %v372 = vadd.f32 0.0, %v371
    %373 = vdwg.mxu0
    %374 = vmatprep.subr.bf16.mxu0 %v147
    %375 = vmatpush1.bf16.msra.mxu0 %v146
    %376 = vmatprep.subr.bf16.mxu0 %v208
    %377 = vmatpush1.bf16.msra.mxu0 %v205
    %378 = vmatprep.subr.bf16.mxu0 0
    %379 = vmatpush1.bf16.msra.mxu0 0
    %380 = vmatprep.subr.bf16.mxu0 0
    %381 = vmatpush1.bf16.msra.mxu0 0
    %382 = vmatprep.subr.bf16.mxu0 0
    %383 = vmatpush1.bf16.msra.mxu0 0
    %384 = vmatprep.subr.bf16.mxu0 0
    %385 = vmatpush1.bf16.msra.mxu0 0
    %386 = vmatprep.subr.bf16.mxu0 0
    %387 = vmatpush1.bf16.msra.mxu0 0
    %388 = vmatprep.subr.bf16.mxu0 0
    %389 = vmatpush1.bf16.msra.mxu0 0
    %390 = vmatprep.subr.bf16.mxu0 0
    %391 = vmatpush1.bf16.msra.mxu0 0
    %392 = vmatprep.subr.bf16.mxu0 0
    %393 = vmatpush1.bf16.msra.mxu0 0
    %394 = vmatprep.subr.bf16.mxu0 0
    %395 = vmatpush1.bf16.msra.mxu0 0
    %396 = vmatprep.subr.bf16.mxu0 0
    %397 = vmatpush1.bf16.msra.mxu0 0
    %398 = vmatprep.subr.bf16.mxu0 0
    %399 = vmatpush1.bf16.msra.mxu0 0
    %400 = vmatprep.subr.bf16.mxu0 0
    %401 = vmatpush1.bf16.msra.mxu0 0
    %402 = vmatprep.subr.bf16.mxu0 0
    %403 = vmatpush1.bf16.msra.mxu0 0
    %404 = vmatprep.subr.bf16.mxu0 0
    %405 = vmatpush1.bf16.msra.mxu0 0
    %406 = vmatprep.mubr.bf16.mxu0 0
    %407 = vmatmul.mubr.bf16.gmra.mrb[0].mxu0 %v180
    %v408 = vpop.f32.mrb[0].mxu0
    %v409 = vadd.f32 0.0, %v408
    %v410 = vpop.f32.mrb[0].mxu0
    %v411 = vadd.f32 0.0, %v410
    %v412 = vpop.f32.mrb[0].mxu0
    %v413 = vadd.f32 0.0, %v412
    %v414 = vpop.f32.mrb[0].mxu0
    %v415 = vadd.f32 0.0, %v414
    %416 = vmatprep.mubr.bf16.mxu0 0
    %417 = vmatmul.mubr.bf16.gmra.mrb[0].mxu0 %v183
    %v418 = vpop.f32.mrb[0].mxu0
    %v419 = vadd.f32 0.0, %v418
    %v420 = vpop.f32.mrb[0].mxu0
    %v421 = vadd.f32 0.0, %v420
    %v422 = vpop.f32.mrb[0].mxu0
    %v423 = vadd.f32 0.0, %v422
    %v424 = vpop.f32.mrb[0].mxu0
    %v425 = vadd.f32 0.0, %v424
    %426 = vmatprep.mubr.bf16.mxu0 0
    %427 = vmatmul.mubr.bf16.gmra.mrb[0].mxu0 %v186
    %v428 = vpop.f32.mrb[0].mxu0
    %v429 = vadd.f32 0.0, %v428
    %v430 = vpop.f32.mrb[0].mxu0
    %v431 = vadd.f32 0.0, %v430
    %v432 = vpop.f32.mrb[0].mxu0
    %v433 = vadd.f32 0.0, %v432
    %v434 = vpop.f32.mrb[0].mxu0
    %v435 = vadd.f32 0.0, %v434
    %436 = vmatprep.mubr.bf16.mxu0 0
    %437 = vmatmul.mubr.bf16.gmra.mrb[0].mxu0 %v189
    %v438 = vpop.f32.mrb[0].mxu0
    %v439 = vadd.f32 0.0, %v438
    %v440 = vpop.f32.mrb[0].mxu0
    %v441 = vadd.f32 0.0, %v440
    %v442 = vpop.f32.mrb[0].mxu0
    %v443 = vadd.f32 0.0, %v442
    %v444 = vpop.f32.mrb[0].mxu0
    %v445 = vadd.f32 0.0, %v444
    %446 = vdwg.mxu0
    %447 = vmatprep.subr.bf16.mxu0 %v149
    %448 = vmatpush1.bf16.msra.mxu0 %v148
    %449 = vmatprep.subr.bf16.mxu0 %v214
    %450 = vmatpush1.bf16.msra.mxu0 %v211
    %451 = vmatprep.subr.bf16.mxu0 0
    %452 = vmatpush1.bf16.msra.mxu0 0
    %453 = vmatprep.subr.bf16.mxu0 0
    %454 = vmatpush1.bf16.msra.mxu0 0
    %455 = vmatprep.subr.bf16.mxu0 0
    %456 = vmatpush1.bf16.msra.mxu0 0
    %457 = vmatprep.subr.bf16.mxu0 0
    %458 = vmatpush1.bf16.msra.mxu0 0
    %459 = vmatprep.subr.bf16.mxu0 0
    %460 = vmatpush1.bf16.msra.mxu0 0
    %461 = vmatprep.subr.bf16.mxu0 0
    %462 = vmatpush1.bf16.msra.mxu0 0
    %463 = vmatprep.subr.bf16.mxu0 0
    %464 = vmatpush1.bf16.msra.mxu0 0
    %465 = vmatprep.subr.bf16.mxu0 0
    %466 = vmatpush1.bf16.msra.mxu0 0
    %467 = vmatprep.subr.bf16.mxu0 0
    %468 = vmatpush1.bf16.msra.mxu0 0
    %469 = vmatprep.subr.bf16.mxu0 0
    %470 = vmatpush1.bf16.msra.mxu0 0
    %471 = vmatprep.subr.bf16.mxu0 0
    %472 = vmatpush1.bf16.msra.mxu0 0
    %473 = vmatprep.subr.bf16.mxu0 0
    %474 = vmatpush1.bf16.msra.mxu0 0
    %475 = vmatprep.subr.bf16.mxu0 0
    %476 = vmatpush1.bf16.msra.mxu0 0
    %477 = vmatprep.subr.bf16.mxu0 0
    %478 = vmatpush1.bf16.msra.mxu0 0
    %479 = vmatprep.mubr.bf16.mxu0 0
    %480 = vmatmul.mubr.bf16.gmra.mrb[0].mxu0 %v180
    %v481 = vpop.f32.mrb[0].mxu0
    %v482 = vadd.f32 0.0, %v481
    %v483 = vpop.f32.mrb[0].mxu0
    %v484 = vadd.f32 0.0, %v483
    %v485 = vpop.f32.mrb[0].mxu0
    %v486 = vadd.f32 0.0, %v485
    %v487 = vpop.f32.mrb[0].mxu0
    %v488 = vadd.f32 0.0, %v487
    %489 = vmatprep.mubr.bf16.mxu0 0
    %490 = vmatmul.mubr.bf16.gmra.mrb[0].mxu0 %v183
    %v491 = vpop.f32.mrb[0].mxu0
    %v492 = vadd.f32 0.0, %v491
    %v493 = vpop.f32.mrb[0].mxu0
    %v494 = vadd.f32 0.0, %v493
    %v495 = vpop.f32.mrb[0].mxu0
    %v496 = vadd.f32 0.0, %v495
    %v497 = vpop.f32.mrb[0].mxu0
    %v498 = vadd.f32 0.0, %v497
    %499 = vmatprep.mubr.bf16.mxu0 0
    %500 = vmatmul.mubr.bf16.gmra.mrb[0].mxu0 %v186
    %v501 = vpop.f32.mrb[0].mxu0
    %v502 = vadd.f32 0.0, %v501
    %v503 = vpop.f32.mrb[0].mxu0
    %v504 = vadd.f32 0.0, %v503
    %v505 = vpop.f32.mrb[0].mxu0
    %v506 = vadd.f32 0.0, %v505
    %v507 = vpop.f32.mrb[0].mxu0
    %v508 = vadd.f32 0.0, %v507
    %509 = vmatprep.mubr.bf16.mxu0 0
    %510 = vmatmul.mubr.bf16.gmra.mrb[0].mxu0 %v189
    %v511 = vpop.f32.mrb[0].mxu0
    %v512 = vadd.f32 0.0, %v511
    %v513 = vpop.f32.mrb[0].mxu0
    %v514 = vadd.f32 0.0, %v513
    %v515 = vpop.f32.mrb[0].mxu0
    %v516 = vadd.f32 0.0, %v515
    %v517 = vpop.f32.mrb[0].mxu0
    %v518 = vadd.f32 0.0, %v517
    %519 = vdwg.mxu0
    %520 = vmatprep.subr.bf16.mxu0 %v151
    %521 = vmatpush1.bf16.msra.mxu0 %v150
    %522 = vmatprep.subr.bf16.mxu0 %v220
    %523 = vmatpush1.bf16.msra.mxu0 %v217
    %524 = vmatprep.subr.bf16.mxu0 0
    %525 = vmatpush1.bf16.msra.mxu0 0
    %526 = vmatprep.subr.bf16.mxu0 0
    %527 = vmatpush1.bf16.msra.mxu0 0
    %528 = vmatprep.subr.bf16.mxu0 0
    %529 = vmatpush1.bf16.msra.mxu0 0
    %530 = vmatprep.subr.bf16.mxu0 0
    %531 = vmatpush1.bf16.msra.mxu0 0
    %532 = vmatprep.subr.bf16.mxu0 0
    %533 = vmatpush1.bf16.msra.mxu0 0
    %534 = vmatprep.subr.bf16.mxu0 0
    %535 = vmatpush1.bf16.msra.mxu0 0
    %536 = vmatprep.subr.bf16.mxu0 0
    %537 = vmatpush1.bf16.msra.mxu0 0
    %538 = vmatprep.subr.bf16.mxu0 0
    %539 = vmatpush1.bf16.msra.mxu0 0
    %540 = vmatprep.subr.bf16.mxu0 0
    %541 = vmatpush1.bf16.msra.mxu0 0
    %542 = vmatprep.subr.bf16.mxu0 0
    %543 = vmatpush1.bf16.msra.mxu0 0
    %544 = vmatprep.subr.bf16.mxu0 0
    %545 = vmatpush1.bf16.msra.mxu0 0
    %546 = vmatprep.subr.bf16.mxu0 0
    %547 = vmatpush1.bf16.msra.mxu0 0
    %548 = vmatprep.subr.bf16.mxu0 0
    %549 = vmatpush1.bf16.msra.mxu0 0
    %550 = vmatprep.subr.bf16.mxu0 0
    %551 = vmatpush1.bf16.msra.mxu0 0
    %552 = vmatprep.mubr.bf16.mxu0 0
    %553 = vmatmul.mubr.bf16.gmra.mrb[0].mxu0 %v180
    %v554 = vpop.f32.mrb[0].mxu0
    %v555 = vadd.f32 0.0, %v554
    %v556 = vpop.f32.mrb[0].mxu0
    %v557 = vadd.f32 0.0, %v556
    %v558 = vpop.f32.mrb[0].mxu0
    %v559 = vadd.f32 0.0, %v558
    %v560 = vpop.f32.mrb[0].mxu0
    %v561 = vadd.f32 0.0, %v560
    %562 = vmatprep.mubr.bf16.mxu0 0
    %563 = vmatmul.mubr.bf16.gmra.mrb[0].mxu0 %v183
    %v564 = vpop.f32.mrb[0].mxu0
    %v565 = vadd.f32 0.0, %v564
    %v566 = vpop.f32.mrb[0].mxu0
    %v567 = vadd.f32 0.0, %v566
    %v568 = vpop.f32.mrb[0].mxu0
    %v569 = vadd.f32 0.0, %v568
    %v570 = vpop.f32.mrb[0].mxu0
    %v571 = vadd.f32 0.0, %v570
    %572 = vmatprep.mubr.bf16.mxu0 0
    %573 = vmatmul.mubr.bf16.gmra.mrb[0].mxu0 %v186
    %v574 = vpop.f32.mrb[0].mxu0
    %v575 = vadd.f32 0.0, %v574
    %v576 = vpop.f32.mrb[0].mxu0
    %v577 = vadd.f32 0.0, %v576
    %v578 = vpop.f32.mrb[0].mxu0
    %v579 = vadd.f32 0.0, %v578
    %v580 = vpop.f32.mrb[0].mxu0
    %v581 = vadd.f32 0.0, %v580
    %582 = vmatprep.mubr.bf16.mxu0 0
    %583 = vmatmul.mubr.bf16.gmra.mrb[0].mxu0 %v189
    %v584 = vpop.f32.mrb[0].mxu0
    %v585 = vadd.f32 0.0, %v584
    %v586 = vpop.f32.mrb[0].mxu0
    %v587 = vadd.f32 0.0, %v586
    %v588 = vpop.f32.mrb[0].mxu0
    %v589 = vadd.f32 0.0, %v588
    %v590 = vpop.f32.mrb[0].mxu0
    %v591 = vadd.f32 0.0, %v590
    %592 = vdwg.mxu0
    %593 = vmatprep.subr.bf16.mxu0 %v153
    %594 = vmatpush1.bf16.msra.mxu0 %v152
    %595 = vmatprep.subr.bf16.mxu0 %v226
    %596 = vmatpush1.bf16.msra.mxu0 %v223
    %597 = vmatprep.subr.bf16.mxu0 0
    %598 = vmatpush1.bf16.msra.mxu0 0
    %599 = vmatprep.subr.bf16.mxu0 0
    %600 = vmatpush1.bf16.msra.mxu0 0
    %601 = vmatprep.subr.bf16.mxu0 0
    %602 = vmatpush1.bf16.msra.mxu0 0
    %603 = vmatprep.subr.bf16.mxu0 0
    %604 = vmatpush1.bf16.msra.mxu0 0
    %605 = vmatprep.subr.bf16.mxu0 0
    %606 = vmatpush1.bf16.msra.mxu0 0
    %607 = vmatprep.subr.bf16.mxu0 0
    %608 = vmatpush1.bf16.msra.mxu0 0
    %609 = vmatprep.subr.bf16.mxu0 0
    %610 = vmatpush1.bf16.msra.mxu0 0
    %611 = vmatprep.subr.bf16.mxu0 0
    %612 = vmatpush1.bf16.msra.mxu0 0
    %613 = vmatprep.subr.bf16.mxu0 0
    %614 = vmatpush1.bf16.msra.mxu0 0
    %615 = vmatprep.subr.bf16.mxu0 0
    %616 = vmatpush1.bf16.msra.mxu0 0
    %617 = vmatprep.subr.bf16.mxu0 0
    %618 = vmatpush1.bf16.msra.mxu0 0
    %619 = vmatprep.subr.bf16.mxu0 0
    %620 = vmatpush1.bf16.msra.mxu0 0
    %621 = vmatprep.subr.bf16.mxu0 0
    %622 = vmatpush1.bf16.msra.mxu0 0
    %623 = vmatprep.subr.bf16.mxu0 0
    %624 = vmatpush1.bf16.msra.mxu0 0
    %625 = vmatprep.mubr.bf16.mxu0 0
    %626 = vmatmul.mubr.bf16.gmra.mrb[0].mxu0 %v180
    %v627 = vpop.f32.mrb[0].mxu0
    %v628 = vadd.f32 0.0, %v627
    %v629 = vpop.f32.mrb[0].mxu0
    %v630 = vadd.f32 0.0, %v629
    %v631 = vpop.f32.mrb[0].mxu0
    %v632 = vadd.f32 0.0, %v631
    %v633 = vpop.f32.mrb[0].mxu0
    %v634 = vadd.f32 0.0, %v633
    %635 = vmatprep.mubr.bf16.mxu0 0
    %636 = vmatmul.mubr.bf16.gmra.mrb[0].mxu0 %v183
    %v637 = vpop.f32.mrb[0].mxu0
    %v638 = vadd.f32 0.0, %v637
    %v639 = vpop.f32.mrb[0].mxu0
    %v640 = vadd.f32 0.0, %v639
    %v641 = vpop.f32.mrb[0].mxu0
    %v642 = vadd.f32 0.0, %v641
    %v643 = vpop.f32.mrb[0].mxu0
    %v644 = vadd.f32 0.0, %v643
    %645 = vmatprep.mubr.bf16.mxu0 0
    %646 = vmatmul.mubr.bf16.gmra.mrb[0].mxu0 %v186
    %v647 = vpop.f32.mrb[0].mxu0
    %v648 = vadd.f32 0.0, %v647
    %v649 = vpop.f32.mrb[0].mxu0
    %v650 = vadd.f32 0.0, %v649
    %v651 = vpop.f32.mrb[0].mxu0
    %v652 = vadd.f32 0.0, %v651
    %v653 = vpop.f32.mrb[0].mxu0
    %v654 = vadd.f32 0.0, %v653
    %655 = vmatprep.mubr.bf16.mxu0 0
    %656 = vmatmul.mubr.bf16.gmra.mrb[0].mxu0 %v189
    %v657 = vpop.f32.mrb[0].mxu0
    %v658 = vadd.f32 0.0, %v657
    %v659 = vpop.f32.mrb[0].mxu0
    %v660 = vadd.f32 0.0, %v659
    %v661 = vpop.f32.mrb[0].mxu0
    %v662 = vadd.f32 0.0, %v661
    %v663 = vpop.f32.mrb[0].mxu0
    %v664 = vadd.f32 0.0, %v663
    %665 = vdwg.mxu0
    %vm698 = vcmask 1046528
    %v699 = vrot.slane %v409, 1
    %v700 = vrot.slane %v413, 1
    %v701 = vsel %vm698, %v699, %v700
    %v702 = vrot.slane %v411, 1
    %v703 = vrot.slane %v415, 1
    %v704 = vsel %vm698, %v702, %v703
    %v705 = vrot.slane %v482, 1
    %v706 = vrot.slane %v486, 1
    %v707 = vsel %vm698, %v705, %v706
    %v708 = vrot.slane %v484, 1
    %v709 = vrot.slane %v488, 1
    %v710 = vsel %vm698, %v708, %v709
    %v711 = vrot.slane %v419, 1
    %v712 = vsel %vm698, %v700, %v711
    %v713 = vrot.slane %v421, 1
    %v714 = vsel %vm698, %v703, %v713
    %v715 = vrot.slane %v492, 1
    %v716 = vsel %vm698, %v706, %v715
    %v717 = vrot.slane %v494, 1
    %v718 = vsel %vm698, %v709, %v717
    %v719 = vrot.slane %v423, 1
    %v720 = vsel %vm698, %v711, %v719
    %v721 = vrot.slane %v425, 1
    %v722 = vsel %vm698, %v713, %v721
    %v723 = vrot.slane %v496, 1
    %v724 = vsel %vm698, %v715, %v723
    %v725 = vrot.slane %v498, 1
    %v726 = vsel %vm698, %v717, %v725
    %v727 = vrot.slane %v429, 1
    %v728 = vrot.slane %v433, 1
    %v729 = vsel %vm698, %v727, %v728
    %v730 = vrot.slane %v431, 1
    %v731 = vrot.slane %v435, 1
    %v732 = vsel %vm698, %v730, %v731
    %v733 = vrot.slane %v502, 1
    %v734 = vrot.slane %v506, 1
    %v735 = vsel %vm698, %v733, %v734
    %v736 = vrot.slane %v504, 1
    %v737 = vrot.slane %v508, 1
    %v738 = vsel %vm698, %v736, %v737
    %v739 = vrot.slane %v439, 1
    %v740 = vsel %vm698, %v728, %v739
    %v741 = vrot.slane %v441, 1
    %v742 = vsel %vm698, %v731, %v741
    %v743 = vrot.slane %v512, 1
    %v744 = vsel %vm698, %v734, %v743
    %v745 = vrot.slane %v514, 1
    %v746 = vsel %vm698, %v737, %v745
    %v747 = vrot.slane %v443, 1
    %v748 = vsel %vm698, %v739, %v747
    %v749 = vrot.slane %v445, 1
    %v750 = vsel %vm698, %v741, %v749
    %v751 = vrot.slane %v516, 1
    %v752 = vsel %vm698, %v743, %v751
    %v753 = vrot.slane %v518, 1
    %v754 = vsel %vm698, %v745, %v753
    %v787 = vadd.f32 %v263, %v701
    %v788 = vadd.f32 %v265, %v704
    %v789 = vadd.f32 %v336, %v707
    %v790 = vadd.f32 %v338, %v710
    %v791 = vadd.f32 %v267, %v712
    %v792 = vadd.f32 %v269, %v714
    %v793 = vadd.f32 %v340, %v716
    %v794 = vadd.f32 %v342, %v718
    %v795 = vadd.f32 %v273, %v720
    %v796 = vadd.f32 %v275, %v722
    %v797 = vadd.f32 %v346, %v724
    %v798 = vadd.f32 %v348, %v726
    %v799 = vadd.f32 %v277, %v719
    %v800 = vadd.f32 %v279, %v721
    %v801 = vadd.f32 %v350, %v723
    %v802 = vadd.f32 %v352, %v725
    %v803 = vadd.f32 %v283, %v729
    %v804 = vadd.f32 %v285, %v732
    %v805 = vadd.f32 %v356, %v735
    %v806 = vadd.f32 %v358, %v738
    %v807 = vadd.f32 %v287, %v740
    %v808 = vadd.f32 %v289, %v742
    %v809 = vadd.f32 %v360, %v744
    %v810 = vadd.f32 %v362, %v746
    %v811 = vadd.f32 %v293, %v748
    %v812 = vadd.f32 %v295, %v750
    %v813 = vadd.f32 %v366, %v752
    %v814 = vadd.f32 %v368, %v754
    %v815 = vadd.f32 %v297, %v747
    %v816 = vadd.f32 %v299, %v749
    %v817 = vadd.f32 %v370, %v751
    %v818 = vadd.f32 %v372, %v753
    %v851 = vrot.slane %v555, 2
    %v852 = vrot.slane %v559, 2
    %v853 = vsel %vm191, %v851, %v852
    %v854 = vrot.slane %v557, 2
    %v855 = vrot.slane %v561, 2
    %v856 = vsel %vm191, %v854, %v855
    %v857 = vrot.slane %v628, 2
    %v858 = vrot.slane %v632, 2
    %v859 = vsel %vm191, %v857, %v858
    %v860 = vrot.slane %v630, 2
    %v861 = vrot.slane %v634, 2
    %v862 = vsel %vm191, %v860, %v861
    %v863 = vrot.slane %v565, 2
    %v864 = vsel %vm191, %v852, %v863
    %v865 = vrot.slane %v567, 2
    %v866 = vsel %vm191, %v855, %v865
    %v867 = vrot.slane %v638, 2
    %v868 = vsel %vm191, %v858, %v867
    %v869 = vrot.slane %v640, 2
    %v870 = vsel %vm191, %v861, %v869
    %v871 = vrot.slane %v569, 2
    %v872 = vsel %vm191, %v863, %v871
    %v873 = vrot.slane %v571, 2
    %v874 = vsel %vm191, %v865, %v873
    %v875 = vrot.slane %v642, 2
    %v876 = vsel %vm191, %v867, %v875
    %v877 = vrot.slane %v644, 2
    %v878 = vsel %vm191, %v869, %v877
    %v879 = vrot.slane %v575, 2
    %v880 = vrot.slane %v579, 2
    %v881 = vsel %vm191, %v879, %v880
    %v882 = vrot.slane %v577, 2
    %v883 = vrot.slane %v581, 2
    %v884 = vsel %vm191, %v882, %v883
    %v885 = vrot.slane %v648, 2
    %v886 = vrot.slane %v652, 2
    %v887 = vsel %vm191, %v885, %v886
    %v888 = vrot.slane %v650, 2
    %v889 = vrot.slane %v654, 2
    %v890 = vsel %vm191, %v888, %v889
    %v891 = vrot.slane %v585, 2
    %v892 = vsel %vm191, %v880, %v891
    %v893 = vrot.slane %v587, 2
    %v894 = vsel %vm191, %v883, %v893
    %v895 = vrot.slane %v658, 2
    %v896 = vsel %vm191, %v886, %v895
    %v897 = vrot.slane %v660, 2
    %v898 = vsel %vm191, %v889, %v897
    %v899 = vrot.slane %v589, 2
    %v900 = vsel %vm191, %v891, %v899
    %v901 = vrot.slane %v591, 2
    %v902 = vsel %vm191, %v893, %v901
    %v903 = vrot.slane %v662, 2
    %v904 = vsel %vm191, %v895, %v903
    %v905 = vrot.slane %v664, 2
    %v906 = vsel %vm191, %v897, %v905
    %v939 = vadd.f32 %v787, %v853
    %v940 = vadd.f32 %v788, %v856
    %v941 = vadd.f32 %v789, %v859
    %v942 = vadd.f32 %v790, %v862
    %v943 = vadd.f32 %v791, %v864
    %v944 = vadd.f32 %v792, %v866
    %v945 = vadd.f32 %v793, %v868
    %v946 = vadd.f32 %v794, %v870
    %v947 = vadd.f32 %v795, %v872
    %v948 = vadd.f32 %v796, %v874
    %v949 = vadd.f32 %v797, %v876
    %v950 = vadd.f32 %v798, %v878
    %v951 = vadd.f32 %v799, %v871
    %v952 = vadd.f32 %v800, %v873
    %v953 = vadd.f32 %v801, %v875
    %v954 = vadd.f32 %v802, %v877
    %v955 = vadd.f32 %v803, %v881
    %v956 = vadd.f32 %v804, %v884
    %v957 = vadd.f32 %v805, %v887
    %v958 = vadd.f32 %v806, %v890
    %v959 = vadd.f32 %v807, %v892
    %v960 = vadd.f32 %v808, %v894
    %v961 = vadd.f32 %v809, %v896
    %v962 = vadd.f32 %v810, %v898
    %v963 = vadd.f32 %v811, %v900
    %v964 = vadd.f32 %v812, %v902
    %v965 = vadd.f32 %v813, %v904
    %v966 = vadd.f32 %v814, %v906
    %v967 = vadd.f32 %v815, %v899
    %v968 = vadd.f32 %v816, %v901
    %v969 = vadd.f32 %v817, %v903
    %v970 = vadd.f32 %v818, %v905
    %v971 = vld [vmem:[%s2] sm:$0xf]
    %v973 = vlaneseq
    %v974 = vshrl.u32 %v973, 7
    %v975 = vsub.s32 0, %v974
    %v976 = vrot.slane %v971, %v975
    %v977 = vlaneseq
    %v978 = vshrl.u32 %v977, 7
    %v979 = vsub.s32 1, %v978
    %v980 = vrot.slane %v971, %v979
    %v981 = vlaneseq
    %v982 = vshrl.u32 %v981, 7
    %v983 = vsub.s32 2, %v982
    %v984 = vrot.slane %v971, %v983
    %v985 = vlaneseq
    %v986 = vshrl.u32 %v985, 7
    %v987 = vsub.s32 3, %v986
    %v988 = vrot.slane %v971, %v987
    %v993 = vadd.f32 %v939, %v976
    %v994 = vadd.f32 %v940, %v980
    %v995 = vadd.f32 %v941, %v984
    %v996 = vadd.f32 %v942, %v988
    %v997 = vadd.f32 %v943, %v976
    %v998 = vadd.f32 %v944, %v980
    %v999 = vadd.f32 %v945, %v984
    %v1000 = vadd.f32 %v946, %v988
    %v1001 = vadd.f32 %v947, %v976
    %v1002 = vadd.f32 %v948, %v980
    %v1003 = vadd.f32 %v949, %v984
    %v1004 = vadd.f32 %v950, %v988
    %v1005 = vadd.f32 %v951, %v976
    %v1006 = vadd.f32 %v952, %v980
    %v1007 = vadd.f32 %v953, %v984
    %v1008 = vadd.f32 %v954, %v988
    %v1009 = vadd.f32 %v955, %v976
    %v1010 = vadd.f32 %v956, %v980
    %v1011 = vadd.f32 %v957, %v984
    %v1012 = vadd.f32 %v958, %v988
    %v1013 = vadd.f32 %v959, %v976
    %v1014 = vadd.f32 %v960, %v980
    %v1015 = vadd.f32 %v961, %v984
    %v1016 = vadd.f32 %v962, %v988
    %v1017 = vadd.f32 %v963, %v976
    %v1018 = vadd.f32 %v964, %v980
    %v1019 = vadd.f32 %v965, %v984
    %v1020 = vadd.f32 %v966, %v988
    %v1021 = vadd.f32 %v967, %v976
    %v1022 = vadd.f32 %v968, %v980
    %v1023 = vadd.f32 %v969, %v984
    %v1024 = vadd.f32 %v970, %v988
    %v1025 = vmax.f32 %v993, 0.0
    %v1026 = vmax.f32 %v994, 0.0
    %v1027 = vmax.f32 %v995, 0.0
    %v1028 = vmax.f32 %v996, 0.0
    %v1029 = vmax.f32 %v997, 0.0
    %v1030 = vmax.f32 %v998, 0.0
    %v1031 = vmax.f32 %v999, 0.0
    %v1032 = vmax.f32 %v1000, 0.0
    %v1033 = vmax.f32 %v1001, 0.0
    %v1034 = vmax.f32 %v1002, 0.0
    %v1035 = vmax.f32 %v1003, 0.0
    %v1036 = vmax.f32 %v1004, 0.0
    %v1037 = vmax.f32 %v1005, 0.0
    %v1038 = vmax.f32 %v1006, 0.0
    %v1039 = vmax.f32 %v1007, 0.0
    %v1040 = vmax.f32 %v1008, 0.0
    %v1041 = vmax.f32 %v1009, 0.0
    %v1042 = vmax.f32 %v1010, 0.0
    %v1043 = vmax.f32 %v1011, 0.0
    %v1044 = vmax.f32 %v1012, 0.0
    %v1045 = vmax.f32 %v1013, 0.0
    %v1046 = vmax.f32 %v1014, 0.0
    %v1047 = vmax.f32 %v1015, 0.0
    %v1048 = vmax.f32 %v1016, 0.0
    %v1049 = vmax.f32 %v1017, 0.0
    %v1050 = vmax.f32 %v1018, 0.0
    %v1051 = vmax.f32 %v1019, 0.0
    %v1052 = vmax.f32 %v1020, 0.0
    %v1053 = vmax.f32 %v1021, 0.0
    %v1054 = vmax.f32 %v1022, 0.0
    %v1055 = vmax.f32 %v1023, 0.0
    %v1056 = vmax.f32 %v1024, 0.0
    %v1057 = vpack.c.bf16 %v1029, %v1025
    %v1058 = vpack.c.bf16 %v1030, %v1026
    %v1059 = vpack.c.bf16 %v1031, %v1027
    %v1060 = vpack.c.bf16 %v1032, %v1028
    %v1061 = vpack.c.bf16 %v1041, %v1033
    %v1062 = vpack.c.bf16 %v1042, %v1034
    %v1063 = vpack.c.bf16 %v1043, %v1035
    %v1064 = vpack.c.bf16 %v1044, %v1036
    %v1065 = vpack.c.bf16 %v1049, %v1045
    %v1066 = vpack.c.bf16 %v1050, %v1046
    %v1067 = vpack.c.bf16 %v1051, %v1047
    %v1068 = vpack.c.bf16 %v1052, %v1048
    %v1069 = vld [vmem:[%s3] sm:$0xff]
    %v1070 = vld [vmem:[%s3 + $0x8] sm:$0xff]
    %v1071 = vld [vmem:[%s3 + $0x10] sm:$0xff]
    %v1072 = vld [vmem:[%s3 + $0x18] sm:$0xff]
    %v1073 = vld [vmem:[%s3 + $0x20] sm:$0xff]
    %v1074 = vld [vmem:[%s3 + $0x28] sm:$0xff]
    %v1075 = vld [vmem:[%s3 + $0x30] sm:$0xff]
    %v1076 = vld [vmem:[%s3 + $0x38] sm:$0xff]
    %v1077 = vld [vmem:[%s3 + $0x40] sm:$0xff]
    %v1078 = vld [vmem:[%s3 + $0x48] sm:$0xff]
    %v1079 = vld [vmem:[%s3 + $0x50] sm:$0xff]
    %v1080 = vld [vmem:[%s3 + $0x58] sm:$0xff]
    %v1081 = vld [vmem:[%s3 + $0x60] sm:$0xff]
    %v1082 = vld [vmem:[%s3 + $0x68] sm:$0xff]
    %v1083 = vld [vmem:[%s3 + $0x70] sm:$0xff]
    %v1084 = vld [vmem:[%s3 + $0x78] sm:$0xff]
    %v1085 = vld [vmem:[%s3 + $0x80] sm:$0xff]
    %v1086 = vld [vmem:[%s3 + $0x88] sm:$0xff]
    %v1087 = vld [vmem:[%s3 + $0x90] sm:$0xff]
    %v1088 = vld [vmem:[%s3 + $0x98] sm:$0xff]
    %v1089 = vld [vmem:[%s3 + $0xa0] sm:$0xff]
    %v1090 = vld [vmem:[%s3 + $0xa8] sm:$0xff]
    %v1091 = vld [vmem:[%s3 + $0xb0] sm:$0xff]
    %v1092 = vld [vmem:[%s3 + $0xb8] sm:$0xff]
    %v1093 = vld [vmem:[%s3 + $0xc0] sm:$0xff]
    %v1094 = vld [vmem:[%s3 + $0xc8] sm:$0xff]
    %v1095 = vld [vmem:[%s3 + $0xd0] sm:$0xff]
    %v1096 = vld [vmem:[%s3 + $0xd8] sm:$0xff]
    %v1097 = vld [vmem:[%s3 + $0xe0] sm:$0xff]
    %v1098 = vld [vmem:[%s3 + $0xe8] sm:$0xff]
    %v1099 = vld [vmem:[%s3 + $0xf0] sm:$0xff]
    %v1100 = vld [vmem:[%s3 + $0xf8] sm:$0xff]
    %v1101 = vld [vmem:[%s3 + $0x100] sm:$0xff]
    %v1102 = vld [vmem:[%s3 + $0x108] sm:$0xff]
    %v1103 = vld [vmem:[%s3 + $0x110] sm:$0xff]
    %v1104 = vld [vmem:[%s3 + $0x118] sm:$0xff]
    %v1105 = vld [vmem:[%s3 + $0x120] sm:$0xff]
    %v1106 = vld [vmem:[%s3 + $0x128] sm:$0xff]
    %v1107 = vld [vmem:[%s3 + $0x130] sm:$0xff]
    %v1108 = vld [vmem:[%s3 + $0x138] sm:$0xff]
    %v1109 = vld [vmem:[%s3 + $0x140] sm:$0xff]
    %v1110 = vld [vmem:[%s3 + $0x148] sm:$0xff]
    %v1111 = vld [vmem:[%s3 + $0x150] sm:$0xff]
    %v1112 = vld [vmem:[%s3 + $0x158] sm:$0xff]
    %v1113 = vld [vmem:[%s3 + $0x160] sm:$0xff]
    %v1114 = vld [vmem:[%s3 + $0x168] sm:$0xff]
    %v1115 = vld [vmem:[%s3 + $0x170] sm:$0xff]
    %v1116 = vld [vmem:[%s3 + $0x178] sm:$0xff]
    %v1117 = vld [vmem:[%s3 + $0x180] sm:$0xff]
    %v1118 = vld [vmem:[%s3 + $0x188] sm:$0xff]
    %v1119 = vld [vmem:[%s3 + $0x190] sm:$0xff]
    %v1120 = vld [vmem:[%s3 + $0x198] sm:$0xff]
    %v1121 = vld [vmem:[%s3 + $0x1a0] sm:$0xff]
    %v1122 = vld [vmem:[%s3 + $0x1a8] sm:$0xff]
    %v1123 = vld [vmem:[%s3 + $0x1b0] sm:$0xff]
    %v1124 = vld [vmem:[%s3 + $0x1b8] sm:$0xff]
    %v1125 = vld [vmem:[%s3 + $0x1c0] sm:$0xff]
    %v1126 = vld [vmem:[%s3 + $0x1c8] sm:$0xff]
    %v1127 = vld [vmem:[%s3 + $0x1d0] sm:$0xff]
    %v1128 = vld [vmem:[%s3 + $0x1d8] sm:$0xff]
    %v1129 = vld [vmem:[%s3 + $0x1e0] sm:$0xff]
    %v1130 = vld [vmem:[%s3 + $0x1e8] sm:$0xff]
    %v1131 = vld [vmem:[%s3 + $0x1f0] sm:$0xff]
    %v1132 = vld [vmem:[%s3 + $0x1f8] sm:$0xff]
    %v1133 = vld [vmem:[%s3 + $0x200] sm:$0xff]
    %v1134 = vld [vmem:[%s3 + $0x208] sm:$0xff]
    %v1135 = vld [vmem:[%s3 + $0x210] sm:$0xff]
    %v1136 = vld [vmem:[%s3 + $0x218] sm:$0xff]
    %v1137 = vld [vmem:[%s3 + $0x220] sm:$0xff]
    %v1138 = vld [vmem:[%s3 + $0x228] sm:$0xff]
    %v1139 = vld [vmem:[%s3 + $0x230] sm:$0xff]
    %v1140 = vld [vmem:[%s3 + $0x238] sm:$0xff]
    %v1141 = vld [vmem:[%s3 + $0x240] sm:$0xff]
    %v1142 = vld [vmem:[%s3 + $0x248] sm:$0xff]
    %v1143 = vld [vmem:[%s3 + $0x250] sm:$0xff]
    %v1144 = vld [vmem:[%s3 + $0x258] sm:$0xff]
    %v1145 = vld [vmem:[%s3 + $0x260] sm:$0xff]
    %v1146 = vld [vmem:[%s3 + $0x268] sm:$0xff]
    %v1147 = vld [vmem:[%s3 + $0x270] sm:$0xff]
    %v1148 = vld [vmem:[%s3 + $0x278] sm:$0xff]
    %v1149 = vld [vmem:[%s3 + $0x280] sm:$0xff]
    %v1150 = vld [vmem:[%s3 + $0x288] sm:$0xff]
    %v1151 = vld [vmem:[%s3 + $0x290] sm:$0xff]
    %v1152 = vld [vmem:[%s3 + $0x298] sm:$0xff]
    %v1153 = vld [vmem:[%s3 + $0x2a0] sm:$0xff]
    %v1154 = vld [vmem:[%s3 + $0x2a8] sm:$0xff]
    %v1155 = vld [vmem:[%s3 + $0x2b0] sm:$0xff]
    %v1156 = vld [vmem:[%s3 + $0x2b8] sm:$0xff]
    %v1157 = vld [vmem:[%s3 + $0x2c0] sm:$0xff]
    %v1158 = vld [vmem:[%s3 + $0x2c8] sm:$0xff]
    %v1159 = vld [vmem:[%s3 + $0x2d0] sm:$0xff]
    %v1160 = vld [vmem:[%s3 + $0x2d8] sm:$0xff]
    %v1161 = vld [vmem:[%s3 + $0x2e0] sm:$0xff]
    %v1162 = vld [vmem:[%s3 + $0x2e8] sm:$0xff]
    %v1163 = vld [vmem:[%s3 + $0x2f0] sm:$0xff]
    %v1164 = vld [vmem:[%s3 + $0x2f8] sm:$0xff]
    %v1165 = vld [vmem:[%s3 + $0x300] sm:$0xff]
    %v1166 = vld [vmem:[%s3 + $0x308] sm:$0xff]
    %v1167 = vld [vmem:[%s3 + $0x310] sm:$0xff]
    %v1168 = vld [vmem:[%s3 + $0x318] sm:$0xff]
    %v1169 = vld [vmem:[%s3 + $0x320] sm:$0xff]
    %v1170 = vld [vmem:[%s3 + $0x328] sm:$0xff]
    %v1171 = vld [vmem:[%s3 + $0x330] sm:$0xff]
    %v1172 = vld [vmem:[%s3 + $0x338] sm:$0xff]
    %v1173 = vld [vmem:[%s3 + $0x340] sm:$0xff]
    %v1174 = vld [vmem:[%s3 + $0x348] sm:$0xff]
    %v1175 = vld [vmem:[%s3 + $0x350] sm:$0xff]
    %v1176 = vld [vmem:[%s3 + $0x358] sm:$0xff]
    %v1177 = vld [vmem:[%s3 + $0x360] sm:$0xff]
    %v1178 = vld [vmem:[%s3 + $0x368] sm:$0xff]
    %v1179 = vld [vmem:[%s3 + $0x370] sm:$0xff]
    %v1180 = vld [vmem:[%s3 + $0x378] sm:$0xff]
    %v1181 = vld [vmem:[%s3 + $0x380] sm:$0xff]
    %v1182 = vld [vmem:[%s3 + $0x388] sm:$0xff]
    %v1183 = vld [vmem:[%s3 + $0x390] sm:$0xff]
    %v1184 = vld [vmem:[%s3 + $0x398] sm:$0xff]
    %v1185 = vld [vmem:[%s3 + $0x3a0] sm:$0xff]
    %v1186 = vld [vmem:[%s3 + $0x3a8] sm:$0xff]
    %v1187 = vld [vmem:[%s3 + $0x3b0] sm:$0xff]
    %v1188 = vld [vmem:[%s3 + $0x3b8] sm:$0xff]
    %v1189 = vld [vmem:[%s3 + $0x3c0] sm:$0xff]
    %v1190 = vld [vmem:[%s3 + $0x3c8] sm:$0xff]
    %v1191 = vld [vmem:[%s3 + $0x3d0] sm:$0xff]
    %v1192 = vld [vmem:[%s3 + $0x3d8] sm:$0xff]
    %v1193 = vld [vmem:[%s3 + $0x3e0] sm:$0xff]
    %v1194 = vld [vmem:[%s3 + $0x3e8] sm:$0xff]
    %v1195 = vld [vmem:[%s3 + $0x3f0] sm:$0xff]
    %v1196 = vld [vmem:[%s3 + $0x3f8] sm:$0xff]
    %v1197 = vld [vmem:[%s3 + $0x400] sm:$0xff]
    %v1198 = vld [vmem:[%s3 + $0x408] sm:$0xff]
    %v1199 = vld [vmem:[%s3 + $0x410] sm:$0xff]
    %v1200 = vld [vmem:[%s3 + $0x418] sm:$0xff]
    %v1201 = vld [vmem:[%s3 + $0x420] sm:$0xff]
    %v1202 = vld [vmem:[%s3 + $0x428] sm:$0xff]
    %v1203 = vld [vmem:[%s3 + $0x430] sm:$0xff]
    %v1204 = vld [vmem:[%s3 + $0x438] sm:$0xff]
    %v1205 = vld [vmem:[%s3 + $0x440] sm:$0xff]
    %v1206 = vld [vmem:[%s3 + $0x448] sm:$0xff]
    %v1207 = vld [vmem:[%s3 + $0x450] sm:$0xff]
    %v1208 = vld [vmem:[%s3 + $0x458] sm:$0xff]
    %v1209 = vld [vmem:[%s3 + $0x460] sm:$0xff]
    %v1210 = vld [vmem:[%s3 + $0x468] sm:$0xff]
    %v1211 = vld [vmem:[%s3 + $0x470] sm:$0xff]
    %v1212 = vld [vmem:[%s3 + $0x478] sm:$0xff]
    %v1213 = vld [vmem:[%s3 + $0x480] sm:$0xff]
    %v1214 = vld [vmem:[%s3 + $0x488] sm:$0xff]
    %v1215 = vld [vmem:[%s3 + $0x490] sm:$0xff]
    %v1216 = vld [vmem:[%s3 + $0x498] sm:$0xff]
    %v1217 = vld [vmem:[%s3 + $0x4a0] sm:$0xff]
    %v1218 = vld [vmem:[%s3 + $0x4a8] sm:$0xff]
    %v1219 = vld [vmem:[%s3 + $0x4b0] sm:$0xff]
    %v1220 = vld [vmem:[%s3 + $0x4b8] sm:$0xff]
    %v1221 = vld [vmem:[%s3 + $0x4c0] sm:$0xff]
    %v1222 = vld [vmem:[%s3 + $0x4c8] sm:$0xff]
    %v1223 = vld [vmem:[%s3 + $0x4d0] sm:$0xff]
    %v1224 = vld [vmem:[%s3 + $0x4d8] sm:$0xff]
    %v1257 = vrot.slane %v1025, 1
    %v1258 = vrot.slane %v1029, 1
    %v1259 = vsel %vm698, %v1257, %v1258
    %v1260 = vrot.slane %v1026, 1
    %v1261 = vrot.slane %v1030, 1
    %v1262 = vsel %vm698, %v1260, %v1261
    %v1263 = vrot.slane %v1027, 1
    %v1264 = vrot.slane %v1031, 1
    %v1265 = vsel %vm698, %v1263, %v1264
    %v1266 = vrot.slane %v1028, 1
    %v1267 = vrot.slane %v1032, 1
    %v1268 = vsel %vm698, %v1266, %v1267
    %v1269 = vrot.slane %v1033, 1
    %v1270 = vsel %vm698, %v1258, %v1269
    %v1271 = vrot.slane %v1034, 1
    %v1272 = vsel %vm698, %v1261, %v1271
    %v1273 = vrot.slane %v1035, 1
    %v1274 = vsel %vm698, %v1264, %v1273
    %v1275 = vrot.slane %v1036, 1
    %v1276 = vsel %vm698, %v1267, %v1275
    %v1277 = vrot.slane %v1037, 1
    %v1278 = vsel %vm698, %v1269, %v1277
    %v1279 = vrot.slane %v1038, 1
    %v1280 = vsel %vm698, %v1271, %v1279
    %v1281 = vrot.slane %v1039, 1
    %v1282 = vsel %vm698, %v1273, %v1281
    %v1283 = vrot.slane %v1040, 1
    %v1284 = vsel %vm698, %v1275, %v1283
    %v1285 = vrot.slane %v1041, 1
    %v1286 = vrot.slane %v1045, 1
    %v1287 = vsel %vm698, %v1285, %v1286
    %v1288 = vrot.slane %v1042, 1
    %v1289 = vrot.slane %v1046, 1
    %v1290 = vsel %vm698, %v1288, %v1289
    %v1291 = vrot.slane %v1043, 1
    %v1292 = vrot.slane %v1047, 1
    %v1293 = vsel %vm698, %v1291, %v1292
    %v1294 = vrot.slane %v1044, 1
    %v1295 = vrot.slane %v1048, 1
    %v1296 = vsel %vm698, %v1294, %v1295
    %v1297 = vrot.slane %v1049, 1
    %v1298 = vsel %vm698, %v1286, %v1297
    %v1299 = vrot.slane %v1050, 1
    %v1300 = vsel %vm698, %v1289, %v1299
    %v1301 = vrot.slane %v1051, 1
    %v1302 = vsel %vm698, %v1292, %v1301
    %v1303 = vrot.slane %v1052, 1
    %v1304 = vsel %vm698, %v1295, %v1303
    %v1305 = vrot.slane %v1053, 1
    %v1306 = vsel %vm698, %v1297, %v1305
    %v1307 = vrot.slane %v1054, 1
    %v1308 = vsel %vm698, %v1299, %v1307
    %v1309 = vrot.slane %v1055, 1
    %v1310 = vsel %vm698, %v1301, %v1309
    %v1311 = vrot.slane %v1056, 1
    %v1312 = vsel %vm698, %v1303, %v1311
    %v1337 = vpack.c.bf16 %v1270, %v1259
    %v1338 = vpack.c.bf16 %v1272, %v1262
    %v1339 = vpack.c.bf16 %v1274, %v1265
    %v1340 = vpack.c.bf16 %v1276, %v1268
    %v1341 = vpack.c.bf16 %v1287, %v1278
    %v1342 = vpack.c.bf16 %v1290, %v1280
    %v1343 = vpack.c.bf16 %v1293, %v1282
    %v1344 = vpack.c.bf16 %v1296, %v1284
    %v1345 = vpack.c.bf16 %v1306, %v1298
    %v1346 = vpack.c.bf16 %v1308, %v1300
    %v1347 = vpack.c.bf16 %v1310, %v1302
    %v1348 = vpack.c.bf16 %v1312, %v1304
    %s1349 = scalar_lea.vmem %s3, 1248
    %v1350 = vld [vmem:[%s1349] sm:$0xff]
    %v1351 = vld [vmem:[%s1349 + $0x8] sm:$0xff]
    %v1352 = vld [vmem:[%s1349 + $0x10] sm:$0xff]
    %v1353 = vld [vmem:[%s1349 + $0x18] sm:$0xff]
    %v1354 = vld [vmem:[%s1349 + $0x20] sm:$0xff]
    %v1355 = vld [vmem:[%s1349 + $0x28] sm:$0xff]
    %v1356 = vld [vmem:[%s1349 + $0x30] sm:$0xff]
    %v1357 = vld [vmem:[%s1349 + $0x38] sm:$0xff]
    %v1358 = vld [vmem:[%s1349 + $0x40] sm:$0xff]
    %v1359 = vld [vmem:[%s1349 + $0x48] sm:$0xff]
    %v1360 = vld [vmem:[%s1349 + $0x50] sm:$0xff]
    %v1361 = vld [vmem:[%s1349 + $0x58] sm:$0xff]
    %v1362 = vld [vmem:[%s1349 + $0x60] sm:$0xff]
    %v1363 = vld [vmem:[%s1349 + $0x68] sm:$0xff]
    %v1364 = vld [vmem:[%s1349 + $0x70] sm:$0xff]
    %v1365 = vld [vmem:[%s1349 + $0x78] sm:$0xff]
    %v1366 = vld [vmem:[%s1349 + $0x80] sm:$0xff]
    %v1367 = vld [vmem:[%s1349 + $0x88] sm:$0xff]
    %v1368 = vld [vmem:[%s1349 + $0x90] sm:$0xff]
    %v1369 = vld [vmem:[%s1349 + $0x98] sm:$0xff]
    %v1370 = vld [vmem:[%s1349 + $0xa0] sm:$0xff]
    %v1371 = vld [vmem:[%s1349 + $0xa8] sm:$0xff]
    %v1372 = vld [vmem:[%s1349 + $0xb0] sm:$0xff]
    %v1373 = vld [vmem:[%s1349 + $0xb8] sm:$0xff]
    %v1374 = vld [vmem:[%s1349 + $0xc0] sm:$0xff]
    %v1375 = vld [vmem:[%s1349 + $0xc8] sm:$0xff]
    %v1376 = vld [vmem:[%s1349 + $0xd0] sm:$0xff]
    %v1377 = vld [vmem:[%s1349 + $0xd8] sm:$0xff]
    %v1378 = vld [vmem:[%s1349 + $0xe0] sm:$0xff]
    %v1379 = vld [vmem:[%s1349 + $0xe8] sm:$0xff]
    %v1380 = vld [vmem:[%s1349 + $0xf0] sm:$0xff]
    %v1381 = vld [vmem:[%s1349 + $0xf8] sm:$0xff]
    %v1382 = vld [vmem:[%s1349 + $0x100] sm:$0xff]
    %v1383 = vld [vmem:[%s1349 + $0x108] sm:$0xff]
    %v1384 = vld [vmem:[%s1349 + $0x110] sm:$0xff]
    %v1385 = vld [vmem:[%s1349 + $0x118] sm:$0xff]
    %v1386 = vld [vmem:[%s1349 + $0x120] sm:$0xff]
    %v1387 = vld [vmem:[%s1349 + $0x128] sm:$0xff]
    %v1388 = vld [vmem:[%s1349 + $0x130] sm:$0xff]
    %v1389 = vld [vmem:[%s1349 + $0x138] sm:$0xff]
    %v1390 = vld [vmem:[%s1349 + $0x140] sm:$0xff]
    %v1391 = vld [vmem:[%s1349 + $0x148] sm:$0xff]
    %v1392 = vld [vmem:[%s1349 + $0x150] sm:$0xff]
    %v1393 = vld [vmem:[%s1349 + $0x158] sm:$0xff]
    %v1394 = vld [vmem:[%s1349 + $0x160] sm:$0xff]
    %v1395 = vld [vmem:[%s1349 + $0x168] sm:$0xff]
    %v1396 = vld [vmem:[%s1349 + $0x170] sm:$0xff]
    %v1397 = vld [vmem:[%s1349 + $0x178] sm:$0xff]
    %v1398 = vld [vmem:[%s1349 + $0x180] sm:$0xff]
    %v1399 = vld [vmem:[%s1349 + $0x188] sm:$0xff]
    %v1400 = vld [vmem:[%s1349 + $0x190] sm:$0xff]
    %v1401 = vld [vmem:[%s1349 + $0x198] sm:$0xff]
    %v1402 = vld [vmem:[%s1349 + $0x1a0] sm:$0xff]
    %v1403 = vld [vmem:[%s1349 + $0x1a8] sm:$0xff]
    %v1404 = vld [vmem:[%s1349 + $0x1b0] sm:$0xff]
    %v1405 = vld [vmem:[%s1349 + $0x1b8] sm:$0xff]
    %v1406 = vld [vmem:[%s1349 + $0x1c0] sm:$0xff]
    %v1407 = vld [vmem:[%s1349 + $0x1c8] sm:$0xff]
    %v1408 = vld [vmem:[%s1349 + $0x1d0] sm:$0xff]
    %v1409 = vld [vmem:[%s1349 + $0x1d8] sm:$0xff]
    %v1410 = vld [vmem:[%s1349 + $0x1e0] sm:$0xff]
    %v1411 = vld [vmem:[%s1349 + $0x1e8] sm:$0xff]
    %v1412 = vld [vmem:[%s1349 + $0x1f0] sm:$0xff]
    %v1413 = vld [vmem:[%s1349 + $0x1f8] sm:$0xff]
    %v1414 = vld [vmem:[%s1349 + $0x200] sm:$0xff]
    %v1415 = vld [vmem:[%s1349 + $0x208] sm:$0xff]
    %v1416 = vld [vmem:[%s1349 + $0x210] sm:$0xff]
    %v1417 = vld [vmem:[%s1349 + $0x218] sm:$0xff]
    %v1418 = vld [vmem:[%s1349 + $0x220] sm:$0xff]
    %v1419 = vld [vmem:[%s1349 + $0x228] sm:$0xff]
    %v1420 = vld [vmem:[%s1349 + $0x230] sm:$0xff]
    %v1421 = vld [vmem:[%s1349 + $0x238] sm:$0xff]
    %v1422 = vld [vmem:[%s1349 + $0x240] sm:$0xff]
    %v1423 = vld [vmem:[%s1349 + $0x248] sm:$0xff]
    %v1424 = vld [vmem:[%s1349 + $0x250] sm:$0xff]
    %v1425 = vld [vmem:[%s1349 + $0x258] sm:$0xff]
    %v1426 = vld [vmem:[%s1349 + $0x260] sm:$0xff]
    %v1427 = vld [vmem:[%s1349 + $0x268] sm:$0xff]
    %v1428 = vld [vmem:[%s1349 + $0x270] sm:$0xff]
    %v1429 = vld [vmem:[%s1349 + $0x278] sm:$0xff]
    %v1430 = vld [vmem:[%s1349 + $0x280] sm:$0xff]
    %v1431 = vld [vmem:[%s1349 + $0x288] sm:$0xff]
    %v1432 = vld [vmem:[%s1349 + $0x290] sm:$0xff]
    %v1433 = vld [vmem:[%s1349 + $0x298] sm:$0xff]
    %v1434 = vld [vmem:[%s1349 + $0x2a0] sm:$0xff]
    %v1435 = vld [vmem:[%s1349 + $0x2a8] sm:$0xff]
    %v1436 = vld [vmem:[%s1349 + $0x2b0] sm:$0xff]
    %v1437 = vld [vmem:[%s1349 + $0x2b8] sm:$0xff]
    %v1438 = vld [vmem:[%s1349 + $0x2c0] sm:$0xff]
    %v1439 = vld [vmem:[%s1349 + $0x2c8] sm:$0xff]
    %v1440 = vld [vmem:[%s1349 + $0x2d0] sm:$0xff]
    %v1441 = vld [vmem:[%s1349 + $0x2d8] sm:$0xff]
    %v1442 = vld [vmem:[%s1349 + $0x2e0] sm:$0xff]
    %v1443 = vld [vmem:[%s1349 + $0x2e8] sm:$0xff]
    %v1444 = vld [vmem:[%s1349 + $0x2f0] sm:$0xff]
    %v1445 = vld [vmem:[%s1349 + $0x2f8] sm:$0xff]
    %v1446 = vld [vmem:[%s1349 + $0x300] sm:$0xff]
    %v1447 = vld [vmem:[%s1349 + $0x308] sm:$0xff]
    %v1448 = vld [vmem:[%s1349 + $0x310] sm:$0xff]
    %v1449 = vld [vmem:[%s1349 + $0x318] sm:$0xff]
    %v1450 = vld [vmem:[%s1349 + $0x320] sm:$0xff]
    %v1451 = vld [vmem:[%s1349 + $0x328] sm:$0xff]
    %v1452 = vld [vmem:[%s1349 + $0x330] sm:$0xff]
    %v1453 = vld [vmem:[%s1349 + $0x338] sm:$0xff]
    %v1454 = vld [vmem:[%s1349 + $0x340] sm:$0xff]
    %v1455 = vld [vmem:[%s1349 + $0x348] sm:$0xff]
    %v1456 = vld [vmem:[%s1349 + $0x350] sm:$0xff]
    %v1457 = vld [vmem:[%s1349 + $0x358] sm:$0xff]
    %v1458 = vld [vmem:[%s1349 + $0x360] sm:$0xff]
    %v1459 = vld [vmem:[%s1349 + $0x368] sm:$0xff]
    %v1460 = vld [vmem:[%s1349 + $0x370] sm:$0xff]
    %v1461 = vld [vmem:[%s1349 + $0x378] sm:$0xff]
    %v1462 = vld [vmem:[%s1349 + $0x380] sm:$0xff]
    %v1463 = vld [vmem:[%s1349 + $0x388] sm:$0xff]
    %v1464 = vld [vmem:[%s1349 + $0x390] sm:$0xff]
    %v1465 = vld [vmem:[%s1349 + $0x398] sm:$0xff]
    %v1466 = vld [vmem:[%s1349 + $0x3a0] sm:$0xff]
    %v1467 = vld [vmem:[%s1349 + $0x3a8] sm:$0xff]
    %v1468 = vld [vmem:[%s1349 + $0x3b0] sm:$0xff]
    %v1469 = vld [vmem:[%s1349 + $0x3b8] sm:$0xff]
    %v1470 = vld [vmem:[%s1349 + $0x3c0] sm:$0xff]
    %v1471 = vld [vmem:[%s1349 + $0x3c8] sm:$0xff]
    %v1472 = vld [vmem:[%s1349 + $0x3d0] sm:$0xff]
    %v1473 = vld [vmem:[%s1349 + $0x3d8] sm:$0xff]
    %v1474 = vld [vmem:[%s1349 + $0x3e0] sm:$0xff]
    %v1475 = vld [vmem:[%s1349 + $0x3e8] sm:$0xff]
    %v1476 = vld [vmem:[%s1349 + $0x3f0] sm:$0xff]
    %v1477 = vld [vmem:[%s1349 + $0x3f8] sm:$0xff]
    %v1478 = vld [vmem:[%s1349 + $0x400] sm:$0xff]
    %v1479 = vld [vmem:[%s1349 + $0x408] sm:$0xff]
    %v1480 = vld [vmem:[%s1349 + $0x410] sm:$0xff]
    %v1481 = vld [vmem:[%s1349 + $0x418] sm:$0xff]
    %v1482 = vld [vmem:[%s1349 + $0x420] sm:$0xff]
    %v1483 = vld [vmem:[%s1349 + $0x428] sm:$0xff]
    %v1484 = vld [vmem:[%s1349 + $0x430] sm:$0xff]
    %v1485 = vld [vmem:[%s1349 + $0x438] sm:$0xff]
    %v1486 = vld [vmem:[%s1349 + $0x440] sm:$0xff]
    %v1487 = vld [vmem:[%s1349 + $0x448] sm:$0xff]
    %v1488 = vld [vmem:[%s1349 + $0x450] sm:$0xff]
    %v1489 = vld [vmem:[%s1349 + $0x458] sm:$0xff]
    %v1490 = vld [vmem:[%s1349 + $0x460] sm:$0xff]
    %v1491 = vld [vmem:[%s1349 + $0x468] sm:$0xff]
    %v1492 = vld [vmem:[%s1349 + $0x470] sm:$0xff]
    %v1493 = vld [vmem:[%s1349 + $0x478] sm:$0xff]
    %v1494 = vld [vmem:[%s1349 + $0x480] sm:$0xff]
    %v1495 = vld [vmem:[%s1349 + $0x488] sm:$0xff]
    %v1496 = vld [vmem:[%s1349 + $0x490] sm:$0xff]
    %v1497 = vld [vmem:[%s1349 + $0x498] sm:$0xff]
    %v1498 = vld [vmem:[%s1349 + $0x4a0] sm:$0xff]
    %v1499 = vld [vmem:[%s1349 + $0x4a8] sm:$0xff]
    %v1500 = vld [vmem:[%s1349 + $0x4b0] sm:$0xff]
    %v1501 = vld [vmem:[%s1349 + $0x4b8] sm:$0xff]
    %v1502 = vld [vmem:[%s1349 + $0x4c0] sm:$0xff]
    %v1503 = vld [vmem:[%s1349 + $0x4c8] sm:$0xff]
    %v1504 = vld [vmem:[%s1349 + $0x4d0] sm:$0xff]
    %v1505 = vld [vmem:[%s1349 + $0x4d8] sm:$0xff]
    %v1662 = vunpack.c.l.b16 %v1350
    %v1663 = vunpack.c.h.b16 %v1350
    %v1664 = vunpack.c.l.b16 %v1351
    %v1665 = vunpack.c.h.b16 %v1351
    %v1666 = vunpack.c.l.b16 %v1352
    %v1667 = vunpack.c.h.b16 %v1352
    %v1668 = vunpack.c.l.b16 %v1353
    %v1669 = vunpack.c.h.b16 %v1353
    %v1670 = vunpack.c.l.b16 %v1354
    %v1671 = vunpack.c.h.b16 %v1354
    %v1672 = vunpack.c.l.b16 %v1355
    %v1673 = vunpack.c.h.b16 %v1355
    %v1674 = vunpack.c.l.b16 %v1356
    %v1675 = vunpack.c.h.b16 %v1356
    %v1676 = vunpack.c.l.b16 %v1357
    %v1677 = vunpack.c.h.b16 %v1357
    %v1678 = vunpack.c.l.b16 %v1358
    %v1679 = vunpack.c.h.b16 %v1358
    %v1680 = vunpack.c.l.b16 %v1359
    %v1681 = vunpack.c.h.b16 %v1359
    %v1682 = vunpack.c.l.b16 %v1360
    %v1683 = vunpack.c.h.b16 %v1360
    %v1684 = vunpack.c.l.b16 %v1361
    %v1685 = vunpack.c.h.b16 %v1361
    %v1686 = vunpack.c.l.b16 %v1362
    %v1687 = vunpack.c.h.b16 %v1362
    %v1688 = vunpack.c.l.b16 %v1363
    %v1689 = vunpack.c.h.b16 %v1363
    %v1690 = vunpack.c.l.b16 %v1364
    %v1691 = vunpack.c.h.b16 %v1364
    %v1692 = vunpack.c.l.b16 %v1365
    %v1693 = vunpack.c.h.b16 %v1365
    %v1694 = vunpack.c.l.b16 %v1366
    %v1695 = vunpack.c.h.b16 %v1366
    %v1696 = vunpack.c.l.b16 %v1367
    %v1697 = vunpack.c.h.b16 %v1367
    %v1698 = vunpack.c.l.b16 %v1368
    %v1699 = vunpack.c.h.b16 %v1368
    %v1700 = vunpack.c.l.b16 %v1369
    %v1701 = vunpack.c.h.b16 %v1369
    %v1702 = vunpack.c.l.b16 %v1370
    %v1703 = vunpack.c.h.b16 %v1370
    %v1704 = vunpack.c.l.b16 %v1371
    %v1705 = vunpack.c.h.b16 %v1371
    %v1706 = vunpack.c.l.b16 %v1372
    %v1707 = vunpack.c.h.b16 %v1372
    %v1708 = vunpack.c.l.b16 %v1373
    %v1709 = vunpack.c.h.b16 %v1373
    %v1710 = vunpack.c.l.b16 %v1374
    %v1711 = vunpack.c.h.b16 %v1374
    %v1712 = vunpack.c.l.b16 %v1375
    %v1713 = vunpack.c.h.b16 %v1375
    %v1714 = vunpack.c.l.b16 %v1376
    %v1715 = vunpack.c.h.b16 %v1376
    %v1716 = vunpack.c.l.b16 %v1377
    %v1717 = vunpack.c.h.b16 %v1377
    %v1718 = vunpack.c.l.b16 %v1378
    %v1719 = vunpack.c.h.b16 %v1378
    %v1720 = vunpack.c.l.b16 %v1379
    %v1721 = vunpack.c.h.b16 %v1379
    %v1722 = vunpack.c.l.b16 %v1380
    %v1723 = vunpack.c.h.b16 %v1380
    %v1724 = vunpack.c.l.b16 %v1381
    %v1725 = vunpack.c.h.b16 %v1381
    %v1726 = vunpack.c.l.b16 %v1382
    %v1727 = vunpack.c.h.b16 %v1382
    %v1728 = vunpack.c.l.b16 %v1383
    %v1729 = vunpack.c.h.b16 %v1383
    %v1730 = vunpack.c.l.b16 %v1384
    %v1731 = vunpack.c.h.b16 %v1384
    %v1732 = vunpack.c.l.b16 %v1385
    %v1733 = vunpack.c.h.b16 %v1385
    %v1734 = vunpack.c.l.b16 %v1386
    %v1735 = vunpack.c.h.b16 %v1386
    %v1736 = vunpack.c.l.b16 %v1387
    %v1737 = vunpack.c.h.b16 %v1387
    %v1738 = vunpack.c.l.b16 %v1388
    %v1739 = vunpack.c.h.b16 %v1388
    %v1740 = vunpack.c.l.b16 %v1389
    %v1741 = vunpack.c.h.b16 %v1389
    %v1742 = vunpack.c.l.b16 %v1390
    %v1743 = vunpack.c.h.b16 %v1390
    %v1744 = vunpack.c.l.b16 %v1391
    %v1745 = vunpack.c.h.b16 %v1391
    %v1746 = vunpack.c.l.b16 %v1392
    %v1747 = vunpack.c.h.b16 %v1392
    %v1748 = vunpack.c.l.b16 %v1393
    %v1749 = vunpack.c.h.b16 %v1393
    %v1750 = vunpack.c.l.b16 %v1394
    %v1751 = vunpack.c.h.b16 %v1394
    %v1752 = vunpack.c.l.b16 %v1395
    %v1753 = vunpack.c.h.b16 %v1395
    %v1754 = vunpack.c.l.b16 %v1396
    %v1755 = vunpack.c.h.b16 %v1396
    %v1756 = vunpack.c.l.b16 %v1397
    %v1757 = vunpack.c.h.b16 %v1397
    %v1758 = vunpack.c.l.b16 %v1398
    %v1759 = vunpack.c.h.b16 %v1398
    %v1760 = vunpack.c.l.b16 %v1399
    %v1761 = vunpack.c.h.b16 %v1399
    %v1762 = vunpack.c.l.b16 %v1400
    %v1763 = vunpack.c.h.b16 %v1400
    %v1764 = vunpack.c.l.b16 %v1401
    %v1765 = vunpack.c.h.b16 %v1401
    %v1766 = vunpack.c.l.b16 %v1402
    %v1767 = vunpack.c.h.b16 %v1402
    %v1768 = vunpack.c.l.b16 %v1403
    %v1769 = vunpack.c.h.b16 %v1403
    %v1770 = vunpack.c.l.b16 %v1404
    %v1771 = vunpack.c.h.b16 %v1404
    %v1772 = vunpack.c.l.b16 %v1405
    %v1773 = vunpack.c.h.b16 %v1405
    %v1774 = vunpack.c.l.b16 %v1406
    %v1775 = vunpack.c.h.b16 %v1406
    %v1776 = vunpack.c.l.b16 %v1407
    %v1777 = vunpack.c.h.b16 %v1407
    %v1778 = vunpack.c.l.b16 %v1408
    %v1779 = vunpack.c.h.b16 %v1408
    %v1780 = vunpack.c.l.b16 %v1409
    %v1781 = vunpack.c.h.b16 %v1409
    %v1782 = vunpack.c.l.b16 %v1410
    %v1783 = vunpack.c.h.b16 %v1410
    %v1784 = vunpack.c.l.b16 %v1411
    %v1785 = vunpack.c.h.b16 %v1411
    %v1786 = vunpack.c.l.b16 %v1412
    %v1787 = vunpack.c.h.b16 %v1412
    %v1788 = vunpack.c.l.b16 %v1413
    %v1789 = vunpack.c.h.b16 %v1413
    %v1790 = vunpack.c.l.b16 %v1414
    %v1791 = vunpack.c.h.b16 %v1414
    %v1792 = vunpack.c.l.b16 %v1415
    %v1793 = vunpack.c.h.b16 %v1415
    %v1794 = vunpack.c.l.b16 %v1416
    %v1795 = vunpack.c.h.b16 %v1416
    %v1796 = vunpack.c.l.b16 %v1417
    %v1797 = vunpack.c.h.b16 %v1417
    %v1798 = vunpack.c.l.b16 %v1418
    %v1799 = vunpack.c.h.b16 %v1418
    %v1800 = vunpack.c.l.b16 %v1419
    %v1801 = vunpack.c.h.b16 %v1419
    %v1802 = vunpack.c.l.b16 %v1420
    %v1803 = vunpack.c.h.b16 %v1420
    %v1804 = vunpack.c.l.b16 %v1421
    %v1805 = vunpack.c.h.b16 %v1421
    %v1806 = vunpack.c.l.b16 %v1422
    %v1807 = vunpack.c.h.b16 %v1422
    %v1808 = vunpack.c.l.b16 %v1423
    %v1809 = vunpack.c.h.b16 %v1423
    %v1810 = vunpack.c.l.b16 %v1424
    %v1811 = vunpack.c.h.b16 %v1424
    %v1812 = vunpack.c.l.b16 %v1425
    %v1813 = vunpack.c.h.b16 %v1425
    %v1814 = vunpack.c.l.b16 %v1426
    %v1815 = vunpack.c.h.b16 %v1426
    %v1816 = vunpack.c.l.b16 %v1427
    %v1817 = vunpack.c.h.b16 %v1427
    %v1818 = vunpack.c.l.b16 %v1428
    %v1819 = vunpack.c.h.b16 %v1428
    %v1820 = vunpack.c.l.b16 %v1429
    %v1821 = vunpack.c.h.b16 %v1429
    %v1822 = vunpack.c.l.b16 %v1430
    %v1823 = vunpack.c.h.b16 %v1430
    %v1824 = vunpack.c.l.b16 %v1431
    %v1825 = vunpack.c.h.b16 %v1431
    %v1826 = vunpack.c.l.b16 %v1432
    %v1827 = vunpack.c.h.b16 %v1432
    %v1828 = vunpack.c.l.b16 %v1433
    %v1829 = vunpack.c.h.b16 %v1433
    %v1830 = vunpack.c.l.b16 %v1434
    %v1831 = vunpack.c.h.b16 %v1434
    %v1832 = vunpack.c.l.b16 %v1435
    %v1833 = vunpack.c.h.b16 %v1435
    %v1834 = vunpack.c.l.b16 %v1436
    %v1835 = vunpack.c.h.b16 %v1436
    %v1836 = vunpack.c.l.b16 %v1437
    %v1837 = vunpack.c.h.b16 %v1437
    %v1838 = vunpack.c.l.b16 %v1438
    %v1839 = vunpack.c.h.b16 %v1438
    %v1840 = vunpack.c.l.b16 %v1439
    %v1841 = vunpack.c.h.b16 %v1439
    %v1842 = vunpack.c.l.b16 %v1440
    %v1843 = vunpack.c.h.b16 %v1440
    %v1844 = vunpack.c.l.b16 %v1441
    %v1845 = vunpack.c.h.b16 %v1441
    %v1846 = vunpack.c.l.b16 %v1442
    %v1847 = vunpack.c.h.b16 %v1442
    %v1848 = vunpack.c.l.b16 %v1443
    %v1849 = vunpack.c.h.b16 %v1443
    %v1850 = vunpack.c.l.b16 %v1444
    %v1851 = vunpack.c.h.b16 %v1444
    %v1852 = vunpack.c.l.b16 %v1445
    %v1853 = vunpack.c.h.b16 %v1445
    %v1854 = vunpack.c.l.b16 %v1446
    %v1855 = vunpack.c.h.b16 %v1446
    %v1856 = vunpack.c.l.b16 %v1447
    %v1857 = vunpack.c.h.b16 %v1447
    %v1858 = vunpack.c.l.b16 %v1448
    %v1859 = vunpack.c.h.b16 %v1448
    %v1860 = vunpack.c.l.b16 %v1449
    %v1861 = vunpack.c.h.b16 %v1449
    %v1862 = vunpack.c.l.b16 %v1450
    %v1863 = vunpack.c.h.b16 %v1450
    %v1864 = vunpack.c.l.b16 %v1451
    %v1865 = vunpack.c.h.b16 %v1451
    %v1866 = vunpack.c.l.b16 %v1452
    %v1867 = vunpack.c.h.b16 %v1452
    %v1868 = vunpack.c.l.b16 %v1453
    %v1869 = vunpack.c.h.b16 %v1453
    %v1870 = vunpack.c.l.b16 %v1454
    %v1871 = vunpack.c.h.b16 %v1454
    %v1872 = vunpack.c.l.b16 %v1455
    %v1873 = vunpack.c.h.b16 %v1455
    %v1874 = vunpack.c.l.b16 %v1456
    %v1875 = vunpack.c.h.b16 %v1456
    %v1876 = vunpack.c.l.b16 %v1457
    %v1877 = vunpack.c.h.b16 %v1457
    %v1878 = vunpack.c.l.b16 %v1458
    %v1879 = vunpack.c.h.b16 %v1458
    %v1880 = vunpack.c.l.b16 %v1459
    %v1881 = vunpack.c.h.b16 %v1459
    %v1882 = vunpack.c.l.b16 %v1460
    %v1883 = vunpack.c.h.b16 %v1460
    %v1884 = vunpack.c.l.b16 %v1461
    %v1885 = vunpack.c.h.b16 %v1461
    %v1886 = vunpack.c.l.b16 %v1462
    %v1887 = vunpack.c.h.b16 %v1462
    %v1888 = vunpack.c.l.b16 %v1463
    %v1889 = vunpack.c.h.b16 %v1463
    %v1890 = vunpack.c.l.b16 %v1464
    %v1891 = vunpack.c.h.b16 %v1464
    %v1892 = vunpack.c.l.b16 %v1465
    %v1893 = vunpack.c.h.b16 %v1465
    %v1894 = vunpack.c.l.b16 %v1466
    %v1895 = vunpack.c.h.b16 %v1466
    %v1896 = vunpack.c.l.b16 %v1467
    %v1897 = vunpack.c.h.b16 %v1467
    %v1898 = vunpack.c.l.b16 %v1468
    %v1899 = vunpack.c.h.b16 %v1468
    %v1900 = vunpack.c.l.b16 %v1469
    %v1901 = vunpack.c.h.b16 %v1469
    %v1902 = vunpack.c.l.b16 %v1470
    %v1903 = vunpack.c.h.b16 %v1470
    %v1904 = vunpack.c.l.b16 %v1471
    %v1905 = vunpack.c.h.b16 %v1471
    %v1906 = vunpack.c.l.b16 %v1472
    %v1907 = vunpack.c.h.b16 %v1472
    %v1908 = vunpack.c.l.b16 %v1473
    %v1909 = vunpack.c.h.b16 %v1473
    %v1910 = vunpack.c.l.b16 %v1474
    %v1911 = vunpack.c.h.b16 %v1474
    %v1912 = vunpack.c.l.b16 %v1475
    %v1913 = vunpack.c.h.b16 %v1475
    %v1914 = vunpack.c.l.b16 %v1476
    %v1915 = vunpack.c.h.b16 %v1476
    %v1916 = vunpack.c.l.b16 %v1477
    %v1917 = vunpack.c.h.b16 %v1477
    %v1918 = vunpack.c.l.b16 %v1478
    %v1919 = vunpack.c.h.b16 %v1478
    %v1920 = vunpack.c.l.b16 %v1479
    %v1921 = vunpack.c.h.b16 %v1479
    %v1922 = vunpack.c.l.b16 %v1480
    %v1923 = vunpack.c.h.b16 %v1480
    %v1924 = vunpack.c.l.b16 %v1481
    %v1925 = vunpack.c.h.b16 %v1481
    %v1926 = vunpack.c.l.b16 %v1482
    %v1927 = vunpack.c.h.b16 %v1482
    %v1928 = vunpack.c.l.b16 %v1483
    %v1929 = vunpack.c.h.b16 %v1483
    %v1930 = vunpack.c.l.b16 %v1484
    %v1931 = vunpack.c.h.b16 %v1484
    %v1932 = vunpack.c.l.b16 %v1485
    %v1933 = vunpack.c.h.b16 %v1485
    %v1934 = vunpack.c.l.b16 %v1486
    %v1935 = vunpack.c.h.b16 %v1486
    %v1936 = vunpack.c.l.b16 %v1487
    %v1937 = vunpack.c.h.b16 %v1487
    %v1938 = vunpack.c.l.b16 %v1488
    %v1939 = vunpack.c.h.b16 %v1488
    %v1940 = vunpack.c.l.b16 %v1489
    %v1941 = vunpack.c.h.b16 %v1489
    %v1942 = vunpack.c.l.b16 %v1490
    %v1943 = vunpack.c.h.b16 %v1490
    %v1944 = vunpack.c.l.b16 %v1491
    %v1945 = vunpack.c.h.b16 %v1491
    %v1946 = vunpack.c.l.b16 %v1492
    %v1947 = vunpack.c.h.b16 %v1492
    %v1948 = vunpack.c.l.b16 %v1493
    %v1949 = vunpack.c.h.b16 %v1493
    %v1950 = vunpack.c.l.b16 %v1494
    %v1951 = vunpack.c.h.b16 %v1494
    %v1952 = vunpack.c.l.b16 %v1495
    %v1953 = vunpack.c.h.b16 %v1495
    %v1954 = vunpack.c.l.b16 %v1496
    %v1955 = vunpack.c.h.b16 %v1496
    %v1956 = vunpack.c.l.b16 %v1497
    %v1957 = vunpack.c.h.b16 %v1497
    %v1958 = vunpack.c.l.b16 %v1498
    %v1959 = vunpack.c.h.b16 %v1498
    %v1960 = vunpack.c.l.b16 %v1499
    %v1961 = vunpack.c.h.b16 %v1499
    %v1962 = vunpack.c.l.b16 %v1500
    %v1963 = vunpack.c.h.b16 %v1500
    %v1964 = vunpack.c.l.b16 %v1501
    %v1965 = vunpack.c.h.b16 %v1501
    %v1966 = vunpack.c.l.b16 %v1502
    %v1967 = vunpack.c.h.b16 %v1502
    %v1968 = vunpack.c.l.b16 %v1503
    %v1969 = vunpack.c.h.b16 %v1503
    %v1970 = vunpack.c.l.b16 %v1504
    %v1971 = vunpack.c.h.b16 %v1504
    %v1972 = vunpack.c.l.b16 %v1505
    %v1973 = vunpack.c.h.b16 %v1505
    %v1974 = vpack.c.b16 %v1668, %v1662
    %v1975 = vpack.c.b16 %v1669, %v1663
    %v1976 = vpack.c.b16 %v1670, %v1664
    %v1977 = vpack.c.b16 %v1671, %v1665
    %v1978 = vpack.c.b16 %v1672, %v1666
    %v1979 = vpack.c.b16 %v1673, %v1667
    %v1980 = vpack.c.b16 %v1680, %v1674
    %v1981 = vpack.c.b16 %v1681, %v1675
    %v1982 = vpack.c.b16 %v1682, %v1676
    %v1983 = vpack.c.b16 %v1683, %v1677
    %v1984 = vpack.c.b16 %v1684, %v1678
    %v1985 = vpack.c.b16 %v1685, %v1679
    %v1986 = vpack.c.b16 %v1692, %v1686
    %v1987 = vpack.c.b16 %v1693, %v1687
    %v1988 = vpack.c.b16 %v1694, %v1688
    %v1989 = vpack.c.b16 %v1695, %v1689
    %v1990 = vpack.c.b16 %v1696, %v1690
    %v1991 = vpack.c.b16 %v1697, %v1691
    %v1992 = vpack.c.b16 %v1704, %v1698
    %v1993 = vpack.c.b16 %v1705, %v1699
    %v1994 = vpack.c.b16 %v1706, %v1700
    %v1995 = vpack.c.b16 %v1707, %v1701
    %v1996 = vpack.c.b16 %v1708, %v1702
    %v1997 = vpack.c.b16 %v1709, %v1703
    %v1998 = vpack.c.b16 %v1716, %v1710
    %v1999 = vpack.c.b16 %v1717, %v1711
    %v2000 = vpack.c.b16 %v1718, %v1712
    %v2001 = vpack.c.b16 %v1719, %v1713
    %v2002 = vpack.c.b16 %v1720, %v1714
    %v2003 = vpack.c.b16 %v1721, %v1715
    %v2004 = vpack.c.b16 %v1728, %v1722
    %v2005 = vpack.c.b16 %v1729, %v1723
    %v2006 = vpack.c.b16 %v1730, %v1724
    %v2007 = vpack.c.b16 %v1731, %v1725
    %v2008 = vpack.c.b16 %v1732, %v1726
    %v2009 = vpack.c.b16 %v1733, %v1727
    %v2010 = vpack.c.b16 %v1740, %v1734
    %v2011 = vpack.c.b16 %v1741, %v1735
    %v2012 = vpack.c.b16 %v1742, %v1736
    %v2013 = vpack.c.b16 %v1743, %v1737
    %v2014 = vpack.c.b16 %v1744, %v1738
    %v2015 = vpack.c.b16 %v1745, %v1739
    %v2016 = vpack.c.b16 %v1752, %v1746
    %v2017 = vpack.c.b16 %v1753, %v1747
    %v2018 = vpack.c.b16 %v1754, %v1748
    %v2019 = vpack.c.b16 %v1755, %v1749
    %v2020 = vpack.c.b16 %v1756, %v1750
    %v2021 = vpack.c.b16 %v1757, %v1751
    %v2022 = vpack.c.b16 %v1764, %v1758
    %v2023 = vpack.c.b16 %v1765, %v1759
    %v2024 = vpack.c.b16 %v1766, %v1760
    %v2025 = vpack.c.b16 %v1767, %v1761
    %v2026 = vpack.c.b16 %v1768, %v1762
    %v2027 = vpack.c.b16 %v1769, %v1763
    %v2028 = vpack.c.b16 %v1776, %v1770
    %v2029 = vpack.c.b16 %v1777, %v1771
    %v2030 = vpack.c.b16 %v1778, %v1772
    %v2031 = vpack.c.b16 %v1779, %v1773
    %v2032 = vpack.c.b16 %v1780, %v1774
    %v2033 = vpack.c.b16 %v1781, %v1775
    %v2034 = vpack.c.b16 %v1788, %v1782
    %v2035 = vpack.c.b16 %v1789, %v1783
    %v2036 = vpack.c.b16 %v1790, %v1784
    %v2037 = vpack.c.b16 %v1791, %v1785
    %v2038 = vpack.c.b16 %v1792, %v1786
    %v2039 = vpack.c.b16 %v1793, %v1787
    %v2040 = vpack.c.b16 %v1800, %v1794
    %v2041 = vpack.c.b16 %v1801, %v1795
    %v2042 = vpack.c.b16 %v1802, %v1796
    %v2043 = vpack.c.b16 %v1803, %v1797
    %v2044 = vpack.c.b16 %v1804, %v1798
    %v2045 = vpack.c.b16 %v1805, %v1799
    %v2046 = vpack.c.b16 %v1812, %v1806
    %v2047 = vpack.c.b16 %v1813, %v1807
    %v2048 = vpack.c.b16 %v1814, %v1808
    %v2049 = vpack.c.b16 %v1815, %v1809
    %v2050 = vpack.c.b16 %v1816, %v1810
    %v2051 = vpack.c.b16 %v1817, %v1811
    %v2052 = vpack.c.b16 %v1824, %v1818
    %v2053 = vpack.c.b16 %v1825, %v1819
    %v2054 = vpack.c.b16 %v1826, %v1820
    %v2055 = vpack.c.b16 %v1827, %v1821
    %v2056 = vpack.c.b16 %v1828, %v1822
    %v2057 = vpack.c.b16 %v1829, %v1823
    %v2058 = vpack.c.b16 %v1836, %v1830
    %v2059 = vpack.c.b16 %v1837, %v1831
    %v2060 = vpack.c.b16 %v1838, %v1832
    %v2061 = vpack.c.b16 %v1839, %v1833
    %v2062 = vpack.c.b16 %v1840, %v1834
    %v2063 = vpack.c.b16 %v1841, %v1835
    %v2064 = vpack.c.b16 %v1848, %v1842
    %v2065 = vpack.c.b16 %v1849, %v1843
    %v2066 = vpack.c.b16 %v1850, %v1844
    %v2067 = vpack.c.b16 %v1851, %v1845
    %v2068 = vpack.c.b16 %v1852, %v1846
    %v2069 = vpack.c.b16 %v1853, %v1847
    %v2070 = vpack.c.b16 %v1860, %v1854
    %v2071 = vpack.c.b16 %v1861, %v1855
    %v2072 = vpack.c.b16 %v1862, %v1856
    %v2073 = vpack.c.b16 %v1863, %v1857
    %v2074 = vpack.c.b16 %v1864, %v1858
    %v2075 = vpack.c.b16 %v1865, %v1859
    %v2076 = vpack.c.b16 %v1872, %v1866
    %v2077 = vpack.c.b16 %v1873, %v1867
    %v2078 = vpack.c.b16 %v1874, %v1868
    %v2079 = vpack.c.b16 %v1875, %v1869
    %v2080 = vpack.c.b16 %v1876, %v1870
    %v2081 = vpack.c.b16 %v1877, %v1871
    %v2082 = vpack.c.b16 %v1884, %v1878
    %v2083 = vpack.c.b16 %v1885, %v1879
    %v2084 = vpack.c.b16 %v1886, %v1880
    %v2085 = vpack.c.b16 %v1887, %v1881
    %v2086 = vpack.c.b16 %v1888, %v1882
    %v2087 = vpack.c.b16 %v1889, %v1883
    %v2088 = vpack.c.b16 %v1896, %v1890
    %v2089 = vpack.c.b16 %v1897, %v1891
    %v2090 = vpack.c.b16 %v1898, %v1892
    %v2091 = vpack.c.b16 %v1899, %v1893
    %v2092 = vpack.c.b16 %v1900, %v1894
    %v2093 = vpack.c.b16 %v1901, %v1895
    %v2094 = vpack.c.b16 %v1908, %v1902
    %v2095 = vpack.c.b16 %v1909, %v1903
    %v2096 = vpack.c.b16 %v1910, %v1904
    %v2097 = vpack.c.b16 %v1911, %v1905
    %v2098 = vpack.c.b16 %v1912, %v1906
    %v2099 = vpack.c.b16 %v1913, %v1907
    %v2100 = vpack.c.b16 %v1920, %v1914
    %v2101 = vpack.c.b16 %v1921, %v1915
    %v2102 = vpack.c.b16 %v1922, %v1916
    %v2103 = vpack.c.b16 %v1923, %v1917
    %v2104 = vpack.c.b16 %v1924, %v1918
    %v2105 = vpack.c.b16 %v1925, %v1919
    %v2106 = vpack.c.b16 %v1932, %v1926
    %v2107 = vpack.c.b16 %v1933, %v1927
    %v2108 = vpack.c.b16 %v1934, %v1928
    %v2109 = vpack.c.b16 %v1935, %v1929
    %v2110 = vpack.c.b16 %v1936, %v1930
    %v2111 = vpack.c.b16 %v1937, %v1931
    %v2112 = vpack.c.b16 %v1944, %v1938
    %v2113 = vpack.c.b16 %v1945, %v1939
    %v2114 = vpack.c.b16 %v1946, %v1940
    %v2115 = vpack.c.b16 %v1947, %v1941
    %v2116 = vpack.c.b16 %v1948, %v1942
    %v2117 = vpack.c.b16 %v1949, %v1943
    %v2118 = vpack.c.b16 %v1956, %v1950
    %v2119 = vpack.c.b16 %v1957, %v1951
    %v2120 = vpack.c.b16 %v1958, %v1952
    %v2121 = vpack.c.b16 %v1959, %v1953
    %v2122 = vpack.c.b16 %v1960, %v1954
    %v2123 = vpack.c.b16 %v1961, %v1955
    %v2124 = vpack.c.b16 %v1968, %v1962
    %v2125 = vpack.c.b16 %v1969, %v1963
    %v2126 = vpack.c.b16 %v1970, %v1964
    %v2127 = vpack.c.b16 %v1971, %v1965
    %v2128 = vpack.c.b16 %v1972, %v1966
    %v2129 = vpack.c.b16 %v1973, %v1967
    %vm2286 = vcmask 261120
    %v2288 = vsel %vm2286, %v1340, 0
    %v2291 = vsel %vm2286, %v1344, 0
    %v2294 = vsel %vm2286, %v1348, 0
    %2296 = vmatprep.subr.bf16.mxu0 %v1975
    %2297 = vmatpush1.bf16.msra.mxu0 %v1974
    %2298 = vmatprep.subr.bf16.mxu0 %v1981
    %2299 = vmatpush1.bf16.msra.mxu0 %v1980
    %2300 = vmatprep.subr.bf16.mxu0 %v1987
    %2301 = vmatpush1.bf16.msra.mxu0 %v1986
    %2302 = vmatprep.subr.bf16.mxu0 %v1993
    %2303 = vmatpush1.bf16.msra.mxu0 %v1992
    %2304 = vmatprep.subr.bf16.mxu0 %v1999
    %2305 = vmatpush1.bf16.msra.mxu0 %v1998
    %2306 = vmatprep.subr.bf16.mxu0 %v2005
    %2307 = vmatpush1.bf16.msra.mxu0 %v2004
    %2308 = vmatprep.subr.bf16.mxu0 %v2011
    %2309 = vmatpush1.bf16.msra.mxu0 %v2010
    %2310 = vmatprep.subr.bf16.mxu0 %v2017
    %2311 = vmatpush1.bf16.msra.mxu0 %v2016
    %2312 = vmatprep.subr.bf16.mxu0 %v2023
    %2313 = vmatpush1.bf16.msra.mxu0 %v2022
    %2314 = vmatprep.subr.bf16.mxu0 %v2029
    %2315 = vmatpush1.bf16.msra.mxu0 %v2028
    %2316 = vmatprep.subr.bf16.mxu0 %v2035
    %2317 = vmatpush1.bf16.msra.mxu0 %v2034
    %2318 = vmatprep.subr.bf16.mxu0 %v2041
    %2319 = vmatpush1.bf16.msra.mxu0 %v2040
    %2320 = vmatprep.subr.bf16.mxu0 %v2047
    %2321 = vmatpush1.bf16.msra.mxu0 %v2046
    %2322 = vmatprep.subr.bf16.mxu0 %v2053
    %2323 = vmatpush1.bf16.msra.mxu0 %v2052
    %2324 = vmatprep.subr.bf16.mxu0 %v2059
    %2325 = vmatpush1.bf16.msra.mxu0 %v2058
    %2326 = vmatprep.subr.bf16.mxu0 %v2065
    %2327 = vmatpush1.bf16.msra.mxu0 %v2064
    %2328 = vmatprep.mubr.bf16.mxu0 %v1338
    %2329 = vmatmul.mubr.bf16.gmra.mrb[0].mxu0 %v1337
    %v2330 = vpop.f32.mrb[0].mxu0
    %v2331 = vadd.f32 0.0, %v2330
    %v2332 = vpop.f32.mrb[0].mxu0
    %v2333 = vadd.f32 0.0, %v2332
    %v2334 = vpop.f32.mrb[0].mxu0
    %v2335 = vadd.f32 0.0, %v2334
    %v2336 = vpop.f32.mrb[0].mxu0
    %v2337 = vadd.f32 0.0, %v2336
    %2338 = vmatprep.mubr.bf16.mxu0 %v1342
    %2339 = vmatmul.mubr.bf16.gmra.mrb[0].mxu0 %v1341
    %v2340 = vpop.f32.mrb[0].mxu0
    %v2341 = vadd.f32 0.0, %v2340
    %v2342 = vpop.f32.mrb[0].mxu0
    %v2343 = vadd.f32 0.0, %v2342
    %v2344 = vpop.f32.mrb[0].mxu0
    %v2345 = vadd.f32 0.0, %v2344
    %v2346 = vpop.f32.mrb[0].mxu0
    %v2347 = vadd.f32 0.0, %v2346
    %2348 = vmatprep.mubr.bf16.mxu0 %v1346
    %2349 = vmatmul.mubr.bf16.gmra.mrb[0].mxu0 %v1345
    %v2350 = vpop.f32.mrb[0].mxu0
    %v2351 = vadd.f32 0.0, %v2350
    %v2352 = vpop.f32.mrb[0].mxu0
    %v2353 = vadd.f32 0.0, %v2352
    %v2354 = vpop.f32.mrb[0].mxu0
    %v2355 = vadd.f32 0.0, %v2354
    %v2356 = vpop.f32.mrb[0].mxu0
    %v2357 = vadd.f32 0.0, %v2356
    %2358 = vdwg.mxu0
    %2359 = vmatprep.subr.bf16.mxu0 %v2071
    %2360 = vmatpush1.bf16.msra.mxu0 %v2070
    %2361 = vmatprep.subr.bf16.mxu0 %v2077
    %2362 = vmatpush1.bf16.msra.mxu0 %v2076
    %2363 = vmatprep.subr.bf16.mxu0 %v2083
    %2364 = vmatpush1.bf16.msra.mxu0 %v2082
    %2365 = vmatprep.subr.bf16.mxu0 %v2089
    %2366 = vmatpush1.bf16.msra.mxu0 %v2088
    %2367 = vmatprep.subr.bf16.mxu0 %v2095
    %2368 = vmatpush1.bf16.msra.mxu0 %v2094
    %2369 = vmatprep.subr.bf16.mxu0 %v2101
    %2370 = vmatpush1.bf16.msra.mxu0 %v2100
    %2371 = vmatprep.subr.bf16.mxu0 %v2107
    %2372 = vmatpush1.bf16.msra.mxu0 %v2106
    %2373 = vmatprep.subr.bf16.mxu0 %v2113
    %2374 = vmatpush1.bf16.msra.mxu0 %v2112
    %2375 = vmatprep.subr.bf16.mxu0 %v2119
    %2376 = vmatpush1.bf16.msra.mxu0 %v2118
    %2377 = vmatprep.subr.bf16.mxu0 %v2125
    %2378 = vmatpush1.bf16.msra.mxu0 %v2124
    %2379 = vmatprep.subr.bf16.mxu0 0
    %2380 = vmatpush1.bf16.msra.mxu0 0
    %2381 = vmatprep.subr.bf16.mxu0 0
    %2382 = vmatpush1.bf16.msra.mxu0 0
    %2383 = vmatprep.subr.bf16.mxu0 0
    %2384 = vmatpush1.bf16.msra.mxu0 0
    %2385 = vmatprep.subr.bf16.mxu0 0
    %2386 = vmatpush1.bf16.msra.mxu0 0
    %2387 = vmatprep.subr.bf16.mxu0 0
    %2388 = vmatpush1.bf16.msra.mxu0 0
    %2389 = vmatprep.subr.bf16.mxu0 0
    %2390 = vmatpush1.bf16.msra.mxu0 0
    %2391 = vmatprep.mubr.bf16.mxu0 %v2288
    %2392 = vmatmul.mubr.bf16.gmra.mrb[0].mxu0 %v1339
    %v2393 = vpop.f32.mrb[0].mxu0
    %v2394 = vadd.f32 %v2331, %v2393
    %v2395 = vpop.f32.mrb[0].mxu0
    %v2396 = vadd.f32 %v2333, %v2395
    %v2397 = vpop.f32.mrb[0].mxu0
    %v2398 = vadd.f32 %v2335, %v2397
    %v2399 = vpop.f32.mrb[0].mxu0
    %v2400 = vadd.f32 %v2337, %v2399
    %2401 = vmatprep.mubr.bf16.mxu0 %v2291
    %2402 = vmatmul.mubr.bf16.gmra.mrb[0].mxu0 %v1343
    %v2403 = vpop.f32.mrb[0].mxu0
    %v2404 = vadd.f32 %v2341, %v2403
    %v2405 = vpop.f32.mrb[0].mxu0
    %v2406 = vadd.f32 %v2343, %v2405
    %v2407 = vpop.f32.mrb[0].mxu0
    %v2408 = vadd.f32 %v2345, %v2407
    %v2409 = vpop.f32.mrb[0].mxu0
    %v2410 = vadd.f32 %v2347, %v2409
    %2411 = vmatprep.mubr.bf16.mxu0 %v2294
    %2412 = vmatmul.mubr.bf16.gmra.mrb[0].mxu0 %v1347
    %v2413 = vpop.f32.mrb[0].mxu0
    %v2414 = vadd.f32 %v2351, %v2413
    %v2415 = vpop.f32.mrb[0].mxu0
    %v2416 = vadd.f32 %v2353, %v2415
    %v2417 = vpop.f32.mrb[0].mxu0
    %v2418 = vadd.f32 %v2355, %v2417
    %v2419 = vpop.f32.mrb[0].mxu0
    %v2420 = vadd.f32 %v2357, %v2419
    %2421 = vdwg.mxu0
    %2422 = vmatprep.subr.bf16.mxu0 %v1977
    %2423 = vmatpush1.bf16.msra.mxu0 %v1976
    %2424 = vmatprep.subr.bf16.mxu0 %v1983
    %2425 = vmatpush1.bf16.msra.mxu0 %v1982
    %2426 = vmatprep.subr.bf16.mxu0 %v1989
    %2427 = vmatpush1.bf16.msra.mxu0 %v1988
    %2428 = vmatprep.subr.bf16.mxu0 %v1995
    %2429 = vmatpush1.bf16.msra.mxu0 %v1994
    %2430 = vmatprep.subr.bf16.mxu0 %v2001
    %2431 = vmatpush1.bf16.msra.mxu0 %v2000
    %2432 = vmatprep.subr.bf16.mxu0 %v2007
    %2433 = vmatpush1.bf16.msra.mxu0 %v2006
    %2434 = vmatprep.subr.bf16.mxu0 %v2013
    %2435 = vmatpush1.bf16.msra.mxu0 %v2012
    %2436 = vmatprep.subr.bf16.mxu0 %v2019
    %2437 = vmatpush1.bf16.msra.mxu0 %v2018
    %2438 = vmatprep.subr.bf16.mxu0 %v2025
    %2439 = vmatpush1.bf16.msra.mxu0 %v2024
    %2440 = vmatprep.subr.bf16.mxu0 %v2031
    %2441 = vmatpush1.bf16.msra.mxu0 %v2030
    %2442 = vmatprep.subr.bf16.mxu0 %v2037
    %2443 = vmatpush1.bf16.msra.mxu0 %v2036
    %2444 = vmatprep.subr.bf16.mxu0 %v2043
    %2445 = vmatpush1.bf16.msra.mxu0 %v2042
    %2446 = vmatprep.subr.bf16.mxu0 %v2049
    %2447 = vmatpush1.bf16.msra.mxu0 %v2048
    %2448 = vmatprep.subr.bf16.mxu0 %v2055
    %2449 = vmatpush1.bf16.msra.mxu0 %v2054
    %2450 = vmatprep.subr.bf16.mxu0 %v2061
    %2451 = vmatpush1.bf16.msra.mxu0 %v2060
    %2452 = vmatprep.subr.bf16.mxu0 %v2067
    %2453 = vmatpush1.bf16.msra.mxu0 %v2066
    %2454 = vmatprep.mubr.bf16.mxu0 %v1338
    %2455 = vmatmul.mubr.bf16.gmra.mrb[0].mxu0 %v1337
    %v2456 = vpop.f32.mrb[0].mxu0
    %v2457 = vadd.f32 0.0, %v2456
    %v2458 = vpop.f32.mrb[0].mxu0
    %v2459 = vadd.f32 0.0, %v2458
    %v2460 = vpop.f32.mrb[0].mxu0
    %v2461 = vadd.f32 0.0, %v2460
    %v2462 = vpop.f32.mrb[0].mxu0
    %v2463 = vadd.f32 0.0, %v2462
    %2464 = vmatprep.mubr.bf16.mxu0 %v1342
    %2465 = vmatmul.mubr.bf16.gmra.mrb[0].mxu0 %v1341
    %v2466 = vpop.f32.mrb[0].mxu0
    %v2467 = vadd.f32 0.0, %v2466
    %v2468 = vpop.f32.mrb[0].mxu0
    %v2469 = vadd.f32 0.0, %v2468
    %v2470 = vpop.f32.mrb[0].mxu0
    %v2471 = vadd.f32 0.0, %v2470
    %v2472 = vpop.f32.mrb[0].mxu0
    %v2473 = vadd.f32 0.0, %v2472
    %2474 = vmatprep.mubr.bf16.mxu0 %v1346
    %2475 = vmatmul.mubr.bf16.gmra.mrb[0].mxu0 %v1345
    %v2476 = vpop.f32.mrb[0].mxu0
    %v2477 = vadd.f32 0.0, %v2476
    %v2478 = vpop.f32.mrb[0].mxu0
    %v2479 = vadd.f32 0.0, %v2478
    %v2480 = vpop.f32.mrb[0].mxu0
    %v2481 = vadd.f32 0.0, %v2480
    %v2482 = vpop.f32.mrb[0].mxu0
    %v2483 = vadd.f32 0.0, %v2482
    %2484 = vdwg.mxu0
    %2485 = vmatprep.subr.bf16.mxu0 %v2073
    %2486 = vmatpush1.bf16.msra.mxu0 %v2072
    %2487 = vmatprep.subr.bf16.mxu0 %v2079
    %2488 = vmatpush1.bf16.msra.mxu0 %v2078
    %2489 = vmatprep.subr.bf16.mxu0 %v2085
    %2490 = vmatpush1.bf16.msra.mxu0 %v2084
    %2491 = vmatprep.subr.bf16.mxu0 %v2091
    %2492 = vmatpush1.bf16.msra.mxu0 %v2090
    %2493 = vmatprep.subr.bf16.mxu0 %v2097
    %2494 = vmatpush1.bf16.msra.mxu0 %v2096
    %2495 = vmatprep.subr.bf16.mxu0 %v2103
    %2496 = vmatpush1.bf16.msra.mxu0 %v2102
    %2497 = vmatprep.subr.bf16.mxu0 %v2109
    %2498 = vmatpush1.bf16.msra.mxu0 %v2108
    %2499 = vmatprep.subr.bf16.mxu0 %v2115
    %2500 = vmatpush1.bf16.msra.mxu0 %v2114
    %2501 = vmatprep.subr.bf16.mxu0 %v2121
    %2502 = vmatpush1.bf16.msra.mxu0 %v2120
    %2503 = vmatprep.subr.bf16.mxu0 %v2127
    %2504 = vmatpush1.bf16.msra.mxu0 %v2126
    %2505 = vmatprep.subr.bf16.mxu0 0
    %2506 = vmatpush1.bf16.msra.mxu0 0
    %2507 = vmatprep.subr.bf16.mxu0 0
    %2508 = vmatpush1.bf16.msra.mxu0 0
    %2509 = vmatprep.subr.bf16.mxu0 0
    %2510 = vmatpush1.bf16.msra.mxu0 0
    %2511 = vmatprep.subr.bf16.mxu0 0
    %2512 = vmatpush1.bf16.msra.mxu0 0
    %2513 = vmatprep.subr.bf16.mxu0 0
    %2514 = vmatpush1.bf16.msra.mxu0 0
    %2515 = vmatprep.subr.bf16.mxu0 0
    %2516 = vmatpush1.bf16.msra.mxu0 0
    %2517 = vmatprep.mubr.bf16.mxu0 %v2288
    %2518 = vmatmul.mubr.bf16.gmra.mrb[0].mxu0 %v1339
    %v2519 = vpop.f32.mrb[0].mxu0
    %v2520 = vadd.f32 %v2457, %v2519
    %v2521 = vpop.f32.mrb[0].mxu0
    %v2522 = vadd.f32 %v2459, %v2521
    %v2523 = vpop.f32.mrb[0].mxu0
    %v2524 = vadd.f32 %v2461, %v2523
    %v2525 = vpop.f32.mrb[0].mxu0
    %v2526 = vadd.f32 %v2463, %v2525
    %2527 = vmatprep.mubr.bf16.mxu0 %v2291
    %2528 = vmatmul.mubr.bf16.gmra.mrb[0].mxu0 %v1343
    %v2529 = vpop.f32.mrb[0].mxu0
    %v2530 = vadd.f32 %v2467, %v2529
    %v2531 = vpop.f32.mrb[0].mxu0
    %v2532 = vadd.f32 %v2469, %v2531
    %v2533 = vpop.f32.mrb[0].mxu0
    %v2534 = vadd.f32 %v2471, %v2533
    %v2535 = vpop.f32.mrb[0].mxu0
    %v2536 = vadd.f32 %v2473, %v2535
    %2537 = vmatprep.mubr.bf16.mxu0 %v2294
    %2538 = vmatmul.mubr.bf16.gmra.mrb[0].mxu0 %v1347
    %v2539 = vpop.f32.mrb[0].mxu0
    %v2540 = vadd.f32 %v2477, %v2539
    %v2541 = vpop.f32.mrb[0].mxu0
    %v2542 = vadd.f32 %v2479, %v2541
    %v2543 = vpop.f32.mrb[0].mxu0
    %v2544 = vadd.f32 %v2481, %v2543
    %v2545 = vpop.f32.mrb[0].mxu0
    %v2546 = vadd.f32 %v2483, %v2545
    %2547 = vdwg.mxu0
    %2548 = vmatprep.subr.bf16.mxu0 %v1979
    %2549 = vmatpush1.bf16.msra.mxu0 %v1978
    %2550 = vmatprep.subr.bf16.mxu0 %v1985
    %2551 = vmatpush1.bf16.msra.mxu0 %v1984
    %2552 = vmatprep.subr.bf16.mxu0 %v1991
    %2553 = vmatpush1.bf16.msra.mxu0 %v1990
    %2554 = vmatprep.subr.bf16.mxu0 %v1997
    %2555 = vmatpush1.bf16.msra.mxu0 %v1996
    %2556 = vmatprep.subr.bf16.mxu0 %v2003
    %2557 = vmatpush1.bf16.msra.mxu0 %v2002
    %2558 = vmatprep.subr.bf16.mxu0 %v2009
    %2559 = vmatpush1.bf16.msra.mxu0 %v2008
    %2560 = vmatprep.subr.bf16.mxu0 %v2015
    %2561 = vmatpush1.bf16.msra.mxu0 %v2014
    %2562 = vmatprep.subr.bf16.mxu0 %v2021
    %2563 = vmatpush1.bf16.msra.mxu0 %v2020
    %2564 = vmatprep.subr.bf16.mxu0 %v2027
    %2565 = vmatpush1.bf16.msra.mxu0 %v2026
    %2566 = vmatprep.subr.bf16.mxu0 %v2033
    %2567 = vmatpush1.bf16.msra.mxu0 %v2032
    %2568 = vmatprep.subr.bf16.mxu0 %v2039
    %2569 = vmatpush1.bf16.msra.mxu0 %v2038
    %2570 = vmatprep.subr.bf16.mxu0 %v2045
    %2571 = vmatpush1.bf16.msra.mxu0 %v2044
    %2572 = vmatprep.subr.bf16.mxu0 %v2051
    %2573 = vmatpush1.bf16.msra.mxu0 %v2050
    %2574 = vmatprep.subr.bf16.mxu0 %v2057
    %2575 = vmatpush1.bf16.msra.mxu0 %v2056
    %2576 = vmatprep.subr.bf16.mxu0 %v2063
    %2577 = vmatpush1.bf16.msra.mxu0 %v2062
    %2578 = vmatprep.subr.bf16.mxu0 %v2069
    %2579 = vmatpush1.bf16.msra.mxu0 %v2068
    %2580 = vmatprep.mubr.bf16.mxu0 %v1338
    %2581 = vmatmul.mubr.bf16.gmra.mrb[0].mxu0 %v1337
    %v2582 = vpop.f32.mrb[0].mxu0
    %v2583 = vadd.f32 0.0, %v2582
    %v2584 = vpop.f32.mrb[0].mxu0
    %v2585 = vadd.f32 0.0, %v2584
    %v2586 = vpop.f32.mrb[0].mxu0
    %v2587 = vadd.f32 0.0, %v2586
    %v2588 = vpop.f32.mrb[0].mxu0
    %v2589 = vadd.f32 0.0, %v2588
    %2590 = vmatprep.mubr.bf16.mxu0 %v1342
    %2591 = vmatmul.mubr.bf16.gmra.mrb[0].mxu0 %v1341
    %v2592 = vpop.f32.mrb[0].mxu0
    %v2593 = vadd.f32 0.0, %v2592
    %v2594 = vpop.f32.mrb[0].mxu0
    %v2595 = vadd.f32 0.0, %v2594
    %v2596 = vpop.f32.mrb[0].mxu0
    %v2597 = vadd.f32 0.0, %v2596
    %v2598 = vpop.f32.mrb[0].mxu0
    %v2599 = vadd.f32 0.0, %v2598
    %2600 = vmatprep.mubr.bf16.mxu0 %v1346
    %2601 = vmatmul.mubr.bf16.gmra.mrb[0].mxu0 %v1345
    %v2602 = vpop.f32.mrb[0].mxu0
    %v2603 = vadd.f32 0.0, %v2602
    %v2604 = vpop.f32.mrb[0].mxu0
    %v2605 = vadd.f32 0.0, %v2604
    %v2606 = vpop.f32.mrb[0].mxu0
    %v2607 = vadd.f32 0.0, %v2606
    %v2608 = vpop.f32.mrb[0].mxu0
    %v2609 = vadd.f32 0.0, %v2608
    %2610 = vdwg.mxu0
    %2611 = vmatprep.subr.bf16.mxu0 %v2075
    %2612 = vmatpush1.bf16.msra.mxu0 %v2074
    %2613 = vmatprep.subr.bf16.mxu0 %v2081
    %2614 = vmatpush1.bf16.msra.mxu0 %v2080
    %2615 = vmatprep.subr.bf16.mxu0 %v2087
    %2616 = vmatpush1.bf16.msra.mxu0 %v2086
    %2617 = vmatprep.subr.bf16.mxu0 %v2093
    %2618 = vmatpush1.bf16.msra.mxu0 %v2092
    %2619 = vmatprep.subr.bf16.mxu0 %v2099
    %2620 = vmatpush1.bf16.msra.mxu0 %v2098
    %2621 = vmatprep.subr.bf16.mxu0 %v2105
    %2622 = vmatpush1.bf16.msra.mxu0 %v2104
    %2623 = vmatprep.subr.bf16.mxu0 %v2111
    %2624 = vmatpush1.bf16.msra.mxu0 %v2110
    %2625 = vmatprep.subr.bf16.mxu0 %v2117
    %2626 = vmatpush1.bf16.msra.mxu0 %v2116
    %2627 = vmatprep.subr.bf16.mxu0 %v2123
    %2628 = vmatpush1.bf16.msra.mxu0 %v2122
    %2629 = vmatprep.subr.bf16.mxu0 %v2129
    %2630 = vmatpush1.bf16.msra.mxu0 %v2128
    %2631 = vmatprep.subr.bf16.mxu0 0
    %2632 = vmatpush1.bf16.msra.mxu0 0
    %2633 = vmatprep.subr.bf16.mxu0 0
    %2634 = vmatpush1.bf16.msra.mxu0 0
    %2635 = vmatprep.subr.bf16.mxu0 0
    %2636 = vmatpush1.bf16.msra.mxu0 0
    %2637 = vmatprep.subr.bf16.mxu0 0
    %2638 = vmatpush1.bf16.msra.mxu0 0
    %2639 = vmatprep.subr.bf16.mxu0 0
    %2640 = vmatpush1.bf16.msra.mxu0 0
    %2641 = vmatprep.subr.bf16.mxu0 0
    %2642 = vmatpush1.bf16.msra.mxu0 0
    %2643 = vmatprep.mubr.bf16.mxu0 %v2288
    %2644 = vmatmul.mubr.bf16.gmra.mrb[0].mxu0 %v1339
    %v2645 = vpop.f32.mrb[0].mxu0
    %v2646 = vadd.f32 %v2583, %v2645
    %v2647 = vpop.f32.mrb[0].mxu0
    %v2648 = vadd.f32 %v2585, %v2647
    %v2649 = vpop.f32.mrb[0].mxu0
    %v2650 = vadd.f32 %v2587, %v2649
    %v2651 = vpop.f32.mrb[0].mxu0
    %v2652 = vadd.f32 %v2589, %v2651
    %2653 = vmatprep.mubr.bf16.mxu0 %v2291
    %2654 = vmatmul.mubr.bf16.gmra.mrb[0].mxu0 %v1343
    %v2655 = vpop.f32.mrb[0].mxu0
    %v2656 = vadd.f32 %v2593, %v2655
    %v2657 = vpop.f32.mrb[0].mxu0
    %v2658 = vadd.f32 %v2595, %v2657
    %v2659 = vpop.f32.mrb[0].mxu0
    %v2660 = vadd.f32 %v2597, %v2659
    %v2661 = vpop.f32.mrb[0].mxu0
    %v2662 = vadd.f32 %v2599, %v2661
    %2663 = vmatprep.mubr.bf16.mxu0 %v2294
    %2664 = vmatmul.mubr.bf16.gmra.mrb[0].mxu0 %v1347
    %v2665 = vpop.f32.mrb[0].mxu0
    %v2666 = vadd.f32 %v2603, %v2665
    %v2667 = vpop.f32.mrb[0].mxu0
    %v2668 = vadd.f32 %v2605, %v2667
    %v2669 = vpop.f32.mrb[0].mxu0
    %v2670 = vadd.f32 %v2607, %v2669
    %v2671 = vpop.f32.mrb[0].mxu0
    %v2672 = vadd.f32 %v2609, %v2671
    %2673 = vdwg.mxu0
    %v2830 = vunpack.c.l.b16 %v1069
    %v2831 = vunpack.c.h.b16 %v1069
    %v2832 = vunpack.c.l.b16 %v1070
    %v2833 = vunpack.c.h.b16 %v1070
    %v2834 = vunpack.c.l.b16 %v1071
    %v2835 = vunpack.c.h.b16 %v1071
    %v2836 = vunpack.c.l.b16 %v1072
    %v2837 = vunpack.c.h.b16 %v1072
    %v2838 = vunpack.c.l.b16 %v1073
    %v2839 = vunpack.c.h.b16 %v1073
    %v2840 = vunpack.c.l.b16 %v1074
    %v2841 = vunpack.c.h.b16 %v1074
    %v2842 = vunpack.c.l.b16 %v1075
    %v2843 = vunpack.c.h.b16 %v1075
    %v2844 = vunpack.c.l.b16 %v1076
    %v2845 = vunpack.c.h.b16 %v1076
    %v2846 = vunpack.c.l.b16 %v1077
    %v2847 = vunpack.c.h.b16 %v1077
    %v2848 = vunpack.c.l.b16 %v1078
    %v2849 = vunpack.c.h.b16 %v1078
    %v2850 = vunpack.c.l.b16 %v1079
    %v2851 = vunpack.c.h.b16 %v1079
    %v2852 = vunpack.c.l.b16 %v1080
    %v2853 = vunpack.c.h.b16 %v1080
    %v2854 = vunpack.c.l.b16 %v1081
    %v2855 = vunpack.c.h.b16 %v1081
    %v2856 = vunpack.c.l.b16 %v1082
    %v2857 = vunpack.c.h.b16 %v1082
    %v2858 = vunpack.c.l.b16 %v1083
    %v2859 = vunpack.c.h.b16 %v1083
    %v2860 = vunpack.c.l.b16 %v1084
    %v2861 = vunpack.c.h.b16 %v1084
    %v2862 = vunpack.c.l.b16 %v1085
    %v2863 = vunpack.c.h.b16 %v1085
    %v2864 = vunpack.c.l.b16 %v1086
    %v2865 = vunpack.c.h.b16 %v1086
    %v2866 = vunpack.c.l.b16 %v1087
    %v2867 = vunpack.c.h.b16 %v1087
    %v2868 = vunpack.c.l.b16 %v1088
    %v2869 = vunpack.c.h.b16 %v1088
    %v2870 = vunpack.c.l.b16 %v1089
    %v2871 = vunpack.c.h.b16 %v1089
    %v2872 = vunpack.c.l.b16 %v1090
    %v2873 = vunpack.c.h.b16 %v1090
    %v2874 = vunpack.c.l.b16 %v1091
    %v2875 = vunpack.c.h.b16 %v1091
    %v2876 = vunpack.c.l.b16 %v1092
    %v2877 = vunpack.c.h.b16 %v1092
    %v2878 = vunpack.c.l.b16 %v1093
    %v2879 = vunpack.c.h.b16 %v1093
    %v2880 = vunpack.c.l.b16 %v1094
    %v2881 = vunpack.c.h.b16 %v1094
    %v2882 = vunpack.c.l.b16 %v1095
    %v2883 = vunpack.c.h.b16 %v1095
    %v2884 = vunpack.c.l.b16 %v1096
    %v2885 = vunpack.c.h.b16 %v1096
    %v2886 = vunpack.c.l.b16 %v1097
    %v2887 = vunpack.c.h.b16 %v1097
    %v2888 = vunpack.c.l.b16 %v1098
    %v2889 = vunpack.c.h.b16 %v1098
    %v2890 = vunpack.c.l.b16 %v1099
    %v2891 = vunpack.c.h.b16 %v1099
    %v2892 = vunpack.c.l.b16 %v1100
    %v2893 = vunpack.c.h.b16 %v1100
    %v2894 = vunpack.c.l.b16 %v1101
    %v2895 = vunpack.c.h.b16 %v1101
    %v2896 = vunpack.c.l.b16 %v1102
    %v2897 = vunpack.c.h.b16 %v1102
    %v2898 = vunpack.c.l.b16 %v1103
    %v2899 = vunpack.c.h.b16 %v1103
    %v2900 = vunpack.c.l.b16 %v1104
    %v2901 = vunpack.c.h.b16 %v1104
    %v2902 = vunpack.c.l.b16 %v1105
    %v2903 = vunpack.c.h.b16 %v1105
    %v2904 = vunpack.c.l.b16 %v1106
    %v2905 = vunpack.c.h.b16 %v1106
    %v2906 = vunpack.c.l.b16 %v1107
    %v2907 = vunpack.c.h.b16 %v1107
    %v2908 = vunpack.c.l.b16 %v1108
    %v2909 = vunpack.c.h.b16 %v1108
    %v2910 = vunpack.c.l.b16 %v1109
    %v2911 = vunpack.c.h.b16 %v1109
    %v2912 = vunpack.c.l.b16 %v1110
    %v2913 = vunpack.c.h.b16 %v1110
    %v2914 = vunpack.c.l.b16 %v1111
    %v2915 = vunpack.c.h.b16 %v1111
    %v2916 = vunpack.c.l.b16 %v1112
    %v2917 = vunpack.c.h.b16 %v1112
    %v2918 = vunpack.c.l.b16 %v1113
    %v2919 = vunpack.c.h.b16 %v1113
    %v2920 = vunpack.c.l.b16 %v1114
    %v2921 = vunpack.c.h.b16 %v1114
    %v2922 = vunpack.c.l.b16 %v1115
    %v2923 = vunpack.c.h.b16 %v1115
    %v2924 = vunpack.c.l.b16 %v1116
    %v2925 = vunpack.c.h.b16 %v1116
    %v2926 = vunpack.c.l.b16 %v1117
    %v2927 = vunpack.c.h.b16 %v1117
    %v2928 = vunpack.c.l.b16 %v1118
    %v2929 = vunpack.c.h.b16 %v1118
    %v2930 = vunpack.c.l.b16 %v1119
    %v2931 = vunpack.c.h.b16 %v1119
    %v2932 = vunpack.c.l.b16 %v1120
    %v2933 = vunpack.c.h.b16 %v1120
    %v2934 = vunpack.c.l.b16 %v1121
    %v2935 = vunpack.c.h.b16 %v1121
    %v2936 = vunpack.c.l.b16 %v1122
    %v2937 = vunpack.c.h.b16 %v1122
    %v2938 = vunpack.c.l.b16 %v1123
    %v2939 = vunpack.c.h.b16 %v1123
    %v2940 = vunpack.c.l.b16 %v1124
    %v2941 = vunpack.c.h.b16 %v1124
    %v2942 = vunpack.c.l.b16 %v1125
    %v2943 = vunpack.c.h.b16 %v1125
    %v2944 = vunpack.c.l.b16 %v1126
    %v2945 = vunpack.c.h.b16 %v1126
    %v2946 = vunpack.c.l.b16 %v1127
    %v2947 = vunpack.c.h.b16 %v1127
    %v2948 = vunpack.c.l.b16 %v1128
    %v2949 = vunpack.c.h.b16 %v1128
    %v2950 = vunpack.c.l.b16 %v1129
    %v2951 = vunpack.c.h.b16 %v1129
    %v2952 = vunpack.c.l.b16 %v1130
    %v2953 = vunpack.c.h.b16 %v1130
    %v2954 = vunpack.c.l.b16 %v1131
    %v2955 = vunpack.c.h.b16 %v1131
    %v2956 = vunpack.c.l.b16 %v1132
    %v2957 = vunpack.c.h.b16 %v1132
    %v2958 = vunpack.c.l.b16 %v1133
    %v2959 = vunpack.c.h.b16 %v1133
    %v2960 = vunpack.c.l.b16 %v1134
    %v2961 = vunpack.c.h.b16 %v1134
    %v2962 = vunpack.c.l.b16 %v1135
    %v2963 = vunpack.c.h.b16 %v1135
    %v2964 = vunpack.c.l.b16 %v1136
    %v2965 = vunpack.c.h.b16 %v1136
    %v2966 = vunpack.c.l.b16 %v1137
    %v2967 = vunpack.c.h.b16 %v1137
    %v2968 = vunpack.c.l.b16 %v1138
    %v2969 = vunpack.c.h.b16 %v1138
    %v2970 = vunpack.c.l.b16 %v1139
    %v2971 = vunpack.c.h.b16 %v1139
    %v2972 = vunpack.c.l.b16 %v1140
    %v2973 = vunpack.c.h.b16 %v1140
    %v2974 = vunpack.c.l.b16 %v1141
    %v2975 = vunpack.c.h.b16 %v1141
    %v2976 = vunpack.c.l.b16 %v1142
    %v2977 = vunpack.c.h.b16 %v1142
    %v2978 = vunpack.c.l.b16 %v1143
    %v2979 = vunpack.c.h.b16 %v1143
    %v2980 = vunpack.c.l.b16 %v1144
    %v2981 = vunpack.c.h.b16 %v1144
    %v2982 = vunpack.c.l.b16 %v1145
    %v2983 = vunpack.c.h.b16 %v1145
    %v2984 = vunpack.c.l.b16 %v1146
    %v2985 = vunpack.c.h.b16 %v1146
    %v2986 = vunpack.c.l.b16 %v1147
    %v2987 = vunpack.c.h.b16 %v1147
    %v2988 = vunpack.c.l.b16 %v1148
    %v2989 = vunpack.c.h.b16 %v1148
    %v2990 = vunpack.c.l.b16 %v1149
    %v2991 = vunpack.c.h.b16 %v1149
    %v2992 = vunpack.c.l.b16 %v1150
    %v2993 = vunpack.c.h.b16 %v1150
    %v2994 = vunpack.c.l.b16 %v1151
    %v2995 = vunpack.c.h.b16 %v1151
    %v2996 = vunpack.c.l.b16 %v1152
    %v2997 = vunpack.c.h.b16 %v1152
    %v2998 = vunpack.c.l.b16 %v1153
    %v2999 = vunpack.c.h.b16 %v1153
    %v3000 = vunpack.c.l.b16 %v1154
    %v3001 = vunpack.c.h.b16 %v1154
    %v3002 = vunpack.c.l.b16 %v1155
    %v3003 = vunpack.c.h.b16 %v1155
    %v3004 = vunpack.c.l.b16 %v1156
    %v3005 = vunpack.c.h.b16 %v1156
    %v3006 = vunpack.c.l.b16 %v1157
    %v3007 = vunpack.c.h.b16 %v1157
    %v3008 = vunpack.c.l.b16 %v1158
    %v3009 = vunpack.c.h.b16 %v1158
    %v3010 = vunpack.c.l.b16 %v1159
    %v3011 = vunpack.c.h.b16 %v1159
    %v3012 = vunpack.c.l.b16 %v1160
    %v3013 = vunpack.c.h.b16 %v1160
    %v3014 = vunpack.c.l.b16 %v1161
    %v3015 = vunpack.c.h.b16 %v1161
    %v3016 = vunpack.c.l.b16 %v1162
    %v3017 = vunpack.c.h.b16 %v1162
    %v3018 = vunpack.c.l.b16 %v1163
    %v3019 = vunpack.c.h.b16 %v1163
    %v3020 = vunpack.c.l.b16 %v1164
    %v3021 = vunpack.c.h.b16 %v1164
    %v3022 = vunpack.c.l.b16 %v1165
    %v3023 = vunpack.c.h.b16 %v1165
    %v3024 = vunpack.c.l.b16 %v1166
    %v3025 = vunpack.c.h.b16 %v1166
    %v3026 = vunpack.c.l.b16 %v1167
    %v3027 = vunpack.c.h.b16 %v1167
    %v3028 = vunpack.c.l.b16 %v1168
    %v3029 = vunpack.c.h.b16 %v1168
    %v3030 = vunpack.c.l.b16 %v1169
    %v3031 = vunpack.c.h.b16 %v1169
    %v3032 = vunpack.c.l.b16 %v1170
    %v3033 = vunpack.c.h.b16 %v1170
    %v3034 = vunpack.c.l.b16 %v1171
    %v3035 = vunpack.c.h.b16 %v1171
    %v3036 = vunpack.c.l.b16 %v1172
    %v3037 = vunpack.c.h.b16 %v1172
    %v3038 = vunpack.c.l.b16 %v1173
    %v3039 = vunpack.c.h.b16 %v1173
    %v3040 = vunpack.c.l.b16 %v1174
    %v3041 = vunpack.c.h.b16 %v1174
    %v3042 = vunpack.c.l.b16 %v1175
    %v3043 = vunpack.c.h.b16 %v1175
    %v3044 = vunpack.c.l.b16 %v1176
    %v3045 = vunpack.c.h.b16 %v1176
    %v3046 = vunpack.c.l.b16 %v1177
    %v3047 = vunpack.c.h.b16 %v1177
    %v3048 = vunpack.c.l.b16 %v1178
    %v3049 = vunpack.c.h.b16 %v1178
    %v3050 = vunpack.c.l.b16 %v1179
    %v3051 = vunpack.c.h.b16 %v1179
    %v3052 = vunpack.c.l.b16 %v1180
    %v3053 = vunpack.c.h.b16 %v1180
    %v3054 = vunpack.c.l.b16 %v1181
    %v3055 = vunpack.c.h.b16 %v1181
    %v3056 = vunpack.c.l.b16 %v1182
    %v3057 = vunpack.c.h.b16 %v1182
    %v3058 = vunpack.c.l.b16 %v1183
    %v3059 = vunpack.c.h.b16 %v1183
    %v3060 = vunpack.c.l.b16 %v1184
    %v3061 = vunpack.c.h.b16 %v1184
    %v3062 = vunpack.c.l.b16 %v1185
    %v3063 = vunpack.c.h.b16 %v1185
    %v3064 = vunpack.c.l.b16 %v1186
    %v3065 = vunpack.c.h.b16 %v1186
    %v3066 = vunpack.c.l.b16 %v1187
    %v3067 = vunpack.c.h.b16 %v1187
    %v3068 = vunpack.c.l.b16 %v1188
    %v3069 = vunpack.c.h.b16 %v1188
    %v3070 = vunpack.c.l.b16 %v1189
    %v3071 = vunpack.c.h.b16 %v1189
    %v3072 = vunpack.c.l.b16 %v1190
    %v3073 = vunpack.c.h.b16 %v1190
    %v3074 = vunpack.c.l.b16 %v1191
    %v3075 = vunpack.c.h.b16 %v1191
    %v3076 = vunpack.c.l.b16 %v1192
    %v3077 = vunpack.c.h.b16 %v1192
    %v3078 = vunpack.c.l.b16 %v1193
    %v3079 = vunpack.c.h.b16 %v1193
    %v3080 = vunpack.c.l.b16 %v1194
    %v3081 = vunpack.c.h.b16 %v1194
    %v3082 = vunpack.c.l.b16 %v1195
    %v3083 = vunpack.c.h.b16 %v1195
    %v3084 = vunpack.c.l.b16 %v1196
    %v3085 = vunpack.c.h.b16 %v1196
    %v3086 = vunpack.c.l.b16 %v1197
    %v3087 = vunpack.c.h.b16 %v1197
    %v3088 = vunpack.c.l.b16 %v1198
    %v3089 = vunpack.c.h.b16 %v1198
    %v3090 = vunpack.c.l.b16 %v1199
    %v3091 = vunpack.c.h.b16 %v1199
    %v3092 = vunpack.c.l.b16 %v1200
    %v3093 = vunpack.c.h.b16 %v1200
    %v3094 = vunpack.c.l.b16 %v1201
    %v3095 = vunpack.c.h.b16 %v1201
    %v3096 = vunpack.c.l.b16 %v1202
    %v3097 = vunpack.c.h.b16 %v1202
    %v3098 = vunpack.c.l.b16 %v1203
    %v3099 = vunpack.c.h.b16 %v1203
    %v3100 = vunpack.c.l.b16 %v1204
    %v3101 = vunpack.c.h.b16 %v1204
    %v3102 = vunpack.c.l.b16 %v1205
    %v3103 = vunpack.c.h.b16 %v1205
    %v3104 = vunpack.c.l.b16 %v1206
    %v3105 = vunpack.c.h.b16 %v1206
    %v3106 = vunpack.c.l.b16 %v1207
    %v3107 = vunpack.c.h.b16 %v1207
    %v3108 = vunpack.c.l.b16 %v1208
    %v3109 = vunpack.c.h.b16 %v1208
    %v3110 = vunpack.c.l.b16 %v1209
    %v3111 = vunpack.c.h.b16 %v1209
    %v3112 = vunpack.c.l.b16 %v1210
    %v3113 = vunpack.c.h.b16 %v1210
    %v3114 = vunpack.c.l.b16 %v1211
    %v3115 = vunpack.c.h.b16 %v1211
    %v3116 = vunpack.c.l.b16 %v1212
    %v3117 = vunpack.c.h.b16 %v1212
    %v3118 = vunpack.c.l.b16 %v1213
    %v3119 = vunpack.c.h.b16 %v1213
    %v3120 = vunpack.c.l.b16 %v1214
    %v3121 = vunpack.c.h.b16 %v1214
    %v3122 = vunpack.c.l.b16 %v1215
    %v3123 = vunpack.c.h.b16 %v1215
    %v3124 = vunpack.c.l.b16 %v1216
    %v3125 = vunpack.c.h.b16 %v1216
    %v3126 = vunpack.c.l.b16 %v1217
    %v3127 = vunpack.c.h.b16 %v1217
    %v3128 = vunpack.c.l.b16 %v1218
    %v3129 = vunpack.c.h.b16 %v1218
    %v3130 = vunpack.c.l.b16 %v1219
    %v3131 = vunpack.c.h.b16 %v1219
    %v3132 = vunpack.c.l.b16 %v1220
    %v3133 = vunpack.c.h.b16 %v1220
    %v3134 = vunpack.c.l.b16 %v1221
    %v3135 = vunpack.c.h.b16 %v1221
    %v3136 = vunpack.c.l.b16 %v1222
    %v3137 = vunpack.c.h.b16 %v1222
    %v3138 = vunpack.c.l.b16 %v1223
    %v3139 = vunpack.c.h.b16 %v1223
    %v3140 = vunpack.c.l.b16 %v1224
    %v3141 = vunpack.c.h.b16 %v1224
    %v3142 = vpack.c.b16 %v2836, %v2830
    %v3143 = vpack.c.b16 %v2837, %v2831
    %v3144 = vpack.c.b16 %v2838, %v2832
    %v3145 = vpack.c.b16 %v2839, %v2833
    %v3146 = vpack.c.b16 %v2840, %v2834
    %v3147 = vpack.c.b16 %v2841, %v2835
    %v3148 = vpack.c.b16 %v2848, %v2842
    %v3149 = vpack.c.b16 %v2849, %v2843
    %v3150 = vpack.c.b16 %v2850, %v2844
    %v3151 = vpack.c.b16 %v2851, %v2845
    %v3152 = vpack.c.b16 %v2852, %v2846
    %v3153 = vpack.c.b16 %v2853, %v2847
    %v3154 = vpack.c.b16 %v2860, %v2854
    %v3155 = vpack.c.b16 %v2861, %v2855
    %v3156 = vpack.c.b16 %v2862, %v2856
    %v3157 = vpack.c.b16 %v2863, %v2857
    %v3158 = vpack.c.b16 %v2864, %v2858
    %v3159 = vpack.c.b16 %v2865, %v2859
    %v3160 = vpack.c.b16 %v2872, %v2866
    %v3161 = vpack.c.b16 %v2873, %v2867
    %v3162 = vpack.c.b16 %v2874, %v2868
    %v3163 = vpack.c.b16 %v2875, %v2869
    %v3164 = vpack.c.b16 %v2876, %v2870
    %v3165 = vpack.c.b16 %v2877, %v2871
    %v3166 = vpack.c.b16 %v2884, %v2878
    %v3167 = vpack.c.b16 %v2885, %v2879
    %v3168 = vpack.c.b16 %v2886, %v2880
    %v3169 = vpack.c.b16 %v2887, %v2881
    %v3170 = vpack.c.b16 %v2888, %v2882
    %v3171 = vpack.c.b16 %v2889, %v2883
    %v3172 = vpack.c.b16 %v2896, %v2890
    %v3173 = vpack.c.b16 %v2897, %v2891
    %v3174 = vpack.c.b16 %v2898, %v2892
    %v3175 = vpack.c.b16 %v2899, %v2893
    %v3176 = vpack.c.b16 %v2900, %v2894
    %v3177 = vpack.c.b16 %v2901, %v2895
    %v3178 = vpack.c.b16 %v2908, %v2902
    %v3179 = vpack.c.b16 %v2909, %v2903
    %v3180 = vpack.c.b16 %v2910, %v2904
    %v3181 = vpack.c.b16 %v2911, %v2905
    %v3182 = vpack.c.b16 %v2912, %v2906
    %v3183 = vpack.c.b16 %v2913, %v2907
    %v3184 = vpack.c.b16 %v2920, %v2914
    %v3185 = vpack.c.b16 %v2921, %v2915
    %v3186 = vpack.c.b16 %v2922, %v2916
    %v3187 = vpack.c.b16 %v2923, %v2917
    %v3188 = vpack.c.b16 %v2924, %v2918
    %v3189 = vpack.c.b16 %v2925, %v2919
    %v3190 = vpack.c.b16 %v2932, %v2926
    %v3191 = vpack.c.b16 %v2933, %v2927
    %v3192 = vpack.c.b16 %v2934, %v2928
    %v3193 = vpack.c.b16 %v2935, %v2929
    %v3194 = vpack.c.b16 %v2936, %v2930
    %v3195 = vpack.c.b16 %v2937, %v2931
    %v3196 = vpack.c.b16 %v2944, %v2938
    %v3197 = vpack.c.b16 %v2945, %v2939
    %v3198 = vpack.c.b16 %v2946, %v2940
    %v3199 = vpack.c.b16 %v2947, %v2941
    %v3200 = vpack.c.b16 %v2948, %v2942
    %v3201 = vpack.c.b16 %v2949, %v2943
    %v3202 = vpack.c.b16 %v2956, %v2950
    %v3203 = vpack.c.b16 %v2957, %v2951
    %v3204 = vpack.c.b16 %v2958, %v2952
    %v3205 = vpack.c.b16 %v2959, %v2953
    %v3206 = vpack.c.b16 %v2960, %v2954
    %v3207 = vpack.c.b16 %v2961, %v2955
    %v3208 = vpack.c.b16 %v2968, %v2962
    %v3209 = vpack.c.b16 %v2969, %v2963
    %v3210 = vpack.c.b16 %v2970, %v2964
    %v3211 = vpack.c.b16 %v2971, %v2965
    %v3212 = vpack.c.b16 %v2972, %v2966
    %v3213 = vpack.c.b16 %v2973, %v2967
    %v3214 = vpack.c.b16 %v2980, %v2974
    %v3215 = vpack.c.b16 %v2981, %v2975
    %v3216 = vpack.c.b16 %v2982, %v2976
    %v3217 = vpack.c.b16 %v2983, %v2977
    %v3218 = vpack.c.b16 %v2984, %v2978
    %v3219 = vpack.c.b16 %v2985, %v2979
    %v3220 = vpack.c.b16 %v2992, %v2986
    %v3221 = vpack.c.b16 %v2993, %v2987
    %v3222 = vpack.c.b16 %v2994, %v2988
    %v3223 = vpack.c.b16 %v2995, %v2989
    %v3224 = vpack.c.b16 %v2996, %v2990
    %v3225 = vpack.c.b16 %v2997, %v2991
    %v3226 = vpack.c.b16 %v3004, %v2998
    %v3227 = vpack.c.b16 %v3005, %v2999
    %v3228 = vpack.c.b16 %v3006, %v3000
    %v3229 = vpack.c.b16 %v3007, %v3001
    %v3230 = vpack.c.b16 %v3008, %v3002
    %v3231 = vpack.c.b16 %v3009, %v3003
    %v3232 = vpack.c.b16 %v3016, %v3010
    %v3233 = vpack.c.b16 %v3017, %v3011
    %v3234 = vpack.c.b16 %v3018, %v3012
    %v3235 = vpack.c.b16 %v3019, %v3013
    %v3236 = vpack.c.b16 %v3020, %v3014
    %v3237 = vpack.c.b16 %v3021, %v3015
    %v3238 = vpack.c.b16 %v3028, %v3022
    %v3239 = vpack.c.b16 %v3029, %v3023
    %v3240 = vpack.c.b16 %v3030, %v3024
    %v3241 = vpack.c.b16 %v3031, %v3025
    %v3242 = vpack.c.b16 %v3032, %v3026
    %v3243 = vpack.c.b16 %v3033, %v3027
    %v3244 = vpack.c.b16 %v3040, %v3034
    %v3245 = vpack.c.b16 %v3041, %v3035
    %v3246 = vpack.c.b16 %v3042, %v3036
    %v3247 = vpack.c.b16 %v3043, %v3037
    %v3248 = vpack.c.b16 %v3044, %v3038
    %v3249 = vpack.c.b16 %v3045, %v3039
    %v3250 = vpack.c.b16 %v3052, %v3046
    %v3251 = vpack.c.b16 %v3053, %v3047
    %v3252 = vpack.c.b16 %v3054, %v3048
    %v3253 = vpack.c.b16 %v3055, %v3049
    %v3254 = vpack.c.b16 %v3056, %v3050
    %v3255 = vpack.c.b16 %v3057, %v3051
    %v3256 = vpack.c.b16 %v3064, %v3058
    %v3257 = vpack.c.b16 %v3065, %v3059
    %v3258 = vpack.c.b16 %v3066, %v3060
    %v3259 = vpack.c.b16 %v3067, %v3061
    %v3260 = vpack.c.b16 %v3068, %v3062
    %v3261 = vpack.c.b16 %v3069, %v3063
    %v3262 = vpack.c.b16 %v3076, %v3070
    %v3263 = vpack.c.b16 %v3077, %v3071
    %v3264 = vpack.c.b16 %v3078, %v3072
    %v3265 = vpack.c.b16 %v3079, %v3073
    %v3266 = vpack.c.b16 %v3080, %v3074
    %v3267 = vpack.c.b16 %v3081, %v3075
    %v3268 = vpack.c.b16 %v3088, %v3082
    %v3269 = vpack.c.b16 %v3089, %v3083
    %v3270 = vpack.c.b16 %v3090, %v3084
    %v3271 = vpack.c.b16 %v3091, %v3085
    %v3272 = vpack.c.b16 %v3092, %v3086
    %v3273 = vpack.c.b16 %v3093, %v3087
    %v3274 = vpack.c.b16 %v3100, %v3094
    %v3275 = vpack.c.b16 %v3101, %v3095
    %v3276 = vpack.c.b16 %v3102, %v3096
    %v3277 = vpack.c.b16 %v3103, %v3097
    %v3278 = vpack.c.b16 %v3104, %v3098
    %v3279 = vpack.c.b16 %v3105, %v3099
    %v3280 = vpack.c.b16 %v3112, %v3106
    %v3281 = vpack.c.b16 %v3113, %v3107
    %v3282 = vpack.c.b16 %v3114, %v3108
    %v3283 = vpack.c.b16 %v3115, %v3109
    %v3284 = vpack.c.b16 %v3116, %v3110
    %v3285 = vpack.c.b16 %v3117, %v3111
    %v3286 = vpack.c.b16 %v3124, %v3118
    %v3287 = vpack.c.b16 %v3125, %v3119
    %v3288 = vpack.c.b16 %v3126, %v3120
    %v3289 = vpack.c.b16 %v3127, %v3121
    %v3290 = vpack.c.b16 %v3128, %v3122
    %v3291 = vpack.c.b16 %v3129, %v3123
    %v3292 = vpack.c.b16 %v3136, %v3130
    %v3293 = vpack.c.b16 %v3137, %v3131
    %v3294 = vpack.c.b16 %v3138, %v3132
    %v3295 = vpack.c.b16 %v3139, %v3133
    %v3296 = vpack.c.b16 %v3140, %v3134
    %v3297 = vpack.c.b16 %v3141, %v3135
    %v3455 = vsel %vm2286, %v1060, 0
    %v3458 = vsel %vm2286, %v1064, 0
    %v3461 = vsel %vm2286, %v1068, 0
    %3463 = vmatprep.subr.bf16.mxu0 %v3143
    %3464 = vmatpush1.bf16.msra.mxu0 %v3142
    %3465 = vmatprep.subr.bf16.mxu0 %v3149
    %3466 = vmatpush1.bf16.msra.mxu0 %v3148
    %3467 = vmatprep.subr.bf16.mxu0 %v3155
    %3468 = vmatpush1.bf16.msra.mxu0 %v3154
    %3469 = vmatprep.subr.bf16.mxu0 %v3161
    %3470 = vmatpush1.bf16.msra.mxu0 %v3160
    %3471 = vmatprep.subr.bf16.mxu0 %v3167
    %3472 = vmatpush1.bf16.msra.mxu0 %v3166
    %3473 = vmatprep.subr.bf16.mxu0 %v3173
    %3474 = vmatpush1.bf16.msra.mxu0 %v3172
    %3475 = vmatprep.subr.bf16.mxu0 %v3179
    %3476 = vmatpush1.bf16.msra.mxu0 %v3178
    %3477 = vmatprep.subr.bf16.mxu0 %v3185
    %3478 = vmatpush1.bf16.msra.mxu0 %v3184
    %3479 = vmatprep.subr.bf16.mxu0 %v3191
    %3480 = vmatpush1.bf16.msra.mxu0 %v3190
    %3481 = vmatprep.subr.bf16.mxu0 %v3197
    %3482 = vmatpush1.bf16.msra.mxu0 %v3196
    %3483 = vmatprep.subr.bf16.mxu0 %v3203
    %3484 = vmatpush1.bf16.msra.mxu0 %v3202
    %3485 = vmatprep.subr.bf16.mxu0 %v3209
    %3486 = vmatpush1.bf16.msra.mxu0 %v3208
    %3487 = vmatprep.subr.bf16.mxu0 %v3215
    %3488 = vmatpush1.bf16.msra.mxu0 %v3214
    %3489 = vmatprep.subr.bf16.mxu0 %v3221
    %3490 = vmatpush1.bf16.msra.mxu0 %v3220
    %3491 = vmatprep.subr.bf16.mxu0 %v3227
    %3492 = vmatpush1.bf16.msra.mxu0 %v3226
    %3493 = vmatprep.subr.bf16.mxu0 %v3233
    %3494 = vmatpush1.bf16.msra.mxu0 %v3232
    %3495 = vmatprep.mubr.bf16.mxu0 %v1058
    %3496 = vmatmul.mubr.bf16.gmra.mrb[0].mxu0 %v1057
    %v3497 = vpop.f32.mrb[0].mxu0
    %v3498 = vadd.f32 %v2394, %v3497
    %v3499 = vpop.f32.mrb[0].mxu0
    %v3500 = vadd.f32 %v2396, %v3499
    %v3501 = vpop.f32.mrb[0].mxu0
    %v3502 = vadd.f32 %v2398, %v3501
    %v3503 = vpop.f32.mrb[0].mxu0
    %v3504 = vadd.f32 %v2400, %v3503
    %3505 = vmatprep.mubr.bf16.mxu0 %v1062
    %3506 = vmatmul.mubr.bf16.gmra.mrb[0].mxu0 %v1061
    %v3507 = vpop.f32.mrb[0].mxu0
    %v3508 = vadd.f32 %v2404, %v3507
    %v3509 = vpop.f32.mrb[0].mxu0
    %v3510 = vadd.f32 %v2406, %v3509
    %v3511 = vpop.f32.mrb[0].mxu0
    %v3512 = vadd.f32 %v2408, %v3511
    %v3513 = vpop.f32.mrb[0].mxu0
    %v3514 = vadd.f32 %v2410, %v3513
    %3515 = vmatprep.mubr.bf16.mxu0 %v1066
    %3516 = vmatmul.mubr.bf16.gmra.mrb[0].mxu0 %v1065
    %v3517 = vpop.f32.mrb[0].mxu0
    %v3518 = vadd.f32 %v2414, %v3517
    %v3519 = vpop.f32.mrb[0].mxu0
    %v3520 = vadd.f32 %v2416, %v3519
    %v3521 = vpop.f32.mrb[0].mxu0
    %v3522 = vadd.f32 %v2418, %v3521
    %v3523 = vpop.f32.mrb[0].mxu0
    %v3524 = vadd.f32 %v2420, %v3523
    %3525 = vdwg.mxu0
    %3526 = vmatprep.subr.bf16.mxu0 %v3239
    %3527 = vmatpush1.bf16.msra.mxu0 %v3238
    %3528 = vmatprep.subr.bf16.mxu0 %v3245
    %3529 = vmatpush1.bf16.msra.mxu0 %v3244
    %3530 = vmatprep.subr.bf16.mxu0 %v3251
    %3531 = vmatpush1.bf16.msra.mxu0 %v3250
    %3532 = vmatprep.subr.bf16.mxu0 %v3257
    %3533 = vmatpush1.bf16.msra.mxu0 %v3256
    %3534 = vmatprep.subr.bf16.mxu0 %v3263
    %3535 = vmatpush1.bf16.msra.mxu0 %v3262
    %3536 = vmatprep.subr.bf16.mxu0 %v3269
    %3537 = vmatpush1.bf16.msra.mxu0 %v3268
    %3538 = vmatprep.subr.bf16.mxu0 %v3275
    %3539 = vmatpush1.bf16.msra.mxu0 %v3274
    %3540 = vmatprep.subr.bf16.mxu0 %v3281
    %3541 = vmatpush1.bf16.msra.mxu0 %v3280
    %3542 = vmatprep.subr.bf16.mxu0 %v3287
    %3543 = vmatpush1.bf16.msra.mxu0 %v3286
    %3544 = vmatprep.subr.bf16.mxu0 %v3293
    %3545 = vmatpush1.bf16.msra.mxu0 %v3292
    %3546 = vmatprep.subr.bf16.mxu0 0
    %3547 = vmatpush1.bf16.msra.mxu0 0
    %3548 = vmatprep.subr.bf16.mxu0 0
    %3549 = vmatpush1.bf16.msra.mxu0 0
    %3550 = vmatprep.subr.bf16.mxu0 0
    %3551 = vmatpush1.bf16.msra.mxu0 0
    %3552 = vmatprep.subr.bf16.mxu0 0
    %3553 = vmatpush1.bf16.msra.mxu0 0
    %3554 = vmatprep.subr.bf16.mxu0 0
    %3555 = vmatpush1.bf16.msra.mxu0 0
    %3556 = vmatprep.subr.bf16.mxu0 0
    %3557 = vmatpush1.bf16.msra.mxu0 0
    %3558 = vmatprep.mubr.bf16.mxu0 %v3455
    %3559 = vmatmul.mubr.bf16.gmra.mrb[0].mxu0 %v1059
    %v3560 = vpop.f32.mrb[0].mxu0
    %v3561 = vadd.f32 %v3498, %v3560
    %v3562 = vpop.f32.mrb[0].mxu0
    %v3563 = vadd.f32 %v3500, %v3562
    %v3564 = vpop.f32.mrb[0].mxu0
    %v3565 = vadd.f32 %v3502, %v3564
    %v3566 = vpop.f32.mrb[0].mxu0
    %v3567 = vadd.f32 %v3504, %v3566
    %3568 = vmatprep.mubr.bf16.mxu0 %v3458
    %3569 = vmatmul.mubr.bf16.gmra.mrb[0].mxu0 %v1063
    %v3570 = vpop.f32.mrb[0].mxu0
    %v3571 = vadd.f32 %v3508, %v3570
    %v3572 = vpop.f32.mrb[0].mxu0
    %v3573 = vadd.f32 %v3510, %v3572
    %v3574 = vpop.f32.mrb[0].mxu0
    %v3575 = vadd.f32 %v3512, %v3574
    %v3576 = vpop.f32.mrb[0].mxu0
    %v3577 = vadd.f32 %v3514, %v3576
    %3578 = vmatprep.mubr.bf16.mxu0 %v3461
    %3579 = vmatmul.mubr.bf16.gmra.mrb[0].mxu0 %v1067
    %v3580 = vpop.f32.mrb[0].mxu0
    %v3581 = vadd.f32 %v3518, %v3580
    %v3582 = vpop.f32.mrb[0].mxu0
    %v3583 = vadd.f32 %v3520, %v3582
    %v3584 = vpop.f32.mrb[0].mxu0
    %v3585 = vadd.f32 %v3522, %v3584
    %v3586 = vpop.f32.mrb[0].mxu0
    %v3587 = vadd.f32 %v3524, %v3586
    %3588 = vdwg.mxu0
    %3589 = vmatprep.subr.bf16.mxu0 %v3145
    %3590 = vmatpush1.bf16.msra.mxu0 %v3144
    %3591 = vmatprep.subr.bf16.mxu0 %v3151
    %3592 = vmatpush1.bf16.msra.mxu0 %v3150
    %3593 = vmatprep.subr.bf16.mxu0 %v3157
    %3594 = vmatpush1.bf16.msra.mxu0 %v3156
    %3595 = vmatprep.subr.bf16.mxu0 %v3163
    %3596 = vmatpush1.bf16.msra.mxu0 %v3162
    %3597 = vmatprep.subr.bf16.mxu0 %v3169
    %3598 = vmatpush1.bf16.msra.mxu0 %v3168
    %3599 = vmatprep.subr.bf16.mxu0 %v3175
    %3600 = vmatpush1.bf16.msra.mxu0 %v3174
    %3601 = vmatprep.subr.bf16.mxu0 %v3181
    %3602 = vmatpush1.bf16.msra.mxu0 %v3180
    %3603 = vmatprep.subr.bf16.mxu0 %v3187
    %3604 = vmatpush1.bf16.msra.mxu0 %v3186
    %3605 = vmatprep.subr.bf16.mxu0 %v3193
    %3606 = vmatpush1.bf16.msra.mxu0 %v3192
    %3607 = vmatprep.subr.bf16.mxu0 %v3199
    %3608 = vmatpush1.bf16.msra.mxu0 %v3198
    %3609 = vmatprep.subr.bf16.mxu0 %v3205
    %3610 = vmatpush1.bf16.msra.mxu0 %v3204
    %3611 = vmatprep.subr.bf16.mxu0 %v3211
    %3612 = vmatpush1.bf16.msra.mxu0 %v3210
    %3613 = vmatprep.subr.bf16.mxu0 %v3217
    %3614 = vmatpush1.bf16.msra.mxu0 %v3216
    %3615 = vmatprep.subr.bf16.mxu0 %v3223
    %3616 = vmatpush1.bf16.msra.mxu0 %v3222
    %3617 = vmatprep.subr.bf16.mxu0 %v3229
    %3618 = vmatpush1.bf16.msra.mxu0 %v3228
    %3619 = vmatprep.subr.bf16.mxu0 %v3235
    %3620 = vmatpush1.bf16.msra.mxu0 %v3234
    %3621 = vmatprep.mubr.bf16.mxu0 %v1058
    %3622 = vmatmul.mubr.bf16.gmra.mrb[0].mxu0 %v1057
    %v3623 = vpop.f32.mrb[0].mxu0
    %v3624 = vadd.f32 %v2520, %v3623
    %v3625 = vpop.f32.mrb[0].mxu0
    %v3626 = vadd.f32 %v2522, %v3625
    %v3627 = vpop.f32.mrb[0].mxu0
    %v3628 = vadd.f32 %v2524, %v3627
    %v3629 = vpop.f32.mrb[0].mxu0
    %v3630 = vadd.f32 %v2526, %v3629
    %3631 = vmatprep.mubr.bf16.mxu0 %v1062
    %3632 = vmatmul.mubr.bf16.gmra.mrb[0].mxu0 %v1061
    %v3633 = vpop.f32.mrb[0].mxu0
    %v3634 = vadd.f32 %v2530, %v3633
    %v3635 = vpop.f32.mrb[0].mxu0
    %v3636 = vadd.f32 %v2532, %v3635
    %v3637 = vpop.f32.mrb[0].mxu0
    %v3638 = vadd.f32 %v2534, %v3637
    %v3639 = vpop.f32.mrb[0].mxu0
    %v3640 = vadd.f32 %v2536, %v3639
    %3641 = vmatprep.mubr.bf16.mxu0 %v1066
    %3642 = vmatmul.mubr.bf16.gmra.mrb[0].mxu0 %v1065
    %v3643 = vpop.f32.mrb[0].mxu0
    %v3644 = vadd.f32 %v2540, %v3643
    %v3645 = vpop.f32.mrb[0].mxu0
    %v3646 = vadd.f32 %v2542, %v3645
    %v3647 = vpop.f32.mrb[0].mxu0
    %v3648 = vadd.f32 %v2544, %v3647
    %v3649 = vpop.f32.mrb[0].mxu0
    %v3650 = vadd.f32 %v2546, %v3649
    %3651 = vdwg.mxu0
    %3652 = vmatprep.subr.bf16.mxu0 %v3241
    %3653 = vmatpush1.bf16.msra.mxu0 %v3240
    %3654 = vmatprep.subr.bf16.mxu0 %v3247
    %3655 = vmatpush1.bf16.msra.mxu0 %v3246
    %3656 = vmatprep.subr.bf16.mxu0 %v3253
    %3657 = vmatpush1.bf16.msra.mxu0 %v3252
    %3658 = vmatprep.subr.bf16.mxu0 %v3259
    %3659 = vmatpush1.bf16.msra.mxu0 %v3258
    %3660 = vmatprep.subr.bf16.mxu0 %v3265
    %3661 = vmatpush1.bf16.msra.mxu0 %v3264
    %3662 = vmatprep.subr.bf16.mxu0 %v3271
    %3663 = vmatpush1.bf16.msra.mxu0 %v3270
    %3664 = vmatprep.subr.bf16.mxu0 %v3277
    %3665 = vmatpush1.bf16.msra.mxu0 %v3276
    %3666 = vmatprep.subr.bf16.mxu0 %v3283
    %3667 = vmatpush1.bf16.msra.mxu0 %v3282
    %3668 = vmatprep.subr.bf16.mxu0 %v3289
    %3669 = vmatpush1.bf16.msra.mxu0 %v3288
    %3670 = vmatprep.subr.bf16.mxu0 %v3295
    %3671 = vmatpush1.bf16.msra.mxu0 %v3294
    %3672 = vmatprep.subr.bf16.mxu0 0
    %3673 = vmatpush1.bf16.msra.mxu0 0
    %3674 = vmatprep.subr.bf16.mxu0 0
    %3675 = vmatpush1.bf16.msra.mxu0 0
    %3676 = vmatprep.subr.bf16.mxu0 0
    %3677 = vmatpush1.bf16.msra.mxu0 0
    %3678 = vmatprep.subr.bf16.mxu0 0
    %3679 = vmatpush1.bf16.msra.mxu0 0
    %3680 = vmatprep.subr.bf16.mxu0 0
    %3681 = vmatpush1.bf16.msra.mxu0 0
    %3682 = vmatprep.subr.bf16.mxu0 0
    %3683 = vmatpush1.bf16.msra.mxu0 0
    %3684 = vmatprep.mubr.bf16.mxu0 %v3455
    %3685 = vmatmul.mubr.bf16.gmra.mrb[0].mxu0 %v1059
    %v3686 = vpop.f32.mrb[0].mxu0
    %v3687 = vadd.f32 %v3624, %v3686
    %v3688 = vpop.f32.mrb[0].mxu0
    %v3689 = vadd.f32 %v3626, %v3688
    %v3690 = vpop.f32.mrb[0].mxu0
    %v3691 = vadd.f32 %v3628, %v3690
    %v3692 = vpop.f32.mrb[0].mxu0
    %v3693 = vadd.f32 %v3630, %v3692
    %3694 = vmatprep.mubr.bf16.mxu0 %v3458
    %3695 = vmatmul.mubr.bf16.gmra.mrb[0].mxu0 %v1063
    %v3696 = vpop.f32.mrb[0].mxu0
    %v3697 = vadd.f32 %v3634, %v3696
    %v3698 = vpop.f32.mrb[0].mxu0
    %v3699 = vadd.f32 %v3636, %v3698
    %v3700 = vpop.f32.mrb[0].mxu0
    %v3701 = vadd.f32 %v3638, %v3700
    %v3702 = vpop.f32.mrb[0].mxu0
    %v3703 = vadd.f32 %v3640, %v3702
    %3704 = vmatprep.mubr.bf16.mxu0 %v3461
    %3705 = vmatmul.mubr.bf16.gmra.mrb[0].mxu0 %v1067
    %v3706 = vpop.f32.mrb[0].mxu0
    %v3707 = vadd.f32 %v3644, %v3706
    %v3708 = vpop.f32.mrb[0].mxu0
    %v3709 = vadd.f32 %v3646, %v3708
    %v3710 = vpop.f32.mrb[0].mxu0
    %v3711 = vadd.f32 %v3648, %v3710
    %v3712 = vpop.f32.mrb[0].mxu0
    %v3713 = vadd.f32 %v3650, %v3712
    %3714 = vdwg.mxu0
    %3715 = vmatprep.subr.bf16.mxu0 %v3147
    %3716 = vmatpush1.bf16.msra.mxu0 %v3146
    %3717 = vmatprep.subr.bf16.mxu0 %v3153
    %3718 = vmatpush1.bf16.msra.mxu0 %v3152
    %3719 = vmatprep.subr.bf16.mxu0 %v3159
    %3720 = vmatpush1.bf16.msra.mxu0 %v3158
    %3721 = vmatprep.subr.bf16.mxu0 %v3165
    %3722 = vmatpush1.bf16.msra.mxu0 %v3164
    %3723 = vmatprep.subr.bf16.mxu0 %v3171
    %3724 = vmatpush1.bf16.msra.mxu0 %v3170
    %3725 = vmatprep.subr.bf16.mxu0 %v3177
    %3726 = vmatpush1.bf16.msra.mxu0 %v3176
    %3727 = vmatprep.subr.bf16.mxu0 %v3183
    %3728 = vmatpush1.bf16.msra.mxu0 %v3182
    %3729 = vmatprep.subr.bf16.mxu0 %v3189
    %3730 = vmatpush1.bf16.msra.mxu0 %v3188
    %3731 = vmatprep.subr.bf16.mxu0 %v3195
    %3732 = vmatpush1.bf16.msra.mxu0 %v3194
    %3733 = vmatprep.subr.bf16.mxu0 %v3201
    %3734 = vmatpush1.bf16.msra.mxu0 %v3200
    %3735 = vmatprep.subr.bf16.mxu0 %v3207
    %3736 = vmatpush1.bf16.msra.mxu0 %v3206
    %3737 = vmatprep.subr.bf16.mxu0 %v3213
    %3738 = vmatpush1.bf16.msra.mxu0 %v3212
    %3739 = vmatprep.subr.bf16.mxu0 %v3219
    %3740 = vmatpush1.bf16.msra.mxu0 %v3218
    %3741 = vmatprep.subr.bf16.mxu0 %v3225
    %3742 = vmatpush1.bf16.msra.mxu0 %v3224
    %3743 = vmatprep.subr.bf16.mxu0 %v3231
    %3744 = vmatpush1.bf16.msra.mxu0 %v3230
    %3745 = vmatprep.subr.bf16.mxu0 %v3237
    %3746 = vmatpush1.bf16.msra.mxu0 %v3236
    %3747 = vmatprep.mubr.bf16.mxu0 %v1058
    %3748 = vmatmul.mubr.bf16.gmra.mrb[0].mxu0 %v1057
    %v3749 = vpop.f32.mrb[0].mxu0
    %v3750 = vadd.f32 %v2646, %v3749
    %v3751 = vpop.f32.mrb[0].mxu0
    %v3752 = vadd.f32 %v2648, %v3751
    %v3753 = vpop.f32.mrb[0].mxu0
    %v3754 = vadd.f32 %v2650, %v3753
    %v3755 = vpop.f32.mrb[0].mxu0
    %v3756 = vadd.f32 %v2652, %v3755
    %3757 = vmatprep.mubr.bf16.mxu0 %v1062
    %3758 = vmatmul.mubr.bf16.gmra.mrb[0].mxu0 %v1061
    %v3759 = vpop.f32.mrb[0].mxu0
    %v3760 = vadd.f32 %v2656, %v3759
    %v3761 = vpop.f32.mrb[0].mxu0
    %v3762 = vadd.f32 %v2658, %v3761
    %v3763 = vpop.f32.mrb[0].mxu0
    %v3764 = vadd.f32 %v2660, %v3763
    %v3765 = vpop.f32.mrb[0].mxu0
    %v3766 = vadd.f32 %v2662, %v3765
    %3767 = vmatprep.mubr.bf16.mxu0 %v1066
    %3768 = vmatmul.mubr.bf16.gmra.mrb[0].mxu0 %v1065
    %v3769 = vpop.f32.mrb[0].mxu0
    %v3770 = vadd.f32 %v2666, %v3769
    %v3771 = vpop.f32.mrb[0].mxu0
    %v3772 = vadd.f32 %v2668, %v3771
    %v3773 = vpop.f32.mrb[0].mxu0
    %v3774 = vadd.f32 %v2670, %v3773
    %v3775 = vpop.f32.mrb[0].mxu0
    %v3776 = vadd.f32 %v2672, %v3775
    %3777 = vdwg.mxu0
    %3778 = vmatprep.subr.bf16.mxu0 %v3243
    %3779 = vmatpush1.bf16.msra.mxu0 %v3242
    %3780 = vmatprep.subr.bf16.mxu0 %v3249
    %3781 = vmatpush1.bf16.msra.mxu0 %v3248
    %3782 = vmatprep.subr.bf16.mxu0 %v3255
    %3783 = vmatpush1.bf16.msra.mxu0 %v3254
    %3784 = vmatprep.subr.bf16.mxu0 %v3261
    %3785 = vmatpush1.bf16.msra.mxu0 %v3260
    %3786 = vmatprep.subr.bf16.mxu0 %v3267
    %3787 = vmatpush1.bf16.msra.mxu0 %v3266
    %3788 = vmatprep.subr.bf16.mxu0 %v3273
    %3789 = vmatpush1.bf16.msra.mxu0 %v3272
    %3790 = vmatprep.subr.bf16.mxu0 %v3279
    %3791 = vmatpush1.bf16.msra.mxu0 %v3278
    %3792 = vmatprep.subr.bf16.mxu0 %v3285
    %3793 = vmatpush1.bf16.msra.mxu0 %v3284
    %3794 = vmatprep.subr.bf16.mxu0 %v3291
    %3795 = vmatpush1.bf16.msra.mxu0 %v3290
    %3796 = vmatprep.subr.bf16.mxu0 %v3297
    %3797 = vmatpush1.bf16.msra.mxu0 %v3296
    %3798 = vmatprep.subr.bf16.mxu0 0
    %3799 = vmatpush1.bf16.msra.mxu0 0
    %3800 = vmatprep.subr.bf16.mxu0 0
    %3801 = vmatpush1.bf16.msra.mxu0 0
    %3802 = vmatprep.subr.bf16.mxu0 0
    %3803 = vmatpush1.bf16.msra.mxu0 0
    %3804 = vmatprep.subr.bf16.mxu0 0
    %3805 = vmatpush1.bf16.msra.mxu0 0
    %3806 = vmatprep.subr.bf16.mxu0 0
    %3807 = vmatpush1.bf16.msra.mxu0 0
    %3808 = vmatprep.subr.bf16.mxu0 0
    %3809 = vmatpush1.bf16.msra.mxu0 0
    %3810 = vmatprep.mubr.bf16.mxu0 %v3455
    %3811 = vmatmul.mubr.bf16.gmra.mrb[0].mxu0 %v1059
    %v3812 = vpop.f32.mrb[0].mxu0
    %v3813 = vadd.f32 %v3750, %v3812
    %v3814 = vpop.f32.mrb[0].mxu0
    %v3815 = vadd.f32 %v3752, %v3814
    %v3816 = vpop.f32.mrb[0].mxu0
    %v3817 = vadd.f32 %v3754, %v3816
    %v3818 = vpop.f32.mrb[0].mxu0
    %v3819 = vadd.f32 %v3756, %v3818
    %3820 = vmatprep.mubr.bf16.mxu0 %v3458
    %3821 = vmatmul.mubr.bf16.gmra.mrb[0].mxu0 %v1063
    %v3822 = vpop.f32.mrb[0].mxu0
    %v3823 = vadd.f32 %v3760, %v3822
    %v3824 = vpop.f32.mrb[0].mxu0
    %v3825 = vadd.f32 %v3762, %v3824
    %v3826 = vpop.f32.mrb[0].mxu0
    %v3827 = vadd.f32 %v3764, %v3826
    %v3828 = vpop.f32.mrb[0].mxu0
    %v3829 = vadd.f32 %v3766, %v3828
    %3830 = vmatprep.mubr.bf16.mxu0 %v3461
    %3831 = vmatmul.mubr.bf16.gmra.mrb[0].mxu0 %v1067
    %v3832 = vpop.f32.mrb[0].mxu0
    %v3833 = vadd.f32 %v3770, %v3832
    %v3834 = vpop.f32.mrb[0].mxu0
    %v3835 = vadd.f32 %v3772, %v3834
    %v3836 = vpop.f32.mrb[0].mxu0
    %v3837 = vadd.f32 %v3774, %v3836
    %v3838 = vpop.f32.mrb[0].mxu0
    %v3839 = vadd.f32 %v3776, %v3838
    %3840 = vdwg.mxu0
    %v3841 = vrot.slane %v1025, 2
    %v3842 = vrot.slane %v1029, 2
    %v3843 = vsel %vm191, %v3841, %v3842
    %v3844 = vrot.slane %v1026, 2
    %v3845 = vrot.slane %v1030, 2
    %v3846 = vsel %vm191, %v3844, %v3845
    %v3847 = vrot.slane %v1027, 2
    %v3848 = vrot.slane %v1031, 2
    %v3849 = vsel %vm191, %v3847, %v3848
    %v3850 = vrot.slane %v1028, 2
    %v3851 = vrot.slane %v1032, 2
    %v3852 = vsel %vm191, %v3850, %v3851
    %v3853 = vrot.slane %v1033, 2
    %v3854 = vsel %vm191, %v3842, %v3853
    %v3855 = vrot.slane %v1034, 2
    %v3856 = vsel %vm191, %v3845, %v3855
    %v3857 = vrot.slane %v1035, 2
    %v3858 = vsel %vm191, %v3848, %v3857
    %v3859 = vrot.slane %v1036, 2
    %v3860 = vsel %vm191, %v3851, %v3859
    %v3861 = vrot.slane %v1037, 2
    %v3862 = vsel %vm191, %v3853, %v3861
    %v3863 = vrot.slane %v1038, 2
    %v3864 = vsel %vm191, %v3855, %v3863
    %v3865 = vrot.slane %v1039, 2
    %v3866 = vsel %vm191, %v3857, %v3865
    %v3867 = vrot.slane %v1040, 2
    %v3868 = vsel %vm191, %v3859, %v3867
    %v3869 = vrot.slane %v1041, 2
    %v3870 = vrot.slane %v1045, 2
    %v3871 = vsel %vm191, %v3869, %v3870
    %v3872 = vrot.slane %v1042, 2
    %v3873 = vrot.slane %v1046, 2
    %v3874 = vsel %vm191, %v3872, %v3873
    %v3875 = vrot.slane %v1043, 2
    %v3876 = vrot.slane %v1047, 2
    %v3877 = vsel %vm191, %v3875, %v3876
    %v3878 = vrot.slane %v1044, 2
    %v3879 = vrot.slane %v1048, 2
    %v3880 = vsel %vm191, %v3878, %v3879
    %v3881 = vrot.slane %v1049, 2
    %v3882 = vsel %vm191, %v3870, %v3881
    %v3883 = vrot.slane %v1050, 2
    %v3884 = vsel %vm191, %v3873, %v3883
    %v3885 = vrot.slane %v1051, 2
    %v3886 = vsel %vm191, %v3876, %v3885
    %v3887 = vrot.slane %v1052, 2
    %v3888 = vsel %vm191, %v3879, %v3887
    %v3889 = vrot.slane %v1053, 2
    %v3890 = vsel %vm191, %v3881, %v3889
    %v3891 = vrot.slane %v1054, 2
    %v3892 = vsel %vm191, %v3883, %v3891
    %v3893 = vrot.slane %v1055, 2
    %v3894 = vsel %vm191, %v3885, %v3893
    %v3895 = vrot.slane %v1056, 2
    %v3896 = vsel %vm191, %v3887, %v3895
    %v3921 = vpack.c.bf16 %v3854, %v3843
    %v3922 = vpack.c.bf16 %v3856, %v3846
    %v3923 = vpack.c.bf16 %v3858, %v3849
    %v3924 = vpack.c.bf16 %v3860, %v3852
    %v3925 = vpack.c.bf16 %v3871, %v3862
    %v3926 = vpack.c.bf16 %v3874, %v3864
    %v3927 = vpack.c.bf16 %v3877, %v3866
    %v3928 = vpack.c.bf16 %v3880, %v3868
    %v3929 = vpack.c.bf16 %v3890, %v3882
    %v3930 = vpack.c.bf16 %v3892, %v3884
    %v3931 = vpack.c.bf16 %v3894, %v3886
    %v3932 = vpack.c.bf16 %v3896, %v3888
    %s3933 = scalar_lea.vmem %s3, 2496
    %v3934 = vld [vmem:[%s3933] sm:$0xff]
    %v3935 = vld [vmem:[%s3933 + $0x8] sm:$0xff]
    %v3936 = vld [vmem:[%s3933 + $0x10] sm:$0xff]
    %v3937 = vld [vmem:[%s3933 + $0x18] sm:$0xff]
    %v3938 = vld [vmem:[%s3933 + $0x20] sm:$0xff]
    %v3939 = vld [vmem:[%s3933 + $0x28] sm:$0xff]
    %v3940 = vld [vmem:[%s3933 + $0x30] sm:$0xff]
    %v3941 = vld [vmem:[%s3933 + $0x38] sm:$0xff]
    %v3942 = vld [vmem:[%s3933 + $0x40] sm:$0xff]
    %v3943 = vld [vmem:[%s3933 + $0x48] sm:$0xff]
    %v3944 = vld [vmem:[%s3933 + $0x50] sm:$0xff]
    %v3945 = vld [vmem:[%s3933 + $0x58] sm:$0xff]
    %v3946 = vld [vmem:[%s3933 + $0x60] sm:$0xff]
    %v3947 = vld [vmem:[%s3933 + $0x68] sm:$0xff]
    %v3948 = vld [vmem:[%s3933 + $0x70] sm:$0xff]
    %v3949 = vld [vmem:[%s3933 + $0x78] sm:$0xff]
    %v3950 = vld [vmem:[%s3933 + $0x80] sm:$0xff]
    %v3951 = vld [vmem:[%s3933 + $0x88] sm:$0xff]
    %v3952 = vld [vmem:[%s3933 + $0x90] sm:$0xff]
    %v3953 = vld [vmem:[%s3933 + $0x98] sm:$0xff]
    %v3954 = vld [vmem:[%s3933 + $0xa0] sm:$0xff]
    %v3955 = vld [vmem:[%s3933 + $0xa8] sm:$0xff]
    %v3956 = vld [vmem:[%s3933 + $0xb0] sm:$0xff]
    %v3957 = vld [vmem:[%s3933 + $0xb8] sm:$0xff]
    %v3958 = vld [vmem:[%s3933 + $0xc0] sm:$0xff]
    %v3959 = vld [vmem:[%s3933 + $0xc8] sm:$0xff]
    %v3960 = vld [vmem:[%s3933 + $0xd0] sm:$0xff]
    %v3961 = vld [vmem:[%s3933 + $0xd8] sm:$0xff]
    %v3962 = vld [vmem:[%s3933 + $0xe0] sm:$0xff]
    %v3963 = vld [vmem:[%s3933 + $0xe8] sm:$0xff]
    %v3964 = vld [vmem:[%s3933 + $0xf0] sm:$0xff]
    %v3965 = vld [vmem:[%s3933 + $0xf8] sm:$0xff]
    %v3966 = vld [vmem:[%s3933 + $0x100] sm:$0xff]
    %v3967 = vld [vmem:[%s3933 + $0x108] sm:$0xff]
    %v3968 = vld [vmem:[%s3933 + $0x110] sm:$0xff]
    %v3969 = vld [vmem:[%s3933 + $0x118] sm:$0xff]
    %v3970 = vld [vmem:[%s3933 + $0x120] sm:$0xff]
    %v3971 = vld [vmem:[%s3933 + $0x128] sm:$0xff]
    %v3972 = vld [vmem:[%s3933 + $0x130] sm:$0xff]
    %v3973 = vld [vmem:[%s3933 + $0x138] sm:$0xff]
    %v3974 = vld [vmem:[%s3933 + $0x140] sm:$0xff]
    %v3975 = vld [vmem:[%s3933 + $0x148] sm:$0xff]
    %v3976 = vld [vmem:[%s3933 + $0x150] sm:$0xff]
    %v3977 = vld [vmem:[%s3933 + $0x158] sm:$0xff]
    %v3978 = vld [vmem:[%s3933 + $0x160] sm:$0xff]
    %v3979 = vld [vmem:[%s3933 + $0x168] sm:$0xff]
    %v3980 = vld [vmem:[%s3933 + $0x170] sm:$0xff]
    %v3981 = vld [vmem:[%s3933 + $0x178] sm:$0xff]
    %v3982 = vld [vmem:[%s3933 + $0x180] sm:$0xff]
    %v3983 = vld [vmem:[%s3933 + $0x188] sm:$0xff]
    %v3984 = vld [vmem:[%s3933 + $0x190] sm:$0xff]
    %v3985 = vld [vmem:[%s3933 + $0x198] sm:$0xff]
    %v3986 = vld [vmem:[%s3933 + $0x1a0] sm:$0xff]
    %v3987 = vld [vmem:[%s3933 + $0x1a8] sm:$0xff]
    %v3988 = vld [vmem:[%s3933 + $0x1b0] sm:$0xff]
    %v3989 = vld [vmem:[%s3933 + $0x1b8] sm:$0xff]
    %v3990 = vld [vmem:[%s3933 + $0x1c0] sm:$0xff]
    %v3991 = vld [vmem:[%s3933 + $0x1c8] sm:$0xff]
    %v3992 = vld [vmem:[%s3933 + $0x1d0] sm:$0xff]
    %v3993 = vld [vmem:[%s3933 + $0x1d8] sm:$0xff]
    %v3994 = vld [vmem:[%s3933 + $0x1e0] sm:$0xff]
    %v3995 = vld [vmem:[%s3933 + $0x1e8] sm:$0xff]
    %v3996 = vld [vmem:[%s3933 + $0x1f0] sm:$0xff]
    %v3997 = vld [vmem:[%s3933 + $0x1f8] sm:$0xff]
    %v3998 = vld [vmem:[%s3933 + $0x200] sm:$0xff]
    %v3999 = vld [vmem:[%s3933 + $0x208] sm:$0xff]
    %v4000 = vld [vmem:[%s3933 + $0x210] sm:$0xff]
    %v4001 = vld [vmem:[%s3933 + $0x218] sm:$0xff]
    %v4002 = vld [vmem:[%s3933 + $0x220] sm:$0xff]
    %v4003 = vld [vmem:[%s3933 + $0x228] sm:$0xff]
    %v4004 = vld [vmem:[%s3933 + $0x230] sm:$0xff]
    %v4005 = vld [vmem:[%s3933 + $0x238] sm:$0xff]
    %v4006 = vld [vmem:[%s3933 + $0x240] sm:$0xff]
    %v4007 = vld [vmem:[%s3933 + $0x248] sm:$0xff]
    %v4008 = vld [vmem:[%s3933 + $0x250] sm:$0xff]
    %v4009 = vld [vmem:[%s3933 + $0x258] sm:$0xff]
    %v4010 = vld [vmem:[%s3933 + $0x260] sm:$0xff]
    %v4011 = vld [vmem:[%s3933 + $0x268] sm:$0xff]
    %v4012 = vld [vmem:[%s3933 + $0x270] sm:$0xff]
    %v4013 = vld [vmem:[%s3933 + $0x278] sm:$0xff]
    %v4014 = vld [vmem:[%s3933 + $0x280] sm:$0xff]
    %v4015 = vld [vmem:[%s3933 + $0x288] sm:$0xff]
    %v4016 = vld [vmem:[%s3933 + $0x290] sm:$0xff]
    %v4017 = vld [vmem:[%s3933 + $0x298] sm:$0xff]
    %v4018 = vld [vmem:[%s3933 + $0x2a0] sm:$0xff]
    %v4019 = vld [vmem:[%s3933 + $0x2a8] sm:$0xff]
    %v4020 = vld [vmem:[%s3933 + $0x2b0] sm:$0xff]
    %v4021 = vld [vmem:[%s3933 + $0x2b8] sm:$0xff]
    %v4022 = vld [vmem:[%s3933 + $0x2c0] sm:$0xff]
    %v4023 = vld [vmem:[%s3933 + $0x2c8] sm:$0xff]
    %v4024 = vld [vmem:[%s3933 + $0x2d0] sm:$0xff]
    %v4025 = vld [vmem:[%s3933 + $0x2d8] sm:$0xff]
    %v4026 = vld [vmem:[%s3933 + $0x2e0] sm:$0xff]
    %v4027 = vld [vmem:[%s3933 + $0x2e8] sm:$0xff]
    %v4028 = vld [vmem:[%s3933 + $0x2f0] sm:$0xff]
    %v4029 = vld [vmem:[%s3933 + $0x2f8] sm:$0xff]
    %v4030 = vld [vmem:[%s3933 + $0x300] sm:$0xff]
    %v4031 = vld [vmem:[%s3933 + $0x308] sm:$0xff]
    %v4032 = vld [vmem:[%s3933 + $0x310] sm:$0xff]
    %v4033 = vld [vmem:[%s3933 + $0x318] sm:$0xff]
    %v4034 = vld [vmem:[%s3933 + $0x320] sm:$0xff]
    %v4035 = vld [vmem:[%s3933 + $0x328] sm:$0xff]
    %v4036 = vld [vmem:[%s3933 + $0x330] sm:$0xff]
    %v4037 = vld [vmem:[%s3933 + $0x338] sm:$0xff]
    %v4038 = vld [vmem:[%s3933 + $0x340] sm:$0xff]
    %v4039 = vld [vmem:[%s3933 + $0x348] sm:$0xff]
    %v4040 = vld [vmem:[%s3933 + $0x350] sm:$0xff]
    %v4041 = vld [vmem:[%s3933 + $0x358] sm:$0xff]
    %v4042 = vld [vmem:[%s3933 + $0x360] sm:$0xff]
    %v4043 = vld [vmem:[%s3933 + $0x368] sm:$0xff]
    %v4044 = vld [vmem:[%s3933 + $0x370] sm:$0xff]
    %v4045 = vld [vmem:[%s3933 + $0x378] sm:$0xff]
    %v4046 = vld [vmem:[%s3933 + $0x380] sm:$0xff]
    %v4047 = vld [vmem:[%s3933 + $0x388] sm:$0xff]
    %v4048 = vld [vmem:[%s3933 + $0x390] sm:$0xff]
    %v4049 = vld [vmem:[%s3933 + $0x398] sm:$0xff]
    %v4050 = vld [vmem:[%s3933 + $0x3a0] sm:$0xff]
    %v4051 = vld [vmem:[%s3933 + $0x3a8] sm:$0xff]
    %v4052 = vld [vmem:[%s3933 + $0x3b0] sm:$0xff]
    %v4053 = vld [vmem:[%s3933 + $0x3b8] sm:$0xff]
    %v4054 = vld [vmem:[%s3933 + $0x3c0] sm:$0xff]
    %v4055 = vld [vmem:[%s3933 + $0x3c8] sm:$0xff]
    %v4056 = vld [vmem:[%s3933 + $0x3d0] sm:$0xff]
    %v4057 = vld [vmem:[%s3933 + $0x3d8] sm:$0xff]
    %v4058 = vld [vmem:[%s3933 + $0x3e0] sm:$0xff]
    %v4059 = vld [vmem:[%s3933 + $0x3e8] sm:$0xff]
    %v4060 = vld [vmem:[%s3933 + $0x3f0] sm:$0xff]
    %v4061 = vld [vmem:[%s3933 + $0x3f8] sm:$0xff]
    %v4062 = vld [vmem:[%s3933 + $0x400] sm:$0xff]
    %v4063 = vld [vmem:[%s3933 + $0x408] sm:$0xff]
    %v4064 = vld [vmem:[%s3933 + $0x410] sm:$0xff]
    %v4065 = vld [vmem:[%s3933 + $0x418] sm:$0xff]
    %v4066 = vld [vmem:[%s3933 + $0x420] sm:$0xff]
    %v4067 = vld [vmem:[%s3933 + $0x428] sm:$0xff]
    %v4068 = vld [vmem:[%s3933 + $0x430] sm:$0xff]
    %v4069 = vld [vmem:[%s3933 + $0x438] sm:$0xff]
    %v4070 = vld [vmem:[%s3933 + $0x440] sm:$0xff]
    %v4071 = vld [vmem:[%s3933 + $0x448] sm:$0xff]
    %v4072 = vld [vmem:[%s3933 + $0x450] sm:$0xff]
    %v4073 = vld [vmem:[%s3933 + $0x458] sm:$0xff]
    %v4074 = vld [vmem:[%s3933 + $0x460] sm:$0xff]
    %v4075 = vld [vmem:[%s3933 + $0x468] sm:$0xff]
    %v4076 = vld [vmem:[%s3933 + $0x470] sm:$0xff]
    %v4077 = vld [vmem:[%s3933 + $0x478] sm:$0xff]
    %v4078 = vld [vmem:[%s3933 + $0x480] sm:$0xff]
    %v4079 = vld [vmem:[%s3933 + $0x488] sm:$0xff]
    %v4080 = vld [vmem:[%s3933 + $0x490] sm:$0xff]
    %v4081 = vld [vmem:[%s3933 + $0x498] sm:$0xff]
    %v4082 = vld [vmem:[%s3933 + $0x4a0] sm:$0xff]
    %v4083 = vld [vmem:[%s3933 + $0x4a8] sm:$0xff]
    %v4084 = vld [vmem:[%s3933 + $0x4b0] sm:$0xff]
    %v4085 = vld [vmem:[%s3933 + $0x4b8] sm:$0xff]
    %v4086 = vld [vmem:[%s3933 + $0x4c0] sm:$0xff]
    %v4087 = vld [vmem:[%s3933 + $0x4c8] sm:$0xff]
    %v4088 = vld [vmem:[%s3933 + $0x4d0] sm:$0xff]
    %v4089 = vld [vmem:[%s3933 + $0x4d8] sm:$0xff]
    %v4246 = vunpack.c.l.b16 %v3934
    %v4247 = vunpack.c.h.b16 %v3934
    %v4248 = vunpack.c.l.b16 %v3935
    %v4249 = vunpack.c.h.b16 %v3935
    %v4250 = vunpack.c.l.b16 %v3936
    %v4251 = vunpack.c.h.b16 %v3936
    %v4252 = vunpack.c.l.b16 %v3937
    %v4253 = vunpack.c.h.b16 %v3937
    %v4254 = vunpack.c.l.b16 %v3938
    %v4255 = vunpack.c.h.b16 %v3938
    %v4256 = vunpack.c.l.b16 %v3939
    %v4257 = vunpack.c.h.b16 %v3939
    %v4258 = vunpack.c.l.b16 %v3940
    %v4259 = vunpack.c.h.b16 %v3940
    %v4260 = vunpack.c.l.b16 %v3941
    %v4261 = vunpack.c.h.b16 %v3941
    %v4262 = vunpack.c.l.b16 %v3942
    %v4263 = vunpack.c.h.b16 %v3942
    %v4264 = vunpack.c.l.b16 %v3943
    %v4265 = vunpack.c.h.b16 %v3943
    %v4266 = vunpack.c.l.b16 %v3944
    %v4267 = vunpack.c.h.b16 %v3944
    %v4268 = vunpack.c.l.b16 %v3945
    %v4269 = vunpack.c.h.b16 %v3945
    %v4270 = vunpack.c.l.b16 %v3946
    %v4271 = vunpack.c.h.b16 %v3946
    %v4272 = vunpack.c.l.b16 %v3947
    %v4273 = vunpack.c.h.b16 %v3947
    %v4274 = vunpack.c.l.b16 %v3948
    %v4275 = vunpack.c.h.b16 %v3948
    %v4276 = vunpack.c.l.b16 %v3949
    %v4277 = vunpack.c.h.b16 %v3949
    %v4278 = vunpack.c.l.b16 %v3950
    %v4279 = vunpack.c.h.b16 %v3950
    %v4280 = vunpack.c.l.b16 %v3951
    %v4281 = vunpack.c.h.b16 %v3951
    %v4282 = vunpack.c.l.b16 %v3952
    %v4283 = vunpack.c.h.b16 %v3952
    %v4284 = vunpack.c.l.b16 %v3953
    %v4285 = vunpack.c.h.b16 %v3953
    %v4286 = vunpack.c.l.b16 %v3954
    %v4287 = vunpack.c.h.b16 %v3954
    %v4288 = vunpack.c.l.b16 %v3955
    %v4289 = vunpack.c.h.b16 %v3955
    %v4290 = vunpack.c.l.b16 %v3956
    %v4291 = vunpack.c.h.b16 %v3956
    %v4292 = vunpack.c.l.b16 %v3957
    %v4293 = vunpack.c.h.b16 %v3957
    %v4294 = vunpack.c.l.b16 %v3958
    %v4295 = vunpack.c.h.b16 %v3958
    %v4296 = vunpack.c.l.b16 %v3959
    %v4297 = vunpack.c.h.b16 %v3959
    %v4298 = vunpack.c.l.b16 %v3960
    %v4299 = vunpack.c.h.b16 %v3960
    %v4300 = vunpack.c.l.b16 %v3961
    %v4301 = vunpack.c.h.b16 %v3961
    %v4302 = vunpack.c.l.b16 %v3962
    %v4303 = vunpack.c.h.b16 %v3962
    %v4304 = vunpack.c.l.b16 %v3963
    %v4305 = vunpack.c.h.b16 %v3963
    %v4306 = vunpack.c.l.b16 %v3964
    %v4307 = vunpack.c.h.b16 %v3964
    %v4308 = vunpack.c.l.b16 %v3965
    %v4309 = vunpack.c.h.b16 %v3965
    %v4310 = vunpack.c.l.b16 %v3966
    %v4311 = vunpack.c.h.b16 %v3966
    %v4312 = vunpack.c.l.b16 %v3967
    %v4313 = vunpack.c.h.b16 %v3967
    %v4314 = vunpack.c.l.b16 %v3968
    %v4315 = vunpack.c.h.b16 %v3968
    %v4316 = vunpack.c.l.b16 %v3969
    %v4317 = vunpack.c.h.b16 %v3969
    %v4318 = vunpack.c.l.b16 %v3970
    %v4319 = vunpack.c.h.b16 %v3970
    %v4320 = vunpack.c.l.b16 %v3971
    %v4321 = vunpack.c.h.b16 %v3971
    %v4322 = vunpack.c.l.b16 %v3972
    %v4323 = vunpack.c.h.b16 %v3972
    %v4324 = vunpack.c.l.b16 %v3973
    %v4325 = vunpack.c.h.b16 %v3973
    %v4326 = vunpack.c.l.b16 %v3974
    %v4327 = vunpack.c.h.b16 %v3974
    %v4328 = vunpack.c.l.b16 %v3975
    %v4329 = vunpack.c.h.b16 %v3975
    %v4330 = vunpack.c.l.b16 %v3976
    %v4331 = vunpack.c.h.b16 %v3976
    %v4332 = vunpack.c.l.b16 %v3977
    %v4333 = vunpack.c.h.b16 %v3977
    %v4334 = vunpack.c.l.b16 %v3978
    %v4335 = vunpack.c.h.b16 %v3978
    %v4336 = vunpack.c.l.b16 %v3979
    %v4337 = vunpack.c.h.b16 %v3979
    %v4338 = vunpack.c.l.b16 %v3980
    %v4339 = vunpack.c.h.b16 %v3980
    %v4340 = vunpack.c.l.b16 %v3981
    %v4341 = vunpack.c.h.b16 %v3981
    %v4342 = vunpack.c.l.b16 %v3982
    %v4343 = vunpack.c.h.b16 %v3982
    %v4344 = vunpack.c.l.b16 %v3983
    %v4345 = vunpack.c.h.b16 %v3983
    %v4346 = vunpack.c.l.b16 %v3984
    %v4347 = vunpack.c.h.b16 %v3984
    %v4348 = vunpack.c.l.b16 %v3985
    %v4349 = vunpack.c.h.b16 %v3985
    %v4350 = vunpack.c.l.b16 %v3986
    %v4351 = vunpack.c.h.b16 %v3986
    %v4352 = vunpack.c.l.b16 %v3987
    %v4353 = vunpack.c.h.b16 %v3987
    %v4354 = vunpack.c.l.b16 %v3988
    %v4355 = vunpack.c.h.b16 %v3988
    %v4356 = vunpack.c.l.b16 %v3989
    %v4357 = vunpack.c.h.b16 %v3989
    %v4358 = vunpack.c.l.b16 %v3990
    %v4359 = vunpack.c.h.b16 %v3990
    %v4360 = vunpack.c.l.b16 %v3991
    %v4361 = vunpack.c.h.b16 %v3991
    %v4362 = vunpack.c.l.b16 %v3992
    %v4363 = vunpack.c.h.b16 %v3992
    %v4364 = vunpack.c.l.b16 %v3993
    %v4365 = vunpack.c.h.b16 %v3993
    %v4366 = vunpack.c.l.b16 %v3994
    %v4367 = vunpack.c.h.b16 %v3994
    %v4368 = vunpack.c.l.b16 %v3995
    %v4369 = vunpack.c.h.b16 %v3995
    %v4370 = vunpack.c.l.b16 %v3996
    %v4371 = vunpack.c.h.b16 %v3996
    %v4372 = vunpack.c.l.b16 %v3997
    %v4373 = vunpack.c.h.b16 %v3997
    %v4374 = vunpack.c.l.b16 %v3998
    %v4375 = vunpack.c.h.b16 %v3998
    %v4376 = vunpack.c.l.b16 %v3999
    %v4377 = vunpack.c.h.b16 %v3999
    %v4378 = vunpack.c.l.b16 %v4000
    %v4379 = vunpack.c.h.b16 %v4000
    %v4380 = vunpack.c.l.b16 %v4001
    %v4381 = vunpack.c.h.b16 %v4001
    %v4382 = vunpack.c.l.b16 %v4002
    %v4383 = vunpack.c.h.b16 %v4002
    %v4384 = vunpack.c.l.b16 %v4003
    %v4385 = vunpack.c.h.b16 %v4003
    %v4386 = vunpack.c.l.b16 %v4004
    %v4387 = vunpack.c.h.b16 %v4004
    %v4388 = vunpack.c.l.b16 %v4005
    %v4389 = vunpack.c.h.b16 %v4005
    %v4390 = vunpack.c.l.b16 %v4006
    %v4391 = vunpack.c.h.b16 %v4006
    %v4392 = vunpack.c.l.b16 %v4007
    %v4393 = vunpack.c.h.b16 %v4007
    %v4394 = vunpack.c.l.b16 %v4008
    %v4395 = vunpack.c.h.b16 %v4008
    %v4396 = vunpack.c.l.b16 %v4009
    %v4397 = vunpack.c.h.b16 %v4009
    %v4398 = vunpack.c.l.b16 %v4010
    %v4399 = vunpack.c.h.b16 %v4010
    %v4400 = vunpack.c.l.b16 %v4011
    %v4401 = vunpack.c.h.b16 %v4011
    %v4402 = vunpack.c.l.b16 %v4012
    %v4403 = vunpack.c.h.b16 %v4012
    %v4404 = vunpack.c.l.b16 %v4013
    %v4405 = vunpack.c.h.b16 %v4013
    %v4406 = vunpack.c.l.b16 %v4014
    %v4407 = vunpack.c.h.b16 %v4014
    %v4408 = vunpack.c.l.b16 %v4015
    %v4409 = vunpack.c.h.b16 %v4015
    %v4410 = vunpack.c.l.b16 %v4016
    %v4411 = vunpack.c.h.b16 %v4016
    %v4412 = vunpack.c.l.b16 %v4017
    %v4413 = vunpack.c.h.b16 %v4017
    %v4414 = vunpack.c.l.b16 %v4018
    %v4415 = vunpack.c.h.b16 %v4018
    %v4416 = vunpack.c.l.b16 %v4019
    %v4417 = vunpack.c.h.b16 %v4019
    %v4418 = vunpack.c.l.b16 %v4020
    %v4419 = vunpack.c.h.b16 %v4020
    %v4420 = vunpack.c.l.b16 %v4021
    %v4421 = vunpack.c.h.b16 %v4021
    %v4422 = vunpack.c.l.b16 %v4022
    %v4423 = vunpack.c.h.b16 %v4022
    %v4424 = vunpack.c.l.b16 %v4023
    %v4425 = vunpack.c.h.b16 %v4023
    %v4426 = vunpack.c.l.b16 %v4024
    %v4427 = vunpack.c.h.b16 %v4024
    %v4428 = vunpack.c.l.b16 %v4025
    %v4429 = vunpack.c.h.b16 %v4025
    %v4430 = vunpack.c.l.b16 %v4026
    %v4431 = vunpack.c.h.b16 %v4026
    %v4432 = vunpack.c.l.b16 %v4027
    %v4433 = vunpack.c.h.b16 %v4027
    %v4434 = vunpack.c.l.b16 %v4028
    %v4435 = vunpack.c.h.b16 %v4028
    %v4436 = vunpack.c.l.b16 %v4029
    %v4437 = vunpack.c.h.b16 %v4029
    %v4438 = vunpack.c.l.b16 %v4030
    %v4439 = vunpack.c.h.b16 %v4030
    %v4440 = vunpack.c.l.b16 %v4031
    %v4441 = vunpack.c.h.b16 %v4031
    %v4442 = vunpack.c.l.b16 %v4032
    %v4443 = vunpack.c.h.b16 %v4032
    %v4444 = vunpack.c.l.b16 %v4033
    %v4445 = vunpack.c.h.b16 %v4033
    %v4446 = vunpack.c.l.b16 %v4034
    %v4447 = vunpack.c.h.b16 %v4034
    %v4448 = vunpack.c.l.b16 %v4035
    %v4449 = vunpack.c.h.b16 %v4035
    %v4450 = vunpack.c.l.b16 %v4036
    %v4451 = vunpack.c.h.b16 %v4036
    %v4452 = vunpack.c.l.b16 %v4037
    %v4453 = vunpack.c.h.b16 %v4037
    %v4454 = vunpack.c.l.b16 %v4038
    %v4455 = vunpack.c.h.b16 %v4038
    %v4456 = vunpack.c.l.b16 %v4039
    %v4457 = vunpack.c.h.b16 %v4039
    %v4458 = vunpack.c.l.b16 %v4040
    %v4459 = vunpack.c.h.b16 %v4040
    %v4460 = vunpack.c.l.b16 %v4041
    %v4461 = vunpack.c.h.b16 %v4041
    %v4462 = vunpack.c.l.b16 %v4042
    %v4463 = vunpack.c.h.b16 %v4042
    %v4464 = vunpack.c.l.b16 %v4043
    %v4465 = vunpack.c.h.b16 %v4043
    %v4466 = vunpack.c.l.b16 %v4044
    %v4467 = vunpack.c.h.b16 %v4044
    %v4468 = vunpack.c.l.b16 %v4045
    %v4469 = vunpack.c.h.b16 %v4045
    %v4470 = vunpack.c.l.b16 %v4046
    %v4471 = vunpack.c.h.b16 %v4046
    %v4472 = vunpack.c.l.b16 %v4047
    %v4473 = vunpack.c.h.b16 %v4047
    %v4474 = vunpack.c.l.b16 %v4048
    %v4475 = vunpack.c.h.b16 %v4048
    %v4476 = vunpack.c.l.b16 %v4049
    %v4477 = vunpack.c.h.b16 %v4049
    %v4478 = vunpack.c.l.b16 %v4050
    %v4479 = vunpack.c.h.b16 %v4050
    %v4480 = vunpack.c.l.b16 %v4051
    %v4481 = vunpack.c.h.b16 %v4051
    %v4482 = vunpack.c.l.b16 %v4052
    %v4483 = vunpack.c.h.b16 %v4052
    %v4484 = vunpack.c.l.b16 %v4053
    %v4485 = vunpack.c.h.b16 %v4053
    %v4486 = vunpack.c.l.b16 %v4054
    %v4487 = vunpack.c.h.b16 %v4054
    %v4488 = vunpack.c.l.b16 %v4055
    %v4489 = vunpack.c.h.b16 %v4055
    %v4490 = vunpack.c.l.b16 %v4056
    %v4491 = vunpack.c.h.b16 %v4056
    %v4492 = vunpack.c.l.b16 %v4057
    %v4493 = vunpack.c.h.b16 %v4057
    %v4494 = vunpack.c.l.b16 %v4058
    %v4495 = vunpack.c.h.b16 %v4058
    %v4496 = vunpack.c.l.b16 %v4059
    %v4497 = vunpack.c.h.b16 %v4059
    %v4498 = vunpack.c.l.b16 %v4060
    %v4499 = vunpack.c.h.b16 %v4060
    %v4500 = vunpack.c.l.b16 %v4061
    %v4501 = vunpack.c.h.b16 %v4061
    %v4502 = vunpack.c.l.b16 %v4062
    %v4503 = vunpack.c.h.b16 %v4062
    %v4504 = vunpack.c.l.b16 %v4063
    %v4505 = vunpack.c.h.b16 %v4063
    %v4506 = vunpack.c.l.b16 %v4064
    %v4507 = vunpack.c.h.b16 %v4064
    %v4508 = vunpack.c.l.b16 %v4065
    %v4509 = vunpack.c.h.b16 %v4065
    %v4510 = vunpack.c.l.b16 %v4066
    %v4511 = vunpack.c.h.b16 %v4066
    %v4512 = vunpack.c.l.b16 %v4067
    %v4513 = vunpack.c.h.b16 %v4067
    %v4514 = vunpack.c.l.b16 %v4068
    %v4515 = vunpack.c.h.b16 %v4068
    %v4516 = vunpack.c.l.b16 %v4069
    %v4517 = vunpack.c.h.b16 %v4069
    %v4518 = vunpack.c.l.b16 %v4070
    %v4519 = vunpack.c.h.b16 %v4070
    %v4520 = vunpack.c.l.b16 %v4071
    %v4521 = vunpack.c.h.b16 %v4071
    %v4522 = vunpack.c.l.b16 %v4072
    %v4523 = vunpack.c.h.b16 %v4072
    %v4524 = vunpack.c.l.b16 %v4073
    %v4525 = vunpack.c.h.b16 %v4073
    %v4526 = vunpack.c.l.b16 %v4074
    %v4527 = vunpack.c.h.b16 %v4074
    %v4528 = vunpack.c.l.b16 %v4075
    %v4529 = vunpack.c.h.b16 %v4075
    %v4530 = vunpack.c.l.b16 %v4076
    %v4531 = vunpack.c.h.b16 %v4076
    %v4532 = vunpack.c.l.b16 %v4077
    %v4533 = vunpack.c.h.b16 %v4077
    %v4534 = vunpack.c.l.b16 %v4078
    %v4535 = vunpack.c.h.b16 %v4078
    %v4536 = vunpack.c.l.b16 %v4079
    %v4537 = vunpack.c.h.b16 %v4079
    %v4538 = vunpack.c.l.b16 %v4080
    %v4539 = vunpack.c.h.b16 %v4080
    %v4540 = vunpack.c.l.b16 %v4081
    %v4541 = vunpack.c.h.b16 %v4081
    %v4542 = vunpack.c.l.b16 %v4082
    %v4543 = vunpack.c.h.b16 %v4082
    %v4544 = vunpack.c.l.b16 %v4083
    %v4545 = vunpack.c.h.b16 %v4083
    %v4546 = vunpack.c.l.b16 %v4084
    %v4547 = vunpack.c.h.b16 %v4084
    %v4548 = vunpack.c.l.b16 %v4085
    %v4549 = vunpack.c.h.b16 %v4085
    %v4550 = vunpack.c.l.b16 %v4086
    %v4551 = vunpack.c.h.b16 %v4086
    %v4552 = vunpack.c.l.b16 %v4087
    %v4553 = vunpack.c.h.b16 %v4087
    %v4554 = vunpack.c.l.b16 %v4088
    %v4555 = vunpack.c.h.b16 %v4088
    %v4556 = vunpack.c.l.b16 %v4089
    %v4557 = vunpack.c.h.b16 %v4089
    %v4558 = vpack.c.b16 %v4252, %v4246
    %v4559 = vpack.c.b16 %v4253, %v4247
    %v4560 = vpack.c.b16 %v4254, %v4248
    %v4561 = vpack.c.b16 %v4255, %v4249
    %v4562 = vpack.c.b16 %v4256, %v4250
    %v4563 = vpack.c.b16 %v4257, %v4251
    %v4564 = vpack.c.b16 %v4264, %v4258
    %v4565 = vpack.c.b16 %v4265, %v4259
    %v4566 = vpack.c.b16 %v4266, %v4260
    %v4567 = vpack.c.b16 %v4267, %v4261
    %v4568 = vpack.c.b16 %v4268, %v4262
    %v4569 = vpack.c.b16 %v4269, %v4263
    %v4570 = vpack.c.b16 %v4276, %v4270
    %v4571 = vpack.c.b16 %v4277, %v4271
    %v4572 = vpack.c.b16 %v4278, %v4272
    %v4573 = vpack.c.b16 %v4279, %v4273
    %v4574 = vpack.c.b16 %v4280, %v4274
    %v4575 = vpack.c.b16 %v4281, %v4275
    %v4576 = vpack.c.b16 %v4288, %v4282
    %v4577 = vpack.c.b16 %v4289, %v4283
    %v4578 = vpack.c.b16 %v4290, %v4284
    %v4579 = vpack.c.b16 %v4291, %v4285
    %v4580 = vpack.c.b16 %v4292, %v4286
    %v4581 = vpack.c.b16 %v4293, %v4287
    %v4582 = vpack.c.b16 %v4300, %v4294
    %v4583 = vpack.c.b16 %v4301, %v4295
    %v4584 = vpack.c.b16 %v4302, %v4296
    %v4585 = vpack.c.b16 %v4303, %v4297
    %v4586 = vpack.c.b16 %v4304, %v4298
    %v4587 = vpack.c.b16 %v4305, %v4299
    %v4588 = vpack.c.b16 %v4312, %v4306
    %v4589 = vpack.c.b16 %v4313, %v4307
    %v4590 = vpack.c.b16 %v4314, %v4308
    %v4591 = vpack.c.b16 %v4315, %v4309
    %v4592 = vpack.c.b16 %v4316, %v4310
    %v4593 = vpack.c.b16 %v4317, %v4311
    %v4594 = vpack.c.b16 %v4324, %v4318
    %v4595 = vpack.c.b16 %v4325, %v4319
    %v4596 = vpack.c.b16 %v4326, %v4320
    %v4597 = vpack.c.b16 %v4327, %v4321
    %v4598 = vpack.c.b16 %v4328, %v4322
    %v4599 = vpack.c.b16 %v4329, %v4323
    %v4600 = vpack.c.b16 %v4336, %v4330
    %v4601 = vpack.c.b16 %v4337, %v4331
    %v4602 = vpack.c.b16 %v4338, %v4332
    %v4603 = vpack.c.b16 %v4339, %v4333
    %v4604 = vpack.c.b16 %v4340, %v4334
    %v4605 = vpack.c.b16 %v4341, %v4335
    %v4606 = vpack.c.b16 %v4348, %v4342
    %v4607 = vpack.c.b16 %v4349, %v4343
    %v4608 = vpack.c.b16 %v4350, %v4344
    %v4609 = vpack.c.b16 %v4351, %v4345
    %v4610 = vpack.c.b16 %v4352, %v4346
    %v4611 = vpack.c.b16 %v4353, %v4347
    %v4612 = vpack.c.b16 %v4360, %v4354
    %v4613 = vpack.c.b16 %v4361, %v4355
    %v4614 = vpack.c.b16 %v4362, %v4356
    %v4615 = vpack.c.b16 %v4363, %v4357
    %v4616 = vpack.c.b16 %v4364, %v4358
    %v4617 = vpack.c.b16 %v4365, %v4359
    %v4618 = vpack.c.b16 %v4372, %v4366
    %v4619 = vpack.c.b16 %v4373, %v4367
    %v4620 = vpack.c.b16 %v4374, %v4368
    %v4621 = vpack.c.b16 %v4375, %v4369
    %v4622 = vpack.c.b16 %v4376, %v4370
    %v4623 = vpack.c.b16 %v4377, %v4371
    %v4624 = vpack.c.b16 %v4384, %v4378
    %v4625 = vpack.c.b16 %v4385, %v4379
    %v4626 = vpack.c.b16 %v4386, %v4380
    %v4627 = vpack.c.b16 %v4387, %v4381
    %v4628 = vpack.c.b16 %v4388, %v4382
    %v4629 = vpack.c.b16 %v4389, %v4383
    %v4630 = vpack.c.b16 %v4396, %v4390
    %v4631 = vpack.c.b16 %v4397, %v4391
    %v4632 = vpack.c.b16 %v4398, %v4392
    %v4633 = vpack.c.b16 %v4399, %v4393
    %v4634 = vpack.c.b16 %v4400, %v4394
    %v4635 = vpack.c.b16 %v4401, %v4395
    %v4636 = vpack.c.b16 %v4408, %v4402
    %v4637 = vpack.c.b16 %v4409, %v4403
    %v4638 = vpack.c.b16 %v4410, %v4404
    %v4639 = vpack.c.b16 %v4411, %v4405
    %v4640 = vpack.c.b16 %v4412, %v4406
    %v4641 = vpack.c.b16 %v4413, %v4407
    %v4642 = vpack.c.b16 %v4420, %v4414
    %v4643 = vpack.c.b16 %v4421, %v4415
    %v4644 = vpack.c.b16 %v4422, %v4416
    %v4645 = vpack.c.b16 %v4423, %v4417
    %v4646 = vpack.c.b16 %v4424, %v4418
    %v4647 = vpack.c.b16 %v4425, %v4419
    %v4648 = vpack.c.b16 %v4432, %v4426
    %v4649 = vpack.c.b16 %v4433, %v4427
    %v4650 = vpack.c.b16 %v4434, %v4428
    %v4651 = vpack.c.b16 %v4435, %v4429
    %v4652 = vpack.c.b16 %v4436, %v4430
    %v4653 = vpack.c.b16 %v4437, %v4431
    %v4654 = vpack.c.b16 %v4444, %v4438
    %v4655 = vpack.c.b16 %v4445, %v4439
    %v4656 = vpack.c.b16 %v4446, %v4440
    %v4657 = vpack.c.b16 %v4447, %v4441
    %v4658 = vpack.c.b16 %v4448, %v4442
    %v4659 = vpack.c.b16 %v4449, %v4443
    %v4660 = vpack.c.b16 %v4456, %v4450
    %v4661 = vpack.c.b16 %v4457, %v4451
    %v4662 = vpack.c.b16 %v4458, %v4452
    %v4663 = vpack.c.b16 %v4459, %v4453
    %v4664 = vpack.c.b16 %v4460, %v4454
    %v4665 = vpack.c.b16 %v4461, %v4455
    %v4666 = vpack.c.b16 %v4468, %v4462
    %v4667 = vpack.c.b16 %v4469, %v4463
    %v4668 = vpack.c.b16 %v4470, %v4464
    %v4669 = vpack.c.b16 %v4471, %v4465
    %v4670 = vpack.c.b16 %v4472, %v4466
    %v4671 = vpack.c.b16 %v4473, %v4467
    %v4672 = vpack.c.b16 %v4480, %v4474
    %v4673 = vpack.c.b16 %v4481, %v4475
    %v4674 = vpack.c.b16 %v4482, %v4476
    %v4675 = vpack.c.b16 %v4483, %v4477
    %v4676 = vpack.c.b16 %v4484, %v4478
    %v4677 = vpack.c.b16 %v4485, %v4479
    %v4678 = vpack.c.b16 %v4492, %v4486
    %v4679 = vpack.c.b16 %v4493, %v4487
    %v4680 = vpack.c.b16 %v4494, %v4488
    %v4681 = vpack.c.b16 %v4495, %v4489
    %v4682 = vpack.c.b16 %v4496, %v4490
    %v4683 = vpack.c.b16 %v4497, %v4491
    %v4684 = vpack.c.b16 %v4504, %v4498
    %v4685 = vpack.c.b16 %v4505, %v4499
    %v4686 = vpack.c.b16 %v4506, %v4500
    %v4687 = vpack.c.b16 %v4507, %v4501
    %v4688 = vpack.c.b16 %v4508, %v4502
    %v4689 = vpack.c.b16 %v4509, %v4503
    %v4690 = vpack.c.b16 %v4516, %v4510
    %v4691 = vpack.c.b16 %v4517, %v4511
    %v4692 = vpack.c.b16 %v4518, %v4512
    %v4693 = vpack.c.b16 %v4519, %v4513
    %v4694 = vpack.c.b16 %v4520, %v4514
    %v4695 = vpack.c.b16 %v4521, %v4515
    %v4696 = vpack.c.b16 %v4528, %v4522
    %v4697 = vpack.c.b16 %v4529, %v4523
    %v4698 = vpack.c.b16 %v4530, %v4524
    %v4699 = vpack.c.b16 %v4531, %v4525
    %v4700 = vpack.c.b16 %v4532, %v4526
    %v4701 = vpack.c.b16 %v4533, %v4527
    %v4702 = vpack.c.b16 %v4540, %v4534
    %v4703 = vpack.c.b16 %v4541, %v4535
    %v4704 = vpack.c.b16 %v4542, %v4536
    %v4705 = vpack.c.b16 %v4543, %v4537
    %v4706 = vpack.c.b16 %v4544, %v4538
    %v4707 = vpack.c.b16 %v4545, %v4539
    %v4708 = vpack.c.b16 %v4552, %v4546
    %v4709 = vpack.c.b16 %v4553, %v4547
    %v4710 = vpack.c.b16 %v4554, %v4548
    %v4711 = vpack.c.b16 %v4555, %v4549
    %v4712 = vpack.c.b16 %v4556, %v4550
    %v4713 = vpack.c.b16 %v4557, %v4551
    %v4871 = vsel %vm2286, %v3924, 0
    %v4874 = vsel %vm2286, %v3928, 0
    %v4877 = vsel %vm2286, %v3932, 0
    %4879 = vmatprep.subr.bf16.mxu0 %v4559
    %4880 = vmatpush1.bf16.msra.mxu0 %v4558
    %4881 = vmatprep.subr.bf16.mxu0 %v4565
    %4882 = vmatpush1.bf16.msra.mxu0 %v4564
    %4883 = vmatprep.subr.bf16.mxu0 %v4571
    %4884 = vmatpush1.bf16.msra.mxu0 %v4570
    %4885 = vmatprep.subr.bf16.mxu0 %v4577
    %4886 = vmatpush1.bf16.msra.mxu0 %v4576
    %4887 = vmatprep.subr.bf16.mxu0 %v4583
    %4888 = vmatpush1.bf16.msra.mxu0 %v4582
    %4889 = vmatprep.subr.bf16.mxu0 %v4589
    %4890 = vmatpush1.bf16.msra.mxu0 %v4588
    %4891 = vmatprep.subr.bf16.mxu0 %v4595
    %4892 = vmatpush1.bf16.msra.mxu0 %v4594
    %4893 = vmatprep.subr.bf16.mxu0 %v4601
    %4894 = vmatpush1.bf16.msra.mxu0 %v4600
    %4895 = vmatprep.subr.bf16.mxu0 %v4607
    %4896 = vmatpush1.bf16.msra.mxu0 %v4606
    %4897 = vmatprep.subr.bf16.mxu0 %v4613
    %4898 = vmatpush1.bf16.msra.mxu0 %v4612
    %4899 = vmatprep.subr.bf16.mxu0 %v4619
    %4900 = vmatpush1.bf16.msra.mxu0 %v4618
    %4901 = vmatprep.subr.bf16.mxu0 %v4625
    %4902 = vmatpush1.bf16.msra.mxu0 %v4624
    %4903 = vmatprep.subr.bf16.mxu0 %v4631
    %4904 = vmatpush1.bf16.msra.mxu0 %v4630
    %4905 = vmatprep.subr.bf16.mxu0 %v4637
    %4906 = vmatpush1.bf16.msra.mxu0 %v4636
    %4907 = vmatprep.subr.bf16.mxu0 %v4643
    %4908 = vmatpush1.bf16.msra.mxu0 %v4642
    %4909 = vmatprep.subr.bf16.mxu0 %v4649
    %4910 = vmatpush1.bf16.msra.mxu0 %v4648
    %4911 = vmatprep.mubr.bf16.mxu0 %v3922
    %4912 = vmatmul.mubr.bf16.gmra.mrb[0].mxu0 %v3921
    %v4913 = vpop.f32.mrb[0].mxu0
    %v4914 = vadd.f32 0.0, %v4913
    %v4915 = vpop.f32.mrb[0].mxu0
    %v4916 = vadd.f32 0.0, %v4915
    %v4917 = vpop.f32.mrb[0].mxu0
    %v4918 = vadd.f32 0.0, %v4917
    %v4919 = vpop.f32.mrb[0].mxu0
    %v4920 = vadd.f32 0.0, %v4919
    %4921 = vmatprep.mubr.bf16.mxu0 %v3926
    %4922 = vmatmul.mubr.bf16.gmra.mrb[0].mxu0 %v3925
    %v4923 = vpop.f32.mrb[0].mxu0
    %v4924 = vadd.f32 0.0, %v4923
    %v4925 = vpop.f32.mrb[0].mxu0
    %v4926 = vadd.f32 0.0, %v4925
    %v4927 = vpop.f32.mrb[0].mxu0
    %v4928 = vadd.f32 0.0, %v4927
    %v4929 = vpop.f32.mrb[0].mxu0
    %v4930 = vadd.f32 0.0, %v4929
    %4931 = vmatprep.mubr.bf16.mxu0 %v3930
    %4932 = vmatmul.mubr.bf16.gmra.mrb[0].mxu0 %v3929
    %v4933 = vpop.f32.mrb[0].mxu0
    %v4934 = vadd.f32 0.0, %v4933
    %v4935 = vpop.f32.mrb[0].mxu0
    %v4936 = vadd.f32 0.0, %v4935
    %v4937 = vpop.f32.mrb[0].mxu0
    %v4938 = vadd.f32 0.0, %v4937
    %v4939 = vpop.f32.mrb[0].mxu0
    %v4940 = vadd.f32 0.0, %v4939
    %4941 = vdwg.mxu0
    %4942 = vmatprep.subr.bf16.mxu0 %v4655
    %4943 = vmatpush1.bf16.msra.mxu0 %v4654
    %4944 = vmatprep.subr.bf16.mxu0 %v4661
    %4945 = vmatpush1.bf16.msra.mxu0 %v4660
    %4946 = vmatprep.subr.bf16.mxu0 %v4667
    %4947 = vmatpush1.bf16.msra.mxu0 %v4666
    %4948 = vmatprep.subr.bf16.mxu0 %v4673
    %4949 = vmatpush1.bf16.msra.mxu0 %v4672
    %4950 = vmatprep.subr.bf16.mxu0 %v4679
    %4951 = vmatpush1.bf16.msra.mxu0 %v4678
    %4952 = vmatprep.subr.bf16.mxu0 %v4685
    %4953 = vmatpush1.bf16.msra.mxu0 %v4684
    %4954 = vmatprep.subr.bf16.mxu0 %v4691
    %4955 = vmatpush1.bf16.msra.mxu0 %v4690
    %4956 = vmatprep.subr.bf16.mxu0 %v4697
    %4957 = vmatpush1.bf16.msra.mxu0 %v4696
    %4958 = vmatprep.subr.bf16.mxu0 %v4703
    %4959 = vmatpush1.bf16.msra.mxu0 %v4702
    %4960 = vmatprep.subr.bf16.mxu0 %v4709
    %4961 = vmatpush1.bf16.msra.mxu0 %v4708
    %4962 = vmatprep.subr.bf16.mxu0 0
    %4963 = vmatpush1.bf16.msra.mxu0 0
    %4964 = vmatprep.subr.bf16.mxu0 0
    %4965 = vmatpush1.bf16.msra.mxu0 0
    %4966 = vmatprep.subr.bf16.mxu0 0
    %4967 = vmatpush1.bf16.msra.mxu0 0
    %4968 = vmatprep.subr.bf16.mxu0 0
    %4969 = vmatpush1.bf16.msra.mxu0 0
    %4970 = vmatprep.subr.bf16.mxu0 0
    %4971 = vmatpush1.bf16.msra.mxu0 0
    %4972 = vmatprep.subr.bf16.mxu0 0
    %4973 = vmatpush1.bf16.msra.mxu0 0
    %4974 = vmatprep.mubr.bf16.mxu0 %v4871
    %4975 = vmatmul.mubr.bf16.gmra.mrb[0].mxu0 %v3923
    %v4976 = vpop.f32.mrb[0].mxu0
    %v4977 = vadd.f32 %v4914, %v4976
    %v4978 = vpop.f32.mrb[0].mxu0
    %v4979 = vadd.f32 %v4916, %v4978
    %v4980 = vpop.f32.mrb[0].mxu0
    %v4981 = vadd.f32 %v4918, %v4980
    %v4982 = vpop.f32.mrb[0].mxu0
    %v4983 = vadd.f32 %v4920, %v4982
    %4984 = vmatprep.mubr.bf16.mxu0 %v4874
    %4985 = vmatmul.mubr.bf16.gmra.mrb[0].mxu0 %v3927
    %v4986 = vpop.f32.mrb[0].mxu0
    %v4987 = vadd.f32 %v4924, %v4986
    %v4988 = vpop.f32.mrb[0].mxu0
    %v4989 = vadd.f32 %v4926, %v4988
    %v4990 = vpop.f32.mrb[0].mxu0
    %v4991 = vadd.f32 %v4928, %v4990
    %v4992 = vpop.f32.mrb[0].mxu0
    %v4993 = vadd.f32 %v4930, %v4992
    %4994 = vmatprep.mubr.bf16.mxu0 %v4877
    %4995 = vmatmul.mubr.bf16.gmra.mrb[0].mxu0 %v3931
    %v4996 = vpop.f32.mrb[0].mxu0
    %v4997 = vadd.f32 %v4934, %v4996
    %v4998 = vpop.f32.mrb[0].mxu0
    %v4999 = vadd.f32 %v4936, %v4998
    %v5000 = vpop.f32.mrb[0].mxu0
    %v5001 = vadd.f32 %v4938, %v5000
    %v5002 = vpop.f32.mrb[0].mxu0
    %v5003 = vadd.f32 %v4940, %v5002
    %5004 = vdwg.mxu0
    %5005 = vmatprep.subr.bf16.mxu0 %v4561
    %5006 = vmatpush1.bf16.msra.mxu0 %v4560
    %5007 = vmatprep.subr.bf16.mxu0 %v4567
    %5008 = vmatpush1.bf16.msra.mxu0 %v4566
    %5009 = vmatprep.subr.bf16.mxu0 %v4573
    %5010 = vmatpush1.bf16.msra.mxu0 %v4572
    %5011 = vmatprep.subr.bf16.mxu0 %v4579
    %5012 = vmatpush1.bf16.msra.mxu0 %v4578
    %5013 = vmatprep.subr.bf16.mxu0 %v4585
    %5014 = vmatpush1.bf16.msra.mxu0 %v4584
    %5015 = vmatprep.subr.bf16.mxu0 %v4591
    %5016 = vmatpush1.bf16.msra.mxu0 %v4590
    %5017 = vmatprep.subr.bf16.mxu0 %v4597
    %5018 = vmatpush1.bf16.msra.mxu0 %v4596
    %5019 = vmatprep.subr.bf16.mxu0 %v4603
    %5020 = vmatpush1.bf16.msra.mxu0 %v4602
    %5021 = vmatprep.subr.bf16.mxu0 %v4609
    %5022 = vmatpush1.bf16.msra.mxu0 %v4608
    %5023 = vmatprep.subr.bf16.mxu0 %v4615
    %5024 = vmatpush1.bf16.msra.mxu0 %v4614
    %5025 = vmatprep.subr.bf16.mxu0 %v4621
    %5026 = vmatpush1.bf16.msra.mxu0 %v4620
    %5027 = vmatprep.subr.bf16.mxu0 %v4627
    %5028 = vmatpush1.bf16.msra.mxu0 %v4626
    %5029 = vmatprep.subr.bf16.mxu0 %v4633
    %5030 = vmatpush1.bf16.msra.mxu0 %v4632
    %5031 = vmatprep.subr.bf16.mxu0 %v4639
    %5032 = vmatpush1.bf16.msra.mxu0 %v4638
    %5033 = vmatprep.subr.bf16.mxu0 %v4645
    %5034 = vmatpush1.bf16.msra.mxu0 %v4644
    %5035 = vmatprep.subr.bf16.mxu0 %v4651
    %5036 = vmatpush1.bf16.msra.mxu0 %v4650
    %5037 = vmatprep.mubr.bf16.mxu0 %v3922
    %5038 = vmatmul.mubr.bf16.gmra.mrb[0].mxu0 %v3921
    %v5039 = vpop.f32.mrb[0].mxu0
    %v5040 = vadd.f32 0.0, %v5039
    %v5041 = vpop.f32.mrb[0].mxu0
    %v5042 = vadd.f32 0.0, %v5041
    %v5043 = vpop.f32.mrb[0].mxu0
    %v5044 = vadd.f32 0.0, %v5043
    %v5045 = vpop.f32.mrb[0].mxu0
    %v5046 = vadd.f32 0.0, %v5045
    %5047 = vmatprep.mubr.bf16.mxu0 %v3926
    %5048 = vmatmul.mubr.bf16.gmra.mrb[0].mxu0 %v3925
    %v5049 = vpop.f32.mrb[0].mxu0
    %v5050 = vadd.f32 0.0, %v5049
    %v5051 = vpop.f32.mrb[0].mxu0
    %v5052 = vadd.f32 0.0, %v5051
    %v5053 = vpop.f32.mrb[0].mxu0
    %v5054 = vadd.f32 0.0, %v5053
    %v5055 = vpop.f32.mrb[0].mxu0
    %v5056 = vadd.f32 0.0, %v5055
    %5057 = vmatprep.mubr.bf16.mxu0 %v3930
    %5058 = vmatmul.mubr.bf16.gmra.mrb[0].mxu0 %v3929
    %v5059 = vpop.f32.mrb[0].mxu0
    %v5060 = vadd.f32 0.0, %v5059
    %v5061 = vpop.f32.mrb[0].mxu0
    %v5062 = vadd.f32 0.0, %v5061
    %v5063 = vpop.f32.mrb[0].mxu0
    %v5064 = vadd.f32 0.0, %v5063
    %v5065 = vpop.f32.mrb[0].mxu0
    %v5066 = vadd.f32 0.0, %v5065
    %5067 = vdwg.mxu0
    %5068 = vmatprep.subr.bf16.mxu0 %v4657
    %5069 = vmatpush1.bf16.msra.mxu0 %v4656
    %5070 = vmatprep.subr.bf16.mxu0 %v4663
    %5071 = vmatpush1.bf16.msra.mxu0 %v4662
    %5072 = vmatprep.subr.bf16.mxu0 %v4669
    %5073 = vmatpush1.bf16.msra.mxu0 %v4668
    %5074 = vmatprep.subr.bf16.mxu0 %v4675
    %5075 = vmatpush1.bf16.msra.mxu0 %v4674
    %5076 = vmatprep.subr.bf16.mxu0 %v4681
    %5077 = vmatpush1.bf16.msra.mxu0 %v4680
    %5078 = vmatprep.subr.bf16.mxu0 %v4687
    %5079 = vmatpush1.bf16.msra.mxu0 %v4686
    %5080 = vmatprep.subr.bf16.mxu0 %v4693
    %5081 = vmatpush1.bf16.msra.mxu0 %v4692
    %5082 = vmatprep.subr.bf16.mxu0 %v4699
    %5083 = vmatpush1.bf16.msra.mxu0 %v4698
    %5084 = vmatprep.subr.bf16.mxu0 %v4705
    %5085 = vmatpush1.bf16.msra.mxu0 %v4704
    %5086 = vmatprep.subr.bf16.mxu0 %v4711
    %5087 = vmatpush1.bf16.msra.mxu0 %v4710
    %5088 = vmatprep.subr.bf16.mxu0 0
    %5089 = vmatpush1.bf16.msra.mxu0 0
    %5090 = vmatprep.subr.bf16.mxu0 0
    %5091 = vmatpush1.bf16.msra.mxu0 0
    %5092 = vmatprep.subr.bf16.mxu0 0
    %5093 = vmatpush1.bf16.msra.mxu0 0
    %5094 = vmatprep.subr.bf16.mxu0 0
    %5095 = vmatpush1.bf16.msra.mxu0 0
    %5096 = vmatprep.subr.bf16.mxu0 0
    %5097 = vmatpush1.bf16.msra.mxu0 0
    %5098 = vmatprep.subr.bf16.mxu0 0
    %5099 = vmatpush1.bf16.msra.mxu0 0
    %5100 = vmatprep.mubr.bf16.mxu0 %v4871
    %5101 = vmatmul.mubr.bf16.gmra.mrb[0].mxu0 %v3923
    %v5102 = vpop.f32.mrb[0].mxu0
    %v5103 = vadd.f32 %v5040, %v5102
    %v5104 = vpop.f32.mrb[0].mxu0
    %v5105 = vadd.f32 %v5042, %v5104
    %v5106 = vpop.f32.mrb[0].mxu0
    %v5107 = vadd.f32 %v5044, %v5106
    %v5108 = vpop.f32.mrb[0].mxu0
    %v5109 = vadd.f32 %v5046, %v5108
    %5110 = vmatprep.mubr.bf16.mxu0 %v4874
    %5111 = vmatmul.mubr.bf16.gmra.mrb[0].mxu0 %v3927
    %v5112 = vpop.f32.mrb[0].mxu0
    %v5113 = vadd.f32 %v5050, %v5112
    %v5114 = vpop.f32.mrb[0].mxu0
    %v5115 = vadd.f32 %v5052, %v5114
    %v5116 = vpop.f32.mrb[0].mxu0
    %v5117 = vadd.f32 %v5054, %v5116
    %v5118 = vpop.f32.mrb[0].mxu0
    %v5119 = vadd.f32 %v5056, %v5118
    %5120 = vmatprep.mubr.bf16.mxu0 %v4877
    %5121 = vmatmul.mubr.bf16.gmra.mrb[0].mxu0 %v3931
    %v5122 = vpop.f32.mrb[0].mxu0
    %v5123 = vadd.f32 %v5060, %v5122
    %v5124 = vpop.f32.mrb[0].mxu0
    %v5125 = vadd.f32 %v5062, %v5124
    %v5126 = vpop.f32.mrb[0].mxu0
    %v5127 = vadd.f32 %v5064, %v5126
    %v5128 = vpop.f32.mrb[0].mxu0
    %v5129 = vadd.f32 %v5066, %v5128
    %5130 = vdwg.mxu0
    %5131 = vmatprep.subr.bf16.mxu0 %v4563
    %5132 = vmatpush1.bf16.msra.mxu0 %v4562
    %5133 = vmatprep.subr.bf16.mxu0 %v4569
    %5134 = vmatpush1.bf16.msra.mxu0 %v4568
    %5135 = vmatprep.subr.bf16.mxu0 %v4575
    %5136 = vmatpush1.bf16.msra.mxu0 %v4574
    %5137 = vmatprep.subr.bf16.mxu0 %v4581
    %5138 = vmatpush1.bf16.msra.mxu0 %v4580
    %5139 = vmatprep.subr.bf16.mxu0 %v4587
    %5140 = vmatpush1.bf16.msra.mxu0 %v4586
    %5141 = vmatprep.subr.bf16.mxu0 %v4593
    %5142 = vmatpush1.bf16.msra.mxu0 %v4592
    %5143 = vmatprep.subr.bf16.mxu0 %v4599
    %5144 = vmatpush1.bf16.msra.mxu0 %v4598
    %5145 = vmatprep.subr.bf16.mxu0 %v4605
    %5146 = vmatpush1.bf16.msra.mxu0 %v4604
    %5147 = vmatprep.subr.bf16.mxu0 %v4611
    %5148 = vmatpush1.bf16.msra.mxu0 %v4610
    %5149 = vmatprep.subr.bf16.mxu0 %v4617
    %5150 = vmatpush1.bf16.msra.mxu0 %v4616
    %5151 = vmatprep.subr.bf16.mxu0 %v4623
    %5152 = vmatpush1.bf16.msra.mxu0 %v4622
    %5153 = vmatprep.subr.bf16.mxu0 %v4629
    %5154 = vmatpush1.bf16.msra.mxu0 %v4628
    %5155 = vmatprep.subr.bf16.mxu0 %v4635
    %5156 = vmatpush1.bf16.msra.mxu0 %v4634
    %5157 = vmatprep.subr.bf16.mxu0 %v4641
    %5158 = vmatpush1.bf16.msra.mxu0 %v4640
    %5159 = vmatprep.subr.bf16.mxu0 %v4647
    %5160 = vmatpush1.bf16.msra.mxu0 %v4646
    %5161 = vmatprep.subr.bf16.mxu0 %v4653
    %5162 = vmatpush1.bf16.msra.mxu0 %v4652
    %5163 = vmatprep.mubr.bf16.mxu0 %v3922
    %5164 = vmatmul.mubr.bf16.gmra.mrb[0].mxu0 %v3921
    %v5165 = vpop.f32.mrb[0].mxu0
    %v5166 = vadd.f32 0.0, %v5165
    %v5167 = vpop.f32.mrb[0].mxu0
    %v5168 = vadd.f32 0.0, %v5167
    %v5169 = vpop.f32.mrb[0].mxu0
    %v5170 = vadd.f32 0.0, %v5169
    %v5171 = vpop.f32.mrb[0].mxu0
    %v5172 = vadd.f32 0.0, %v5171
    %5173 = vmatprep.mubr.bf16.mxu0 %v3926
    %5174 = vmatmul.mubr.bf16.gmra.mrb[0].mxu0 %v3925
    %v5175 = vpop.f32.mrb[0].mxu0
    %v5176 = vadd.f32 0.0, %v5175
    %v5177 = vpop.f32.mrb[0].mxu0
    %v5178 = vadd.f32 0.0, %v5177
    %v5179 = vpop.f32.mrb[0].mxu0
    %v5180 = vadd.f32 0.0, %v5179
    %v5181 = vpop.f32.mrb[0].mxu0
    %v5182 = vadd.f32 0.0, %v5181
    %5183 = vmatprep.mubr.bf16.mxu0 %v3930
    %5184 = vmatmul.mubr.bf16.gmra.mrb[0].mxu0 %v3929
    %v5185 = vpop.f32.mrb[0].mxu0
    %v5186 = vadd.f32 0.0, %v5185
    %v5187 = vpop.f32.mrb[0].mxu0
    %v5188 = vadd.f32 0.0, %v5187
    %v5189 = vpop.f32.mrb[0].mxu0
    %v5190 = vadd.f32 0.0, %v5189
    %v5191 = vpop.f32.mrb[0].mxu0
    %v5192 = vadd.f32 0.0, %v5191
    %5193 = vdwg.mxu0
    %5194 = vmatprep.subr.bf16.mxu0 %v4659
    %5195 = vmatpush1.bf16.msra.mxu0 %v4658
    %5196 = vmatprep.subr.bf16.mxu0 %v4665
    %5197 = vmatpush1.bf16.msra.mxu0 %v4664
    %5198 = vmatprep.subr.bf16.mxu0 %v4671
    %5199 = vmatpush1.bf16.msra.mxu0 %v4670
    %5200 = vmatprep.subr.bf16.mxu0 %v4677
    %5201 = vmatpush1.bf16.msra.mxu0 %v4676
    %5202 = vmatprep.subr.bf16.mxu0 %v4683
    %5203 = vmatpush1.bf16.msra.mxu0 %v4682
    %5204 = vmatprep.subr.bf16.mxu0 %v4689
    %5205 = vmatpush1.bf16.msra.mxu0 %v4688
    %5206 = vmatprep.subr.bf16.mxu0 %v4695
    %5207 = vmatpush1.bf16.msra.mxu0 %v4694
    %5208 = vmatprep.subr.bf16.mxu0 %v4701
    %5209 = vmatpush1.bf16.msra.mxu0 %v4700
    %5210 = vmatprep.subr.bf16.mxu0 %v4707
    %5211 = vmatpush1.bf16.msra.mxu0 %v4706
    %5212 = vmatprep.subr.bf16.mxu0 %v4713
    %5213 = vmatpush1.bf16.msra.mxu0 %v4712
    %5214 = vmatprep.subr.bf16.mxu0 0
    %5215 = vmatpush1.bf16.msra.mxu0 0
    %5216 = vmatprep.subr.bf16.mxu0 0
    %5217 = vmatpush1.bf16.msra.mxu0 0
    %5218 = vmatprep.subr.bf16.mxu0 0
    %5219 = vmatpush1.bf16.msra.mxu0 0
    %5220 = vmatprep.subr.bf16.mxu0 0
    %5221 = vmatpush1.bf16.msra.mxu0 0
    %5222 = vmatprep.subr.bf16.mxu0 0
    %5223 = vmatpush1.bf16.msra.mxu0 0
    %5224 = vmatprep.subr.bf16.mxu0 0
    %5225 = vmatpush1.bf16.msra.mxu0 0
    %5226 = vmatprep.mubr.bf16.mxu0 %v4871
    %5227 = vmatmul.mubr.bf16.gmra.mrb[0].mxu0 %v3923
    %v5228 = vpop.f32.mrb[0].mxu0
    %v5229 = vadd.f32 %v5166, %v5228
    %v5230 = vpop.f32.mrb[0].mxu0
    %v5231 = vadd.f32 %v5168, %v5230
    %v5232 = vpop.f32.mrb[0].mxu0
    %v5233 = vadd.f32 %v5170, %v5232
    %v5234 = vpop.f32.mrb[0].mxu0
    %v5235 = vadd.f32 %v5172, %v5234
    %5236 = vmatprep.mubr.bf16.mxu0 %v4874
    %5237 = vmatmul.mubr.bf16.gmra.mrb[0].mxu0 %v3927
    %v5238 = vpop.f32.mrb[0].mxu0
    %v5239 = vadd.f32 %v5176, %v5238
    %v5240 = vpop.f32.mrb[0].mxu0
    %v5241 = vadd.f32 %v5178, %v5240
    %v5242 = vpop.f32.mrb[0].mxu0
    %v5243 = vadd.f32 %v5180, %v5242
    %v5244 = vpop.f32.mrb[0].mxu0
    %v5245 = vadd.f32 %v5182, %v5244
    %5246 = vmatprep.mubr.bf16.mxu0 %v4877
    %5247 = vmatmul.mubr.bf16.gmra.mrb[0].mxu0 %v3931
    %v5248 = vpop.f32.mrb[0].mxu0
    %v5249 = vadd.f32 %v5186, %v5248
    %v5250 = vpop.f32.mrb[0].mxu0
    %v5251 = vadd.f32 %v5188, %v5250
    %v5252 = vpop.f32.mrb[0].mxu0
    %v5253 = vadd.f32 %v5190, %v5252
    %v5254 = vpop.f32.mrb[0].mxu0
    %v5255 = vadd.f32 %v5192, %v5254
    %5256 = vdwg.mxu0
    %v5257 = vadd.f32 %v3561, %v4977
    %v5258 = vadd.f32 %v3563, %v4979
    %v5259 = vadd.f32 %v3687, %v5103
    %v5260 = vadd.f32 %v3689, %v5105
    %v5261 = vadd.f32 %v3813, %v5229
    %v5262 = vadd.f32 %v3815, %v5231
    %v5263 = vadd.f32 %v3565, %v4981
    %v5264 = vadd.f32 %v3567, %v4983
    %v5265 = vadd.f32 %v3691, %v5107
    %v5266 = vadd.f32 %v3693, %v5109
    %v5267 = vadd.f32 %v3817, %v5233
    %v5268 = vadd.f32 %v3819, %v5235
    %v5269 = vadd.f32 %v3571, %v4987
    %v5270 = vadd.f32 %v3573, %v4989
    %v5271 = vadd.f32 %v3697, %v5113
    %v5272 = vadd.f32 %v3699, %v5115
    %v5273 = vadd.f32 %v3823, %v5239
    %v5274 = vadd.f32 %v3825, %v5241
    %v5275 = vadd.f32 %v3575, %v4991
    %v5276 = vadd.f32 %v3577, %v4993
    %v5277 = vadd.f32 %v3701, %v5117
    %v5278 = vadd.f32 %v3703, %v5119
    %v5279 = vadd.f32 %v3827, %v5243
    %v5280 = vadd.f32 %v3829, %v5245
    %v5281 = vadd.f32 %v3581, %v4997
    %v5282 = vadd.f32 %v3583, %v4999
    %v5283 = vadd.f32 %v3707, %v5123
    %v5284 = vadd.f32 %v3709, %v5125
    %v5285 = vadd.f32 %v3833, %v5249
    %v5286 = vadd.f32 %v3835, %v5251
    %v5287 = vadd.f32 %v3585, %v5001
    %v5288 = vadd.f32 %v3587, %v5003
    %v5289 = vadd.f32 %v3711, %v5127
    %v5290 = vadd.f32 %v3713, %v5129
    %v5291 = vadd.f32 %v3837, %v5253
    %v5292 = vadd.f32 %v3839, %v5255
    %v5293 = vld [vmem:[%s4] sm:$0x3f]
    %v5295 = vlaneseq
    %v5296 = vshrl.u32 %v5295, 7
    %v5297 = vsub.s32 0, %v5296
    %v5298 = vrot.slane %v5293, %v5297
    %v5299 = vlaneseq
    %v5300 = vshrl.u32 %v5299, 7
    %v5301 = vsub.s32 1, %v5300
    %v5302 = vrot.slane %v5293, %v5301
    %v5303 = vlaneseq
    %v5304 = vshrl.u32 %v5303, 7
    %v5305 = vsub.s32 2, %v5304
    %v5306 = vrot.slane %v5293, %v5305
    %v5307 = vlaneseq
    %v5308 = vshrl.u32 %v5307, 7
    %v5309 = vsub.s32 3, %v5308
    %v5310 = vrot.slane %v5293, %v5309
    %v5311 = vlaneseq
    %v5312 = vshrl.u32 %v5311, 7
    %v5313 = vsub.s32 4, %v5312
    %v5314 = vrot.slane %v5293, %v5313
    %v5315 = vlaneseq
    %v5316 = vshrl.u32 %v5315, 7
    %v5317 = vsub.s32 5, %v5316
    %v5318 = vrot.slane %v5293, %v5317
    %v5325 = vadd.f32 %v5257, %v5298
    %v5326 = vadd.f32 %v5258, %v5302
    %v5327 = vadd.f32 %v5259, %v5306
    %v5328 = vadd.f32 %v5260, %v5310
    %v5329 = vadd.f32 %v5261, %v5314
    %v5330 = vadd.f32 %v5262, %v5318
    %v5331 = vadd.f32 %v5263, %v5298
    %v5332 = vadd.f32 %v5264, %v5302
    %v5333 = vadd.f32 %v5265, %v5306
    %v5334 = vadd.f32 %v5266, %v5310
    %v5335 = vadd.f32 %v5267, %v5314
    %v5336 = vadd.f32 %v5268, %v5318
    %v5337 = vadd.f32 %v5269, %v5298
    %v5338 = vadd.f32 %v5270, %v5302
    %v5339 = vadd.f32 %v5271, %v5306
    %v5340 = vadd.f32 %v5272, %v5310
    %v5341 = vadd.f32 %v5273, %v5314
    %v5342 = vadd.f32 %v5274, %v5318
    %v5343 = vadd.f32 %v5275, %v5298
    %v5344 = vadd.f32 %v5276, %v5302
    %v5345 = vadd.f32 %v5277, %v5306
    %v5346 = vadd.f32 %v5278, %v5310
    %v5347 = vadd.f32 %v5279, %v5314
    %v5348 = vadd.f32 %v5280, %v5318
    %v5349 = vadd.f32 %v5281, %v5298
    %v5350 = vadd.f32 %v5282, %v5302
    %v5351 = vadd.f32 %v5283, %v5306
    %v5352 = vadd.f32 %v5284, %v5310
    %v5353 = vadd.f32 %v5285, %v5314
    %v5354 = vadd.f32 %v5286, %v5318
    %v5355 = vadd.f32 %v5287, %v5298
    %v5356 = vadd.f32 %v5288, %v5302
    %v5357 = vadd.f32 %v5289, %v5306
    %v5358 = vadd.f32 %v5290, %v5310
    %v5359 = vadd.f32 %v5291, %v5314
    %v5360 = vadd.f32 %v5292, %v5318
    %v5361 = vmax.f32 %v5325, 0.0
    %v5362 = vmax.f32 %v5326, 0.0
    %v5363 = vmax.f32 %v5327, 0.0
    %v5364 = vmax.f32 %v5328, 0.0
    %v5365 = vmax.f32 %v5329, 0.0
    %v5366 = vmax.f32 %v5330, 0.0
    %v5367 = vmax.f32 %v5331, 0.0
    %v5368 = vmax.f32 %v5332, 0.0
    %v5369 = vmax.f32 %v5333, 0.0
    %v5370 = vmax.f32 %v5334, 0.0
    %v5371 = vmax.f32 %v5335, 0.0
    %v5372 = vmax.f32 %v5336, 0.0
    %v5373 = vmax.f32 %v5337, 0.0
    %v5374 = vmax.f32 %v5338, 0.0
    %v5375 = vmax.f32 %v5339, 0.0
    %v5376 = vmax.f32 %v5340, 0.0
    %v5377 = vmax.f32 %v5341, 0.0
    %v5378 = vmax.f32 %v5342, 0.0
    %v5379 = vmax.f32 %v5343, 0.0
    %v5380 = vmax.f32 %v5344, 0.0
    %v5381 = vmax.f32 %v5345, 0.0
    %v5382 = vmax.f32 %v5346, 0.0
    %v5383 = vmax.f32 %v5347, 0.0
    %v5384 = vmax.f32 %v5348, 0.0
    %v5385 = vmax.f32 %v5349, 0.0
    %v5386 = vmax.f32 %v5350, 0.0
    %v5387 = vmax.f32 %v5351, 0.0
    %v5388 = vmax.f32 %v5352, 0.0
    %v5389 = vmax.f32 %v5353, 0.0
    %v5390 = vmax.f32 %v5354, 0.0
    %v5391 = vmax.f32 %v5355, 0.0
    %v5392 = vmax.f32 %v5356, 0.0
    %v5393 = vmax.f32 %v5357, 0.0
    %v5394 = vmax.f32 %v5358, 0.0
    %v5395 = vmax.f32 %v5359, 0.0
    %v5396 = vmax.f32 %v5360, 0.0
    %v5409 = vrot.slane %v5361, 1
    %v5410 = vrot.slane %v5362, 1
    %v5411 = vrot.slane %v5363, 1
    %v5412 = vrot.slane %v5364, 1
    %v5413 = vrot.slane %v5365, 1
    %v5414 = vrot.slane %v5366, 1
    %v5415 = vrot.slane %v5379, 1
    %v5416 = vrot.slane %v5380, 1
    %v5417 = vrot.slane %v5381, 1
    %v5418 = vrot.slane %v5382, 1
    %v5419 = vrot.slane %v5383, 1
    %v5420 = vrot.slane %v5384, 1
    %v5433 = vmax.f32 %v5361, %v5409
    %v5434 = vmax.f32 %v5362, %v5410
    %v5435 = vmax.f32 %v5363, %v5411
    %v5436 = vmax.f32 %v5364, %v5412
    %v5437 = vmax.f32 %v5365, %v5413
    %v5438 = vmax.f32 %v5366, %v5414
    %v5439 = vmax.f32 %v5379, %v5415
    %v5440 = vmax.f32 %v5380, %v5416
    %v5441 = vmax.f32 %v5381, %v5417
    %v5442 = vmax.f32 %v5382, %v5418
    %v5443 = vmax.f32 %v5383, %v5419
    %v5444 = vmax.f32 %v5384, %v5420
    %v5445 = vmax.f32 %v5433, %v5436
    %v5446 = vmax.f32 %v5434, %v5437
    %v5447 = vmax.f32 %v5435, %v5438
    %v5448 = vmax.f32 %v5439, %v5442
    %v5449 = vmax.f32 %v5440, %v5443
    %v5450 = vmax.f32 %v5441, %v5444
    %v5451 = vpack.c.bf16 %v5445, %v5445
    %v5452 = vpack.c.bf16 %v5446, %v5446
    %v5453 = vpack.c.bf16 %v5447, %v5447
    %v5454 = vpack.c.bf16 %v5448, %v5448
    %v5455 = vpack.c.bf16 %v5449, %v5449
    %v5456 = vpack.c.bf16 %v5450, %v5450
    %v5457 = vld [vmem:[%s5] sm:$0xf]
    %v5458 = vld [vmem:[%s5 + $0x4] sm:$0xf]
    %v5459 = vld [vmem:[%s5 + $0x8] sm:$0xf]
    %v5460 = vld [vmem:[%s5 + $0xc] sm:$0xf]
    %v5461 = vld [vmem:[%s5 + $0x10] sm:$0xf]
    %v5462 = vld [vmem:[%s5 + $0x14] sm:$0xf]
    %v5463 = vld [vmem:[%s5 + $0x18] sm:$0xf]
    %v5464 = vld [vmem:[%s5 + $0x1c] sm:$0xf]
    %v5465 = vld [vmem:[%s5 + $0x20] sm:$0xf]
    %v5466 = vld [vmem:[%s5 + $0x24] sm:$0xf]
    %v5467 = vld [vmem:[%s5 + $0x28] sm:$0xf]
    %v5468 = vld [vmem:[%s5 + $0x2c] sm:$0xf]
    %v5469 = vld [vmem:[%s5 + $0x30] sm:$0xf]
    %v5470 = vld [vmem:[%s5 + $0x34] sm:$0xf]
    %v5471 = vld [vmem:[%s5 + $0x38] sm:$0xf]
    %v5472 = vld [vmem:[%s5 + $0x3c] sm:$0xf]
    %v5473 = vld [vmem:[%s5 + $0x40] sm:$0xf]
    %v5474 = vld [vmem:[%s5 + $0x44] sm:$0xf]
    %v5475 = vld [vmem:[%s5 + $0x48] sm:$0xf]
    %v5476 = vld [vmem:[%s5 + $0x4c] sm:$0xf]
    %v5477 = vld [vmem:[%s5 + $0x50] sm:$0xf]
    %v5478 = vld [vmem:[%s5 + $0x54] sm:$0xf]
    %v5479 = vld [vmem:[%s5 + $0x58] sm:$0xf]
    %v5480 = vld [vmem:[%s5 + $0x5c] sm:$0xf]
    %v5481 = vld [vmem:[%s5 + $0x60] sm:$0xf]
    %v5482 = vld [vmem:[%s5 + $0x64] sm:$0xf]
    %v5483 = vld [vmem:[%s5 + $0x68] sm:$0xf]
    %v5484 = vld [vmem:[%s5 + $0x6c] sm:$0xf]
    %v5485 = vld [vmem:[%s5 + $0x70] sm:$0xf]
    %v5486 = vld [vmem:[%s5 + $0x74] sm:$0xf]
    %v5487 = vld [vmem:[%s5 + $0x78] sm:$0xf]
    %v5488 = vld [vmem:[%s5 + $0x7c] sm:$0xf]
    %v5489 = vld [vmem:[%s5 + $0x80] sm:$0xf]
    %v5490 = vld [vmem:[%s5 + $0x84] sm:$0xf]
    %v5491 = vld [vmem:[%s5 + $0x88] sm:$0xf]
    %v5492 = vld [vmem:[%s5 + $0x8c] sm:$0xf]
    %v5493 = vld [vmem:[%s5 + $0x90] sm:$0xf]
    %v5494 = vld [vmem:[%s5 + $0x94] sm:$0xf]
    %v5495 = vld [vmem:[%s5 + $0x98] sm:$0xf]
    %v5496 = vld [vmem:[%s5 + $0x9c] sm:$0xf]
    %v5497 = vld [vmem:[%s5 + $0xa0] sm:$0xf]
    %v5498 = vld [vmem:[%s5 + $0xa4] sm:$0xf]
    %v5499 = vld [vmem:[%s5 + $0xa8] sm:$0xf]
    %v5500 = vld [vmem:[%s5 + $0xac] sm:$0xf]
    %v5501 = vld [vmem:[%s5 + $0xb0] sm:$0xf]
    %v5502 = vld [vmem:[%s5 + $0xb4] sm:$0xf]
    %v5503 = vld [vmem:[%s5 + $0xb8] sm:$0xf]
    %v5504 = vld [vmem:[%s5 + $0xbc] sm:$0xf]
    %s5505 = scalar_lea.vmem %s5, 192
    %v5506 = vld [vmem:[%s5505] sm:$0xf]
    %v5507 = vld [vmem:[%s5505 + $0x4] sm:$0xf]
    %v5508 = vld [vmem:[%s5505 + $0x8] sm:$0xf]
    %v5509 = vld [vmem:[%s5505 + $0xc] sm:$0xf]
    %v5510 = vld [vmem:[%s5505 + $0x10] sm:$0xf]
    %v5511 = vld [vmem:[%s5505 + $0x14] sm:$0xf]
    %v5512 = vld [vmem:[%s5505 + $0x18] sm:$0xf]
    %v5513 = vld [vmem:[%s5505 + $0x1c] sm:$0xf]
    %v5514 = vld [vmem:[%s5505 + $0x20] sm:$0xf]
    %v5515 = vld [vmem:[%s5505 + $0x24] sm:$0xf]
    %v5516 = vld [vmem:[%s5505 + $0x28] sm:$0xf]
    %v5517 = vld [vmem:[%s5505 + $0x2c] sm:$0xf]
    %v5518 = vld [vmem:[%s5505 + $0x30] sm:$0xf]
    %v5519 = vld [vmem:[%s5505 + $0x34] sm:$0xf]
    %v5520 = vld [vmem:[%s5505 + $0x38] sm:$0xf]
    %v5521 = vld [vmem:[%s5505 + $0x3c] sm:$0xf]
    %v5522 = vld [vmem:[%s5505 + $0x40] sm:$0xf]
    %v5523 = vld [vmem:[%s5505 + $0x44] sm:$0xf]
    %v5524 = vld [vmem:[%s5505 + $0x48] sm:$0xf]
    %v5525 = vld [vmem:[%s5505 + $0x4c] sm:$0xf]
    %v5526 = vld [vmem:[%s5505 + $0x50] sm:$0xf]
    %v5527 = vld [vmem:[%s5505 + $0x54] sm:$0xf]
    %v5528 = vld [vmem:[%s5505 + $0x58] sm:$0xf]
    %v5529 = vld [vmem:[%s5505 + $0x5c] sm:$0xf]
    %v5530 = vld [vmem:[%s5505 + $0x60] sm:$0xf]
    %v5531 = vld [vmem:[%s5505 + $0x64] sm:$0xf]
    %v5532 = vld [vmem:[%s5505 + $0x68] sm:$0xf]
    %v5533 = vld [vmem:[%s5505 + $0x6c] sm:$0xf]
    %v5534 = vld [vmem:[%s5505 + $0x70] sm:$0xf]
    %v5535 = vld [vmem:[%s5505 + $0x74] sm:$0xf]
    %v5536 = vld [vmem:[%s5505 + $0x78] sm:$0xf]
    %v5537 = vld [vmem:[%s5505 + $0x7c] sm:$0xf]
    %v5538 = vld [vmem:[%s5505 + $0x80] sm:$0xf]
    %v5539 = vld [vmem:[%s5505 + $0x84] sm:$0xf]
    %v5540 = vld [vmem:[%s5505 + $0x88] sm:$0xf]
    %v5541 = vld [vmem:[%s5505 + $0x8c] sm:$0xf]
    %v5542 = vld [vmem:[%s5505 + $0x90] sm:$0xf]
    %v5543 = vld [vmem:[%s5505 + $0x94] sm:$0xf]
    %v5544 = vld [vmem:[%s5505 + $0x98] sm:$0xf]
    %v5545 = vld [vmem:[%s5505 + $0x9c] sm:$0xf]
    %v5546 = vld [vmem:[%s5505 + $0xa0] sm:$0xf]
    %v5547 = vld [vmem:[%s5505 + $0xa4] sm:$0xf]
    %v5548 = vld [vmem:[%s5505 + $0xa8] sm:$0xf]
    %v5549 = vld [vmem:[%s5505 + $0xac] sm:$0xf]
    %v5550 = vld [vmem:[%s5505 + $0xb0] sm:$0xf]
    %v5551 = vld [vmem:[%s5505 + $0xb4] sm:$0xf]
    %v5552 = vld [vmem:[%s5505 + $0xb8] sm:$0xf]
    %v5553 = vld [vmem:[%s5505 + $0xbc] sm:$0xf]
    %v5560 = vunpack.c.l.b16 %v5451
    %v5561 = vunpack.c.l.b16 %v5452
    %v5562 = vunpack.c.l.b16 %v5453
    %v5563 = vunpack.c.l.b16 %v5454
    %v5564 = vunpack.c.l.b16 %v5455
    %v5565 = vunpack.c.l.b16 %v5456
    %v5566 = vrot.slane %v5560, 2
    %v5567 = vrot.slane %v5563, 1
    %vm5568 = vcmask 1041409
    %v5569 = vsel %vm5568, %v5567, %v5566
    %v5570 = vrot.slane %v5561, 2
    %v5571 = vrot.slane %v5564, 1
    %v5572 = vsel %vm5568, %v5571, %v5570
    %v5573 = vrot.slane %v5562, 2
    %v5574 = vrot.slane %v5565, 1
    %v5575 = vsel %vm5568, %v5574, %v5573
    %v5576 = vpack.c.b16 %v5569, %v5569
    %v5577 = vpack.c.b16 %v5572, %v5572
    %v5578 = vpack.c.b16 %v5575, %v5575
    %v5630 = vunpack.c.l.b16 %v5506
    %v5631 = vunpack.c.l.b16 %v5507
    %v5632 = vunpack.c.l.b16 %v5508
    %v5633 = vunpack.c.l.b16 %v5509
    %v5634 = vunpack.c.l.b16 %v5510
    %v5635 = vunpack.c.l.b16 %v5511
    %v5636 = vunpack.c.l.b16 %v5512
    %v5637 = vunpack.c.l.b16 %v5513
    %v5638 = vunpack.c.l.b16 %v5514
    %v5639 = vunpack.c.l.b16 %v5515
    %v5640 = vunpack.c.l.b16 %v5516
    %v5641 = vunpack.c.l.b16 %v5517
    %v5642 = vunpack.c.l.b16 %v5518
    %v5643 = vunpack.c.l.b16 %v5519
    %v5644 = vunpack.c.l.b16 %v5520
    %v5645 = vunpack.c.l.b16 %v5521
    %v5646 = vunpack.c.l.b16 %v5522
    %v5647 = vunpack.c.l.b16 %v5523
    %v5648 = vunpack.c.l.b16 %v5524
    %v5649 = vunpack.c.l.b16 %v5525
    %v5650 = vunpack.c.l.b16 %v5526
    %v5651 = vunpack.c.l.b16 %v5527
    %v5652 = vunpack.c.l.b16 %v5528
    %v5653 = vunpack.c.l.b16 %v5529
    %v5654 = vunpack.c.l.b16 %v5530
    %v5655 = vunpack.c.l.b16 %v5531
    %v5656 = vunpack.c.l.b16 %v5532
    %v5657 = vunpack.c.l.b16 %v5533
    %v5658 = vunpack.c.l.b16 %v5534
    %v5659 = vunpack.c.l.b16 %v5535
    %v5660 = vunpack.c.l.b16 %v5536
    %v5661 = vunpack.c.l.b16 %v5537
    %v5662 = vunpack.c.l.b16 %v5538
    %v5663 = vunpack.c.l.b16 %v5539
    %v5664 = vunpack.c.l.b16 %v5540
    %v5665 = vunpack.c.l.b16 %v5541
    %v5666 = vunpack.c.l.b16 %v5542
    %v5667 = vunpack.c.l.b16 %v5543
    %v5668 = vunpack.c.l.b16 %v5544
    %v5669 = vunpack.c.l.b16 %v5545
    %v5670 = vunpack.c.l.b16 %v5546
    %v5671 = vunpack.c.l.b16 %v5547
    %v5672 = vunpack.c.l.b16 %v5548
    %v5673 = vunpack.c.l.b16 %v5549
    %v5674 = vunpack.c.l.b16 %v5550
    %v5675 = vunpack.c.l.b16 %v5551
    %v5676 = vunpack.c.l.b16 %v5552
    %v5677 = vunpack.c.l.b16 %v5553
    %v5678 = vpack.c.b16 %v5631, %v5630
    %v5679 = vpack.c.b16 %v5633, %v5632
    %v5680 = vpack.c.b16 %v5635, %v5634
    %v5681 = vpack.c.b16 %v5637, %v5636
    %v5682 = vpack.c.b16 %v5639, %v5638
    %v5683 = vpack.c.b16 %v5641, %v5640
    %v5684 = vpack.c.b16 %v5643, %v5642
    %v5685 = vpack.c.b16 %v5645, %v5644
    %v5686 = vpack.c.b16 %v5647, %v5646
    %v5687 = vpack.c.b16 %v5649, %v5648
    %v5688 = vpack.c.b16 %v5651, %v5650
    %v5689 = vpack.c.b16 %v5653, %v5652
    %v5690 = vpack.c.b16 %v5655, %v5654
    %v5691 = vpack.c.b16 %v5657, %v5656
    %v5692 = vpack.c.b16 %v5659, %v5658
    %v5693 = vpack.c.b16 %v5661, %v5660
    %v5694 = vpack.c.b16 %v5663, %v5662
    %v5695 = vpack.c.b16 %v5665, %v5664
    %v5696 = vpack.c.b16 %v5667, %v5666
    %v5697 = vpack.c.b16 %v5669, %v5668
    %v5698 = vpack.c.b16 %v5671, %v5670
    %v5699 = vpack.c.b16 %v5673, %v5672
    %v5700 = vpack.c.b16 %v5675, %v5674
    %v5701 = vpack.c.b16 %v5677, %v5676
    %5726 = vmatprep.subr.bf16.mxu0 0
    %5727 = vmatpush1.bf16.msra.mxu0 %v5678
    %5728 = vmatprep.subr.bf16.mxu0 0
    %5729 = vmatpush1.bf16.msra.mxu0 %v5679
    %5730 = vmatprep.subr.bf16.mxu0 0
    %5731 = vmatpush1.bf16.msra.mxu0 %v5680
    %5732 = vmatprep.subr.bf16.mxu0 0
    %5733 = vmatpush1.bf16.msra.mxu0 %v5681
    %5734 = vmatprep.subr.bf16.mxu0 0
    %5735 = vmatpush1.bf16.msra.mxu0 %v5682
    %5736 = vmatprep.subr.bf16.mxu0 0
    %5737 = vmatpush1.bf16.msra.mxu0 %v5683
    %5738 = vmatprep.subr.bf16.mxu0 0
    %5739 = vmatpush1.bf16.msra.mxu0 %v5684
    %5740 = vmatprep.subr.bf16.mxu0 0
    %5741 = vmatpush1.bf16.msra.mxu0 %v5685
    %5742 = vmatprep.subr.bf16.mxu0 0
    %5743 = vmatpush1.bf16.msra.mxu0 %v5686
    %5744 = vmatprep.subr.bf16.mxu0 0
    %5745 = vmatpush1.bf16.msra.mxu0 %v5687
    %5746 = vmatprep.subr.bf16.mxu0 0
    %5747 = vmatpush1.bf16.msra.mxu0 %v5688
    %5748 = vmatprep.subr.bf16.mxu0 0
    %5749 = vmatpush1.bf16.msra.mxu0 %v5689
    %5750 = vmatprep.subr.bf16.mxu0 0
    %5751 = vmatpush1.bf16.msra.mxu0 %v5690
    %5752 = vmatprep.subr.bf16.mxu0 0
    %5753 = vmatpush1.bf16.msra.mxu0 %v5691
    %5754 = vmatprep.subr.bf16.mxu0 0
    %5755 = vmatpush1.bf16.msra.mxu0 %v5692
    %5756 = vmatprep.subr.bf16.mxu0 0
    %5757 = vmatpush1.bf16.msra.mxu0 %v5693
    %5758 = vmatprep.mubr.bf16.mxu0 %v5577
    %5759 = vmatmul.mubr.bf16.gmra.mrb[0].mxu0 %v5576
    %v5760 = vpop.f32.mrb[0].mxu0
    %v5761 = vadd.f32 0.0, %v5760
    %v5762 = vpop.f32.mrb[0].mxu0
    %v5763 = vpop.f32.mrb[0].mxu0
    %v5764 = vpop.f32.mrb[0].mxu0
    %5765 = vdwg.mxu0
    %5766 = vmatprep.subr.bf16.mxu0 0
    %5767 = vmatpush1.bf16.msra.mxu0 %v5694
    %5768 = vmatprep.subr.bf16.mxu0 0
    %5769 = vmatpush1.bf16.msra.mxu0 %v5695
    %5770 = vmatprep.subr.bf16.mxu0 0
    %5771 = vmatpush1.bf16.msra.mxu0 %v5696
    %5772 = vmatprep.subr.bf16.mxu0 0
    %5773 = vmatpush1.bf16.msra.mxu0 %v5697
    %5774 = vmatprep.subr.bf16.mxu0 0
    %5775 = vmatpush1.bf16.msra.mxu0 %v5698
    %5776 = vmatprep.subr.bf16.mxu0 0
    %5777 = vmatpush1.bf16.msra.mxu0 %v5699
    %5778 = vmatprep.subr.bf16.mxu0 0
    %5779 = vmatpush1.bf16.msra.mxu0 %v5700
    %5780 = vmatprep.subr.bf16.mxu0 0
    %5781 = vmatpush1.bf16.msra.mxu0 %v5701
    %5782 = vmatprep.subr.bf16.mxu0 0
    %5783 = vmatpush1.bf16.msra.mxu0 0
    %5784 = vmatprep.subr.bf16.mxu0 0
    %5785 = vmatpush1.bf16.msra.mxu0 0
    %5786 = vmatprep.subr.bf16.mxu0 0
    %5787 = vmatpush1.bf16.msra.mxu0 0
    %5788 = vmatprep.subr.bf16.mxu0 0
    %5789 = vmatpush1.bf16.msra.mxu0 0
    %5790 = vmatprep.subr.bf16.mxu0 0
    %5791 = vmatpush1.bf16.msra.mxu0 0
    %5792 = vmatprep.subr.bf16.mxu0 0
    %5793 = vmatpush1.bf16.msra.mxu0 0
    %5794 = vmatprep.subr.bf16.mxu0 0
    %5795 = vmatpush1.bf16.msra.mxu0 0
    %5796 = vmatprep.subr.bf16.mxu0 0
    %5797 = vmatpush1.bf16.msra.mxu0 0
    %5798 = vmatprep.mubr.bf16.mxu0 0
    %5799 = vmatmul.mubr.bf16.gmra.mrb[0].mxu0 %v5578
    %v5800 = vpop.f32.mrb[0].mxu0
    %v5801 = vadd.f32 %v5761, %v5800
    %v5802 = vpop.f32.mrb[0].mxu0
    %v5803 = vpop.f32.mrb[0].mxu0
    %v5804 = vpop.f32.mrb[0].mxu0
    %5805 = vdwg.mxu0
    %v5806 = vrot.slane %v5563, 7
    %v5807 = vsel %vm5568, %v5806, %v5560
    %v5808 = vrot.slane %v5564, 7
    %v5809 = vsel %vm5568, %v5808, %v5561
    %v5810 = vrot.slane %v5565, 7
    %v5811 = vsel %vm5568, %v5810, %v5562
    %v5812 = vpack.c.b16 %v5807, %v5807
    %v5813 = vpack.c.b16 %v5809, %v5809
    %v5814 = vpack.c.b16 %v5811, %v5811
    %v5866 = vunpack.c.l.b16 %v5457
    %v5867 = vunpack.c.l.b16 %v5458
    %v5868 = vunpack.c.l.b16 %v5459
    %v5869 = vunpack.c.l.b16 %v5460
    %v5870 = vunpack.c.l.b16 %v5461
    %v5871 = vunpack.c.l.b16 %v5462
    %v5872 = vunpack.c.l.b16 %v5463
    %v5873 = vunpack.c.l.b16 %v5464
    %v5874 = vunpack.c.l.b16 %v5465
    %v5875 = vunpack.c.l.b16 %v5466
    %v5876 = vunpack.c.l.b16 %v5467
    %v5877 = vunpack.c.l.b16 %v5468
    %v5878 = vunpack.c.l.b16 %v5469
    %v5879 = vunpack.c.l.b16 %v5470
    %v5880 = vunpack.c.l.b16 %v5471
    %v5881 = vunpack.c.l.b16 %v5472
    %v5882 = vunpack.c.l.b16 %v5473
    %v5883 = vunpack.c.l.b16 %v5474
    %v5884 = vunpack.c.l.b16 %v5475
    %v5885 = vunpack.c.l.b16 %v5476
    %v5886 = vunpack.c.l.b16 %v5477
    %v5887 = vunpack.c.l.b16 %v5478
    %v5888 = vunpack.c.l.b16 %v5479
    %v5889 = vunpack.c.l.b16 %v5480
    %v5890 = vunpack.c.l.b16 %v5481
    %v5891 = vunpack.c.l.b16 %v5482
    %v5892 = vunpack.c.l.b16 %v5483
    %v5893 = vunpack.c.l.b16 %v5484
    %v5894 = vunpack.c.l.b16 %v5485
    %v5895 = vunpack.c.l.b16 %v5486
    %v5896 = vunpack.c.l.b16 %v5487
    %v5897 = vunpack.c.l.b16 %v5488
    %v5898 = vunpack.c.l.b16 %v5489
    %v5899 = vunpack.c.l.b16 %v5490
    %v5900 = vunpack.c.l.b16 %v5491
    %v5901 = vunpack.c.l.b16 %v5492
    %v5902 = vunpack.c.l.b16 %v5493
    %v5903 = vunpack.c.l.b16 %v5494
    %v5904 = vunpack.c.l.b16 %v5495
    %v5905 = vunpack.c.l.b16 %v5496
    %v5906 = vunpack.c.l.b16 %v5497
    %v5907 = vunpack.c.l.b16 %v5498
    %v5908 = vunpack.c.l.b16 %v5499
    %v5909 = vunpack.c.l.b16 %v5500
    %v5910 = vunpack.c.l.b16 %v5501
    %v5911 = vunpack.c.l.b16 %v5502
    %v5912 = vunpack.c.l.b16 %v5503
    %v5913 = vunpack.c.l.b16 %v5504
    %v5914 = vpack.c.b16 %v5867, %v5866
    %v5915 = vpack.c.b16 %v5869, %v5868
    %v5916 = vpack.c.b16 %v5871, %v5870
    %v5917 = vpack.c.b16 %v5873, %v5872
    %v5918 = vpack.c.b16 %v5875, %v5874
    %v5919 = vpack.c.b16 %v5877, %v5876
    %v5920 = vpack.c.b16 %v5879, %v5878
    %v5921 = vpack.c.b16 %v5881, %v5880
    %v5922 = vpack.c.b16 %v5883, %v5882
    %v5923 = vpack.c.b16 %v5885, %v5884
    %v5924 = vpack.c.b16 %v5887, %v5886
    %v5925 = vpack.c.b16 %v5889, %v5888
    %v5926 = vpack.c.b16 %v5891, %v5890
    %v5927 = vpack.c.b16 %v5893, %v5892
    %v5928 = vpack.c.b16 %v5895, %v5894
    %v5929 = vpack.c.b16 %v5897, %v5896
    %v5930 = vpack.c.b16 %v5899, %v5898
    %v5931 = vpack.c.b16 %v5901, %v5900
    %v5932 = vpack.c.b16 %v5903, %v5902
    %v5933 = vpack.c.b16 %v5905, %v5904
    %v5934 = vpack.c.b16 %v5907, %v5906
    %v5935 = vpack.c.b16 %v5909, %v5908
    %v5936 = vpack.c.b16 %v5911, %v5910
    %v5937 = vpack.c.b16 %v5913, %v5912
    %5962 = vmatprep.subr.bf16.mxu0 0
    %5963 = vmatpush1.bf16.msra.mxu0 %v5914
    %5964 = vmatprep.subr.bf16.mxu0 0
    %5965 = vmatpush1.bf16.msra.mxu0 %v5915
    %5966 = vmatprep.subr.bf16.mxu0 0
    %5967 = vmatpush1.bf16.msra.mxu0 %v5916
    %5968 = vmatprep.subr.bf16.mxu0 0
    %5969 = vmatpush1.bf16.msra.mxu0 %v5917
    %5970 = vmatprep.subr.bf16.mxu0 0
    %5971 = vmatpush1.bf16.msra.mxu0 %v5918
    %5972 = vmatprep.subr.bf16.mxu0 0
    %5973 = vmatpush1.bf16.msra.mxu0 %v5919
    %5974 = vmatprep.subr.bf16.mxu0 0
    %5975 = vmatpush1.bf16.msra.mxu0 %v5920
    %5976 = vmatprep.subr.bf16.mxu0 0
    %5977 = vmatpush1.bf16.msra.mxu0 %v5921
    %5978 = vmatprep.subr.bf16.mxu0 0
    %5979 = vmatpush1.bf16.msra.mxu0 %v5922
    %5980 = vmatprep.subr.bf16.mxu0 0
    %5981 = vmatpush1.bf16.msra.mxu0 %v5923
    %5982 = vmatprep.subr.bf16.mxu0 0
    %5983 = vmatpush1.bf16.msra.mxu0 %v5924
    %5984 = vmatprep.subr.bf16.mxu0 0
    %5985 = vmatpush1.bf16.msra.mxu0 %v5925
    %5986 = vmatprep.subr.bf16.mxu0 0
    %5987 = vmatpush1.bf16.msra.mxu0 %v5926
    %5988 = vmatprep.subr.bf16.mxu0 0
    %5989 = vmatpush1.bf16.msra.mxu0 %v5927
    %5990 = vmatprep.subr.bf16.mxu0 0
    %5991 = vmatpush1.bf16.msra.mxu0 %v5928
    %5992 = vmatprep.subr.bf16.mxu0 0
    %5993 = vmatpush1.bf16.msra.mxu0 %v5929
    %5994 = vmatprep.mubr.bf16.mxu0 %v5813
    %5995 = vmatmul.mubr.bf16.gmra.mrb[0].mxu0 %v5812
    %v5996 = vpop.f32.mrb[0].mxu0
    %v5997 = vadd.f32 %v5801, %v5996
    %v5998 = vpop.f32.mrb[0].mxu0
    %v5999 = vpop.f32.mrb[0].mxu0
    %v6000 = vpop.f32.mrb[0].mxu0
    %6001 = vdwg.mxu0
    %6002 = vmatprep.subr.bf16.mxu0 0
    %6003 = vmatpush1.bf16.msra.mxu0 %v5930
    %6004 = vmatprep.subr.bf16.mxu0 0
    %6005 = vmatpush1.bf16.msra.mxu0 %v5931
    %6006 = vmatprep.subr.bf16.mxu0 0
    %6007 = vmatpush1.bf16.msra.mxu0 %v5932
    %6008 = vmatprep.subr.bf16.mxu0 0
    %6009 = vmatpush1.bf16.msra.mxu0 %v5933
    %6010 = vmatprep.subr.bf16.mxu0 0
    %6011 = vmatpush1.bf16.msra.mxu0 %v5934
    %6012 = vmatprep.subr.bf16.mxu0 0
    %6013 = vmatpush1.bf16.msra.mxu0 %v5935
    %6014 = vmatprep.subr.bf16.mxu0 0
    %6015 = vmatpush1.bf16.msra.mxu0 %v5936
    %6016 = vmatprep.subr.bf16.mxu0 0
    %6017 = vmatpush1.bf16.msra.mxu0 %v5937
    %6018 = vmatprep.subr.bf16.mxu0 0
    %6019 = vmatpush1.bf16.msra.mxu0 0
    %6020 = vmatprep.subr.bf16.mxu0 0
    %6021 = vmatpush1.bf16.msra.mxu0 0
    %6022 = vmatprep.subr.bf16.mxu0 0
    %6023 = vmatpush1.bf16.msra.mxu0 0
    %6024 = vmatprep.subr.bf16.mxu0 0
    %6025 = vmatpush1.bf16.msra.mxu0 0
    %6026 = vmatprep.subr.bf16.mxu0 0
    %6027 = vmatpush1.bf16.msra.mxu0 0
    %6028 = vmatprep.subr.bf16.mxu0 0
    %6029 = vmatpush1.bf16.msra.mxu0 0
    %6030 = vmatprep.subr.bf16.mxu0 0
    %6031 = vmatpush1.bf16.msra.mxu0 0
    %6032 = vmatprep.subr.bf16.mxu0 0
    %6033 = vmatpush1.bf16.msra.mxu0 0
    %6034 = vmatprep.mubr.bf16.mxu0 0
    %6035 = vmatmul.mubr.bf16.gmra.mrb[0].mxu0 %v5814
    %v6036 = vpop.f32.mrb[0].mxu0
    %v6037 = vadd.f32 %v5997, %v6036
    %v6038 = vpop.f32.mrb[0].mxu0
    %v6039 = vpop.f32.mrb[0].mxu0
    %v6040 = vpop.f32.mrb[0].mxu0
    %6041 = vdwg.mxu0
    %s6042 = scalar_lea.vmem %s5, 384
    %v6043 = vld [vmem:[%s6042] sm:$0xf]
    %v6044 = vld [vmem:[%s6042 + $0x4] sm:$0xf]
    %v6045 = vld [vmem:[%s6042 + $0x8] sm:$0xf]
    %v6046 = vld [vmem:[%s6042 + $0xc] sm:$0xf]
    %v6047 = vld [vmem:[%s6042 + $0x10] sm:$0xf]
    %v6048 = vld [vmem:[%s6042 + $0x14] sm:$0xf]
    %v6049 = vld [vmem:[%s6042 + $0x18] sm:$0xf]
    %v6050 = vld [vmem:[%s6042 + $0x1c] sm:$0xf]
    %v6051 = vld [vmem:[%s6042 + $0x20] sm:$0xf]
    %v6052 = vld [vmem:[%s6042 + $0x24] sm:$0xf]
    %v6053 = vld [vmem:[%s6042 + $0x28] sm:$0xf]
    %v6054 = vld [vmem:[%s6042 + $0x2c] sm:$0xf]
    %v6055 = vld [vmem:[%s6042 + $0x30] sm:$0xf]
    %v6056 = vld [vmem:[%s6042 + $0x34] sm:$0xf]
    %v6057 = vld [vmem:[%s6042 + $0x38] sm:$0xf]
    %v6058 = vld [vmem:[%s6042 + $0x3c] sm:$0xf]
    %v6059 = vld [vmem:[%s6042 + $0x40] sm:$0xf]
    %v6060 = vld [vmem:[%s6042 + $0x44] sm:$0xf]
    %v6061 = vld [vmem:[%s6042 + $0x48] sm:$0xf]
    %v6062 = vld [vmem:[%s6042 + $0x4c] sm:$0xf]
    %v6063 = vld [vmem:[%s6042 + $0x50] sm:$0xf]
    %v6064 = vld [vmem:[%s6042 + $0x54] sm:$0xf]
    %v6065 = vld [vmem:[%s6042 + $0x58] sm:$0xf]
    %v6066 = vld [vmem:[%s6042 + $0x5c] sm:$0xf]
    %v6067 = vld [vmem:[%s6042 + $0x60] sm:$0xf]
    %v6068 = vld [vmem:[%s6042 + $0x64] sm:$0xf]
    %v6069 = vld [vmem:[%s6042 + $0x68] sm:$0xf]
    %v6070 = vld [vmem:[%s6042 + $0x6c] sm:$0xf]
    %v6071 = vld [vmem:[%s6042 + $0x70] sm:$0xf]
    %v6072 = vld [vmem:[%s6042 + $0x74] sm:$0xf]
    %v6073 = vld [vmem:[%s6042 + $0x78] sm:$0xf]
    %v6074 = vld [vmem:[%s6042 + $0x7c] sm:$0xf]
    %v6075 = vld [vmem:[%s6042 + $0x80] sm:$0xf]
    %v6076 = vld [vmem:[%s6042 + $0x84] sm:$0xf]
    %v6077 = vld [vmem:[%s6042 + $0x88] sm:$0xf]
    %v6078 = vld [vmem:[%s6042 + $0x8c] sm:$0xf]
    %v6079 = vld [vmem:[%s6042 + $0x90] sm:$0xf]
    %v6080 = vld [vmem:[%s6042 + $0x94] sm:$0xf]
    %v6081 = vld [vmem:[%s6042 + $0x98] sm:$0xf]
    %v6082 = vld [vmem:[%s6042 + $0x9c] sm:$0xf]
    %v6083 = vld [vmem:[%s6042 + $0xa0] sm:$0xf]
    %v6084 = vld [vmem:[%s6042 + $0xa4] sm:$0xf]
    %v6085 = vld [vmem:[%s6042 + $0xa8] sm:$0xf]
    %v6086 = vld [vmem:[%s6042 + $0xac] sm:$0xf]
    %v6087 = vld [vmem:[%s6042 + $0xb0] sm:$0xf]
    %v6088 = vld [vmem:[%s6042 + $0xb4] sm:$0xf]
    %v6089 = vld [vmem:[%s6042 + $0xb8] sm:$0xf]
    %v6090 = vld [vmem:[%s6042 + $0xbc] sm:$0xf]
    %v6091 = vrot.slane %v5560, 4
    %v6092 = vrot.slane %v5563, 3
    %v6093 = vsel %vm5568, %v6092, %v6091
    %v6094 = vrot.slane %v5561, 4
    %v6095 = vrot.slane %v5564, 3
    %v6096 = vsel %vm5568, %v6095, %v6094
    %v6097 = vrot.slane %v5562, 4
    %v6098 = vrot.slane %v5565, 3
    %v6099 = vsel %vm5568, %v6098, %v6097
    %v6100 = vpack.c.b16 %v6093, %v6093
    %v6101 = vpack.c.b16 %v6096, %v6096
    %v6102 = vpack.c.b16 %v6099, %v6099
    %v6154 = vunpack.c.l.b16 %v6043
    %v6155 = vunpack.c.l.b16 %v6044
    %v6156 = vunpack.c.l.b16 %v6045
    %v6157 = vunpack.c.l.b16 %v6046
    %v6158 = vunpack.c.l.b16 %v6047
    %v6159 = vunpack.c.l.b16 %v6048
    %v6160 = vunpack.c.l.b16 %v6049
    %v6161 = vunpack.c.l.b16 %v6050
    %v6162 = vunpack.c.l.b16 %v6051
    %v6163 = vunpack.c.l.b16 %v6052
    %v6164 = vunpack.c.l.b16 %v6053
    %v6165 = vunpack.c.l.b16 %v6054
    %v6166 = vunpack.c.l.b16 %v6055
    %v6167 = vunpack.c.l.b16 %v6056
    %v6168 = vunpack.c.l.b16 %v6057
    %v6169 = vunpack.c.l.b16 %v6058
    %v6170 = vunpack.c.l.b16 %v6059
    %v6171 = vunpack.c.l.b16 %v6060
    %v6172 = vunpack.c.l.b16 %v6061
    %v6173 = vunpack.c.l.b16 %v6062
    %v6174 = vunpack.c.l.b16 %v6063
    %v6175 = vunpack.c.l.b16 %v6064
    %v6176 = vunpack.c.l.b16 %v6065
    %v6177 = vunpack.c.l.b16 %v6066
    %v6178 = vunpack.c.l.b16 %v6067
    %v6179 = vunpack.c.l.b16 %v6068
    %v6180 = vunpack.c.l.b16 %v6069
    %v6181 = vunpack.c.l.b16 %v6070
    %v6182 = vunpack.c.l.b16 %v6071
    %v6183 = vunpack.c.l.b16 %v6072
    %v6184 = vunpack.c.l.b16 %v6073
    %v6185 = vunpack.c.l.b16 %v6074
    %v6186 = vunpack.c.l.b16 %v6075
    %v6187 = vunpack.c.l.b16 %v6076
    %v6188 = vunpack.c.l.b16 %v6077
    %v6189 = vunpack.c.l.b16 %v6078
    %v6190 = vunpack.c.l.b16 %v6079
    %v6191 = vunpack.c.l.b16 %v6080
    %v6192 = vunpack.c.l.b16 %v6081
    %v6193 = vunpack.c.l.b16 %v6082
    %v6194 = vunpack.c.l.b16 %v6083
    %v6195 = vunpack.c.l.b16 %v6084
    %v6196 = vunpack.c.l.b16 %v6085
    %v6197 = vunpack.c.l.b16 %v6086
    %v6198 = vunpack.c.l.b16 %v6087
    %v6199 = vunpack.c.l.b16 %v6088
    %v6200 = vunpack.c.l.b16 %v6089
    %v6201 = vunpack.c.l.b16 %v6090
    %v6202 = vpack.c.b16 %v6155, %v6154
    %v6203 = vpack.c.b16 %v6157, %v6156
    %v6204 = vpack.c.b16 %v6159, %v6158
    %v6205 = vpack.c.b16 %v6161, %v6160
    %v6206 = vpack.c.b16 %v6163, %v6162
    %v6207 = vpack.c.b16 %v6165, %v6164
    %v6208 = vpack.c.b16 %v6167, %v6166
    %v6209 = vpack.c.b16 %v6169, %v6168
    %v6210 = vpack.c.b16 %v6171, %v6170
    %v6211 = vpack.c.b16 %v6173, %v6172
    %v6212 = vpack.c.b16 %v6175, %v6174
    %v6213 = vpack.c.b16 %v6177, %v6176
    %v6214 = vpack.c.b16 %v6179, %v6178
    %v6215 = vpack.c.b16 %v6181, %v6180
    %v6216 = vpack.c.b16 %v6183, %v6182
    %v6217 = vpack.c.b16 %v6185, %v6184
    %v6218 = vpack.c.b16 %v6187, %v6186
    %v6219 = vpack.c.b16 %v6189, %v6188
    %v6220 = vpack.c.b16 %v6191, %v6190
    %v6221 = vpack.c.b16 %v6193, %v6192
    %v6222 = vpack.c.b16 %v6195, %v6194
    %v6223 = vpack.c.b16 %v6197, %v6196
    %v6224 = vpack.c.b16 %v6199, %v6198
    %v6225 = vpack.c.b16 %v6201, %v6200
    %6250 = vmatprep.subr.bf16.mxu0 0
    %6251 = vmatpush1.bf16.msra.mxu0 %v6202
    %6252 = vmatprep.subr.bf16.mxu0 0
    %6253 = vmatpush1.bf16.msra.mxu0 %v6203
    %6254 = vmatprep.subr.bf16.mxu0 0
    %6255 = vmatpush1.bf16.msra.mxu0 %v6204
    %6256 = vmatprep.subr.bf16.mxu0 0
    %6257 = vmatpush1.bf16.msra.mxu0 %v6205
    %6258 = vmatprep.subr.bf16.mxu0 0
    %6259 = vmatpush1.bf16.msra.mxu0 %v6206
    %6260 = vmatprep.subr.bf16.mxu0 0
    %6261 = vmatpush1.bf16.msra.mxu0 %v6207
    %6262 = vmatprep.subr.bf16.mxu0 0
    %6263 = vmatpush1.bf16.msra.mxu0 %v6208
    %6264 = vmatprep.subr.bf16.mxu0 0
    %6265 = vmatpush1.bf16.msra.mxu0 %v6209
    %6266 = vmatprep.subr.bf16.mxu0 0
    %6267 = vmatpush1.bf16.msra.mxu0 %v6210
    %6268 = vmatprep.subr.bf16.mxu0 0
    %6269 = vmatpush1.bf16.msra.mxu0 %v6211
    %6270 = vmatprep.subr.bf16.mxu0 0
    %6271 = vmatpush1.bf16.msra.mxu0 %v6212
    %6272 = vmatprep.subr.bf16.mxu0 0
    %6273 = vmatpush1.bf16.msra.mxu0 %v6213
    %6274 = vmatprep.subr.bf16.mxu0 0
    %6275 = vmatpush1.bf16.msra.mxu0 %v6214
    %6276 = vmatprep.subr.bf16.mxu0 0
    %6277 = vmatpush1.bf16.msra.mxu0 %v6215
    %6278 = vmatprep.subr.bf16.mxu0 0
    %6279 = vmatpush1.bf16.msra.mxu0 %v6216
    %6280 = vmatprep.subr.bf16.mxu0 0
    %6281 = vmatpush1.bf16.msra.mxu0 %v6217
    %6282 = vmatprep.mubr.bf16.mxu0 %v6101
    %6283 = vmatmul.mubr.bf16.gmra.mrb[0].mxu0 %v6100
    %v6284 = vpop.f32.mrb[0].mxu0
    %v6285 = vadd.f32 0.0, %v6284
    %v6286 = vpop.f32.mrb[0].mxu0
    %v6287 = vpop.f32.mrb[0].mxu0
    %v6288 = vpop.f32.mrb[0].mxu0
    %6289 = vdwg.mxu0
    %6290 = vmatprep.subr.bf16.mxu0 0
    %6291 = vmatpush1.bf16.msra.mxu0 %v6218
    %6292 = vmatprep.subr.bf16.mxu0 0
    %6293 = vmatpush1.bf16.msra.mxu0 %v6219
    %6294 = vmatprep.subr.bf16.mxu0 0
    %6295 = vmatpush1.bf16.msra.mxu0 %v6220
    %6296 = vmatprep.subr.bf16.mxu0 0
    %6297 = vmatpush1.bf16.msra.mxu0 %v6221
    %6298 = vmatprep.subr.bf16.mxu0 0
    %6299 = vmatpush1.bf16.msra.mxu0 %v6222
    %6300 = vmatprep.subr.bf16.mxu0 0
    %6301 = vmatpush1.bf16.msra.mxu0 %v6223
    %6302 = vmatprep.subr.bf16.mxu0 0
    %6303 = vmatpush1.bf16.msra.mxu0 %v6224
    %6304 = vmatprep.subr.bf16.mxu0 0
    %6305 = vmatpush1.bf16.msra.mxu0 %v6225
    %6306 = vmatprep.subr.bf16.mxu0 0
    %6307 = vmatpush1.bf16.msra.mxu0 0
    %6308 = vmatprep.subr.bf16.mxu0 0
    %6309 = vmatpush1.bf16.msra.mxu0 0
    %6310 = vmatprep.subr.bf16.mxu0 0
    %6311 = vmatpush1.bf16.msra.mxu0 0
    %6312 = vmatprep.subr.bf16.mxu0 0
    %6313 = vmatpush1.bf16.msra.mxu0 0
    %6314 = vmatprep.subr.bf16.mxu0 0
    %6315 = vmatpush1.bf16.msra.mxu0 0
    %6316 = vmatprep.subr.bf16.mxu0 0
    %6317 = vmatpush1.bf16.msra.mxu0 0
    %6318 = vmatprep.subr.bf16.mxu0 0
    %6319 = vmatpush1.bf16.msra.mxu0 0
    %6320 = vmatprep.subr.bf16.mxu0 0
    %6321 = vmatpush1.bf16.msra.mxu0 0
    %6322 = vmatprep.mubr.bf16.mxu0 0
    %6323 = vmatmul.mubr.bf16.gmra.mrb[0].mxu0 %v6102
    %v6324 = vpop.f32.mrb[0].mxu0
    %v6325 = vadd.f32 %v6285, %v6324
    %v6326 = vpop.f32.mrb[0].mxu0
    %v6327 = vpop.f32.mrb[0].mxu0
    %v6328 = vpop.f32.mrb[0].mxu0
    %6329 = vdwg.mxu0
    %v6330 = vadd.f32 %v6037, %v6325
    %s6331 = scalar_lea.vmem %s5, 576
    %v6332 = vld [vmem:[%s6331] sm:$0xf]
    %v6333 = vld [vmem:[%s6331 + $0x4] sm:$0xf]
    %v6334 = vld [vmem:[%s6331 + $0x8] sm:$0xf]
    %v6335 = vld [vmem:[%s6331 + $0xc] sm:$0xf]
    %v6336 = vld [vmem:[%s6331 + $0x10] sm:$0xf]
    %v6337 = vld [vmem:[%s6331 + $0x14] sm:$0xf]
    %v6338 = vld [vmem:[%s6331 + $0x18] sm:$0xf]
    %v6339 = vld [vmem:[%s6331 + $0x1c] sm:$0xf]
    %v6340 = vld [vmem:[%s6331 + $0x20] sm:$0xf]
    %v6341 = vld [vmem:[%s6331 + $0x24] sm:$0xf]
    %v6342 = vld [vmem:[%s6331 + $0x28] sm:$0xf]
    %v6343 = vld [vmem:[%s6331 + $0x2c] sm:$0xf]
    %v6344 = vld [vmem:[%s6331 + $0x30] sm:$0xf]
    %v6345 = vld [vmem:[%s6331 + $0x34] sm:$0xf]
    %v6346 = vld [vmem:[%s6331 + $0x38] sm:$0xf]
    %v6347 = vld [vmem:[%s6331 + $0x3c] sm:$0xf]
    %v6348 = vld [vmem:[%s6331 + $0x40] sm:$0xf]
    %v6349 = vld [vmem:[%s6331 + $0x44] sm:$0xf]
    %v6350 = vld [vmem:[%s6331 + $0x48] sm:$0xf]
    %v6351 = vld [vmem:[%s6331 + $0x4c] sm:$0xf]
    %v6352 = vld [vmem:[%s6331 + $0x50] sm:$0xf]
    %v6353 = vld [vmem:[%s6331 + $0x54] sm:$0xf]
    %v6354 = vld [vmem:[%s6331 + $0x58] sm:$0xf]
    %v6355 = vld [vmem:[%s6331 + $0x5c] sm:$0xf]
    %v6356 = vld [vmem:[%s6331 + $0x60] sm:$0xf]
    %v6357 = vld [vmem:[%s6331 + $0x64] sm:$0xf]
    %v6358 = vld [vmem:[%s6331 + $0x68] sm:$0xf]
    %v6359 = vld [vmem:[%s6331 + $0x6c] sm:$0xf]
    %v6360 = vld [vmem:[%s6331 + $0x70] sm:$0xf]
    %v6361 = vld [vmem:[%s6331 + $0x74] sm:$0xf]
    %v6362 = vld [vmem:[%s6331 + $0x78] sm:$0xf]
    %v6363 = vld [vmem:[%s6331 + $0x7c] sm:$0xf]
    %v6364 = vld [vmem:[%s6331 + $0x80] sm:$0xf]
    %v6365 = vld [vmem:[%s6331 + $0x84] sm:$0xf]
    %v6366 = vld [vmem:[%s6331 + $0x88] sm:$0xf]
    %v6367 = vld [vmem:[%s6331 + $0x8c] sm:$0xf]
    %v6368 = vld [vmem:[%s6331 + $0x90] sm:$0xf]
    %v6369 = vld [vmem:[%s6331 + $0x94] sm:$0xf]
    %v6370 = vld [vmem:[%s6331 + $0x98] sm:$0xf]
    %v6371 = vld [vmem:[%s6331 + $0x9c] sm:$0xf]
    %v6372 = vld [vmem:[%s6331 + $0xa0] sm:$0xf]
    %v6373 = vld [vmem:[%s6331 + $0xa4] sm:$0xf]
    %v6374 = vld [vmem:[%s6331 + $0xa8] sm:$0xf]
    %v6375 = vld [vmem:[%s6331 + $0xac] sm:$0xf]
    %v6376 = vld [vmem:[%s6331 + $0xb0] sm:$0xf]
    %v6377 = vld [vmem:[%s6331 + $0xb4] sm:$0xf]
    %v6378 = vld [vmem:[%s6331 + $0xb8] sm:$0xf]
    %v6379 = vld [vmem:[%s6331 + $0xbc] sm:$0xf]
    %v6380 = vrot.slane %v5560, 6
    %v6381 = vrot.slane %v5563, 5
    %v6382 = vsel %vm5568, %v6381, %v6380
    %v6383 = vrot.slane %v5561, 6
    %v6384 = vrot.slane %v5564, 5
    %v6385 = vsel %vm5568, %v6384, %v6383
    %v6386 = vrot.slane %v5562, 6
    %v6387 = vrot.slane %v5565, 5
    %v6388 = vsel %vm5568, %v6387, %v6386
    %v6389 = vpack.c.b16 %v6382, %v6382
    %v6390 = vpack.c.b16 %v6385, %v6385
    %v6391 = vpack.c.b16 %v6388, %v6388
    %v6443 = vunpack.c.l.b16 %v6332
    %v6444 = vunpack.c.l.b16 %v6333
    %v6445 = vunpack.c.l.b16 %v6334
    %v6446 = vunpack.c.l.b16 %v6335
    %v6447 = vunpack.c.l.b16 %v6336
    %v6448 = vunpack.c.l.b16 %v6337
    %v6449 = vunpack.c.l.b16 %v6338
    %v6450 = vunpack.c.l.b16 %v6339
    %v6451 = vunpack.c.l.b16 %v6340
    %v6452 = vunpack.c.l.b16 %v6341
    %v6453 = vunpack.c.l.b16 %v6342
    %v6454 = vunpack.c.l.b16 %v6343
    %v6455 = vunpack.c.l.b16 %v6344
    %v6456 = vunpack.c.l.b16 %v6345
    %v6457 = vunpack.c.l.b16 %v6346
    %v6458 = vunpack.c.l.b16 %v6347
    %v6459 = vunpack.c.l.b16 %v6348
    %v6460 = vunpack.c.l.b16 %v6349
    %v6461 = vunpack.c.l.b16 %v6350
    %v6462 = vunpack.c.l.b16 %v6351
    %v6463 = vunpack.c.l.b16 %v6352
    %v6464 = vunpack.c.l.b16 %v6353
    %v6465 = vunpack.c.l.b16 %v6354
    %v6466 = vunpack.c.l.b16 %v6355
    %v6467 = vunpack.c.l.b16 %v6356
    %v6468 = vunpack.c.l.b16 %v6357
    %v6469 = vunpack.c.l.b16 %v6358
    %v6470 = vunpack.c.l.b16 %v6359
    %v6471 = vunpack.c.l.b16 %v6360
    %v6472 = vunpack.c.l.b16 %v6361
    %v6473 = vunpack.c.l.b16 %v6362
    %v6474 = vunpack.c.l.b16 %v6363
    %v6475 = vunpack.c.l.b16 %v6364
    %v6476 = vunpack.c.l.b16 %v6365
    %v6477 = vunpack.c.l.b16 %v6366
    %v6478 = vunpack.c.l.b16 %v6367
    %v6479 = vunpack.c.l.b16 %v6368
    %v6480 = vunpack.c.l.b16 %v6369
    %v6481 = vunpack.c.l.b16 %v6370
    %v6482 = vunpack.c.l.b16 %v6371
    %v6483 = vunpack.c.l.b16 %v6372
    %v6484 = vunpack.c.l.b16 %v6373
    %v6485 = vunpack.c.l.b16 %v6374
    %v6486 = vunpack.c.l.b16 %v6375
    %v6487 = vunpack.c.l.b16 %v6376
    %v6488 = vunpack.c.l.b16 %v6377
    %v6489 = vunpack.c.l.b16 %v6378
    %v6490 = vunpack.c.l.b16 %v6379
    %v6491 = vpack.c.b16 %v6444, %v6443
    %v6492 = vpack.c.b16 %v6446, %v6445
    %v6493 = vpack.c.b16 %v6448, %v6447
    %v6494 = vpack.c.b16 %v6450, %v6449
    %v6495 = vpack.c.b16 %v6452, %v6451
    %v6496 = vpack.c.b16 %v6454, %v6453
    %v6497 = vpack.c.b16 %v6456, %v6455
    %v6498 = vpack.c.b16 %v6458, %v6457
    %v6499 = vpack.c.b16 %v6460, %v6459
    %v6500 = vpack.c.b16 %v6462, %v6461
    %v6501 = vpack.c.b16 %v6464, %v6463
    %v6502 = vpack.c.b16 %v6466, %v6465
    %v6503 = vpack.c.b16 %v6468, %v6467
    %v6504 = vpack.c.b16 %v6470, %v6469
    %v6505 = vpack.c.b16 %v6472, %v6471
    %v6506 = vpack.c.b16 %v6474, %v6473
    %v6507 = vpack.c.b16 %v6476, %v6475
    %v6508 = vpack.c.b16 %v6478, %v6477
    %v6509 = vpack.c.b16 %v6480, %v6479
    %v6510 = vpack.c.b16 %v6482, %v6481
    %v6511 = vpack.c.b16 %v6484, %v6483
    %v6512 = vpack.c.b16 %v6486, %v6485
    %v6513 = vpack.c.b16 %v6488, %v6487
    %v6514 = vpack.c.b16 %v6490, %v6489
    %6539 = vmatprep.subr.bf16.mxu0 0
    %6540 = vmatpush1.bf16.msra.mxu0 %v6491
    %6541 = vmatprep.subr.bf16.mxu0 0
    %6542 = vmatpush1.bf16.msra.mxu0 %v6492
    %6543 = vmatprep.subr.bf16.mxu0 0
    %6544 = vmatpush1.bf16.msra.mxu0 %v6493
    %6545 = vmatprep.subr.bf16.mxu0 0
    %6546 = vmatpush1.bf16.msra.mxu0 %v6494
    %6547 = vmatprep.subr.bf16.mxu0 0
    %6548 = vmatpush1.bf16.msra.mxu0 %v6495
    %6549 = vmatprep.subr.bf16.mxu0 0
    %6550 = vmatpush1.bf16.msra.mxu0 %v6496
    %6551 = vmatprep.subr.bf16.mxu0 0
    %6552 = vmatpush1.bf16.msra.mxu0 %v6497
    %6553 = vmatprep.subr.bf16.mxu0 0
    %6554 = vmatpush1.bf16.msra.mxu0 %v6498
    %6555 = vmatprep.subr.bf16.mxu0 0
    %6556 = vmatpush1.bf16.msra.mxu0 %v6499
    %6557 = vmatprep.subr.bf16.mxu0 0
    %6558 = vmatpush1.bf16.msra.mxu0 %v6500
    %6559 = vmatprep.subr.bf16.mxu0 0
    %6560 = vmatpush1.bf16.msra.mxu0 %v6501
    %6561 = vmatprep.subr.bf16.mxu0 0
    %6562 = vmatpush1.bf16.msra.mxu0 %v6502
    %6563 = vmatprep.subr.bf16.mxu0 0
    %6564 = vmatpush1.bf16.msra.mxu0 %v6503
    %6565 = vmatprep.subr.bf16.mxu0 0
    %6566 = vmatpush1.bf16.msra.mxu0 %v6504
    %6567 = vmatprep.subr.bf16.mxu0 0
    %6568 = vmatpush1.bf16.msra.mxu0 %v6505
    %6569 = vmatprep.subr.bf16.mxu0 0
    %6570 = vmatpush1.bf16.msra.mxu0 %v6506
    %6571 = vmatprep.mubr.bf16.mxu0 %v6390
    %6572 = vmatmul.mubr.bf16.gmra.mrb[0].mxu0 %v6389
    %v6573 = vpop.f32.mrb[0].mxu0
    %v6574 = vadd.f32 0.0, %v6573
    %v6575 = vpop.f32.mrb[0].mxu0
    %v6576 = vpop.f32.mrb[0].mxu0
    %v6577 = vpop.f32.mrb[0].mxu0
    %6578 = vdwg.mxu0
    %6579 = vmatprep.subr.bf16.mxu0 0
    %6580 = vmatpush1.bf16.msra.mxu0 %v6507
    %6581 = vmatprep.subr.bf16.mxu0 0
    %6582 = vmatpush1.bf16.msra.mxu0 %v6508
    %6583 = vmatprep.subr.bf16.mxu0 0
    %6584 = vmatpush1.bf16.msra.mxu0 %v6509
    %6585 = vmatprep.subr.bf16.mxu0 0
    %6586 = vmatpush1.bf16.msra.mxu0 %v6510
    %6587 = vmatprep.subr.bf16.mxu0 0
    %6588 = vmatpush1.bf16.msra.mxu0 %v6511
    %6589 = vmatprep.subr.bf16.mxu0 0
    %6590 = vmatpush1.bf16.msra.mxu0 %v6512
    %6591 = vmatprep.subr.bf16.mxu0 0
    %6592 = vmatpush1.bf16.msra.mxu0 %v6513
    %6593 = vmatprep.subr.bf16.mxu0 0
    %6594 = vmatpush1.bf16.msra.mxu0 %v6514
    %6595 = vmatprep.subr.bf16.mxu0 0
    %6596 = vmatpush1.bf16.msra.mxu0 0
    %6597 = vmatprep.subr.bf16.mxu0 0
    %6598 = vmatpush1.bf16.msra.mxu0 0
    %6599 = vmatprep.subr.bf16.mxu0 0
    %6600 = vmatpush1.bf16.msra.mxu0 0
    %6601 = vmatprep.subr.bf16.mxu0 0
    %6602 = vmatpush1.bf16.msra.mxu0 0
    %6603 = vmatprep.subr.bf16.mxu0 0
    %6604 = vmatpush1.bf16.msra.mxu0 0
    %6605 = vmatprep.subr.bf16.mxu0 0
    %6606 = vmatpush1.bf16.msra.mxu0 0
    %6607 = vmatprep.subr.bf16.mxu0 0
    %6608 = vmatpush1.bf16.msra.mxu0 0
    %6609 = vmatprep.subr.bf16.mxu0 0
    %6610 = vmatpush1.bf16.msra.mxu0 0
    %6611 = vmatprep.mubr.bf16.mxu0 0
    %6612 = vmatmul.mubr.bf16.gmra.mrb[0].mxu0 %v6391
    %v6613 = vpop.f32.mrb[0].mxu0
    %v6614 = vadd.f32 %v6574, %v6613
    %v6615 = vpop.f32.mrb[0].mxu0
    %v6616 = vpop.f32.mrb[0].mxu0
    %v6617 = vpop.f32.mrb[0].mxu0
    %6618 = vdwg.mxu0
    %v6619 = vadd.f32 %v6330, %v6614
    %v6632 = vrot.slane %v5367, 1
    %v6633 = vrot.slane %v5368, 1
    %v6634 = vrot.slane %v5369, 1
    %v6635 = vrot.slane %v5370, 1
    %v6636 = vrot.slane %v5371, 1
    %v6637 = vrot.slane %v5372, 1
    %v6638 = vrot.slane %v5385, 1
    %v6639 = vrot.slane %v5386, 1
    %v6640 = vrot.slane %v5387, 1
    %v6641 = vrot.slane %v5388, 1
    %v6642 = vrot.slane %v5389, 1
    %v6643 = vrot.slane %v5390, 1
    %v6656 = vmax.f32 %v5367, %v6632
    %v6657 = vmax.f32 %v5368, %v6633
    %v6658 = vmax.f32 %v5369, %v6634
    %v6659 = vmax.f32 %v5370, %v6635
    %v6660 = vmax.f32 %v5371, %v6636
    %v6661 = vmax.f32 %v5372, %v6637
    %v6662 = vmax.f32 %v5385, %v6638
    %v6663 = vmax.f32 %v5386, %v6639
    %v6664 = vmax.f32 %v5387, %v6640
    %v6665 = vmax.f32 %v5388, %v6641
    %v6666 = vmax.f32 %v5389, %v6642
    %v6667 = vmax.f32 %v5390, %v6643
    %v6668 = vmax.f32 %v6656, %v6659
    %v6669 = vmax.f32 %v6657, %v6660
    %v6670 = vmax.f32 %v6658, %v6661
    %v6671 = vmax.f32 %v6662, %v6665
    %v6672 = vmax.f32 %v6663, %v6666
    %v6673 = vmax.f32 %v6664, %v6667
    %v6674 = vpack.c.bf16 %v6668, %v6668
    %v6675 = vpack.c.bf16 %v6669, %v6669
    %v6676 = vpack.c.bf16 %v6670, %v6670
    %v6677 = vpack.c.bf16 %v6671, %v6671
    %v6678 = vpack.c.bf16 %v6672, %v6672
    %v6679 = vpack.c.bf16 %v6673, %v6673
    %s6680 = scalar_lea.vmem %s5, 768
    %v6681 = vld [vmem:[%s6680] sm:$0xf]
    %v6682 = vld [vmem:[%s6680 + $0x4] sm:$0xf]
    %v6683 = vld [vmem:[%s6680 + $0x8] sm:$0xf]
    %v6684 = vld [vmem:[%s6680 + $0xc] sm:$0xf]
    %v6685 = vld [vmem:[%s6680 + $0x10] sm:$0xf]
    %v6686 = vld [vmem:[%s6680 + $0x14] sm:$0xf]
    %v6687 = vld [vmem:[%s6680 + $0x18] sm:$0xf]
    %v6688 = vld [vmem:[%s6680 + $0x1c] sm:$0xf]
    %v6689 = vld [vmem:[%s6680 + $0x20] sm:$0xf]
    %v6690 = vld [vmem:[%s6680 + $0x24] sm:$0xf]
    %v6691 = vld [vmem:[%s6680 + $0x28] sm:$0xf]
    %v6692 = vld [vmem:[%s6680 + $0x2c] sm:$0xf]
    %v6693 = vld [vmem:[%s6680 + $0x30] sm:$0xf]
    %v6694 = vld [vmem:[%s6680 + $0x34] sm:$0xf]
    %v6695 = vld [vmem:[%s6680 + $0x38] sm:$0xf]
    %v6696 = vld [vmem:[%s6680 + $0x3c] sm:$0xf]
    %v6697 = vld [vmem:[%s6680 + $0x40] sm:$0xf]
    %v6698 = vld [vmem:[%s6680 + $0x44] sm:$0xf]
    %v6699 = vld [vmem:[%s6680 + $0x48] sm:$0xf]
    %v6700 = vld [vmem:[%s6680 + $0x4c] sm:$0xf]
    %v6701 = vld [vmem:[%s6680 + $0x50] sm:$0xf]
    %v6702 = vld [vmem:[%s6680 + $0x54] sm:$0xf]
    %v6703 = vld [vmem:[%s6680 + $0x58] sm:$0xf]
    %v6704 = vld [vmem:[%s6680 + $0x5c] sm:$0xf]
    %v6705 = vld [vmem:[%s6680 + $0x60] sm:$0xf]
    %v6706 = vld [vmem:[%s6680 + $0x64] sm:$0xf]
    %v6707 = vld [vmem:[%s6680 + $0x68] sm:$0xf]
    %v6708 = vld [vmem:[%s6680 + $0x6c] sm:$0xf]
    %v6709 = vld [vmem:[%s6680 + $0x70] sm:$0xf]
    %v6710 = vld [vmem:[%s6680 + $0x74] sm:$0xf]
    %v6711 = vld [vmem:[%s6680 + $0x78] sm:$0xf]
    %v6712 = vld [vmem:[%s6680 + $0x7c] sm:$0xf]
    %v6713 = vld [vmem:[%s6680 + $0x80] sm:$0xf]
    %v6714 = vld [vmem:[%s6680 + $0x84] sm:$0xf]
    %v6715 = vld [vmem:[%s6680 + $0x88] sm:$0xf]
    %v6716 = vld [vmem:[%s6680 + $0x8c] sm:$0xf]
    %v6717 = vld [vmem:[%s6680 + $0x90] sm:$0xf]
    %v6718 = vld [vmem:[%s6680 + $0x94] sm:$0xf]
    %v6719 = vld [vmem:[%s6680 + $0x98] sm:$0xf]
    %v6720 = vld [vmem:[%s6680 + $0x9c] sm:$0xf]
    %v6721 = vld [vmem:[%s6680 + $0xa0] sm:$0xf]
    %v6722 = vld [vmem:[%s6680 + $0xa4] sm:$0xf]
    %v6723 = vld [vmem:[%s6680 + $0xa8] sm:$0xf]
    %v6724 = vld [vmem:[%s6680 + $0xac] sm:$0xf]
    %v6725 = vld [vmem:[%s6680 + $0xb0] sm:$0xf]
    %v6726 = vld [vmem:[%s6680 + $0xb4] sm:$0xf]
    %v6727 = vld [vmem:[%s6680 + $0xb8] sm:$0xf]
    %v6728 = vld [vmem:[%s6680 + $0xbc] sm:$0xf]
    %v6735 = vunpack.c.l.b16 %v6674
    %v6736 = vunpack.c.l.b16 %v6675
    %v6737 = vunpack.c.l.b16 %v6676
    %v6738 = vunpack.c.l.b16 %v6677
    %v6739 = vunpack.c.l.b16 %v6678
    %v6740 = vunpack.c.l.b16 %v6679
    %v6741 = vrot.slane %v6738, 7
    %v6742 = vsel %vm5568, %v6741, %v6735
    %v6743 = vrot.slane %v6739, 7
    %v6744 = vsel %vm5568, %v6743, %v6736
    %v6745 = vrot.slane %v6740, 7
    %v6746 = vsel %vm5568, %v6745, %v6737
    %v6747 = vpack.c.b16 %v6742, %v6742
    %v6748 = vpack.c.b16 %v6744, %v6744
    %v6749 = vpack.c.b16 %v6746, %v6746
    %v6801 = vunpack.c.l.b16 %v6681
    %v6802 = vunpack.c.l.b16 %v6682
    %v6803 = vunpack.c.l.b16 %v6683
    %v6804 = vunpack.c.l.b16 %v6684
    %v6805 = vunpack.c.l.b16 %v6685
    %v6806 = vunpack.c.l.b16 %v6686
    %v6807 = vunpack.c.l.b16 %v6687
    %v6808 = vunpack.c.l.b16 %v6688
    %v6809 = vunpack.c.l.b16 %v6689
    %v6810 = vunpack.c.l.b16 %v6690
    %v6811 = vunpack.c.l.b16 %v6691
    %v6812 = vunpack.c.l.b16 %v6692
    %v6813 = vunpack.c.l.b16 %v6693
    %v6814 = vunpack.c.l.b16 %v6694
    %v6815 = vunpack.c.l.b16 %v6695
    %v6816 = vunpack.c.l.b16 %v6696
    %v6817 = vunpack.c.l.b16 %v6697
    %v6818 = vunpack.c.l.b16 %v6698
    %v6819 = vunpack.c.l.b16 %v6699
    %v6820 = vunpack.c.l.b16 %v6700
    %v6821 = vunpack.c.l.b16 %v6701
    %v6822 = vunpack.c.l.b16 %v6702
    %v6823 = vunpack.c.l.b16 %v6703
    %v6824 = vunpack.c.l.b16 %v6704
    %v6825 = vunpack.c.l.b16 %v6705
    %v6826 = vunpack.c.l.b16 %v6706
    %v6827 = vunpack.c.l.b16 %v6707
    %v6828 = vunpack.c.l.b16 %v6708
    %v6829 = vunpack.c.l.b16 %v6709
    %v6830 = vunpack.c.l.b16 %v6710
    %v6831 = vunpack.c.l.b16 %v6711
    %v6832 = vunpack.c.l.b16 %v6712
    %v6833 = vunpack.c.l.b16 %v6713
    %v6834 = vunpack.c.l.b16 %v6714
    %v6835 = vunpack.c.l.b16 %v6715
    %v6836 = vunpack.c.l.b16 %v6716
    %v6837 = vunpack.c.l.b16 %v6717
    %v6838 = vunpack.c.l.b16 %v6718
    %v6839 = vunpack.c.l.b16 %v6719
    %v6840 = vunpack.c.l.b16 %v6720
    %v6841 = vunpack.c.l.b16 %v6721
    %v6842 = vunpack.c.l.b16 %v6722
    %v6843 = vunpack.c.l.b16 %v6723
    %v6844 = vunpack.c.l.b16 %v6724
    %v6845 = vunpack.c.l.b16 %v6725
    %v6846 = vunpack.c.l.b16 %v6726
    %v6847 = vunpack.c.l.b16 %v6727
    %v6848 = vunpack.c.l.b16 %v6728
    %v6849 = vpack.c.b16 %v6802, %v6801
    %v6850 = vpack.c.b16 %v6804, %v6803
    %v6851 = vpack.c.b16 %v6806, %v6805
    %v6852 = vpack.c.b16 %v6808, %v6807
    %v6853 = vpack.c.b16 %v6810, %v6809
    %v6854 = vpack.c.b16 %v6812, %v6811
    %v6855 = vpack.c.b16 %v6814, %v6813
    %v6856 = vpack.c.b16 %v6816, %v6815
    %v6857 = vpack.c.b16 %v6818, %v6817
    %v6858 = vpack.c.b16 %v6820, %v6819
    %v6859 = vpack.c.b16 %v6822, %v6821
    %v6860 = vpack.c.b16 %v6824, %v6823
    %v6861 = vpack.c.b16 %v6826, %v6825
    %v6862 = vpack.c.b16 %v6828, %v6827
    %v6863 = vpack.c.b16 %v6830, %v6829
    %v6864 = vpack.c.b16 %v6832, %v6831
    %v6865 = vpack.c.b16 %v6834, %v6833
    %v6866 = vpack.c.b16 %v6836, %v6835
    %v6867 = vpack.c.b16 %v6838, %v6837
    %v6868 = vpack.c.b16 %v6840, %v6839
    %v6869 = vpack.c.b16 %v6842, %v6841
    %v6870 = vpack.c.b16 %v6844, %v6843
    %v6871 = vpack.c.b16 %v6846, %v6845
    %v6872 = vpack.c.b16 %v6848, %v6847
    %6897 = vmatprep.subr.bf16.mxu0 0
    %6898 = vmatpush1.bf16.msra.mxu0 %v6849
    %6899 = vmatprep.subr.bf16.mxu0 0
    %6900 = vmatpush1.bf16.msra.mxu0 %v6850
    %6901 = vmatprep.subr.bf16.mxu0 0
    %6902 = vmatpush1.bf16.msra.mxu0 %v6851
    %6903 = vmatprep.subr.bf16.mxu0 0
    %6904 = vmatpush1.bf16.msra.mxu0 %v6852
    %6905 = vmatprep.subr.bf16.mxu0 0
    %6906 = vmatpush1.bf16.msra.mxu0 %v6853
    %6907 = vmatprep.subr.bf16.mxu0 0
    %6908 = vmatpush1.bf16.msra.mxu0 %v6854
    %6909 = vmatprep.subr.bf16.mxu0 0
    %6910 = vmatpush1.bf16.msra.mxu0 %v6855
    %6911 = vmatprep.subr.bf16.mxu0 0
    %6912 = vmatpush1.bf16.msra.mxu0 %v6856
    %6913 = vmatprep.subr.bf16.mxu0 0
    %6914 = vmatpush1.bf16.msra.mxu0 %v6857
    %6915 = vmatprep.subr.bf16.mxu0 0
    %6916 = vmatpush1.bf16.msra.mxu0 %v6858
    %6917 = vmatprep.subr.bf16.mxu0 0
    %6918 = vmatpush1.bf16.msra.mxu0 %v6859
    %6919 = vmatprep.subr.bf16.mxu0 0
    %6920 = vmatpush1.bf16.msra.mxu0 %v6860
    %6921 = vmatprep.subr.bf16.mxu0 0
    %6922 = vmatpush1.bf16.msra.mxu0 %v6861
    %6923 = vmatprep.subr.bf16.mxu0 0
    %6924 = vmatpush1.bf16.msra.mxu0 %v6862
    %6925 = vmatprep.subr.bf16.mxu0 0
    %6926 = vmatpush1.bf16.msra.mxu0 %v6863
    %6927 = vmatprep.subr.bf16.mxu0 0
    %6928 = vmatpush1.bf16.msra.mxu0 %v6864
    %6929 = vmatprep.mubr.bf16.mxu0 %v6748
    %6930 = vmatmul.mubr.bf16.gmra.mrb[0].mxu0 %v6747
    %v6931 = vpop.f32.mrb[0].mxu0
    %v6932 = vadd.f32 0.0, %v6931
    %v6933 = vpop.f32.mrb[0].mxu0
    %v6934 = vpop.f32.mrb[0].mxu0
    %v6935 = vpop.f32.mrb[0].mxu0
    %6936 = vdwg.mxu0
    %6937 = vmatprep.subr.bf16.mxu0 0
    %6938 = vmatpush1.bf16.msra.mxu0 %v6865
    %6939 = vmatprep.subr.bf16.mxu0 0
    %6940 = vmatpush1.bf16.msra.mxu0 %v6866
    %6941 = vmatprep.subr.bf16.mxu0 0
    %6942 = vmatpush1.bf16.msra.mxu0 %v6867
    %6943 = vmatprep.subr.bf16.mxu0 0
    %6944 = vmatpush1.bf16.msra.mxu0 %v6868
    %6945 = vmatprep.subr.bf16.mxu0 0
    %6946 = vmatpush1.bf16.msra.mxu0 %v6869
    %6947 = vmatprep.subr.bf16.mxu0 0
    %6948 = vmatpush1.bf16.msra.mxu0 %v6870
    %6949 = vmatprep.subr.bf16.mxu0 0
    %6950 = vmatpush1.bf16.msra.mxu0 %v6871
    %6951 = vmatprep.subr.bf16.mxu0 0
    %6952 = vmatpush1.bf16.msra.mxu0 %v6872
    %6953 = vmatprep.subr.bf16.mxu0 0
    %6954 = vmatpush1.bf16.msra.mxu0 0
    %6955 = vmatprep.subr.bf16.mxu0 0
    %6956 = vmatpush1.bf16.msra.mxu0 0
    %6957 = vmatprep.subr.bf16.mxu0 0
    %6958 = vmatpush1.bf16.msra.mxu0 0
    %6959 = vmatprep.subr.bf16.mxu0 0
    %6960 = vmatpush1.bf16.msra.mxu0 0
    %6961 = vmatprep.subr.bf16.mxu0 0
    %6962 = vmatpush1.bf16.msra.mxu0 0
    %6963 = vmatprep.subr.bf16.mxu0 0
    %6964 = vmatpush1.bf16.msra.mxu0 0
    %6965 = vmatprep.subr.bf16.mxu0 0
    %6966 = vmatpush1.bf16.msra.mxu0 0
    %6967 = vmatprep.subr.bf16.mxu0 0
    %6968 = vmatpush1.bf16.msra.mxu0 0
    %6969 = vmatprep.mubr.bf16.mxu0 0
    %6970 = vmatmul.mubr.bf16.gmra.mrb[0].mxu0 %v6749
    %v6971 = vpop.f32.mrb[0].mxu0
    %v6972 = vadd.f32 %v6932, %v6971
    %v6973 = vpop.f32.mrb[0].mxu0
    %v6974 = vpop.f32.mrb[0].mxu0
    %v6975 = vpop.f32.mrb[0].mxu0
    %6976 = vdwg.mxu0
    %v6977 = vadd.f32 %v6619, %v6972
    %s6978 = scalar_lea.vmem %s5, 960
    %v6979 = vld [vmem:[%s6978] sm:$0xf]
    %v6980 = vld [vmem:[%s6978 + $0x4] sm:$0xf]
    %v6981 = vld [vmem:[%s6978 + $0x8] sm:$0xf]
    %v6982 = vld [vmem:[%s6978 + $0xc] sm:$0xf]
    %v6983 = vld [vmem:[%s6978 + $0x10] sm:$0xf]
    %v6984 = vld [vmem:[%s6978 + $0x14] sm:$0xf]
    %v6985 = vld [vmem:[%s6978 + $0x18] sm:$0xf]
    %v6986 = vld [vmem:[%s6978 + $0x1c] sm:$0xf]
    %v6987 = vld [vmem:[%s6978 + $0x20] sm:$0xf]
    %v6988 = vld [vmem:[%s6978 + $0x24] sm:$0xf]
    %v6989 = vld [vmem:[%s6978 + $0x28] sm:$0xf]
    %v6990 = vld [vmem:[%s6978 + $0x2c] sm:$0xf]
    %v6991 = vld [vmem:[%s6978 + $0x30] sm:$0xf]
    %v6992 = vld [vmem:[%s6978 + $0x34] sm:$0xf]
    %v6993 = vld [vmem:[%s6978 + $0x38] sm:$0xf]
    %v6994 = vld [vmem:[%s6978 + $0x3c] sm:$0xf]
    %v6995 = vld [vmem:[%s6978 + $0x40] sm:$0xf]
    %v6996 = vld [vmem:[%s6978 + $0x44] sm:$0xf]
    %v6997 = vld [vmem:[%s6978 + $0x48] sm:$0xf]
    %v6998 = vld [vmem:[%s6978 + $0x4c] sm:$0xf]
    %v6999 = vld [vmem:[%s6978 + $0x50] sm:$0xf]
    %v7000 = vld [vmem:[%s6978 + $0x54] sm:$0xf]
    %v7001 = vld [vmem:[%s6978 + $0x58] sm:$0xf]
    %v7002 = vld [vmem:[%s6978 + $0x5c] sm:$0xf]
    %v7003 = vld [vmem:[%s6978 + $0x60] sm:$0xf]
    %v7004 = vld [vmem:[%s6978 + $0x64] sm:$0xf]
    %v7005 = vld [vmem:[%s6978 + $0x68] sm:$0xf]
    %v7006 = vld [vmem:[%s6978 + $0x6c] sm:$0xf]
    %v7007 = vld [vmem:[%s6978 + $0x70] sm:$0xf]
    %v7008 = vld [vmem:[%s6978 + $0x74] sm:$0xf]
    %v7009 = vld [vmem:[%s6978 + $0x78] sm:$0xf]
    %v7010 = vld [vmem:[%s6978 + $0x7c] sm:$0xf]
    %v7011 = vld [vmem:[%s6978 + $0x80] sm:$0xf]
    %v7012 = vld [vmem:[%s6978 + $0x84] sm:$0xf]
    %v7013 = vld [vmem:[%s6978 + $0x88] sm:$0xf]
    %v7014 = vld [vmem:[%s6978 + $0x8c] sm:$0xf]
    %v7015 = vld [vmem:[%s6978 + $0x90] sm:$0xf]
    %v7016 = vld [vmem:[%s6978 + $0x94] sm:$0xf]
    %v7017 = vld [vmem:[%s6978 + $0x98] sm:$0xf]
    %v7018 = vld [vmem:[%s6978 + $0x9c] sm:$0xf]
    %v7019 = vld [vmem:[%s6978 + $0xa0] sm:$0xf]
    %v7020 = vld [vmem:[%s6978 + $0xa4] sm:$0xf]
    %v7021 = vld [vmem:[%s6978 + $0xa8] sm:$0xf]
    %v7022 = vld [vmem:[%s6978 + $0xac] sm:$0xf]
    %v7023 = vld [vmem:[%s6978 + $0xb0] sm:$0xf]
    %v7024 = vld [vmem:[%s6978 + $0xb4] sm:$0xf]
    %v7025 = vld [vmem:[%s6978 + $0xb8] sm:$0xf]
    %v7026 = vld [vmem:[%s6978 + $0xbc] sm:$0xf]
    %v7027 = vrot.slane %v6735, 2
    %v7028 = vrot.slane %v6738, 1
    %v7029 = vsel %vm5568, %v7028, %v7027
    %v7030 = vrot.slane %v6736, 2
    %v7031 = vrot.slane %v6739, 1
    %v7032 = vsel %vm5568, %v7031, %v7030
    %v7033 = vrot.slane %v6737, 2
    %v7034 = vrot.slane %v6740, 1
    %v7035 = vsel %vm5568, %v7034, %v7033
    %v7036 = vpack.c.b16 %v7029, %v7029
    %v7037 = vpack.c.b16 %v7032, %v7032
    %v7038 = vpack.c.b16 %v7035, %v7035
    %v7090 = vunpack.c.l.b16 %v6979
    %v7091 = vunpack.c.l.b16 %v6980
    %v7092 = vunpack.c.l.b16 %v6981
    %v7093 = vunpack.c.l.b16 %v6982
    %v7094 = vunpack.c.l.b16 %v6983
    %v7095 = vunpack.c.l.b16 %v6984
    %v7096 = vunpack.c.l.b16 %v6985
    %v7097 = vunpack.c.l.b16 %v6986
    %v7098 = vunpack.c.l.b16 %v6987
    %v7099 = vunpack.c.l.b16 %v6988
    %v7100 = vunpack.c.l.b16 %v6989
    %v7101 = vunpack.c.l.b16 %v6990
    %v7102 = vunpack.c.l.b16 %v6991
    %v7103 = vunpack.c.l.b16 %v6992
    %v7104 = vunpack.c.l.b16 %v6993
    %v7105 = vunpack.c.l.b16 %v6994
    %v7106 = vunpack.c.l.b16 %v6995
    %v7107 = vunpack.c.l.b16 %v6996
    %v7108 = vunpack.c.l.b16 %v6997
    %v7109 = vunpack.c.l.b16 %v6998
    %v7110 = vunpack.c.l.b16 %v6999
    %v7111 = vunpack.c.l.b16 %v7000
    %v7112 = vunpack.c.l.b16 %v7001
    %v7113 = vunpack.c.l.b16 %v7002
    %v7114 = vunpack.c.l.b16 %v7003
    %v7115 = vunpack.c.l.b16 %v7004
    %v7116 = vunpack.c.l.b16 %v7005
    %v7117 = vunpack.c.l.b16 %v7006
    %v7118 = vunpack.c.l.b16 %v7007
    %v7119 = vunpack.c.l.b16 %v7008
    %v7120 = vunpack.c.l.b16 %v7009
    %v7121 = vunpack.c.l.b16 %v7010
    %v7122 = vunpack.c.l.b16 %v7011
    %v7123 = vunpack.c.l.b16 %v7012
    %v7124 = vunpack.c.l.b16 %v7013
    %v7125 = vunpack.c.l.b16 %v7014
    %v7126 = vunpack.c.l.b16 %v7015
    %v7127 = vunpack.c.l.b16 %v7016
    %v7128 = vunpack.c.l.b16 %v7017
    %v7129 = vunpack.c.l.b16 %v7018
    %v7130 = vunpack.c.l.b16 %v7019
    %v7131 = vunpack.c.l.b16 %v7020
    %v7132 = vunpack.c.l.b16 %v7021
    %v7133 = vunpack.c.l.b16 %v7022
    %v7134 = vunpack.c.l.b16 %v7023
    %v7135 = vunpack.c.l.b16 %v7024
    %v7136 = vunpack.c.l.b16 %v7025
    %v7137 = vunpack.c.l.b16 %v7026
    %v7138 = vpack.c.b16 %v7091, %v7090
    %v7139 = vpack.c.b16 %v7093, %v7092
    %v7140 = vpack.c.b16 %v7095, %v7094
    %v7141 = vpack.c.b16 %v7097, %v7096
    %v7142 = vpack.c.b16 %v7099, %v7098
    %v7143 = vpack.c.b16 %v7101, %v7100
    %v7144 = vpack.c.b16 %v7103, %v7102
    %v7145 = vpack.c.b16 %v7105, %v7104
    %v7146 = vpack.c.b16 %v7107, %v7106
    %v7147 = vpack.c.b16 %v7109, %v7108
    %v7148 = vpack.c.b16 %v7111, %v7110
    %v7149 = vpack.c.b16 %v7113, %v7112
    %v7150 = vpack.c.b16 %v7115, %v7114
    %v7151 = vpack.c.b16 %v7117, %v7116
    %v7152 = vpack.c.b16 %v7119, %v7118
    %v7153 = vpack.c.b16 %v7121, %v7120
    %v7154 = vpack.c.b16 %v7123, %v7122
    %v7155 = vpack.c.b16 %v7125, %v7124
    %v7156 = vpack.c.b16 %v7127, %v7126
    %v7157 = vpack.c.b16 %v7129, %v7128
    %v7158 = vpack.c.b16 %v7131, %v7130
    %v7159 = vpack.c.b16 %v7133, %v7132
    %v7160 = vpack.c.b16 %v7135, %v7134
    %v7161 = vpack.c.b16 %v7137, %v7136
    %7186 = vmatprep.subr.bf16.mxu0 0
    %7187 = vmatpush1.bf16.msra.mxu0 %v7138
    %7188 = vmatprep.subr.bf16.mxu0 0
    %7189 = vmatpush1.bf16.msra.mxu0 %v7139
    %7190 = vmatprep.subr.bf16.mxu0 0
    %7191 = vmatpush1.bf16.msra.mxu0 %v7140
    %7192 = vmatprep.subr.bf16.mxu0 0
    %7193 = vmatpush1.bf16.msra.mxu0 %v7141
    %7194 = vmatprep.subr.bf16.mxu0 0
    %7195 = vmatpush1.bf16.msra.mxu0 %v7142
    %7196 = vmatprep.subr.bf16.mxu0 0
    %7197 = vmatpush1.bf16.msra.mxu0 %v7143
    %7198 = vmatprep.subr.bf16.mxu0 0
    %7199 = vmatpush1.bf16.msra.mxu0 %v7144
    %7200 = vmatprep.subr.bf16.mxu0 0
    %7201 = vmatpush1.bf16.msra.mxu0 %v7145
    %7202 = vmatprep.subr.bf16.mxu0 0
    %7203 = vmatpush1.bf16.msra.mxu0 %v7146
    %7204 = vmatprep.subr.bf16.mxu0 0
    %7205 = vmatpush1.bf16.msra.mxu0 %v7147
    %7206 = vmatprep.subr.bf16.mxu0 0
    %7207 = vmatpush1.bf16.msra.mxu0 %v7148
    %7208 = vmatprep.subr.bf16.mxu0 0
    %7209 = vmatpush1.bf16.msra.mxu0 %v7149
    %7210 = vmatprep.subr.bf16.mxu0 0
    %7211 = vmatpush1.bf16.msra.mxu0 %v7150
    %7212 = vmatprep.subr.bf16.mxu0 0
    %7213 = vmatpush1.bf16.msra.mxu0 %v7151
    %7214 = vmatprep.subr.bf16.mxu0 0
    %7215 = vmatpush1.bf16.msra.mxu0 %v7152
    %7216 = vmatprep.subr.bf16.mxu0 0
    %7217 = vmatpush1.bf16.msra.mxu0 %v7153
    %7218 = vmatprep.mubr.bf16.mxu0 %v7037
    %7219 = vmatmul.mubr.bf16.gmra.mrb[0].mxu0 %v7036
    %v7220 = vpop.f32.mrb[0].mxu0
    %v7221 = vadd.f32 0.0, %v7220
    %v7222 = vpop.f32.mrb[0].mxu0
    %v7223 = vpop.f32.mrb[0].mxu0
    %v7224 = vpop.f32.mrb[0].mxu0
    %7225 = vdwg.mxu0
    %7226 = vmatprep.subr.bf16.mxu0 0
    %7227 = vmatpush1.bf16.msra.mxu0 %v7154
    %7228 = vmatprep.subr.bf16.mxu0 0
    %7229 = vmatpush1.bf16.msra.mxu0 %v7155
    %7230 = vmatprep.subr.bf16.mxu0 0
    %7231 = vmatpush1.bf16.msra.mxu0 %v7156
    %7232 = vmatprep.subr.bf16.mxu0 0
    %7233 = vmatpush1.bf16.msra.mxu0 %v7157
    %7234 = vmatprep.subr.bf16.mxu0 0
    %7235 = vmatpush1.bf16.msra.mxu0 %v7158
    %7236 = vmatprep.subr.bf16.mxu0 0
    %7237 = vmatpush1.bf16.msra.mxu0 %v7159
    %7238 = vmatprep.subr.bf16.mxu0 0
    %7239 = vmatpush1.bf16.msra.mxu0 %v7160
    %7240 = vmatprep.subr.bf16.mxu0 0
    %7241 = vmatpush1.bf16.msra.mxu0 %v7161
    %7242 = vmatprep.subr.bf16.mxu0 0
    %7243 = vmatpush1.bf16.msra.mxu0 0
    %7244 = vmatprep.subr.bf16.mxu0 0
    %7245 = vmatpush1.bf16.msra.mxu0 0
    %7246 = vmatprep.subr.bf16.mxu0 0
    %7247 = vmatpush1.bf16.msra.mxu0 0
    %7248 = vmatprep.subr.bf16.mxu0 0
    %7249 = vmatpush1.bf16.msra.mxu0 0
    %7250 = vmatprep.subr.bf16.mxu0 0
    %7251 = vmatpush1.bf16.msra.mxu0 0
    %7252 = vmatprep.subr.bf16.mxu0 0
    %7253 = vmatpush1.bf16.msra.mxu0 0
    %7254 = vmatprep.subr.bf16.mxu0 0
    %7255 = vmatpush1.bf16.msra.mxu0 0
    %7256 = vmatprep.subr.bf16.mxu0 0
    %7257 = vmatpush1.bf16.msra.mxu0 0
    %7258 = vmatprep.mubr.bf16.mxu0 0
    %7259 = vmatmul.mubr.bf16.gmra.mrb[0].mxu0 %v7038
    %v7260 = vpop.f32.mrb[0].mxu0
    %v7261 = vadd.f32 %v7221, %v7260
    %v7262 = vpop.f32.mrb[0].mxu0
    %v7263 = vpop.f32.mrb[0].mxu0
    %v7264 = vpop.f32.mrb[0].mxu0
    %7265 = vdwg.mxu0
    %v7266 = vadd.f32 %v6977, %v7261
    %s7267 = scalar_lea.vmem %s5, 1152
    %v7268 = vld [vmem:[%s7267] sm:$0xf]
    %v7269 = vld [vmem:[%s7267 + $0x4] sm:$0xf]
    %v7270 = vld [vmem:[%s7267 + $0x8] sm:$0xf]
    %v7271 = vld [vmem:[%s7267 + $0xc] sm:$0xf]
    %v7272 = vld [vmem:[%s7267 + $0x10] sm:$0xf]
    %v7273 = vld [vmem:[%s7267 + $0x14] sm:$0xf]
    %v7274 = vld [vmem:[%s7267 + $0x18] sm:$0xf]
    %v7275 = vld [vmem:[%s7267 + $0x1c] sm:$0xf]
    %v7276 = vld [vmem:[%s7267 + $0x20] sm:$0xf]
    %v7277 = vld [vmem:[%s7267 + $0x24] sm:$0xf]
    %v7278 = vld [vmem:[%s7267 + $0x28] sm:$0xf]
    %v7279 = vld [vmem:[%s7267 + $0x2c] sm:$0xf]
    %v7280 = vld [vmem:[%s7267 + $0x30] sm:$0xf]
    %v7281 = vld [vmem:[%s7267 + $0x34] sm:$0xf]
    %v7282 = vld [vmem:[%s7267 + $0x38] sm:$0xf]
    %v7283 = vld [vmem:[%s7267 + $0x3c] sm:$0xf]
    %v7284 = vld [vmem:[%s7267 + $0x40] sm:$0xf]
    %v7285 = vld [vmem:[%s7267 + $0x44] sm:$0xf]
    %v7286 = vld [vmem:[%s7267 + $0x48] sm:$0xf]
    %v7287 = vld [vmem:[%s7267 + $0x4c] sm:$0xf]
    %v7288 = vld [vmem:[%s7267 + $0x50] sm:$0xf]
    %v7289 = vld [vmem:[%s7267 + $0x54] sm:$0xf]
    %v7290 = vld [vmem:[%s7267 + $0x58] sm:$0xf]
    %v7291 = vld [vmem:[%s7267 + $0x5c] sm:$0xf]
    %v7292 = vld [vmem:[%s7267 + $0x60] sm:$0xf]
    %v7293 = vld [vmem:[%s7267 + $0x64] sm:$0xf]
    %v7294 = vld [vmem:[%s7267 + $0x68] sm:$0xf]
    %v7295 = vld [vmem:[%s7267 + $0x6c] sm:$0xf]
    %v7296 = vld [vmem:[%s7267 + $0x70] sm:$0xf]
    %v7297 = vld [vmem:[%s7267 + $0x74] sm:$0xf]
    %v7298 = vld [vmem:[%s7267 + $0x78] sm:$0xf]
    %v7299 = vld [vmem:[%s7267 + $0x7c] sm:$0xf]
    %v7300 = vld [vmem:[%s7267 + $0x80] sm:$0xf]
    %v7301 = vld [vmem:[%s7267 + $0x84] sm:$0xf]
    %v7302 = vld [vmem:[%s7267 + $0x88] sm:$0xf]
    %v7303 = vld [vmem:[%s7267 + $0x8c] sm:$0xf]
    %v7304 = vld [vmem:[%s7267 + $0x90] sm:$0xf]
    %v7305 = vld [vmem:[%s7267 + $0x94] sm:$0xf]
    %v7306 = vld [vmem:[%s7267 + $0x98] sm:$0xf]
    %v7307 = vld [vmem:[%s7267 + $0x9c] sm:$0xf]
    %v7308 = vld [vmem:[%s7267 + $0xa0] sm:$0xf]
    %v7309 = vld [vmem:[%s7267 + $0xa4] sm:$0xf]
    %v7310 = vld [vmem:[%s7267 + $0xa8] sm:$0xf]
    %v7311 = vld [vmem:[%s7267 + $0xac] sm:$0xf]
    %v7312 = vld [vmem:[%s7267 + $0xb0] sm:$0xf]
    %v7313 = vld [vmem:[%s7267 + $0xb4] sm:$0xf]
    %v7314 = vld [vmem:[%s7267 + $0xb8] sm:$0xf]
    %v7315 = vld [vmem:[%s7267 + $0xbc] sm:$0xf]
    %v7316 = vrot.slane %v6735, 4
    %v7317 = vrot.slane %v6738, 3
    %v7318 = vsel %vm5568, %v7317, %v7316
    %v7319 = vrot.slane %v6736, 4
    %v7320 = vrot.slane %v6739, 3
    %v7321 = vsel %vm5568, %v7320, %v7319
    %v7322 = vrot.slane %v6737, 4
    %v7323 = vrot.slane %v6740, 3
    %v7324 = vsel %vm5568, %v7323, %v7322
    %v7325 = vpack.c.b16 %v7318, %v7318
    %v7326 = vpack.c.b16 %v7321, %v7321
    %v7327 = vpack.c.b16 %v7324, %v7324
    %v7379 = vunpack.c.l.b16 %v7268
    %v7380 = vunpack.c.l.b16 %v7269
    %v7381 = vunpack.c.l.b16 %v7270
    %v7382 = vunpack.c.l.b16 %v7271
    %v7383 = vunpack.c.l.b16 %v7272
    %v7384 = vunpack.c.l.b16 %v7273
    %v7385 = vunpack.c.l.b16 %v7274
    %v7386 = vunpack.c.l.b16 %v7275
    %v7387 = vunpack.c.l.b16 %v7276
    %v7388 = vunpack.c.l.b16 %v7277
    %v7389 = vunpack.c.l.b16 %v7278
    %v7390 = vunpack.c.l.b16 %v7279
    %v7391 = vunpack.c.l.b16 %v7280
    %v7392 = vunpack.c.l.b16 %v7281
    %v7393 = vunpack.c.l.b16 %v7282
    %v7394 = vunpack.c.l.b16 %v7283
    %v7395 = vunpack.c.l.b16 %v7284
    %v7396 = vunpack.c.l.b16 %v7285
    %v7397 = vunpack.c.l.b16 %v7286
    %v7398 = vunpack.c.l.b16 %v7287
    %v7399 = vunpack.c.l.b16 %v7288
    %v7400 = vunpack.c.l.b16 %v7289
    %v7401 = vunpack.c.l.b16 %v7290
    %v7402 = vunpack.c.l.b16 %v7291
    %v7403 = vunpack.c.l.b16 %v7292
    %v7404 = vunpack.c.l.b16 %v7293
    %v7405 = vunpack.c.l.b16 %v7294
    %v7406 = vunpack.c.l.b16 %v7295
    %v7407 = vunpack.c.l.b16 %v7296
    %v7408 = vunpack.c.l.b16 %v7297
    %v7409 = vunpack.c.l.b16 %v7298
    %v7410 = vunpack.c.l.b16 %v7299
    %v7411 = vunpack.c.l.b16 %v7300
    %v7412 = vunpack.c.l.b16 %v7301
    %v7413 = vunpack.c.l.b16 %v7302
    %v7414 = vunpack.c.l.b16 %v7303
    %v7415 = vunpack.c.l.b16 %v7304
    %v7416 = vunpack.c.l.b16 %v7305
    %v7417 = vunpack.c.l.b16 %v7306
    %v7418 = vunpack.c.l.b16 %v7307
    %v7419 = vunpack.c.l.b16 %v7308
    %v7420 = vunpack.c.l.b16 %v7309
    %v7421 = vunpack.c.l.b16 %v7310
    %v7422 = vunpack.c.l.b16 %v7311
    %v7423 = vunpack.c.l.b16 %v7312
    %v7424 = vunpack.c.l.b16 %v7313
    %v7425 = vunpack.c.l.b16 %v7314
    %v7426 = vunpack.c.l.b16 %v7315
    %v7427 = vpack.c.b16 %v7380, %v7379
    %v7428 = vpack.c.b16 %v7382, %v7381
    %v7429 = vpack.c.b16 %v7384, %v7383
    %v7430 = vpack.c.b16 %v7386, %v7385
    %v7431 = vpack.c.b16 %v7388, %v7387
    %v7432 = vpack.c.b16 %v7390, %v7389
    %v7433 = vpack.c.b16 %v7392, %v7391
    %v7434 = vpack.c.b16 %v7394, %v7393
    %v7435 = vpack.c.b16 %v7396, %v7395
    %v7436 = vpack.c.b16 %v7398, %v7397
    %v7437 = vpack.c.b16 %v7400, %v7399
    %v7438 = vpack.c.b16 %v7402, %v7401
    %v7439 = vpack.c.b16 %v7404, %v7403
    %v7440 = vpack.c.b16 %v7406, %v7405
    %v7441 = vpack.c.b16 %v7408, %v7407
    %v7442 = vpack.c.b16 %v7410, %v7409
    %v7443 = vpack.c.b16 %v7412, %v7411
    %v7444 = vpack.c.b16 %v7414, %v7413
    %v7445 = vpack.c.b16 %v7416, %v7415
    %v7446 = vpack.c.b16 %v7418, %v7417
    %v7447 = vpack.c.b16 %v7420, %v7419
    %v7448 = vpack.c.b16 %v7422, %v7421
    %v7449 = vpack.c.b16 %v7424, %v7423
    %v7450 = vpack.c.b16 %v7426, %v7425
    %7475 = vmatprep.subr.bf16.mxu0 0
    %7476 = vmatpush1.bf16.msra.mxu0 %v7427
    %7477 = vmatprep.subr.bf16.mxu0 0
    %7478 = vmatpush1.bf16.msra.mxu0 %v7428
    %7479 = vmatprep.subr.bf16.mxu0 0
    %7480 = vmatpush1.bf16.msra.mxu0 %v7429
    %7481 = vmatprep.subr.bf16.mxu0 0
    %7482 = vmatpush1.bf16.msra.mxu0 %v7430
    %7483 = vmatprep.subr.bf16.mxu0 0
    %7484 = vmatpush1.bf16.msra.mxu0 %v7431
    %7485 = vmatprep.subr.bf16.mxu0 0
    %7486 = vmatpush1.bf16.msra.mxu0 %v7432
    %7487 = vmatprep.subr.bf16.mxu0 0
    %7488 = vmatpush1.bf16.msra.mxu0 %v7433
    %7489 = vmatprep.subr.bf16.mxu0 0
    %7490 = vmatpush1.bf16.msra.mxu0 %v7434
    %7491 = vmatprep.subr.bf16.mxu0 0
    %7492 = vmatpush1.bf16.msra.mxu0 %v7435
    %7493 = vmatprep.subr.bf16.mxu0 0
    %7494 = vmatpush1.bf16.msra.mxu0 %v7436
    %7495 = vmatprep.subr.bf16.mxu0 0
    %7496 = vmatpush1.bf16.msra.mxu0 %v7437
    %7497 = vmatprep.subr.bf16.mxu0 0
    %7498 = vmatpush1.bf16.msra.mxu0 %v7438
    %7499 = vmatprep.subr.bf16.mxu0 0
    %7500 = vmatpush1.bf16.msra.mxu0 %v7439
    %7501 = vmatprep.subr.bf16.mxu0 0
    %7502 = vmatpush1.bf16.msra.mxu0 %v7440
    %7503 = vmatprep.subr.bf16.mxu0 0
    %7504 = vmatpush1.bf16.msra.mxu0 %v7441
    %7505 = vmatprep.subr.bf16.mxu0 0
    %7506 = vmatpush1.bf16.msra.mxu0 %v7442
    %7507 = vmatprep.mubr.bf16.mxu0 %v7326
    %7508 = vmatmul.mubr.bf16.gmra.mrb[0].mxu0 %v7325
    %v7509 = vpop.f32.mrb[0].mxu0
    %v7510 = vadd.f32 0.0, %v7509
    %v7511 = vpop.f32.mrb[0].mxu0
    %v7512 = vpop.f32.mrb[0].mxu0
    %v7513 = vpop.f32.mrb[0].mxu0
    %7514 = vdwg.mxu0
    %7515 = vmatprep.subr.bf16.mxu0 0
    %7516 = vmatpush1.bf16.msra.mxu0 %v7443
    %7517 = vmatprep.subr.bf16.mxu0 0
    %7518 = vmatpush1.bf16.msra.mxu0 %v7444
    %7519 = vmatprep.subr.bf16.mxu0 0
    %7520 = vmatpush1.bf16.msra.mxu0 %v7445
    %7521 = vmatprep.subr.bf16.mxu0 0
    %7522 = vmatpush1.bf16.msra.mxu0 %v7446
    %7523 = vmatprep.subr.bf16.mxu0 0
    %7524 = vmatpush1.bf16.msra.mxu0 %v7447
    %7525 = vmatprep.subr.bf16.mxu0 0
    %7526 = vmatpush1.bf16.msra.mxu0 %v7448
    %7527 = vmatprep.subr.bf16.mxu0 0
    %7528 = vmatpush1.bf16.msra.mxu0 %v7449
    %7529 = vmatprep.subr.bf16.mxu0 0
    %7530 = vmatpush1.bf16.msra.mxu0 %v7450
    %7531 = vmatprep.subr.bf16.mxu0 0
    %7532 = vmatpush1.bf16.msra.mxu0 0
    %7533 = vmatprep.subr.bf16.mxu0 0
    %7534 = vmatpush1.bf16.msra.mxu0 0
    %7535 = vmatprep.subr.bf16.mxu0 0
    %7536 = vmatpush1.bf16.msra.mxu0 0
    %7537 = vmatprep.subr.bf16.mxu0 0
    %7538 = vmatpush1.bf16.msra.mxu0 0
    %7539 = vmatprep.subr.bf16.mxu0 0
    %7540 = vmatpush1.bf16.msra.mxu0 0
    %7541 = vmatprep.subr.bf16.mxu0 0
    %7542 = vmatpush1.bf16.msra.mxu0 0
    %7543 = vmatprep.subr.bf16.mxu0 0
    %7544 = vmatpush1.bf16.msra.mxu0 0
    %7545 = vmatprep.subr.bf16.mxu0 0
    %7546 = vmatpush1.bf16.msra.mxu0 0
    %7547 = vmatprep.mubr.bf16.mxu0 0
    %7548 = vmatmul.mubr.bf16.gmra.mrb[0].mxu0 %v7327
    %v7549 = vpop.f32.mrb[0].mxu0
    %v7550 = vadd.f32 %v7510, %v7549
    %v7551 = vpop.f32.mrb[0].mxu0
    %v7552 = vpop.f32.mrb[0].mxu0
    %v7553 = vpop.f32.mrb[0].mxu0
    %7554 = vdwg.mxu0
    %v7555 = vadd.f32 %v7266, %v7550
    %s7556 = scalar_lea.vmem %s5, 1344
    %v7557 = vld [vmem:[%s7556] sm:$0xf]
    %v7558 = vld [vmem:[%s7556 + $0x4] sm:$0xf]
    %v7559 = vld [vmem:[%s7556 + $0x8] sm:$0xf]
    %v7560 = vld [vmem:[%s7556 + $0xc] sm:$0xf]
    %v7561 = vld [vmem:[%s7556 + $0x10] sm:$0xf]
    %v7562 = vld [vmem:[%s7556 + $0x14] sm:$0xf]
    %v7563 = vld [vmem:[%s7556 + $0x18] sm:$0xf]
    %v7564 = vld [vmem:[%s7556 + $0x1c] sm:$0xf]
    %v7565 = vld [vmem:[%s7556 + $0x20] sm:$0xf]
    %v7566 = vld [vmem:[%s7556 + $0x24] sm:$0xf]
    %v7567 = vld [vmem:[%s7556 + $0x28] sm:$0xf]
    %v7568 = vld [vmem:[%s7556 + $0x2c] sm:$0xf]
    %v7569 = vld [vmem:[%s7556 + $0x30] sm:$0xf]
    %v7570 = vld [vmem:[%s7556 + $0x34] sm:$0xf]
    %v7571 = vld [vmem:[%s7556 + $0x38] sm:$0xf]
    %v7572 = vld [vmem:[%s7556 + $0x3c] sm:$0xf]
    %v7573 = vld [vmem:[%s7556 + $0x40] sm:$0xf]
    %v7574 = vld [vmem:[%s7556 + $0x44] sm:$0xf]
    %v7575 = vld [vmem:[%s7556 + $0x48] sm:$0xf]
    %v7576 = vld [vmem:[%s7556 + $0x4c] sm:$0xf]
    %v7577 = vld [vmem:[%s7556 + $0x50] sm:$0xf]
    %v7578 = vld [vmem:[%s7556 + $0x54] sm:$0xf]
    %v7579 = vld [vmem:[%s7556 + $0x58] sm:$0xf]
    %v7580 = vld [vmem:[%s7556 + $0x5c] sm:$0xf]
    %v7581 = vld [vmem:[%s7556 + $0x60] sm:$0xf]
    %v7582 = vld [vmem:[%s7556 + $0x64] sm:$0xf]
    %v7583 = vld [vmem:[%s7556 + $0x68] sm:$0xf]
    %v7584 = vld [vmem:[%s7556 + $0x6c] sm:$0xf]
    %v7585 = vld [vmem:[%s7556 + $0x70] sm:$0xf]
    %v7586 = vld [vmem:[%s7556 + $0x74] sm:$0xf]
    %v7587 = vld [vmem:[%s7556 + $0x78] sm:$0xf]
    %v7588 = vld [vmem:[%s7556 + $0x7c] sm:$0xf]
    %v7589 = vld [vmem:[%s7556 + $0x80] sm:$0xf]
    %v7590 = vld [vmem:[%s7556 + $0x84] sm:$0xf]
    %v7591 = vld [vmem:[%s7556 + $0x88] sm:$0xf]
    %v7592 = vld [vmem:[%s7556 + $0x8c] sm:$0xf]
    %v7593 = vld [vmem:[%s7556 + $0x90] sm:$0xf]
    %v7594 = vld [vmem:[%s7556 + $0x94] sm:$0xf]
    %v7595 = vld [vmem:[%s7556 + $0x98] sm:$0xf]
    %v7596 = vld [vmem:[%s7556 + $0x9c] sm:$0xf]
    %v7597 = vld [vmem:[%s7556 + $0xa0] sm:$0xf]
    %v7598 = vld [vmem:[%s7556 + $0xa4] sm:$0xf]
    %v7599 = vld [vmem:[%s7556 + $0xa8] sm:$0xf]
    %v7600 = vld [vmem:[%s7556 + $0xac] sm:$0xf]
    %v7601 = vld [vmem:[%s7556 + $0xb0] sm:$0xf]
    %v7602 = vld [vmem:[%s7556 + $0xb4] sm:$0xf]
    %v7603 = vld [vmem:[%s7556 + $0xb8] sm:$0xf]
    %v7604 = vld [vmem:[%s7556 + $0xbc] sm:$0xf]
    %v7605 = vrot.slane %v6735, 6
    %v7606 = vrot.slane %v6738, 5
    %v7607 = vsel %vm5568, %v7606, %v7605
    %v7608 = vrot.slane %v6736, 6
    %v7609 = vrot.slane %v6739, 5
    %v7610 = vsel %vm5568, %v7609, %v7608
    %v7611 = vrot.slane %v6737, 6
    %v7612 = vrot.slane %v6740, 5
    %v7613 = vsel %vm5568, %v7612, %v7611
    %v7614 = vpack.c.b16 %v7607, %v7607
    %v7615 = vpack.c.b16 %v7610, %v7610
    %v7616 = vpack.c.b16 %v7613, %v7613
    %v7668 = vunpack.c.l.b16 %v7557
    %v7669 = vunpack.c.l.b16 %v7558
    %v7670 = vunpack.c.l.b16 %v7559
    %v7671 = vunpack.c.l.b16 %v7560
    %v7672 = vunpack.c.l.b16 %v7561
    %v7673 = vunpack.c.l.b16 %v7562
    %v7674 = vunpack.c.l.b16 %v7563
    %v7675 = vunpack.c.l.b16 %v7564
    %v7676 = vunpack.c.l.b16 %v7565
    %v7677 = vunpack.c.l.b16 %v7566
    %v7678 = vunpack.c.l.b16 %v7567
    %v7679 = vunpack.c.l.b16 %v7568
    %v7680 = vunpack.c.l.b16 %v7569
    %v7681 = vunpack.c.l.b16 %v7570
    %v7682 = vunpack.c.l.b16 %v7571
    %v7683 = vunpack.c.l.b16 %v7572
    %v7684 = vunpack.c.l.b16 %v7573
    %v7685 = vunpack.c.l.b16 %v7574
    %v7686 = vunpack.c.l.b16 %v7575
    %v7687 = vunpack.c.l.b16 %v7576
    %v7688 = vunpack.c.l.b16 %v7577
    %v7689 = vunpack.c.l.b16 %v7578
    %v7690 = vunpack.c.l.b16 %v7579
    %v7691 = vunpack.c.l.b16 %v7580
    %v7692 = vunpack.c.l.b16 %v7581
    %v7693 = vunpack.c.l.b16 %v7582
    %v7694 = vunpack.c.l.b16 %v7583
    %v7695 = vunpack.c.l.b16 %v7584
    %v7696 = vunpack.c.l.b16 %v7585
    %v7697 = vunpack.c.l.b16 %v7586
    %v7698 = vunpack.c.l.b16 %v7587
    %v7699 = vunpack.c.l.b16 %v7588
    %v7700 = vunpack.c.l.b16 %v7589
    %v7701 = vunpack.c.l.b16 %v7590
    %v7702 = vunpack.c.l.b16 %v7591
    %v7703 = vunpack.c.l.b16 %v7592
    %v7704 = vunpack.c.l.b16 %v7593
    %v7705 = vunpack.c.l.b16 %v7594
    %v7706 = vunpack.c.l.b16 %v7595
    %v7707 = vunpack.c.l.b16 %v7596
    %v7708 = vunpack.c.l.b16 %v7597
    %v7709 = vunpack.c.l.b16 %v7598
    %v7710 = vunpack.c.l.b16 %v7599
    %v7711 = vunpack.c.l.b16 %v7600
    %v7712 = vunpack.c.l.b16 %v7601
    %v7713 = vunpack.c.l.b16 %v7602
    %v7714 = vunpack.c.l.b16 %v7603
    %v7715 = vunpack.c.l.b16 %v7604
    %v7716 = vpack.c.b16 %v7669, %v7668
    %v7717 = vpack.c.b16 %v7671, %v7670
    %v7718 = vpack.c.b16 %v7673, %v7672
    %v7719 = vpack.c.b16 %v7675, %v7674
    %v7720 = vpack.c.b16 %v7677, %v7676
    %v7721 = vpack.c.b16 %v7679, %v7678
    %v7722 = vpack.c.b16 %v7681, %v7680
    %v7723 = vpack.c.b16 %v7683, %v7682
    %v7724 = vpack.c.b16 %v7685, %v7684
    %v7725 = vpack.c.b16 %v7687, %v7686
    %v7726 = vpack.c.b16 %v7689, %v7688
    %v7727 = vpack.c.b16 %v7691, %v7690
    %v7728 = vpack.c.b16 %v7693, %v7692
    %v7729 = vpack.c.b16 %v7695, %v7694
    %v7730 = vpack.c.b16 %v7697, %v7696
    %v7731 = vpack.c.b16 %v7699, %v7698
    %v7732 = vpack.c.b16 %v7701, %v7700
    %v7733 = vpack.c.b16 %v7703, %v7702
    %v7734 = vpack.c.b16 %v7705, %v7704
    %v7735 = vpack.c.b16 %v7707, %v7706
    %v7736 = vpack.c.b16 %v7709, %v7708
    %v7737 = vpack.c.b16 %v7711, %v7710
    %v7738 = vpack.c.b16 %v7713, %v7712
    %v7739 = vpack.c.b16 %v7715, %v7714
    %7764 = vmatprep.subr.bf16.mxu0 0
    %7765 = vmatpush1.bf16.msra.mxu0 %v7716
    %7766 = vmatprep.subr.bf16.mxu0 0
    %7767 = vmatpush1.bf16.msra.mxu0 %v7717
    %7768 = vmatprep.subr.bf16.mxu0 0
    %7769 = vmatpush1.bf16.msra.mxu0 %v7718
    %7770 = vmatprep.subr.bf16.mxu0 0
    %7771 = vmatpush1.bf16.msra.mxu0 %v7719
    %7772 = vmatprep.subr.bf16.mxu0 0
    %7773 = vmatpush1.bf16.msra.mxu0 %v7720
    %7774 = vmatprep.subr.bf16.mxu0 0
    %7775 = vmatpush1.bf16.msra.mxu0 %v7721
    %7776 = vmatprep.subr.bf16.mxu0 0
    %7777 = vmatpush1.bf16.msra.mxu0 %v7722
    %7778 = vmatprep.subr.bf16.mxu0 0
    %7779 = vmatpush1.bf16.msra.mxu0 %v7723
    %7780 = vmatprep.subr.bf16.mxu0 0
    %7781 = vmatpush1.bf16.msra.mxu0 %v7724
    %7782 = vmatprep.subr.bf16.mxu0 0
    %7783 = vmatpush1.bf16.msra.mxu0 %v7725
    %7784 = vmatprep.subr.bf16.mxu0 0
    %7785 = vmatpush1.bf16.msra.mxu0 %v7726
    %7786 = vmatprep.subr.bf16.mxu0 0
    %7787 = vmatpush1.bf16.msra.mxu0 %v7727
    %7788 = vmatprep.subr.bf16.mxu0 0
    %7789 = vmatpush1.bf16.msra.mxu0 %v7728
    %7790 = vmatprep.subr.bf16.mxu0 0
    %7791 = vmatpush1.bf16.msra.mxu0 %v7729
    %7792 = vmatprep.subr.bf16.mxu0 0
    %7793 = vmatpush1.bf16.msra.mxu0 %v7730
    %7794 = vmatprep.subr.bf16.mxu0 0
    %7795 = vmatpush1.bf16.msra.mxu0 %v7731
    %7796 = vmatprep.mubr.bf16.mxu0 %v7615
    %7797 = vmatmul.mubr.bf16.gmra.mrb[0].mxu0 %v7614
    %v7798 = vpop.f32.mrb[0].mxu0
    %v7799 = vadd.f32 0.0, %v7798
    %v7800 = vpop.f32.mrb[0].mxu0
    %v7801 = vpop.f32.mrb[0].mxu0
    %v7802 = vpop.f32.mrb[0].mxu0
    %7803 = vdwg.mxu0
    %7804 = vmatprep.subr.bf16.mxu0 0
    %7805 = vmatpush1.bf16.msra.mxu0 %v7732
    %7806 = vmatprep.subr.bf16.mxu0 0
    %7807 = vmatpush1.bf16.msra.mxu0 %v7733
    %7808 = vmatprep.subr.bf16.mxu0 0
    %7809 = vmatpush1.bf16.msra.mxu0 %v7734
    %7810 = vmatprep.subr.bf16.mxu0 0
    %7811 = vmatpush1.bf16.msra.mxu0 %v7735
    %7812 = vmatprep.subr.bf16.mxu0 0
    %7813 = vmatpush1.bf16.msra.mxu0 %v7736
    %7814 = vmatprep.subr.bf16.mxu0 0
    %7815 = vmatpush1.bf16.msra.mxu0 %v7737
    %7816 = vmatprep.subr.bf16.mxu0 0
    %7817 = vmatpush1.bf16.msra.mxu0 %v7738
    %7818 = vmatprep.subr.bf16.mxu0 0
    %7819 = vmatpush1.bf16.msra.mxu0 %v7739
    %7820 = vmatprep.subr.bf16.mxu0 0
    %7821 = vmatpush1.bf16.msra.mxu0 0
    %7822 = vmatprep.subr.bf16.mxu0 0
    %7823 = vmatpush1.bf16.msra.mxu0 0
    %7824 = vmatprep.subr.bf16.mxu0 0
    %7825 = vmatpush1.bf16.msra.mxu0 0
    %7826 = vmatprep.subr.bf16.mxu0 0
    %7827 = vmatpush1.bf16.msra.mxu0 0
    %7828 = vmatprep.subr.bf16.mxu0 0
    %7829 = vmatpush1.bf16.msra.mxu0 0
    %7830 = vmatprep.subr.bf16.mxu0 0
    %7831 = vmatpush1.bf16.msra.mxu0 0
    %7832 = vmatprep.subr.bf16.mxu0 0
    %7833 = vmatpush1.bf16.msra.mxu0 0
    %7834 = vmatprep.subr.bf16.mxu0 0
    %7835 = vmatpush1.bf16.msra.mxu0 0
    %7836 = vmatprep.mubr.bf16.mxu0 0
    %7837 = vmatmul.mubr.bf16.gmra.mrb[0].mxu0 %v7616
    %v7838 = vpop.f32.mrb[0].mxu0
    %v7839 = vadd.f32 %v7799, %v7838
    %v7840 = vpop.f32.mrb[0].mxu0
    %v7841 = vpop.f32.mrb[0].mxu0
    %v7842 = vpop.f32.mrb[0].mxu0
    %7843 = vdwg.mxu0
    %v7844 = vadd.f32 %v7555, %v7839
    %v7857 = vrot.slane %v5373, 1
    %v7858 = vrot.slane %v5374, 1
    %v7859 = vrot.slane %v5375, 1
    %v7860 = vrot.slane %v5376, 1
    %v7861 = vrot.slane %v5377, 1
    %v7862 = vrot.slane %v5378, 1
    %v7863 = vrot.slane %v5391, 1
    %v7864 = vrot.slane %v5392, 1
    %v7865 = vrot.slane %v5393, 1
    %v7866 = vrot.slane %v5394, 1
    %v7867 = vrot.slane %v5395, 1
    %v7868 = vrot.slane %v5396, 1
    %v7881 = vmax.f32 %v5373, %v7857
    %v7882 = vmax.f32 %v5374, %v7858
    %v7883 = vmax.f32 %v5375, %v7859
    %v7884 = vmax.f32 %v5376, %v7860
    %v7885 = vmax.f32 %v5377, %v7861
    %v7886 = vmax.f32 %v5378, %v7862
    %v7887 = vmax.f32 %v5391, %v7863
    %v7888 = vmax.f32 %v5392, %v7864
    %v7889 = vmax.f32 %v5393, %v7865
    %v7890 = vmax.f32 %v5394, %v7866
    %v7891 = vmax.f32 %v5395, %v7867
    %v7892 = vmax.f32 %v5396, %v7868
    %v7893 = vmax.f32 %v7881, %v7884
    %v7894 = vmax.f32 %v7882, %v7885
    %v7895 = vmax.f32 %v7883, %v7886
    %v7896 = vmax.f32 %v7887, %v7890
    %v7897 = vmax.f32 %v7888, %v7891
    %v7898 = vmax.f32 %v7889, %v7892
    %v7899 = vpack.c.bf16 %v7893, %v7893
    %v7900 = vpack.c.bf16 %v7894, %v7894
    %v7901 = vpack.c.bf16 %v7895, %v7895
    %v7902 = vpack.c.bf16 %v7896, %v7896
    %v7903 = vpack.c.bf16 %v7897, %v7897
    %v7904 = vpack.c.bf16 %v7898, %v7898
    %s7905 = scalar_lea.vmem %s5, 1536
    %v7906 = vld [vmem:[%s7905] sm:$0xf]
    %v7907 = vld [vmem:[%s7905 + $0x4] sm:$0xf]
    %v7908 = vld [vmem:[%s7905 + $0x8] sm:$0xf]
    %v7909 = vld [vmem:[%s7905 + $0xc] sm:$0xf]
    %v7910 = vld [vmem:[%s7905 + $0x10] sm:$0xf]
    %v7911 = vld [vmem:[%s7905 + $0x14] sm:$0xf]
    %v7912 = vld [vmem:[%s7905 + $0x18] sm:$0xf]
    %v7913 = vld [vmem:[%s7905 + $0x1c] sm:$0xf]
    %v7914 = vld [vmem:[%s7905 + $0x20] sm:$0xf]
    %v7915 = vld [vmem:[%s7905 + $0x24] sm:$0xf]
    %v7916 = vld [vmem:[%s7905 + $0x28] sm:$0xf]
    %v7917 = vld [vmem:[%s7905 + $0x2c] sm:$0xf]
    %v7918 = vld [vmem:[%s7905 + $0x30] sm:$0xf]
    %v7919 = vld [vmem:[%s7905 + $0x34] sm:$0xf]
    %v7920 = vld [vmem:[%s7905 + $0x38] sm:$0xf]
    %v7921 = vld [vmem:[%s7905 + $0x3c] sm:$0xf]
    %v7922 = vld [vmem:[%s7905 + $0x40] sm:$0xf]
    %v7923 = vld [vmem:[%s7905 + $0x44] sm:$0xf]
    %v7924 = vld [vmem:[%s7905 + $0x48] sm:$0xf]
    %v7925 = vld [vmem:[%s7905 + $0x4c] sm:$0xf]
    %v7926 = vld [vmem:[%s7905 + $0x50] sm:$0xf]
    %v7927 = vld [vmem:[%s7905 + $0x54] sm:$0xf]
    %v7928 = vld [vmem:[%s7905 + $0x58] sm:$0xf]
    %v7929 = vld [vmem:[%s7905 + $0x5c] sm:$0xf]
    %v7930 = vld [vmem:[%s7905 + $0x60] sm:$0xf]
    %v7931 = vld [vmem:[%s7905 + $0x64] sm:$0xf]
    %v7932 = vld [vmem:[%s7905 + $0x68] sm:$0xf]
    %v7933 = vld [vmem:[%s7905 + $0x6c] sm:$0xf]
    %v7934 = vld [vmem:[%s7905 + $0x70] sm:$0xf]
    %v7935 = vld [vmem:[%s7905 + $0x74] sm:$0xf]
    %v7936 = vld [vmem:[%s7905 + $0x78] sm:$0xf]
    %v7937 = vld [vmem:[%s7905 + $0x7c] sm:$0xf]
    %v7938 = vld [vmem:[%s7905 + $0x80] sm:$0xf]
    %v7939 = vld [vmem:[%s7905 + $0x84] sm:$0xf]
    %v7940 = vld [vmem:[%s7905 + $0x88] sm:$0xf]
    %v7941 = vld [vmem:[%s7905 + $0x8c] sm:$0xf]
    %v7942 = vld [vmem:[%s7905 + $0x90] sm:$0xf]
    %v7943 = vld [vmem:[%s7905 + $0x94] sm:$0xf]
    %v7944 = vld [vmem:[%s7905 + $0x98] sm:$0xf]
    %v7945 = vld [vmem:[%s7905 + $0x9c] sm:$0xf]
    %v7946 = vld [vmem:[%s7905 + $0xa0] sm:$0xf]
    %v7947 = vld [vmem:[%s7905 + $0xa4] sm:$0xf]
    %v7948 = vld [vmem:[%s7905 + $0xa8] sm:$0xf]
    %v7949 = vld [vmem:[%s7905 + $0xac] sm:$0xf]
    %v7950 = vld [vmem:[%s7905 + $0xb0] sm:$0xf]
    %v7951 = vld [vmem:[%s7905 + $0xb4] sm:$0xf]
    %v7952 = vld [vmem:[%s7905 + $0xb8] sm:$0xf]
    %v7953 = vld [vmem:[%s7905 + $0xbc] sm:$0xf]
    %v7960 = vunpack.c.l.b16 %v7899
    %v7961 = vunpack.c.l.b16 %v7900
    %v7962 = vunpack.c.l.b16 %v7901
    %v7963 = vunpack.c.l.b16 %v7902
    %v7964 = vunpack.c.l.b16 %v7903
    %v7965 = vunpack.c.l.b16 %v7904
    %v7966 = vrot.slane %v7963, 7
    %v7967 = vsel %vm5568, %v7966, %v7960
    %v7968 = vrot.slane %v7964, 7
    %v7969 = vsel %vm5568, %v7968, %v7961
    %v7970 = vrot.slane %v7965, 7
    %v7971 = vsel %vm5568, %v7970, %v7962
    %v7972 = vpack.c.b16 %v7967, %v7967
    %v7973 = vpack.c.b16 %v7969, %v7969
    %v7974 = vpack.c.b16 %v7971, %v7971
    %v8026 = vunpack.c.l.b16 %v7906
    %v8027 = vunpack.c.l.b16 %v7907
    %v8028 = vunpack.c.l.b16 %v7908
    %v8029 = vunpack.c.l.b16 %v7909
    %v8030 = vunpack.c.l.b16 %v7910
    %v8031 = vunpack.c.l.b16 %v7911
    %v8032 = vunpack.c.l.b16 %v7912
    %v8033 = vunpack.c.l.b16 %v7913
    %v8034 = vunpack.c.l.b16 %v7914
    %v8035 = vunpack.c.l.b16 %v7915
    %v8036 = vunpack.c.l.b16 %v7916
    %v8037 = vunpack.c.l.b16 %v7917
    %v8038 = vunpack.c.l.b16 %v7918
    %v8039 = vunpack.c.l.b16 %v7919
    %v8040 = vunpack.c.l.b16 %v7920
    %v8041 = vunpack.c.l.b16 %v7921
    %v8042 = vunpack.c.l.b16 %v7922
    %v8043 = vunpack.c.l.b16 %v7923
    %v8044 = vunpack.c.l.b16 %v7924
    %v8045 = vunpack.c.l.b16 %v7925
    %v8046 = vunpack.c.l.b16 %v7926
    %v8047 = vunpack.c.l.b16 %v7927
    %v8048 = vunpack.c.l.b16 %v7928
    %v8049 = vunpack.c.l.b16 %v7929
    %v8050 = vunpack.c.l.b16 %v7930
    %v8051 = vunpack.c.l.b16 %v7931
    %v8052 = vunpack.c.l.b16 %v7932
    %v8053 = vunpack.c.l.b16 %v7933
    %v8054 = vunpack.c.l.b16 %v7934
    %v8055 = vunpack.c.l.b16 %v7935
    %v8056 = vunpack.c.l.b16 %v7936
    %v8057 = vunpack.c.l.b16 %v7937
    %v8058 = vunpack.c.l.b16 %v7938
    %v8059 = vunpack.c.l.b16 %v7939
    %v8060 = vunpack.c.l.b16 %v7940
    %v8061 = vunpack.c.l.b16 %v7941
    %v8062 = vunpack.c.l.b16 %v7942
    %v8063 = vunpack.c.l.b16 %v7943
    %v8064 = vunpack.c.l.b16 %v7944
    %v8065 = vunpack.c.l.b16 %v7945
    %v8066 = vunpack.c.l.b16 %v7946
    %v8067 = vunpack.c.l.b16 %v7947
    %v8068 = vunpack.c.l.b16 %v7948
    %v8069 = vunpack.c.l.b16 %v7949
    %v8070 = vunpack.c.l.b16 %v7950
    %v8071 = vunpack.c.l.b16 %v7951
    %v8072 = vunpack.c.l.b16 %v7952
    %v8073 = vunpack.c.l.b16 %v7953
    %v8074 = vpack.c.b16 %v8027, %v8026
    %v8075 = vpack.c.b16 %v8029, %v8028
    %v8076 = vpack.c.b16 %v8031, %v8030
    %v8077 = vpack.c.b16 %v8033, %v8032
    %v8078 = vpack.c.b16 %v8035, %v8034
    %v8079 = vpack.c.b16 %v8037, %v8036
    %v8080 = vpack.c.b16 %v8039, %v8038
    %v8081 = vpack.c.b16 %v8041, %v8040
    %v8082 = vpack.c.b16 %v8043, %v8042
    %v8083 = vpack.c.b16 %v8045, %v8044
    %v8084 = vpack.c.b16 %v8047, %v8046
    %v8085 = vpack.c.b16 %v8049, %v8048
    %v8086 = vpack.c.b16 %v8051, %v8050
    %v8087 = vpack.c.b16 %v8053, %v8052
    %v8088 = vpack.c.b16 %v8055, %v8054
    %v8089 = vpack.c.b16 %v8057, %v8056
    %v8090 = vpack.c.b16 %v8059, %v8058
    %v8091 = vpack.c.b16 %v8061, %v8060
    %v8092 = vpack.c.b16 %v8063, %v8062
    %v8093 = vpack.c.b16 %v8065, %v8064
    %v8094 = vpack.c.b16 %v8067, %v8066
    %v8095 = vpack.c.b16 %v8069, %v8068
    %v8096 = vpack.c.b16 %v8071, %v8070
    %v8097 = vpack.c.b16 %v8073, %v8072
    %8122 = vmatprep.subr.bf16.mxu0 0
    %8123 = vmatpush1.bf16.msra.mxu0 %v8074
    %8124 = vmatprep.subr.bf16.mxu0 0
    %8125 = vmatpush1.bf16.msra.mxu0 %v8075
    %8126 = vmatprep.subr.bf16.mxu0 0
    %8127 = vmatpush1.bf16.msra.mxu0 %v8076
    %8128 = vmatprep.subr.bf16.mxu0 0
    %8129 = vmatpush1.bf16.msra.mxu0 %v8077
    %8130 = vmatprep.subr.bf16.mxu0 0
    %8131 = vmatpush1.bf16.msra.mxu0 %v8078
    %8132 = vmatprep.subr.bf16.mxu0 0
    %8133 = vmatpush1.bf16.msra.mxu0 %v8079
    %8134 = vmatprep.subr.bf16.mxu0 0
    %8135 = vmatpush1.bf16.msra.mxu0 %v8080
    %8136 = vmatprep.subr.bf16.mxu0 0
    %8137 = vmatpush1.bf16.msra.mxu0 %v8081
    %8138 = vmatprep.subr.bf16.mxu0 0
    %8139 = vmatpush1.bf16.msra.mxu0 %v8082
    %8140 = vmatprep.subr.bf16.mxu0 0
    %8141 = vmatpush1.bf16.msra.mxu0 %v8083
    %8142 = vmatprep.subr.bf16.mxu0 0
    %8143 = vmatpush1.bf16.msra.mxu0 %v8084
    %8144 = vmatprep.subr.bf16.mxu0 0
    %8145 = vmatpush1.bf16.msra.mxu0 %v8085
    %8146 = vmatprep.subr.bf16.mxu0 0
    %8147 = vmatpush1.bf16.msra.mxu0 %v8086
    %8148 = vmatprep.subr.bf16.mxu0 0
    %8149 = vmatpush1.bf16.msra.mxu0 %v8087
    %8150 = vmatprep.subr.bf16.mxu0 0
    %8151 = vmatpush1.bf16.msra.mxu0 %v8088
    %8152 = vmatprep.subr.bf16.mxu0 0
    %8153 = vmatpush1.bf16.msra.mxu0 %v8089
    %8154 = vmatprep.mubr.bf16.mxu0 %v7973
    %8155 = vmatmul.mubr.bf16.gmra.mrb[0].mxu0 %v7972
    %v8156 = vpop.f32.mrb[0].mxu0
    %v8157 = vadd.f32 0.0, %v8156
    %v8158 = vpop.f32.mrb[0].mxu0
    %v8159 = vpop.f32.mrb[0].mxu0
    %v8160 = vpop.f32.mrb[0].mxu0
    %8161 = vdwg.mxu0
    %8162 = vmatprep.subr.bf16.mxu0 0
    %8163 = vmatpush1.bf16.msra.mxu0 %v8090
    %8164 = vmatprep.subr.bf16.mxu0 0
    %8165 = vmatpush1.bf16.msra.mxu0 %v8091
    %8166 = vmatprep.subr.bf16.mxu0 0
    %8167 = vmatpush1.bf16.msra.mxu0 %v8092
    %8168 = vmatprep.subr.bf16.mxu0 0
    %8169 = vmatpush1.bf16.msra.mxu0 %v8093
    %8170 = vmatprep.subr.bf16.mxu0 0
    %8171 = vmatpush1.bf16.msra.mxu0 %v8094
    %8172 = vmatprep.subr.bf16.mxu0 0
    %8173 = vmatpush1.bf16.msra.mxu0 %v8095
    %8174 = vmatprep.subr.bf16.mxu0 0
    %8175 = vmatpush1.bf16.msra.mxu0 %v8096
    %8176 = vmatprep.subr.bf16.mxu0 0
    %8177 = vmatpush1.bf16.msra.mxu0 %v8097
    %8178 = vmatprep.subr.bf16.mxu0 0
    %8179 = vmatpush1.bf16.msra.mxu0 0
    %8180 = vmatprep.subr.bf16.mxu0 0
    %8181 = vmatpush1.bf16.msra.mxu0 0
    %8182 = vmatprep.subr.bf16.mxu0 0
    %8183 = vmatpush1.bf16.msra.mxu0 0
    %8184 = vmatprep.subr.bf16.mxu0 0
    %8185 = vmatpush1.bf16.msra.mxu0 0
    %8186 = vmatprep.subr.bf16.mxu0 0
    %8187 = vmatpush1.bf16.msra.mxu0 0
    %8188 = vmatprep.subr.bf16.mxu0 0
    %8189 = vmatpush1.bf16.msra.mxu0 0
    %8190 = vmatprep.subr.bf16.mxu0 0
    %8191 = vmatpush1.bf16.msra.mxu0 0
    %8192 = vmatprep.subr.bf16.mxu0 0
    %8193 = vmatpush1.bf16.msra.mxu0 0
    %8194 = vmatprep.mubr.bf16.mxu0 0
    %8195 = vmatmul.mubr.bf16.gmra.mrb[0].mxu0 %v7974
    %v8196 = vpop.f32.mrb[0].mxu0
    %v8197 = vadd.f32 %v8157, %v8196
    %v8198 = vpop.f32.mrb[0].mxu0
    %v8199 = vpop.f32.mrb[0].mxu0
    %v8200 = vpop.f32.mrb[0].mxu0
    %8201 = vdwg.mxu0
    %v8202 = vadd.f32 %v7844, %v8197
    %s8203 = scalar_lea.vmem %s5, 1728
    %v8204 = vld [vmem:[%s8203] sm:$0xf]
    %v8205 = vld [vmem:[%s8203 + $0x4] sm:$0xf]
    %v8206 = vld [vmem:[%s8203 + $0x8] sm:$0xf]
    %v8207 = vld [vmem:[%s8203 + $0xc] sm:$0xf]
    %v8208 = vld [vmem:[%s8203 + $0x10] sm:$0xf]
    %v8209 = vld [vmem:[%s8203 + $0x14] sm:$0xf]
    %v8210 = vld [vmem:[%s8203 + $0x18] sm:$0xf]
    %v8211 = vld [vmem:[%s8203 + $0x1c] sm:$0xf]
    %v8212 = vld [vmem:[%s8203 + $0x20] sm:$0xf]
    %v8213 = vld [vmem:[%s8203 + $0x24] sm:$0xf]
    %v8214 = vld [vmem:[%s8203 + $0x28] sm:$0xf]
    %v8215 = vld [vmem:[%s8203 + $0x2c] sm:$0xf]
    %v8216 = vld [vmem:[%s8203 + $0x30] sm:$0xf]
    %v8217 = vld [vmem:[%s8203 + $0x34] sm:$0xf]
    %v8218 = vld [vmem:[%s8203 + $0x38] sm:$0xf]
    %v8219 = vld [vmem:[%s8203 + $0x3c] sm:$0xf]
    %v8220 = vld [vmem:[%s8203 + $0x40] sm:$0xf]
    %v8221 = vld [vmem:[%s8203 + $0x44] sm:$0xf]
    %v8222 = vld [vmem:[%s8203 + $0x48] sm:$0xf]
    %v8223 = vld [vmem:[%s8203 + $0x4c] sm:$0xf]
    %v8224 = vld [vmem:[%s8203 + $0x50] sm:$0xf]
    %v8225 = vld [vmem:[%s8203 + $0x54] sm:$0xf]
    %v8226 = vld [vmem:[%s8203 + $0x58] sm:$0xf]
    %v8227 = vld [vmem:[%s8203 + $0x5c] sm:$0xf]
    %v8228 = vld [vmem:[%s8203 + $0x60] sm:$0xf]
    %v8229 = vld [vmem:[%s8203 + $0x64] sm:$0xf]
    %v8230 = vld [vmem:[%s8203 + $0x68] sm:$0xf]
    %v8231 = vld [vmem:[%s8203 + $0x6c] sm:$0xf]
    %v8232 = vld [vmem:[%s8203 + $0x70] sm:$0xf]
    %v8233 = vld [vmem:[%s8203 + $0x74] sm:$0xf]
    %v8234 = vld [vmem:[%s8203 + $0x78] sm:$0xf]
    %v8235 = vld [vmem:[%s8203 + $0x7c] sm:$0xf]
    %v8236 = vld [vmem:[%s8203 + $0x80] sm:$0xf]
    %v8237 = vld [vmem:[%s8203 + $0x84] sm:$0xf]
    %v8238 = vld [vmem:[%s8203 + $0x88] sm:$0xf]
    %v8239 = vld [vmem:[%s8203 + $0x8c] sm:$0xf]
    %v8240 = vld [vmem:[%s8203 + $0x90] sm:$0xf]
    %v8241 = vld [vmem:[%s8203 + $0x94] sm:$0xf]
    %v8242 = vld [vmem:[%s8203 + $0x98] sm:$0xf]
    %v8243 = vld [vmem:[%s8203 + $0x9c] sm:$0xf]
    %v8244 = vld [vmem:[%s8203 + $0xa0] sm:$0xf]
    %v8245 = vld [vmem:[%s8203 + $0xa4] sm:$0xf]
    %v8246 = vld [vmem:[%s8203 + $0xa8] sm:$0xf]
    %v8247 = vld [vmem:[%s8203 + $0xac] sm:$0xf]
    %v8248 = vld [vmem:[%s8203 + $0xb0] sm:$0xf]
    %v8249 = vld [vmem:[%s8203 + $0xb4] sm:$0xf]
    %v8250 = vld [vmem:[%s8203 + $0xb8] sm:$0xf]
    %v8251 = vld [vmem:[%s8203 + $0xbc] sm:$0xf]
    %v8252 = vrot.slane %v7960, 2
    %v8253 = vrot.slane %v7963, 1
    %v8254 = vsel %vm5568, %v8253, %v8252
    %v8255 = vrot.slane %v7961, 2
    %v8256 = vrot.slane %v7964, 1
    %v8257 = vsel %vm5568, %v8256, %v8255
    %v8258 = vrot.slane %v7962, 2
    %v8259 = vrot.slane %v7965, 1
    %v8260 = vsel %vm5568, %v8259, %v8258
    %v8261 = vpack.c.b16 %v8254, %v8254
    %v8262 = vpack.c.b16 %v8257, %v8257
    %v8263 = vpack.c.b16 %v8260, %v8260
    %v8315 = vunpack.c.l.b16 %v8204
    %v8316 = vunpack.c.l.b16 %v8205
    %v8317 = vunpack.c.l.b16 %v8206
    %v8318 = vunpack.c.l.b16 %v8207
    %v8319 = vunpack.c.l.b16 %v8208
    %v8320 = vunpack.c.l.b16 %v8209
    %v8321 = vunpack.c.l.b16 %v8210
    %v8322 = vunpack.c.l.b16 %v8211
    %v8323 = vunpack.c.l.b16 %v8212
    %v8324 = vunpack.c.l.b16 %v8213
    %v8325 = vunpack.c.l.b16 %v8214
    %v8326 = vunpack.c.l.b16 %v8215
    %v8327 = vunpack.c.l.b16 %v8216
    %v8328 = vunpack.c.l.b16 %v8217
    %v8329 = vunpack.c.l.b16 %v8218
    %v8330 = vunpack.c.l.b16 %v8219
    %v8331 = vunpack.c.l.b16 %v8220
    %v8332 = vunpack.c.l.b16 %v8221
    %v8333 = vunpack.c.l.b16 %v8222
    %v8334 = vunpack.c.l.b16 %v8223
    %v8335 = vunpack.c.l.b16 %v8224
    %v8336 = vunpack.c.l.b16 %v8225
    %v8337 = vunpack.c.l.b16 %v8226
    %v8338 = vunpack.c.l.b16 %v8227
    %v8339 = vunpack.c.l.b16 %v8228
    %v8340 = vunpack.c.l.b16 %v8229
    %v8341 = vunpack.c.l.b16 %v8230
    %v8342 = vunpack.c.l.b16 %v8231
    %v8343 = vunpack.c.l.b16 %v8232
    %v8344 = vunpack.c.l.b16 %v8233
    %v8345 = vunpack.c.l.b16 %v8234
    %v8346 = vunpack.c.l.b16 %v8235
    %v8347 = vunpack.c.l.b16 %v8236
    %v8348 = vunpack.c.l.b16 %v8237
    %v8349 = vunpack.c.l.b16 %v8238
    %v8350 = vunpack.c.l.b16 %v8239
    %v8351 = vunpack.c.l.b16 %v8240
    %v8352 = vunpack.c.l.b16 %v8241
    %v8353 = vunpack.c.l.b16 %v8242
    %v8354 = vunpack.c.l.b16 %v8243
    %v8355 = vunpack.c.l.b16 %v8244
    %v8356 = vunpack.c.l.b16 %v8245
    %v8357 = vunpack.c.l.b16 %v8246
    %v8358 = vunpack.c.l.b16 %v8247
    %v8359 = vunpack.c.l.b16 %v8248
    %v8360 = vunpack.c.l.b16 %v8249
    %v8361 = vunpack.c.l.b16 %v8250
    %v8362 = vunpack.c.l.b16 %v8251
    %v8363 = vpack.c.b16 %v8316, %v8315
    %v8364 = vpack.c.b16 %v8318, %v8317
    %v8365 = vpack.c.b16 %v8320, %v8319
    %v8366 = vpack.c.b16 %v8322, %v8321
    %v8367 = vpack.c.b16 %v8324, %v8323
    %v8368 = vpack.c.b16 %v8326, %v8325
    %v8369 = vpack.c.b16 %v8328, %v8327
    %v8370 = vpack.c.b16 %v8330, %v8329
    %v8371 = vpack.c.b16 %v8332, %v8331
    %v8372 = vpack.c.b16 %v8334, %v8333
    %v8373 = vpack.c.b16 %v8336, %v8335
    %v8374 = vpack.c.b16 %v8338, %v8337
    %v8375 = vpack.c.b16 %v8340, %v8339
    %v8376 = vpack.c.b16 %v8342, %v8341
    %v8377 = vpack.c.b16 %v8344, %v8343
    %v8378 = vpack.c.b16 %v8346, %v8345
    %v8379 = vpack.c.b16 %v8348, %v8347
    %v8380 = vpack.c.b16 %v8350, %v8349
    %v8381 = vpack.c.b16 %v8352, %v8351
    %v8382 = vpack.c.b16 %v8354, %v8353
    %v8383 = vpack.c.b16 %v8356, %v8355
    %v8384 = vpack.c.b16 %v8358, %v8357
    %v8385 = vpack.c.b16 %v8360, %v8359
    %v8386 = vpack.c.b16 %v8362, %v8361
    %8411 = vmatprep.subr.bf16.mxu0 0
    %8412 = vmatpush1.bf16.msra.mxu0 %v8363
    %8413 = vmatprep.subr.bf16.mxu0 0
    %8414 = vmatpush1.bf16.msra.mxu0 %v8364
    %8415 = vmatprep.subr.bf16.mxu0 0
    %8416 = vmatpush1.bf16.msra.mxu0 %v8365
    %8417 = vmatprep.subr.bf16.mxu0 0
    %8418 = vmatpush1.bf16.msra.mxu0 %v8366
    %8419 = vmatprep.subr.bf16.mxu0 0
    %8420 = vmatpush1.bf16.msra.mxu0 %v8367
    %8421 = vmatprep.subr.bf16.mxu0 0
    %8422 = vmatpush1.bf16.msra.mxu0 %v8368
    %8423 = vmatprep.subr.bf16.mxu0 0
    %8424 = vmatpush1.bf16.msra.mxu0 %v8369
    %8425 = vmatprep.subr.bf16.mxu0 0
    %8426 = vmatpush1.bf16.msra.mxu0 %v8370
    %8427 = vmatprep.subr.bf16.mxu0 0
    %8428 = vmatpush1.bf16.msra.mxu0 %v8371
    %8429 = vmatprep.subr.bf16.mxu0 0
    %8430 = vmatpush1.bf16.msra.mxu0 %v8372
    %8431 = vmatprep.subr.bf16.mxu0 0
    %8432 = vmatpush1.bf16.msra.mxu0 %v8373
    %8433 = vmatprep.subr.bf16.mxu0 0
    %8434 = vmatpush1.bf16.msra.mxu0 %v8374
    %8435 = vmatprep.subr.bf16.mxu0 0
    %8436 = vmatpush1.bf16.msra.mxu0 %v8375
    %8437 = vmatprep.subr.bf16.mxu0 0
    %8438 = vmatpush1.bf16.msra.mxu0 %v8376
    %8439 = vmatprep.subr.bf16.mxu0 0
    %8440 = vmatpush1.bf16.msra.mxu0 %v8377
    %8441 = vmatprep.subr.bf16.mxu0 0
    %8442 = vmatpush1.bf16.msra.mxu0 %v8378
    %8443 = vmatprep.mubr.bf16.mxu0 %v8262
    %8444 = vmatmul.mubr.bf16.gmra.mrb[0].mxu0 %v8261
    %v8445 = vpop.f32.mrb[0].mxu0
    %v8446 = vadd.f32 0.0, %v8445
    %v8447 = vpop.f32.mrb[0].mxu0
    %v8448 = vpop.f32.mrb[0].mxu0
    %v8449 = vpop.f32.mrb[0].mxu0
    %8450 = vdwg.mxu0
    %8451 = vmatprep.subr.bf16.mxu0 0
    %8452 = vmatpush1.bf16.msra.mxu0 %v8379
    %8453 = vmatprep.subr.bf16.mxu0 0
    %8454 = vmatpush1.bf16.msra.mxu0 %v8380
    %8455 = vmatprep.subr.bf16.mxu0 0
    %8456 = vmatpush1.bf16.msra.mxu0 %v8381
    %8457 = vmatprep.subr.bf16.mxu0 0
    %8458 = vmatpush1.bf16.msra.mxu0 %v8382
    %8459 = vmatprep.subr.bf16.mxu0 0
    %8460 = vmatpush1.bf16.msra.mxu0 %v8383
    %8461 = vmatprep.subr.bf16.mxu0 0
    %8462 = vmatpush1.bf16.msra.mxu0 %v8384
    %8463 = vmatprep.subr.bf16.mxu0 0
    %8464 = vmatpush1.bf16.msra.mxu0 %v8385
    %8465 = vmatprep.subr.bf16.mxu0 0
    %8466 = vmatpush1.bf16.msra.mxu0 %v8386
    %8467 = vmatprep.subr.bf16.mxu0 0
    %8468 = vmatpush1.bf16.msra.mxu0 0
    %8469 = vmatprep.subr.bf16.mxu0 0
    %8470 = vmatpush1.bf16.msra.mxu0 0
    %8471 = vmatprep.subr.bf16.mxu0 0
    %8472 = vmatpush1.bf16.msra.mxu0 0
    %8473 = vmatprep.subr.bf16.mxu0 0
    %8474 = vmatpush1.bf16.msra.mxu0 0
    %8475 = vmatprep.subr.bf16.mxu0 0
    %8476 = vmatpush1.bf16.msra.mxu0 0
    %8477 = vmatprep.subr.bf16.mxu0 0
    %8478 = vmatpush1.bf16.msra.mxu0 0
    %8479 = vmatprep.subr.bf16.mxu0 0
    %8480 = vmatpush1.bf16.msra.mxu0 0
    %8481 = vmatprep.subr.bf16.mxu0 0
    %8482 = vmatpush1.bf16.msra.mxu0 0
    %8483 = vmatprep.mubr.bf16.mxu0 0
    %8484 = vmatmul.mubr.bf16.gmra.mrb[0].mxu0 %v8263
    %v8485 = vpop.f32.mrb[0].mxu0
    %v8486 = vadd.f32 %v8446, %v8485
    %v8487 = vpop.f32.mrb[0].mxu0
    %v8488 = vpop.f32.mrb[0].mxu0
    %v8489 = vpop.f32.mrb[0].mxu0
    %8490 = vdwg.mxu0
    %v8491 = vadd.f32 %v8202, %v8486
    %s8492 = scalar_lea.vmem %s5, 1920
    %v8493 = vld [vmem:[%s8492] sm:$0xf]
    %v8494 = vld [vmem:[%s8492 + $0x4] sm:$0xf]
    %v8495 = vld [vmem:[%s8492 + $0x8] sm:$0xf]
    %v8496 = vld [vmem:[%s8492 + $0xc] sm:$0xf]
    %v8497 = vld [vmem:[%s8492 + $0x10] sm:$0xf]
    %v8498 = vld [vmem:[%s8492 + $0x14] sm:$0xf]
    %v8499 = vld [vmem:[%s8492 + $0x18] sm:$0xf]
    %v8500 = vld [vmem:[%s8492 + $0x1c] sm:$0xf]
    %v8501 = vld [vmem:[%s8492 + $0x20] sm:$0xf]
    %v8502 = vld [vmem:[%s8492 + $0x24] sm:$0xf]
    %v8503 = vld [vmem:[%s8492 + $0x28] sm:$0xf]
    %v8504 = vld [vmem:[%s8492 + $0x2c] sm:$0xf]
    %v8505 = vld [vmem:[%s8492 + $0x30] sm:$0xf]
    %v8506 = vld [vmem:[%s8492 + $0x34] sm:$0xf]
    %v8507 = vld [vmem:[%s8492 + $0x38] sm:$0xf]
    %v8508 = vld [vmem:[%s8492 + $0x3c] sm:$0xf]
    %v8509 = vld [vmem:[%s8492 + $0x40] sm:$0xf]
    %v8510 = vld [vmem:[%s8492 + $0x44] sm:$0xf]
    %v8511 = vld [vmem:[%s8492 + $0x48] sm:$0xf]
    %v8512 = vld [vmem:[%s8492 + $0x4c] sm:$0xf]
    %v8513 = vld [vmem:[%s8492 + $0x50] sm:$0xf]
    %v8514 = vld [vmem:[%s8492 + $0x54] sm:$0xf]
    %v8515 = vld [vmem:[%s8492 + $0x58] sm:$0xf]
    %v8516 = vld [vmem:[%s8492 + $0x5c] sm:$0xf]
    %v8517 = vld [vmem:[%s8492 + $0x60] sm:$0xf]
    %v8518 = vld [vmem:[%s8492 + $0x64] sm:$0xf]
    %v8519 = vld [vmem:[%s8492 + $0x68] sm:$0xf]
    %v8520 = vld [vmem:[%s8492 + $0x6c] sm:$0xf]
    %v8521 = vld [vmem:[%s8492 + $0x70] sm:$0xf]
    %v8522 = vld [vmem:[%s8492 + $0x74] sm:$0xf]
    %v8523 = vld [vmem:[%s8492 + $0x78] sm:$0xf]
    %v8524 = vld [vmem:[%s8492 + $0x7c] sm:$0xf]
    %v8525 = vld [vmem:[%s8492 + $0x80] sm:$0xf]
    %v8526 = vld [vmem:[%s8492 + $0x84] sm:$0xf]
    %v8527 = vld [vmem:[%s8492 + $0x88] sm:$0xf]
    %v8528 = vld [vmem:[%s8492 + $0x8c] sm:$0xf]
    %v8529 = vld [vmem:[%s8492 + $0x90] sm:$0xf]
    %v8530 = vld [vmem:[%s8492 + $0x94] sm:$0xf]
    %v8531 = vld [vmem:[%s8492 + $0x98] sm:$0xf]
    %v8532 = vld [vmem:[%s8492 + $0x9c] sm:$0xf]
    %v8533 = vld [vmem:[%s8492 + $0xa0] sm:$0xf]
    %v8534 = vld [vmem:[%s8492 + $0xa4] sm:$0xf]
    %v8535 = vld [vmem:[%s8492 + $0xa8] sm:$0xf]
    %v8536 = vld [vmem:[%s8492 + $0xac] sm:$0xf]
    %v8537 = vld [vmem:[%s8492 + $0xb0] sm:$0xf]
    %v8538 = vld [vmem:[%s8492 + $0xb4] sm:$0xf]
    %v8539 = vld [vmem:[%s8492 + $0xb8] sm:$0xf]
    %v8540 = vld [vmem:[%s8492 + $0xbc] sm:$0xf]
    %v8541 = vrot.slane %v7960, 4
    %v8542 = vrot.slane %v7963, 3
    %v8543 = vsel %vm5568, %v8542, %v8541
    %v8544 = vrot.slane %v7961, 4
    %v8545 = vrot.slane %v7964, 3
    %v8546 = vsel %vm5568, %v8545, %v8544
    %v8547 = vrot.slane %v7962, 4
    %v8548 = vrot.slane %v7965, 3
    %v8549 = vsel %vm5568, %v8548, %v8547
    %v8550 = vpack.c.b16 %v8543, %v8543
    %v8551 = vpack.c.b16 %v8546, %v8546
    %v8552 = vpack.c.b16 %v8549, %v8549
    %v8604 = vunpack.c.l.b16 %v8493
    %v8605 = vunpack.c.l.b16 %v8494
    %v8606 = vunpack.c.l.b16 %v8495
    %v8607 = vunpack.c.l.b16 %v8496
    %v8608 = vunpack.c.l.b16 %v8497
    %v8609 = vunpack.c.l.b16 %v8498
    %v8610 = vunpack.c.l.b16 %v8499
    %v8611 = vunpack.c.l.b16 %v8500
    %v8612 = vunpack.c.l.b16 %v8501
    %v8613 = vunpack.c.l.b16 %v8502
    %v8614 = vunpack.c.l.b16 %v8503
    %v8615 = vunpack.c.l.b16 %v8504
    %v8616 = vunpack.c.l.b16 %v8505
    %v8617 = vunpack.c.l.b16 %v8506
    %v8618 = vunpack.c.l.b16 %v8507
    %v8619 = vunpack.c.l.b16 %v8508
    %v8620 = vunpack.c.l.b16 %v8509
    %v8621 = vunpack.c.l.b16 %v8510
    %v8622 = vunpack.c.l.b16 %v8511
    %v8623 = vunpack.c.l.b16 %v8512
    %v8624 = vunpack.c.l.b16 %v8513
    %v8625 = vunpack.c.l.b16 %v8514
    %v8626 = vunpack.c.l.b16 %v8515
    %v8627 = vunpack.c.l.b16 %v8516
    %v8628 = vunpack.c.l.b16 %v8517
    %v8629 = vunpack.c.l.b16 %v8518
    %v8630 = vunpack.c.l.b16 %v8519
    %v8631 = vunpack.c.l.b16 %v8520
    %v8632 = vunpack.c.l.b16 %v8521
    %v8633 = vunpack.c.l.b16 %v8522
    %v8634 = vunpack.c.l.b16 %v8523
    %v8635 = vunpack.c.l.b16 %v8524
    %v8636 = vunpack.c.l.b16 %v8525
    %v8637 = vunpack.c.l.b16 %v8526
    %v8638 = vunpack.c.l.b16 %v8527
    %v8639 = vunpack.c.l.b16 %v8528
    %v8640 = vunpack.c.l.b16 %v8529
    %v8641 = vunpack.c.l.b16 %v8530
    %v8642 = vunpack.c.l.b16 %v8531
    %v8643 = vunpack.c.l.b16 %v8532
    %v8644 = vunpack.c.l.b16 %v8533
    %v8645 = vunpack.c.l.b16 %v8534
    %v8646 = vunpack.c.l.b16 %v8535
    %v8647 = vunpack.c.l.b16 %v8536
    %v8648 = vunpack.c.l.b16 %v8537
    %v8649 = vunpack.c.l.b16 %v8538
    %v8650 = vunpack.c.l.b16 %v8539
    %v8651 = vunpack.c.l.b16 %v8540
    %v8652 = vpack.c.b16 %v8605, %v8604
    %v8653 = vpack.c.b16 %v8607, %v8606
    %v8654 = vpack.c.b16 %v8609, %v8608
    %v8655 = vpack.c.b16 %v8611, %v8610
    %v8656 = vpack.c.b16 %v8613, %v8612
    %v8657 = vpack.c.b16 %v8615, %v8614
    %v8658 = vpack.c.b16 %v8617, %v8616
    %v8659 = vpack.c.b16 %v8619, %v8618
    %v8660 = vpack.c.b16 %v8621, %v8620
    %v8661 = vpack.c.b16 %v8623, %v8622
    %v8662 = vpack.c.b16 %v8625, %v8624
    %v8663 = vpack.c.b16 %v8627, %v8626
    %v8664 = vpack.c.b16 %v8629, %v8628
    %v8665 = vpack.c.b16 %v8631, %v8630
    %v8666 = vpack.c.b16 %v8633, %v8632
    %v8667 = vpack.c.b16 %v8635, %v8634
    %v8668 = vpack.c.b16 %v8637, %v8636
    %v8669 = vpack.c.b16 %v8639, %v8638
    %v8670 = vpack.c.b16 %v8641, %v8640
    %v8671 = vpack.c.b16 %v8643, %v8642
    %v8672 = vpack.c.b16 %v8645, %v8644
    %v8673 = vpack.c.b16 %v8647, %v8646
    %v8674 = vpack.c.b16 %v8649, %v8648
    %v8675 = vpack.c.b16 %v8651, %v8650
    %8700 = vmatprep.subr.bf16.mxu0 0
    %8701 = vmatpush1.bf16.msra.mxu0 %v8652
    %8702 = vmatprep.subr.bf16.mxu0 0
    %8703 = vmatpush1.bf16.msra.mxu0 %v8653
    %8704 = vmatprep.subr.bf16.mxu0 0
    %8705 = vmatpush1.bf16.msra.mxu0 %v8654
    %8706 = vmatprep.subr.bf16.mxu0 0
    %8707 = vmatpush1.bf16.msra.mxu0 %v8655
    %8708 = vmatprep.subr.bf16.mxu0 0
    %8709 = vmatpush1.bf16.msra.mxu0 %v8656
    %8710 = vmatprep.subr.bf16.mxu0 0
    %8711 = vmatpush1.bf16.msra.mxu0 %v8657
    %8712 = vmatprep.subr.bf16.mxu0 0
    %8713 = vmatpush1.bf16.msra.mxu0 %v8658
    %8714 = vmatprep.subr.bf16.mxu0 0
    %8715 = vmatpush1.bf16.msra.mxu0 %v8659
    %8716 = vmatprep.subr.bf16.mxu0 0
    %8717 = vmatpush1.bf16.msra.mxu0 %v8660
    %8718 = vmatprep.subr.bf16.mxu0 0
    %8719 = vmatpush1.bf16.msra.mxu0 %v8661
    %8720 = vmatprep.subr.bf16.mxu0 0
    %8721 = vmatpush1.bf16.msra.mxu0 %v8662
    %8722 = vmatprep.subr.bf16.mxu0 0
    %8723 = vmatpush1.bf16.msra.mxu0 %v8663
    %8724 = vmatprep.subr.bf16.mxu0 0
    %8725 = vmatpush1.bf16.msra.mxu0 %v8664
    %8726 = vmatprep.subr.bf16.mxu0 0
    %8727 = vmatpush1.bf16.msra.mxu0 %v8665
    %8728 = vmatprep.subr.bf16.mxu0 0
    %8729 = vmatpush1.bf16.msra.mxu0 %v8666
    %8730 = vmatprep.subr.bf16.mxu0 0
    %8731 = vmatpush1.bf16.msra.mxu0 %v8667
    %8732 = vmatprep.mubr.bf16.mxu0 %v8551
    %8733 = vmatmul.mubr.bf16.gmra.mrb[0].mxu0 %v8550
    %v8734 = vpop.f32.mrb[0].mxu0
    %v8735 = vadd.f32 0.0, %v8734
    %v8736 = vpop.f32.mrb[0].mxu0
    %v8737 = vpop.f32.mrb[0].mxu0
    %v8738 = vpop.f32.mrb[0].mxu0
    %8739 = vdwg.mxu0
    %8740 = vmatprep.subr.bf16.mxu0 0
    %8741 = vmatpush1.bf16.msra.mxu0 %v8668
    %8742 = vmatprep.subr.bf16.mxu0 0
    %8743 = vmatpush1.bf16.msra.mxu0 %v8669
    %8744 = vmatprep.subr.bf16.mxu0 0
    %8745 = vmatpush1.bf16.msra.mxu0 %v8670
    %8746 = vmatprep.subr.bf16.mxu0 0
    %8747 = vmatpush1.bf16.msra.mxu0 %v8671
    %8748 = vmatprep.subr.bf16.mxu0 0
    %8749 = vmatpush1.bf16.msra.mxu0 %v8672
    %8750 = vmatprep.subr.bf16.mxu0 0
    %8751 = vmatpush1.bf16.msra.mxu0 %v8673
    %8752 = vmatprep.subr.bf16.mxu0 0
    %8753 = vmatpush1.bf16.msra.mxu0 %v8674
    %8754 = vmatprep.subr.bf16.mxu0 0
    %8755 = vmatpush1.bf16.msra.mxu0 %v8675
    %8756 = vmatprep.subr.bf16.mxu0 0
    %8757 = vmatpush1.bf16.msra.mxu0 0
    %8758 = vmatprep.subr.bf16.mxu0 0
    %8759 = vmatpush1.bf16.msra.mxu0 0
    %8760 = vmatprep.subr.bf16.mxu0 0
    %8761 = vmatpush1.bf16.msra.mxu0 0
    %8762 = vmatprep.subr.bf16.mxu0 0
    %8763 = vmatpush1.bf16.msra.mxu0 0
    %8764 = vmatprep.subr.bf16.mxu0 0
    %8765 = vmatpush1.bf16.msra.mxu0 0
    %8766 = vmatprep.subr.bf16.mxu0 0
    %8767 = vmatpush1.bf16.msra.mxu0 0
    %8768 = vmatprep.subr.bf16.mxu0 0
    %8769 = vmatpush1.bf16.msra.mxu0 0
    %8770 = vmatprep.subr.bf16.mxu0 0
    %8771 = vmatpush1.bf16.msra.mxu0 0
    %8772 = vmatprep.mubr.bf16.mxu0 0
    %8773 = vmatmul.mubr.bf16.gmra.mrb[0].mxu0 %v8552
    %v8774 = vpop.f32.mrb[0].mxu0
    %v8775 = vadd.f32 %v8735, %v8774
    %v8776 = vpop.f32.mrb[0].mxu0
    %v8777 = vpop.f32.mrb[0].mxu0
    %v8778 = vpop.f32.mrb[0].mxu0
    %8779 = vdwg.mxu0
    %v8780 = vadd.f32 %v8491, %v8775
    %s8781 = scalar_lea.vmem %s5, 2112
    %v8782 = vld [vmem:[%s8781] sm:$0xf]
    %v8783 = vld [vmem:[%s8781 + $0x4] sm:$0xf]
    %v8784 = vld [vmem:[%s8781 + $0x8] sm:$0xf]
    %v8785 = vld [vmem:[%s8781 + $0xc] sm:$0xf]
    %v8786 = vld [vmem:[%s8781 + $0x10] sm:$0xf]
    %v8787 = vld [vmem:[%s8781 + $0x14] sm:$0xf]
    %v8788 = vld [vmem:[%s8781 + $0x18] sm:$0xf]
    %v8789 = vld [vmem:[%s8781 + $0x1c] sm:$0xf]
    %v8790 = vld [vmem:[%s8781 + $0x20] sm:$0xf]
    %v8791 = vld [vmem:[%s8781 + $0x24] sm:$0xf]
    %v8792 = vld [vmem:[%s8781 + $0x28] sm:$0xf]
    %v8793 = vld [vmem:[%s8781 + $0x2c] sm:$0xf]
    %v8794 = vld [vmem:[%s8781 + $0x30] sm:$0xf]
    %v8795 = vld [vmem:[%s8781 + $0x34] sm:$0xf]
    %v8796 = vld [vmem:[%s8781 + $0x38] sm:$0xf]
    %v8797 = vld [vmem:[%s8781 + $0x3c] sm:$0xf]
    %v8798 = vld [vmem:[%s8781 + $0x40] sm:$0xf]
    %v8799 = vld [vmem:[%s8781 + $0x44] sm:$0xf]
    %v8800 = vld [vmem:[%s8781 + $0x48] sm:$0xf]
    %v8801 = vld [vmem:[%s8781 + $0x4c] sm:$0xf]
    %v8802 = vld [vmem:[%s8781 + $0x50] sm:$0xf]
    %v8803 = vld [vmem:[%s8781 + $0x54] sm:$0xf]
    %v8804 = vld [vmem:[%s8781 + $0x58] sm:$0xf]
    %v8805 = vld [vmem:[%s8781 + $0x5c] sm:$0xf]
    %v8806 = vld [vmem:[%s8781 + $0x60] sm:$0xf]
    %v8807 = vld [vmem:[%s8781 + $0x64] sm:$0xf]
    %v8808 = vld [vmem:[%s8781 + $0x68] sm:$0xf]
    %v8809 = vld [vmem:[%s8781 + $0x6c] sm:$0xf]
    %v8810 = vld [vmem:[%s8781 + $0x70] sm:$0xf]
    %v8811 = vld [vmem:[%s8781 + $0x74] sm:$0xf]
    %v8812 = vld [vmem:[%s8781 + $0x78] sm:$0xf]
    %v8813 = vld [vmem:[%s8781 + $0x7c] sm:$0xf]
    %v8814 = vld [vmem:[%s8781 + $0x80] sm:$0xf]
    %v8815 = vld [vmem:[%s8781 + $0x84] sm:$0xf]
    %v8816 = vld [vmem:[%s8781 + $0x88] sm:$0xf]
    %v8817 = vld [vmem:[%s8781 + $0x8c] sm:$0xf]
    %v8818 = vld [vmem:[%s8781 + $0x90] sm:$0xf]
    %v8819 = vld [vmem:[%s8781 + $0x94] sm:$0xf]
    %v8820 = vld [vmem:[%s8781 + $0x98] sm:$0xf]
    %v8821 = vld [vmem:[%s8781 + $0x9c] sm:$0xf]
    %v8822 = vld [vmem:[%s8781 + $0xa0] sm:$0xf]
    %v8823 = vld [vmem:[%s8781 + $0xa4] sm:$0xf]
    %v8824 = vld [vmem:[%s8781 + $0xa8] sm:$0xf]
    %v8825 = vld [vmem:[%s8781 + $0xac] sm:$0xf]
    %v8826 = vld [vmem:[%s8781 + $0xb0] sm:$0xf]
    %v8827 = vld [vmem:[%s8781 + $0xb4] sm:$0xf]
    %v8828 = vld [vmem:[%s8781 + $0xb8] sm:$0xf]
    %v8829 = vld [vmem:[%s8781 + $0xbc] sm:$0xf]
    %v8830 = vrot.slane %v7960, 6
    %v8831 = vrot.slane %v7963, 5
    %v8832 = vsel %vm5568, %v8831, %v8830
    %v8833 = vrot.slane %v7961, 6
    %v8834 = vrot.slane %v7964, 5
    %v8835 = vsel %vm5568, %v8834, %v8833
    %v8836 = vrot.slane %v7962, 6
    %v8837 = vrot.slane %v7965, 5
    %v8838 = vsel %vm5568, %v8837, %v8836
    %v8839 = vpack.c.b16 %v8832, %v8832
    %v8840 = vpack.c.b16 %v8835, %v8835
    %v8841 = vpack.c.b16 %v8838, %v8838
    %v8893 = vunpack.c.l.b16 %v8782
    %v8894 = vunpack.c.l.b16 %v8783
    %v8895 = vunpack.c.l.b16 %v8784
    %v8896 = vunpack.c.l.b16 %v8785
    %v8897 = vunpack.c.l.b16 %v8786
    %v8898 = vunpack.c.l.b16 %v8787
    %v8899 = vunpack.c.l.b16 %v8788
    %v8900 = vunpack.c.l.b16 %v8789
    %v8901 = vunpack.c.l.b16 %v8790
    %v8902 = vunpack.c.l.b16 %v8791
    %v8903 = vunpack.c.l.b16 %v8792
    %v8904 = vunpack.c.l.b16 %v8793
    %v8905 = vunpack.c.l.b16 %v8794
    %v8906 = vunpack.c.l.b16 %v8795
    %v8907 = vunpack.c.l.b16 %v8796
    %v8908 = vunpack.c.l.b16 %v8797
    %v8909 = vunpack.c.l.b16 %v8798
    %v8910 = vunpack.c.l.b16 %v8799
    %v8911 = vunpack.c.l.b16 %v8800
    %v8912 = vunpack.c.l.b16 %v8801
    %v8913 = vunpack.c.l.b16 %v8802
    %v8914 = vunpack.c.l.b16 %v8803
    %v8915 = vunpack.c.l.b16 %v8804
    %v8916 = vunpack.c.l.b16 %v8805
    %v8917 = vunpack.c.l.b16 %v8806
    %v8918 = vunpack.c.l.b16 %v8807
    %v8919 = vunpack.c.l.b16 %v8808
    %v8920 = vunpack.c.l.b16 %v8809
    %v8921 = vunpack.c.l.b16 %v8810
    %v8922 = vunpack.c.l.b16 %v8811
    %v8923 = vunpack.c.l.b16 %v8812
    %v8924 = vunpack.c.l.b16 %v8813
    %v8925 = vunpack.c.l.b16 %v8814
    %v8926 = vunpack.c.l.b16 %v8815
    %v8927 = vunpack.c.l.b16 %v8816
    %v8928 = vunpack.c.l.b16 %v8817
    %v8929 = vunpack.c.l.b16 %v8818
    %v8930 = vunpack.c.l.b16 %v8819
    %v8931 = vunpack.c.l.b16 %v8820
    %v8932 = vunpack.c.l.b16 %v8821
    %v8933 = vunpack.c.l.b16 %v8822
    %v8934 = vunpack.c.l.b16 %v8823
    %v8935 = vunpack.c.l.b16 %v8824
    %v8936 = vunpack.c.l.b16 %v8825
    %v8937 = vunpack.c.l.b16 %v8826
    %v8938 = vunpack.c.l.b16 %v8827
    %v8939 = vunpack.c.l.b16 %v8828
    %v8940 = vunpack.c.l.b16 %v8829
    %v8941 = vpack.c.b16 %v8894, %v8893
    %v8942 = vpack.c.b16 %v8896, %v8895
    %v8943 = vpack.c.b16 %v8898, %v8897
    %v8944 = vpack.c.b16 %v8900, %v8899
    %v8945 = vpack.c.b16 %v8902, %v8901
    %v8946 = vpack.c.b16 %v8904, %v8903
    %v8947 = vpack.c.b16 %v8906, %v8905
    %v8948 = vpack.c.b16 %v8908, %v8907
    %v8949 = vpack.c.b16 %v8910, %v8909
    %v8950 = vpack.c.b16 %v8912, %v8911
    %v8951 = vpack.c.b16 %v8914, %v8913
    %v8952 = vpack.c.b16 %v8916, %v8915
    %v8953 = vpack.c.b16 %v8918, %v8917
    %v8954 = vpack.c.b16 %v8920, %v8919
    %v8955 = vpack.c.b16 %v8922, %v8921
    %v8956 = vpack.c.b16 %v8924, %v8923
    %v8957 = vpack.c.b16 %v8926, %v8925
    %v8958 = vpack.c.b16 %v8928, %v8927
    %v8959 = vpack.c.b16 %v8930, %v8929
    %v8960 = vpack.c.b16 %v8932, %v8931
    %v8961 = vpack.c.b16 %v8934, %v8933
    %v8962 = vpack.c.b16 %v8936, %v8935
    %v8963 = vpack.c.b16 %v8938, %v8937
    %v8964 = vpack.c.b16 %v8940, %v8939
    %8989 = vmatprep.subr.bf16.mxu0 0
    %8990 = vmatpush1.bf16.msra.mxu0 %v8941
    %8991 = vmatprep.subr.bf16.mxu0 0
    %8992 = vmatpush1.bf16.msra.mxu0 %v8942
    %8993 = vmatprep.subr.bf16.mxu0 0
    %8994 = vmatpush1.bf16.msra.mxu0 %v8943
    %8995 = vmatprep.subr.bf16.mxu0 0
    %8996 = vmatpush1.bf16.msra.mxu0 %v8944
    %8997 = vmatprep.subr.bf16.mxu0 0
    %8998 = vmatpush1.bf16.msra.mxu0 %v8945
    %8999 = vmatprep.subr.bf16.mxu0 0
    %9000 = vmatpush1.bf16.msra.mxu0 %v8946
    %9001 = vmatprep.subr.bf16.mxu0 0
    %9002 = vmatpush1.bf16.msra.mxu0 %v8947
    %9003 = vmatprep.subr.bf16.mxu0 0
    %9004 = vmatpush1.bf16.msra.mxu0 %v8948
    %9005 = vmatprep.subr.bf16.mxu0 0
    %9006 = vmatpush1.bf16.msra.mxu0 %v8949
    %9007 = vmatprep.subr.bf16.mxu0 0
    %9008 = vmatpush1.bf16.msra.mxu0 %v8950
    %9009 = vmatprep.subr.bf16.mxu0 0
    %9010 = vmatpush1.bf16.msra.mxu0 %v8951
    %9011 = vmatprep.subr.bf16.mxu0 0
    %9012 = vmatpush1.bf16.msra.mxu0 %v8952
    %9013 = vmatprep.subr.bf16.mxu0 0
    %9014 = vmatpush1.bf16.msra.mxu0 %v8953
    %9015 = vmatprep.subr.bf16.mxu0 0
    %9016 = vmatpush1.bf16.msra.mxu0 %v8954
    %9017 = vmatprep.subr.bf16.mxu0 0
    %9018 = vmatpush1.bf16.msra.mxu0 %v8955
    %9019 = vmatprep.subr.bf16.mxu0 0
    %9020 = vmatpush1.bf16.msra.mxu0 %v8956
    %9021 = vmatprep.mubr.bf16.mxu0 %v8840
    %9022 = vmatmul.mubr.bf16.gmra.mrb[0].mxu0 %v8839
    %v9023 = vpop.f32.mrb[0].mxu0
    %v9024 = vadd.f32 0.0, %v9023
    %v9025 = vpop.f32.mrb[0].mxu0
    %v9026 = vpop.f32.mrb[0].mxu0
    %v9027 = vpop.f32.mrb[0].mxu0
    %9028 = vdwg.mxu0
    %9029 = vmatprep.subr.bf16.mxu0 0
    %9030 = vmatpush1.bf16.msra.mxu0 %v8957
    %9031 = vmatprep.subr.bf16.mxu0 0
    %9032 = vmatpush1.bf16.msra.mxu0 %v8958
    %9033 = vmatprep.subr.bf16.mxu0 0
    %9034 = vmatpush1.bf16.msra.mxu0 %v8959
    %9035 = vmatprep.subr.bf16.mxu0 0
    %9036 = vmatpush1.bf16.msra.mxu0 %v8960
    %9037 = vmatprep.subr.bf16.mxu0 0
    %9038 = vmatpush1.bf16.msra.mxu0 %v8961
    %9039 = vmatprep.subr.bf16.mxu0 0
    %9040 = vmatpush1.bf16.msra.mxu0 %v8962
    %9041 = vmatprep.subr.bf16.mxu0 0
    %9042 = vmatpush1.bf16.msra.mxu0 %v8963
    %9043 = vmatprep.subr.bf16.mxu0 0
    %9044 = vmatpush1.bf16.msra.mxu0 %v8964
    %9045 = vmatprep.subr.bf16.mxu0 0
    %9046 = vmatpush1.bf16.msra.mxu0 0
    %9047 = vmatprep.subr.bf16.mxu0 0
    %9048 = vmatpush1.bf16.msra.mxu0 0
    %9049 = vmatprep.subr.bf16.mxu0 0
    %9050 = vmatpush1.bf16.msra.mxu0 0
    %9051 = vmatprep.subr.bf16.mxu0 0
    %9052 = vmatpush1.bf16.msra.mxu0 0
    %9053 = vmatprep.subr.bf16.mxu0 0
    %9054 = vmatpush1.bf16.msra.mxu0 0
    %9055 = vmatprep.subr.bf16.mxu0 0
    %9056 = vmatpush1.bf16.msra.mxu0 0
    %9057 = vmatprep.subr.bf16.mxu0 0
    %9058 = vmatpush1.bf16.msra.mxu0 0
    %9059 = vmatprep.subr.bf16.mxu0 0
    %9060 = vmatpush1.bf16.msra.mxu0 0
    %9061 = vmatprep.mubr.bf16.mxu0 0
    %9062 = vmatmul.mubr.bf16.gmra.mrb[0].mxu0 %v8841
    %v9063 = vpop.f32.mrb[0].mxu0
    %v9064 = vadd.f32 %v9024, %v9063
    %v9065 = vpop.f32.mrb[0].mxu0
    %v9066 = vpop.f32.mrb[0].mxu0
    %v9067 = vpop.f32.mrb[0].mxu0
    %9068 = vdwg.mxu0
    %v9069 = vadd.f32 %v8780, %v9064
    %v9070 = vld [vmem:[%s6] sm:$0x1]
    %v9072 = vlaneseq
    %v9073 = vshrl.u32 %v9072, 7
    %v9074 = vsub.s32 0, %v9073
    %v9075 = vrot.slane %v9070, %v9074
    %v9077 = vadd.f32 %v9069, %v9075
    %v9078 = vmax.f32 %v9077, 0.0
    %v9079 = vld [vmem:[%s7] sm:$0xff]
    %v9080 = vld [vmem:[%s7 + $0x8] sm:$0xff]
    %v9081 = vld [vmem:[%s7 + $0x10] sm:$0xff]
    %v9082 = vld [vmem:[%s7 + $0x18] sm:$0xff]
    %v9083 = vld [vmem:[%s7 + $0x20] sm:$0xff]
    %v9084 = vld [vmem:[%s7 + $0x28] sm:$0xff]
    %v9085 = vld [vmem:[%s7 + $0x30] sm:$0xff]
    %v9086 = vld [vmem:[%s7 + $0x38] sm:$0xff]
    %v9087 = vld [vmem:[%s8] sm:$0x1]
    %v9089 = vlaneseq
    %v9090 = vshrl.u32 %v9089, 7
    %v9091 = vsub.s32 0, %v9090
    %v9092 = vrot.slane %v9087, %v9091
    %vm9094 = vcmask 523264
    %v9096 = vsel %vm9094, %v9078, 0
    %9098 = vmatprep.subr.mxu0 0.0
    %9099 = vmatpush1.msra.mxu0 %v9079
    %9100 = vmatprep.subr.mxu0 0.0
    %9101 = vmatpush1.msra.mxu0 %v9080
    %9102 = vmatprep.subr.mxu0 0.0
    %9103 = vmatpush1.msra.mxu0 %v9081
    %9104 = vmatprep.subr.mxu0 0.0
    %9105 = vmatpush1.msra.mxu0 %v9082
    %9106 = vmatprep.subr.mxu0 0.0
    %9107 = vmatpush1.msra.mxu0 %v9083
    %9108 = vmatprep.subr.mxu0 0.0
    %9109 = vmatpush1.msra.mxu0 %v9084
    %9110 = vmatprep.subr.mxu0 0.0
    %9111 = vmatpush1.msra.mxu0 %v9085
    %9112 = vmatprep.subr.mxu0 0.0
    %9113 = vmatpush1.msra.mxu0 %v9086
    %9114 = vmatprep.subr.mxu0 0.0
    %9115 = vmatpush1.msra.mxu0 0.0
    %9116 = vmatprep.subr.mxu0 0.0
    %9117 = vmatpush1.msra.mxu0 0.0
    %9118 = vmatprep.subr.mxu0 0.0
    %9119 = vmatpush1.msra.mxu0 0.0
    %9120 = vmatprep.subr.mxu0 0.0
    %9121 = vmatpush1.msra.mxu0 0.0
    %9122 = vmatprep.subr.mxu0 0.0
    %9123 = vmatpush1.msra.mxu0 0.0
    %9124 = vmatprep.subr.mxu0 0.0
    %9125 = vmatpush1.msra.mxu0 0.0
    %9126 = vmatprep.subr.mxu0 0.0
    %9127 = vmatpush1.msra.mxu0 0.0
    %9128 = vmatprep.subr.mxu0 0.0
    %9129 = vmatpush1.msra.mxu0 0.0
    %9130 = vmatprep.subr.mxu0 0.0
    %9131 = vmatpush1.msra.mxu0 0.0
    %9132 = vmatprep.subr.mxu0 0.0
    %9133 = vmatpush1.msra.mxu0 0.0
    %9134 = vmatprep.subr.mxu0 0.0
    %9135 = vmatpush1.msra.mxu0 0.0
    %9136 = vmatprep.subr.mxu0 0.0
    %9137 = vmatpush1.msra.mxu0 0.0
    %9138 = vmatprep.subr.mxu0 0.0
    %9139 = vmatpush1.msra.mxu0 0.0
    %9140 = vmatprep.subr.mxu0 0.0
    %9141 = vmatpush1.msra.mxu0 0.0
    %9142 = vmatprep.subr.mxu0 0.0
    %9143 = vmatpush1.msra.mxu0 0.0
    %9144 = vmatprep.subr.mxu0 0.0
    %9145 = vmatpush1.msra.mxu0 0.0
    %9146 = vmatprep.subr.mxu0 0.0
    %9147 = vmatpush1.msra.mxu0 0.0
    %9148 = vmatprep.subr.mxu0 0.0
    %9149 = vmatpush1.msra.mxu0 0.0
    %9150 = vmatprep.subr.mxu0 0.0
    %9151 = vmatpush1.msra.mxu0 0.0
    %9152 = vmatprep.subr.mxu0 0.0
    %9153 = vmatpush1.msra.mxu0 0.0
    %9154 = vmatprep.subr.mxu0 0.0
    %9155 = vmatpush1.msra.mxu0 0.0
    %9156 = vmatprep.subr.mxu0 0.0
    %9157 = vmatpush1.msra.mxu0 0.0
    %9158 = vmatprep.subr.mxu0 0.0
    %9159 = vmatpush1.msra.mxu0 0.0
    %9160 = vmatprep.subr.mxu0 0.0
    %9161 = vmatpush1.msra.mxu0 0.0
    %9162 = vmatprep.mubr.f32.mxu0 0.0
    %9163 = vmatmul.mubr.f32.gmra.mrb[0].mxu0 %v9096
    %v9164 = vpop.f32.mrb[0].mxu0
    %v9165 = vadd.f32 %v9092, %v9164
    %v9166 = vpop.f32.mrb[0].mxu0
    %9167 = vdwg.mxu0
    %vm9168 = vcmask 74752
    %v9169 = vsel %vm9168, %v9165, -inf
    %9170 = vmax.xlane.f32.xlu0 %v9169
    %v9171 = vpop.xlane.xlu0 %9170
    %v9172 = vsub.f32 %v9165, %v9171
    %v9173 = vmul.f32 %v9172, 1.442695
    %v9174 = vpow.pop %v9173
    %v9175 = vsel %vm9168, %v9174, 0.0
    %9176 = vadd.xlane.f32.xlu0 %v9175
    %v9177 = vpop.xlane.xlu0 %9176
    %v9178 = vlog2.pop %v9177
    %v9179 = vmul.f32 %v9178, 0.6931472
    %v9180 = vadd.f32 %v9171, %v9179
    %v9181 = vsub.f32 %v9165, %v9180
    %9182 = vst.msk [vmem:[#allocation2] sm:$0x3] %vm9168, %v9181
    // Predicated region
    $region38: #{_lambda_.1} parent=1 // pred_check
      _
    $region39: #{_lambda_.1} parent=1 // pred_check_branch
      %9184 = sbr.rel (0) target = $region41
    $region40: #{_lambda_.1} parent=1 // pred_region
      %s9186 = ssub.s32 32, 32
      %9187 = vsyncadd [#allocation3], %s9186
      %s9189 = sshll.u32 [#allocation2], 4
      %s9190 = int_to_ptr.vmem [resolvable:$true] %s9189
      %9192 = dma.vmem_to_hbm [thread:$0]  %s9190, 32, %s9, [#allocation3]
    $region41: #{_lambda_.1} parent=1 // pred_fallthru
      _
    // Predicated region
    $region42: #{_lambda_.1} parent=1 // pred_check
      _
    $region43: #{_lambda_.1} parent=1 // pred_check_branch
      %9194 = sbr.rel (0) target = $region45
    $region44: #{_lambda_.1} parent=1 // pred_region
      %9195 = dma.done [#allocation3], 32
    $region45: #{_lambda_.1} parent=1 // pred_fallthru
      _
    %9196 = vsyncpa [#allocation3], 1

</llo_original>
